<compile_context>
chip_gen: v7x
topology: tpu7x:2x2x1
jax: 0.10.0
libtpu: 0.0.40
codegen_flags: <defaults>
</compile_context>

<pallas_src>
from functools import partial

import numpy as np
import jax
import jax.numpy as jnp
from jax import lax
from jax.experimental import pallas as pl
from jax.experimental.pallas import tpu as pltpu


# -----------------------------------------------------------------------------
# Small config (consistent with the module's forward; scaled down)
# -----------------------------------------------------------------------------
BATCH = 2
IMG = 16
PATCH = 4
IN_CHANS = 3
EMBED = 32
DEPTH = 2
NUM_HEADS = 4
DEC_EMBED = 32          # decoder_embed_dim chosen TPU-friendly (head_dim = 8)
DEC_DEPTH = 2
DEC_NUM_HEADS = 4
MLP_RATIO = 4.0
LN_EPS = 1e-5           # nn.LayerNorm default


# -----------------------------------------------------------------------------
# sin-cos positional embedding (parameter setup, plain numpy)
# -----------------------------------------------------------------------------
def _get_1d_sincos(embed_dim, pos):
    omega = np.arange(embed_dim // 2, dtype=np.float64)
    omega /= embed_dim / 2.0
    omega = 1.0 / 10000 ** omega
    pos = pos.reshape(-1)
    out = np.einsum("m,d->md", pos, omega)
    return np.concatenate([np.sin(out), np.cos(out)], axis=1)


def get_2d_sincos_pos_embed(embed_dim, grid_size, cls_token=False):
    grid_h = np.arange(grid_size, dtype=np.float32)
    grid_w = np.arange(grid_size, dtype=np.float32)
    grid = np.meshgrid(grid_w, grid_h)
    grid = np.stack(grid, axis=0).reshape([2, 1, grid_size, grid_size])
    emb_h = _get_1d_sincos(embed_dim // 2, grid[0])
    emb_w = _get_1d_sincos(embed_dim // 2, grid[1])
    pos = np.concatenate([emb_h, emb_w], axis=1)
    if cls_token:
        pos = np.concatenate([np.zeros([1, embed_dim]), pos], axis=0)
    return pos.astype(np.float32)


# -----------------------------------------------------------------------------
# Small in-kernel helpers
# -----------------------------------------------------------------------------
def _gelu_tanh(x):
    # TODO(synk): nn.GELU default is exact erf; tanh approx used here (EUP slot),
    # ~1e-3 abs deviation.
    c = 0.7978845608028654  # sqrt(2/pi)
    return 0.5 * x * (1.0 + jnp.tanh(c * (x + 0.044715 * x * x * x)))


def _layernorm(v, g, b, eps):
    mu = jnp.mean(v, axis=-1, keepdims=True)
    vc = v - mu
    var = jnp.mean(vc * vc, axis=-1, keepdims=True)
    return vc * lax.rsqrt(var + eps) * g + b


def _round_up(x, m):
    return ((x + m - 1) // m) * m


def _pad_seq(x, s_pad):
    n, s, d = x.shape
    if s == s_pad:
        return x
    return jnp.concatenate([x, jnp.zeros((n, s_pad - s, d), x.dtype)], axis=1)


def _key_bias(s_valid, s_pad):
    # additive softmax bias: 0 for valid key columns, -1e30 for pad columns
    return jnp.where(jnp.arange(s_pad) < s_valid, 0.0, -1e30
                     ).astype(jnp.float32).reshape(1, s_pad)


# -----------------------------------------------------------------------------
# Kernel 1: patch embed (conv-as-matmul) + bias + pos-embed add, single batched
#           matmul over all N*L patch rows (grid=(1,)).
# -----------------------------------------------------------------------------
def _patch_embed_kernel(xp_ref, w_ref, b_ref, pos_ref, o_ref):
    y = jnp.dot(xp_ref[...].astype(jnp.bfloat16), w_ref[...],
                preferred_element_type=jnp.float32)            # (N*L, D)
    o_ref[...] = y + b_ref[...] + pos_ref[...]


def patch_embed(xp_flat, w, b, pos_flat):
    M, K = xp_flat.shape
    D = w.shape[1]
    return pl.pallas_call(
        _patch_embed_kernel,
        out_shape=jax.ShapeDtypeStruct((M, D), jnp.float32),
        grid=(1,),
        in_specs=[
            pl.BlockSpec((M, K), lambda i: (0, 0)),
            pl.BlockSpec((K, D), lambda i: (0, 0)),
            pl.BlockSpec((1, D), lambda i: (0, 0)),
            pl.BlockSpec((M, D), lambda i: (0, 0)),
        ],
        out_specs=pl.BlockSpec((M, D), lambda i: (0, 0)),
        compiler_params=pltpu.CompilerParams(dimension_semantics=("arbitrary",)),
    )(xp_flat, w, b, pos_flat)


# -----------------------------------------------------------------------------
# Kernel 2: fused transformer stack
#   grid = (batch,) "parallel"; static in-kernel loop over `depth` layers with
#   all stacked weights VMEM-resident (constant index maps, full-array blocks).
#   Fuses: pos add, `depth` transformer blocks, padded-key softmax masking,
#          final LayerNorm + final Linear projection.
# -----------------------------------------------------------------------------
_LAYER_PARAM_ORDER = ("ln1_g", "ln1_b", "wqkv", "bqkv", "wproj", "bproj",
                      "ln2_g", "ln2_b", "wfc1", "bfc1", "wfc2", "bfc2")


def _stack_kernel(x_ref, pos_ref, bias_ref,
                  ln1_g, ln1_b, wqkv, bqkv, wproj, bproj,
                  ln2_g, ln2_b, wfc1, bfc1, wfc2, bfc2,
                  fin_g, fin_b, w_out, b_out,
                  o_ref, *, num_heads, depth, eps):
    f32 = jnp.float32
    bf16 = jnp.bfloat16

    x = x_ref[0] + pos_ref[0]                       # (S, D) f32
    bias = bias_ref[...]                            # (1, S): 0 valid / -1e30 pad
    S, D = x.shape
    hd = D // num_heads
    scale = float(hd) ** -0.5

    for l in range(depth):                          # static unroll, weights resident
        # ---- multi-head self attention (single fused QKV projection) ----
        xn = _layernorm(x, ln1_g[l], ln1_b[l], eps)
        qkv = jnp.dot(xn.astype(bf16), wqkv[l],
                      preferred_element_type=f32) + bqkv[l]     # (S, 3D)
        q = qkv[:, 0 * D:1 * D] * scale
        k = qkv[:, 1 * D:2 * D]
        v = qkv[:, 2 * D:3 * D]
        head_outs = []
        for h in range(num_heads):                  # static lane slices of full-width QKV
            qh = q[:, h * hd:(h + 1) * hd].astype(bf16)
            kh = k[:, h * hd:(h + 1) * hd].astype(bf16)
            vh = v[:, h * hd:(h + 1) * hd].astype(bf16)
            s = lax.dot_general(qh, kh, (((1,), (1,)), ((), ())),
                                preferred_element_type=f32)      # (S, S)
            s = s + bias                            # mask padded key columns
            m = jnp.max(s, axis=-1, keepdims=True)
            e = jnp.exp(s - m)
            p = e * pl.reciprocal(jnp.sum(e, axis=-1, keepdims=True), approx=True)
            head_outs.append(jnp.dot(p.astype(bf16), vh,
                                     preferred_element_type=f32))  # (S, hd)
        o_cat = jnp.concatenate(head_outs, axis=-1)                 # (S, D)
        attn = jnp.dot(o_cat.astype(bf16), wproj[l],
                       preferred_element_type=f32) + bproj[l]
        x = x + attn

        # ---- MLP ----
        xn2 = _layernorm(x, ln2_g[l], ln2_b[l], eps)
        h1 = jnp.dot(xn2.astype(bf16), wfc1[l],
                     preferred_element_type=f32) + bfc1[l]
        h1 = _gelu_tanh(h1)
        h2 = jnp.dot(h1.astype(bf16), wfc2[l],
                     preferred_element_type=f32) + bfc2[l]
        x = x + h2

    # ---- fused final LayerNorm + Linear projection ----
    xf = _layernorm(x, fin_g[...], fin_b[...], eps)
    o_ref[0] = jnp.dot(xf.astype(bf16), w_out[...],
                       preferred_element_type=f32) + b_out[...]


def _const_index_map(ndim):
    return lambda b: (0,) * ndim


def transformer_stack(x, pos, key_bias, stacked, fin_g, fin_b, w_out, b_out,
                      *, num_heads, depth, eps=LN_EPS):
    N, S, D = x.shape
    Dout = w_out.shape[1]

    args = [x, pos, key_bias]
    in_specs = [
        pl.BlockSpec((1, S, D), lambda b: (b, 0, 0)),
        pl.BlockSpec((1, S, D), lambda b: (0, 0, 0)),
        pl.BlockSpec((1, S), lambda b: (0, 0)),
    ]
    for name in _LAYER_PARAM_ORDER:
        arr = stacked[name]
        args.append(arr)
        in_specs.append(pl.BlockSpec(arr.shape, _const_index_map(arr.ndim)))
    for arr in (fin_g, fin_b, w_out, b_out):
        args.append(arr)
        in_specs.append(pl.BlockSpec(arr.shape, _const_index_map(arr.ndim)))

    return pl.pallas_call(
        partial(_stack_kernel, num_heads=num_heads, depth=depth, eps=eps),
        out_shape=jax.ShapeDtypeStruct((N, S, Dout), jnp.float32),
        grid=(N,),
        in_specs=in_specs,
        out_specs=pl.BlockSpec((1, S, Dout), lambda b: (b, 0, 0)),
        compiler_params=pltpu.CompilerParams(dimension_semantics=("parallel",)),
    )(*args)


# -----------------------------------------------------------------------------
# Kernel 3: masked MSE reconstruction loss
# -----------------------------------------------------------------------------
def _loss_kernel(pred_ref, tgt_ref, mask_ref, o_ref):
    diff = pred_ref[...] - tgt_ref[...]
    per_patch = jnp.mean(diff * diff, axis=-1)       # (N, L)
    m = mask_ref[...]
    num = jnp.sum(per_patch * m)
    den = jnp.sum(m)                                 # matches reference: (loss*mask).sum()/mask.sum()
    o_ref[...] = (num / den) * jnp.ones((1, 1), jnp.float32)


def masked_mse_loss(pred, target, mask):
    N, L, P = pred.shape
    # TODO(synk): could be fused into the decoder stack's last step / emitted
    # via SMEM; kept as a tiny separate call for clarity.
    out = pl.pallas_call(
        _loss_kernel,
        out_shape=jax.ShapeDtypeStruct((1, 1), jnp.float32),
        grid=(1,),
        in_specs=[
            pl.BlockSpec((N, L, P), lambda i: (0, 0, 0)),
            pl.BlockSpec((N, L, P), lambda i: (0, 0, 0)),
            pl.BlockSpec((N, L), lambda i: (0, 0)),
        ],
        out_specs=pl.BlockSpec((1, 1), lambda i: (0, 0)),
        compiler_params=pltpu.CompilerParams(dimension_semantics=("arbitrary",)),
    )(pred, target, mask)
    return out[0, 0]


# -----------------------------------------------------------------------------
# Parameters (deterministic synthetic init mirroring the module's __init__)
# -----------------------------------------------------------------------------
def xavier_uniform(key, shape):
    fan_in, fan_out = shape
    bound = float(np.sqrt(6.0 / (fan_in + fan_out)))
    return jax.random.uniform(key, shape, jnp.float32, -bound, bound)


def init_stack_params(key, depth, dim, mlp_hidden):
    f32, bf16 = jnp.float32, jnp.bfloat16
    layers = []
    for k in jax.random.split(key, depth):
        ks = jax.random.split(k, 4)
        layers.append(dict(
            ln1_g=jnp.ones((1, dim), f32), ln1_b=jnp.zeros((1, dim), f32),
            wqkv=xavier_uniform(ks[0], (dim, 3 * dim)).astype(bf16),
            bqkv=jnp.zeros((1, 3 * dim), f32),
            wproj=xavier_uniform(ks[1], (dim, dim)).astype(bf16),
            bproj=jnp.zeros((1, dim), f32),
            ln2_g=jnp.ones((1, dim), f32), ln2_b=jnp.zeros((1, dim), f32),
            wfc1=xavier_uniform(ks[2], (dim, mlp_hidden)).astype(bf16),
            bfc1=jnp.zeros((1, mlp_hidden), f32),
            wfc2=xavier_uniform(ks[3], (mlp_hidden, dim)).astype(bf16),
            bfc2=jnp.zeros((1, dim), f32),
        ))
    # stack along a leading layer axis; the kernel indexes it statically per layer
    return {k: jnp.stack([lyr[k] for lyr in layers], axis=0) for k in layers[0]}


def init_params(key):
    f32, bf16 = jnp.float32, jnp.bfloat16
    keys = jax.random.split(key, 8)
    grid_size = IMG // PATCH
    p = {}
    p["pe_w"] = xavier_uniform(keys[0], (IN_CHANS * PATCH * PATCH, EMBED)).astype(bf16)
    p["pe_b"] = jnp.zeros((1, EMBED), f32)
    p["cls_token"] = 0.02 * jax.random.normal(keys[1], (1, 1, EMBED), f32)
    p["pos_embed"] = jnp.asarray(get_2d_sincos_pos_embed(EMBED, grid_size, True))[None]
    p["enc"] = init_stack_params(keys[2], DEPTH, EMBED, int(EMBED * MLP_RATIO))
    p["norm_g"] = jnp.ones((1, EMBED), f32)
    p["norm_b"] = jnp.zeros((1, EMBED), f32)
    p["dec_embed_w"] = xavier_uniform(keys[3], (EMBED, DEC_EMBED)).astype(bf16)
    p["dec_embed_b"] = jnp.zeros((1, DEC_EMBED), f32)
    p["mask_token"] = 0.02 * jax.random.normal(keys[4], (1, 1, DEC_EMBED), f32)
    p["dec_pos_embed"] = jnp.asarray(get_2d_sincos_pos_embed(DEC_EMBED, grid_size, True))[None]
    p["dec"] = init_stack_params(keys[5], DEC_DEPTH, DEC_EMBED, int(DEC_EMBED * MLP_RATIO))
    p["dec_norm_g"] = jnp.ones((1, DEC_EMBED), f32)
    p["dec_norm_b"] = jnp.zeros((1, DEC_EMBED), f32)
    p["dec_pred_w"] = xavier_uniform(keys[6], (DEC_EMBED, PATCH * PATCH * IN_CHANS)).astype(bf16)
    p["dec_pred_b"] = jnp.zeros((1, PATCH * PATCH * IN_CHANS), f32)
    return p


# -----------------------------------------------------------------------------
# Forward pass (MAE: encoder -> decoder -> loss)
# -----------------------------------------------------------------------------
def patchify_target(imgs):
    # (N, 3, H, W) -> (N, L, p*p*3), flatten order (p, q, c) like the reference
    N, C, H, W = imgs.shape
    ph = H // PATCH
    x = imgs.reshape(N, C, ph, PATCH, ph, PATCH)
    x = jnp.transpose(x, (0, 2, 4, 3, 5, 1))
    return x.reshape(N, ph * ph, PATCH * PATCH * C)


def forward(imgs, params, mask_key, mask_ratio=0.75):
    N, C, H, W = imgs.shape
    ph = H // PATCH
    L = ph * ph

    # ---------------- encoder ----------------
    # patch extraction, flatten order (c, i, j) matches Conv2d weight layout
    xp = imgs.reshape(N, C, ph, PATCH, ph, PATCH)
    xp = jnp.transpose(xp, (0, 2, 4, 1, 3, 5)).reshape(N * L, C * PATCH * PATCH)
    pos_patch = jnp.tile(params["pos_embed"][0, 1:, :], (N, 1))          # (N*L, D)
    # fused: patch-embed matmul + bias + pos_embed[:, 1:, :]
    x = patch_embed(xp, params["pe_w"], params["pe_b"], pos_patch).reshape(N, L, EMBED)

    # random masking (argsort of noise; glue, no clean Pallas equivalent)
    # TODO(synk): random masking argsort + gathers stay in plain JAX.
    len_keep = int(L * (1 - mask_ratio))
    noise = jax.random.uniform(mask_key, (N, L), jnp.float32)
    ids_shuffle = jnp.argsort(noise, axis=1)
    ids_restore = jnp.argsort(ids_shuffle, axis=1)
    ids_keep = ids_shuffle[:, :len_keep]
    x_masked = jnp.take_along_axis(
        x, jnp.broadcast_to(ids_keep[:, :, None], (N, len_keep, EMBED)), axis=1)
    mask = jnp.broadcast_to(
        (jnp.arange(L)[None, :] >= len_keep).astype(jnp.float32), (N, L))
    mask = jnp.take_along_axis(mask, ids_restore, axis=1)

    cls = params["cls_token"] + params["pos_embed"][:, :1, :]
    cls = jnp.broadcast_to(cls, (N, 1, EMBED))
    xe = jnp.concatenate([cls, x_masked], axis=1)            # (N, len_keep+1, D)
    S_enc = xe.shape[1]
    S_enc_pad = _round_up(S_enc, 8)

    # pad tokens to 8-sublane granule; pad keys masked out of softmax
    xe_p = _pad_seq(xe, S_enc_pad)
    enc_bias = _key_bias(S_enc, S_enc_pad)
    enc_pos = jnp.zeros((1, S_enc_pad, EMBED), jnp.float32)  # encoder pos already added

    # fused: DEPTH encoder blocks -> final norm -> decoder_embed linear
    xd_full = transformer_stack(xe_p, enc_pos, enc_bias, params["enc"],
                                params["norm_g"], params["norm_b"],
                                params["dec_embed_w"], params["dec_embed_b"],
                                num_heads=NUM_HEADS, depth=DEPTH)
    xd = xd_full[:, :S_enc, :]        # decoder_embed(norm(encoder(x))), (N, S_enc, Dd)

    # ---------------- decoder ----------------
    n_mask = L + 1 - S_enc
    mask_tokens = jnp.broadcast_to(params["mask_token"], (N, n_mask, DEC_EMBED))
    x_ = jnp.concatenate([xd[:, 1:, :], mask_tokens], axis=1)            # (N, L, Dd)
    x_ = jnp.take_along_axis(
        x_, jnp.broadcast_to(ids_restore[:, :, None], (N, L, DEC_EMBED)), axis=1)
    xdec = jnp.concatenate([xd[:, :1, :], x_], axis=1)                   # (N, L+1, Dd)

    S_dec = L + 1
    S_dec_pad = _round_up(S_dec, 8)
    xdec_p = _pad_seq(xdec, S_dec_pad)
    dec_bias = _key_bias(S_dec, S_dec_pad)
    dec_pos = _pad_seq(params["dec_pos_embed"], S_dec_pad)               # (1, S_dec_pad, Dd)

    # fused: +decoder_pos_embed -> DEC_DEPTH blocks -> decoder_norm -> decoder_pred
    pred_full = transformer_stack(xdec_p, dec_pos, dec_bias, params["dec"],
                                  params["dec_norm_g"], params["dec_norm_b"],
                                  params["dec_pred_w"], params["dec_pred_b"],
                                  num_heads=DEC_NUM_HEADS, depth=DEC_DEPTH)
    pred = pred_full[:, 1:S_dec, :]                                      # (N, L, p*p*3)

    # ---------------- loss ----------------
    target = patchify_target(imgs)
    # norm_pix_loss defaults to False in the module; that branch is implemented.
    loss = masked_mse_loss(pred, target, mask)
    return loss, pred, mask


# -----------------------------------------------------------------------------
if __name__ == "__main__":
    key = jax.random.PRNGKey(0)
    k_param, k_img, k_mask = jax.random.split(key, 3)

    params = init_params(k_param)
    imgs = jax.random.normal(k_img, (BATCH, IN_CHANS, IMG, IMG), jnp.float32)

    fwd = jax.jit(forward)            # glue ops fuse into one XLA program
    loss, pred, mask = fwd(imgs, params, k_mask)
    jax.block_until_ready((loss, pred, mask))

    assert pred.shape == (BATCH, (IMG // PATCH) ** 2, PATCH * PATCH * IN_CHANS)
    assert mask.shape == (BATCH, (IMG // PATCH) ** 2)
    assert loss.shape == ()
    assert bool(jnp.isfinite(loss))
    print("KERNEL_OK")
</pallas_src>

<mosaic_0001>
module attributes {stable_mosaic.version = 11 : i64} {
  func.func @_patch_embed_kernel(%arg0: i32, %arg1: memref<32x48xf32, #tpu.memory_space<vmem>>, %arg2: memref<48x32xbf16, #tpu.memory_space<vmem>>, %arg3: memref<1x32xf32, #tpu.memory_space<vmem>>, %arg4: memref<32x32xf32, #tpu.memory_space<vmem>>, %arg5: memref<32x32xf32, #tpu.memory_space<vmem>>) attributes {dimension_semantics = [#tpu.dimension_semantics<arbitrary>], iteration_bounds = array<i64: 1>, scalar_prefetch = 0 : i64, scratch_operands = 0 : i64, tpu.core_type = #tpu.core_type<tc>, window_params = [{pipeline_mode = #tpu.pipeline_mode<synchronous>, transform_indices = @transform_0, window_bounds = array<i64: 32, 48>}, {pipeline_mode = #tpu.pipeline_mode<synchronous>, transform_indices = @transform_1, window_bounds = array<i64: 48, 32>}, {pipeline_mode = #tpu.pipeline_mode<synchronous>, transform_indices = @transform_2, window_bounds = array<i64: 1, 32>}, {pipeline_mode = #tpu.pipeline_mode<synchronous>, transform_indices = @transform_3, window_bounds = array<i64: 32, 32>}, {pipeline_mode = #tpu.pipeline_mode<synchronous>, transform_indices = @transform_4, window_bounds = array<i64: 32, 32>}]} {
    %c0 = arith.constant 0 : index
    %c0_0 = arith.constant 0 : index
    %0 = vector.load %arg1[%c0, %c0_0] : memref<32x48xf32, #tpu.memory_space<vmem>>, vector<32x48xf32>
    %1 = arith.truncf %0 : vector<32x48xf32> to vector<32x48xbf16>
    %c0_1 = arith.constant 0 : index
    %c0_2 = arith.constant 0 : index
    %2 = vector.load %arg2[%c0_1, %c0_2] : memref<48x32xbf16, #tpu.memory_space<vmem>>, vector<48x32xbf16>
    %cst = arith.constant dense<0.000000e+00> : vector<32x32xf32>
    %3 = tpu.matmul %1, %2, %cst {dimension_numbers = #tpu.dot_dimension_numbers<[1], [0], [0], [1], [0, 0, 1, 1], [], []>} : vector<32x48xbf16>, vector<48x32xbf16>, vector<32x32xf32> -> vector<32x32xf32>
    %c0_3 = arith.constant 0 : index
    %c0_4 = arith.constant 0 : index
    %4 = vector.load %arg3[%c0_3, %c0_4] : memref<1x32xf32, #tpu.memory_space<vmem>>, vector<1x32xf32>
    %5 = vector.broadcast %4 : vector<1x32xf32> to vector<32x32xf32>
    %6 = arith.addf %3, %5 : vector<32x32xf32>
    %c0_5 = arith.constant 0 : index
    %c0_6 = arith.constant 0 : index
    %7 = vector.load %arg4[%c0_5, %c0_6] : memref<32x32xf32, #tpu.memory_space<vmem>>, vector<32x32xf32>
    %8 = arith.addf %6, %7 : vector<32x32xf32>
    %c0_7 = arith.constant 0 : index
    %c0_8 = arith.constant 0 : index
    %9 = vector.load %arg5[%c0_7, %c0_8] : memref<32x32xf32, #tpu.memory_space<vmem>>, vector<32x32xf32>
    tpu.vector_store %arg5[%c0_7, %c0_8], %8 {strides = array<i32>} : memref<32x32xf32, #tpu.memory_space<vmem>>, vector<32x32xf32>,
    return
  }
  func.func @transform_0(%arg0: i32) -> (i32, i32) {
    %c0_i32 = arith.constant 0 : i32
    %c0_i32_0 = arith.constant 0 : i32
    %c0_i32_1 = arith.constant 0 : i32
    return %c0_i32, %c0_i32_0 : i32, i32
  }
  func.func @transform_1(%arg0: i32) -> (i32, i32) {
    %c0_i32 = arith.constant 0 : i32
    %c0_i32_0 = arith.constant 0 : i32
    %c0_i32_1 = arith.constant 0 : i32
    return %c0_i32, %c0_i32_0 : i32, i32
  }
  func.func @transform_2(%arg0: i32) -> (i32, i32) {
    %c0_i32 = arith.constant 0 : i32
    %c0_i32_0 = arith.constant 0 : i32
    %c0_i32_1 = arith.constant 0 : i32
    return %c0_i32, %c0_i32_0 : i32, i32
  }
  func.func @transform_3(%arg0: i32) -> (i32, i32) {
    %c0_i32 = arith.constant 0 : i32
    %c0_i32_0 = arith.constant 0 : i32
    %c0_i32_1 = arith.constant 0 : i32
    return %c0_i32, %c0_i32_0 : i32, i32
  }
  func.func @transform_4(%arg0: i32) -> (i32, i32) {
    %c0_i32 = arith.constant 0 : i32
    %c0_i32_0 = arith.constant 0 : i32
    %c0_i32_1 = arith.constant 0 : i32
    return %c0_i32, %c0_i32_0 : i32, i32
  }
}

module attributes {stable_mosaic.version = 11 : i64} {
  func.func @_stack_kernel(%arg0: i32, %arg1: memref<1x8x32xf32, #tpu.memory_space<vmem>>, %arg2: memref<1x8x32xf32, #tpu.memory_space<vmem>>, %arg3: memref<1x8xf32, #tpu.memory_space<vmem>>, %arg4: memref<2x1x32xf32, #tpu.memory_space<vmem>>, %arg5: memref<2x1x32xf32, #tpu.memory_space<vmem>>, %arg6: memref<2x32x96xbf16, #tpu.memory_space<vmem>>, %arg7: memref<2x1x96xf32, #tpu.memory_space<vmem>>, %arg8: memref<2x32x32xbf16, #tpu.memory_space<vmem>>, %arg9: memref<2x1x32xf32, #tpu.memory_space<vmem>>, %arg10: memref<2x1x32xf32, #tpu.memory_space<vmem>>, %arg11: memref<2x1x32xf32, #tpu.memory_space<vmem>>, %arg12: memref<2x32x128xbf16, #tpu.memory_space<vmem>>, %arg13: memref<2x1x128xf32, #tpu.memory_space<vmem>>, %arg14: memref<2x128x32xbf16, #tpu.memory_space<vmem>>, %arg15: memref<2x1x32xf32, #tpu.memory_space<vmem>>, %arg16: memref<1x32xf32, #tpu.memory_space<vmem>>, %arg17: memref<1x32xf32, #tpu.memory_space<vmem>>, %arg18: memref<32x32xbf16, #tpu.memory_space<vmem>>, %arg19: memref<1x32xf32, #tpu.memory_space<vmem>>, %arg20: memref<1x8x32xf32, #tpu.memory_space<vmem>>) attributes {dimension_semantics = [#tpu.dimension_semantics<parallel>], iteration_bounds = array<i64: 2>, scalar_prefetch = 0 : i64, scratch_operands = 0 : i64, tpu.core_type = #tpu.core_type<tc>, window_params = [{transform_indices = @transform_0, window_bounds = array<i64: 1, 8, 32>}, {pipeline_mode = #tpu.pipeline_mode<synchronous>, transform_indices = @transform_1, window_bounds = array<i64: 1, 8, 32>}, {pipeline_mode = #tpu.pipeline_mode<synchronous>, transform_indices = @transform_2, window_bounds = array<i64: 1, 8>}, {pipeline_mode = #tpu.pipeline_mode<synchronous>, transform_indices = @transform_3, window_bounds = array<i64: 2, 1, 32>}, {pipeline_mode = #tpu.pipeline_mode<synchronous>, transform_indices = @transform_4, window_bounds = array<i64: 2, 1, 32>}, {pipeline_mode = #tpu.pipeline_mode<synchronous>, transform_indices = @transform_5, window_bounds = array<i64: 2, 32, 96>}, {pipeline_mode = #tpu.pipeline_mode<synchronous>, transform_indices = @transform_6, window_bounds = array<i64: 2, 1, 96>}, {pipeline_mode = #tpu.pipeline_mode<synchronous>, transform_indices = @transform_7, window_bounds = array<i64: 2, 32, 32>}, {pipeline_mode = #tpu.pipeline_mode<synchronous>, transform_indices = @transform_8, window_bounds = array<i64: 2, 1, 32>}, {pipeline_mode = #tpu.pipeline_mode<synchronous>, transform_indices = @transform_9, window_bounds = array<i64: 2, 1, 32>}, {pipeline_mode = #tpu.pipeline_mode<synchronous>, transform_indices = @transform_10, window_bounds = array<i64: 2, 1, 32>}, {pipeline_mode = #tpu.pipeline_mode<synchronous>, transform_indices = @transform_11, window_bounds = array<i64: 2, 32, 128>}, {pipeline_mode = #tpu.pipeline_mode<synchronous>, transform_indices = @transform_12, window_bounds = array<i64: 2, 1, 128>}, {pipeline_mode = #tpu.pipeline_mode<synchronous>, transform_indices = @transform_13, window_bounds = array<i64: 2, 128, 32>}, {pipeline_mode = #tpu.pipeline_mode<synchronous>, transform_indices = @transform_14, window_bounds = array<i64: 2, 1, 32>}, {pipeline_mode = #tpu.pipeline_mode<synchronous>, transform_indices = @transform_15, window_bounds = array<i64: 1, 32>}, {pipeline_mode = #tpu.pipeline_mode<synchronous>, transform_indices = @transform_16, window_bounds = array<i64: 1, 32>}, {pipeline_mode = #tpu.pipeline_mode<synchronous>, transform_indices = @transform_17, window_bounds = array<i64: 32, 32>}, {pipeline_mode = #tpu.pipeline_mode<synchronous>, transform_indices = @transform_18, window_bounds = array<i64: 1, 32>}, {transform_indices = @transform_19, window_bounds = array<i64: 1, 8, 32>}]} {
    %c0 = arith.constant 0 : index
    %c0_0 = arith.constant 0 : index
    %c0_1 = arith.constant 0 : index
    %0 = vector.load %arg1[%c0, %c0_0, %c0_1] : memref<1x8x32xf32, #tpu.memory_space<vmem>>, vector<1x8x32xf32>
    %1 = vector.shape_cast %0 : vector<1x8x32xf32> to vector<8x32xf32>
    %c0_2 = arith.constant 0 : index
    %c0_3 = arith.constant 0 : index
    %c0_4 = arith.constant 0 : index
    %2 = vector.load %arg2[%c0_2, %c0_3, %c0_4] : memref<1x8x32xf32, #tpu.memory_space<vmem>>, vector<1x8x32xf32>
    %3 = vector.shape_cast %2 : vector<1x8x32xf32> to vector<8x32xf32>
    %4 = arith.addf %1, %3 : vector<8x32xf32>
    %c0_5 = arith.constant 0 : index
    %c0_6 = arith.constant 0 : index
    %5 = vector.load %arg3[%c0_5, %c0_6] : memref<1x8xf32, #tpu.memory_space<vmem>>, vector<1x8xf32>
    %c0_7 = arith.constant 0 : index
    %c0_8 = arith.constant 0 : index
    %c0_9 = arith.constant 0 : index
    %6 = vector.load %arg4[%c0_7, %c0_8, %c0_9] : memref<2x1x32xf32, #tpu.memory_space<vmem>>, vector<1x1x32xf32>
    %7 = vector.shape_cast %6 : vector<1x1x32xf32> to vector<1x32xf32>
    %c0_10 = arith.constant 0 : index
    %c0_11 = arith.constant 0 : index
    %c0_12 = arith.constant 0 : index
    %8 = vector.load %arg5[%c0_10, %c0_11, %c0_12] : memref<2x1x32xf32, #tpu.memory_space<vmem>>, vector<1x1x32xf32>
    %9 = vector.shape_cast %8 : vector<1x1x32xf32> to vector<1x32xf32>
    %cst = arith.constant dense<0.000000e+00> : vector<8xf32>
    %10 = vector.multi_reduction <add>, %4, %cst [1] : vector<8x32xf32> to vector<8xf32>
    %11 = vector.shape_cast %10 : vector<8xf32> to vector<8x1xf32>
    %cst_13 = arith.constant 3.200000e+01 : f32
    %12 = vector.broadcast %cst_13 : f32 to vector<8x1xf32>
    %13 = arith.divf %11, %12 : vector<8x1xf32>
    %14 = vector.broadcast %13 : vector<8x1xf32> to vector<8x32xf32>
    %15 = arith.subf %4, %14 : vector<8x32xf32>
    %16 = arith.mulf %15, %15 : vector<8x32xf32>
    %cst_14 = arith.constant dense<0.000000e+00> : vector<8xf32>
    %17 = vector.multi_reduction <add>, %16, %cst_14 [1] : vector<8x32xf32> to vector<8xf32>
    %18 = vector.shape_cast %17 : vector<8xf32> to vector<8x1xf32>
    %cst_15 = arith.constant 3.200000e+01 : f32
    %19 = vector.broadcast %cst_15 : f32 to vector<8x1xf32>
    %20 = arith.divf %18, %19 : vector<8x1xf32>
    %cst_16 = arith.constant 9.99999974E-6 : f32
    %21 = vector.broadcast %cst_16 : f32 to vector<8x1xf32>
    %22 = arith.addf %20, %21 : vector<8x1xf32>
    %23 = math.rsqrt %22 : vector<8x1xf32>
    %24 = vector.broadcast %23 : vector<8x1xf32> to vector<8x32xf32>
    %25 = arith.mulf %15, %24 : vector<8x32xf32>
    %26 = vector.broadcast %7 : vector<1x32xf32> to vector<8x32xf32>
    %27 = arith.mulf %25, %26 : vector<8x32xf32>
    %28 = vector.broadcast %9 : vector<1x32xf32> to vector<8x32xf32>
    %29 = arith.addf %27, %28 : vector<8x32xf32>
    %30 = arith.truncf %29 : vector<8x32xf32> to vector<8x32xbf16>
    %c0_17 = arith.constant 0 : index
    %c0_18 = arith.constant 0 : index
    %c0_19 = arith.constant 0 : index
    %31 = vector.load %arg6[%c0_17, %c0_18, %c0_19] : memref<2x32x96xbf16, #tpu.memory_space<vmem>>, vector<1x32x96xbf16>
    %32 = vector.shape_cast %31 : vector<1x32x96xbf16> to vector<32x96xbf16>
    %cst_20 = arith.constant dense<0.000000e+00> : vector<8x96xf32>
    %33 = tpu.matmul %30, %32, %cst_20 {dimension_numbers = #tpu.dot_dimension_numbers<[1], [0], [0], [1], [0, 0, 1, 1], [], []>} : vector<8x32xbf16>, vector<32x96xbf16>, vector<8x96xf32> -> vector<8x96xf32>
    %c0_21 = arith.constant 0 : index
    %c0_22 = arith.constant 0 : index
    %c0_23 = arith.constant 0 : index
    %34 = vector.load %arg7[%c0_21, %c0_22, %c0_23] : memref<2x1x96xf32, #tpu.memory_space<vmem>>, vector<1x1x96xf32>
    %35 = vector.shape_cast %34 : vector<1x1x96xf32> to vector<1x96xf32>
    %36 = vector.broadcast %35 : vector<1x96xf32> to vector<8x96xf32>
    %37 = arith.addf %33, %36 : vector<8x96xf32>
    %38 = vector.extract_strided_slice %37 {offsets = [0, 0], sizes = [8, 32], strides = [1, 1]} : vector<8x96xf32> to vector<8x32xf32>
    %cst_24 = arith.constant 0.353553385 : f32
    %39 = vector.broadcast %cst_24 : f32 to vector<8x32xf32>
    %40 = arith.mulf %38, %39 : vector<8x32xf32>
    %41 = vector.extract_strided_slice %37 {offsets = [0, 32], sizes = [8, 32], strides = [1, 1]} : vector<8x96xf32> to vector<8x32xf32>
    %42 = vector.extract_strided_slice %37 {offsets = [0, 64], sizes = [8, 32], strides = [1, 1]} : vector<8x96xf32> to vector<8x32xf32>
    %43 = vector.extract_strided_slice %40 {offsets = [0, 0], sizes = [8, 8], strides = [1, 1]} : vector<8x32xf32> to vector<8x8xf32>
    %44 = arith.truncf %43 : vector<8x8xf32> to vector<8x8xbf16>
    %45 = vector.extract_strided_slice %41 {offsets = [0, 0], sizes = [8, 8], strides = [1, 1]} : vector<8x32xf32> to vector<8x8xf32>
    %46 = arith.truncf %45 : vector<8x8xf32> to vector<8x8xbf16>
    %47 = vector.extract_strided_slice %42 {offsets = [0, 0], sizes = [8, 8], strides = [1, 1]} : vector<8x32xf32> to vector<8x8xf32>
    %48 = arith.truncf %47 : vector<8x8xf32> to vector<8x8xbf16>
    %cst_25 = arith.constant dense<0.000000e+00> : vector<8x8xf32>
    %49 = tpu.matmul %44, %46, %cst_25 {dimension_numbers = #tpu.dot_dimension_numbers<[1], [1], [0], [0], [0, 0, 1, 0], [], []>} : vector<8x8xbf16>, vector<8x8xbf16>, vector<8x8xf32> -> vector<8x8xf32>
    %50 = vector.broadcast %5 : vector<1x8xf32> to vector<8x8xf32>
    %51 = arith.addf %49, %50 : vector<8x8xf32>
    %cst_26 = arith.constant dense<0xFF800000> : vector<8xf32>
    %52 = vector.multi_reduction <maximumf>, %51, %cst_26 [1] : vector<8x8xf32> to vector<8xf32>
    %53 = vector.shape_cast %52 : vector<8xf32> to vector<8x1xf32>
    %54 = vector.broadcast %53 : vector<8x1xf32> to vector<8x8xf32>
    %55 = arith.subf %51, %54 : vector<8x8xf32>
    %56 = math.exp %55 : vector<8x8xf32>
    %cst_27 = arith.constant dense<0.000000e+00> : vector<8xf32>
    %57 = vector.multi_reduction <add>, %56, %cst_27 [1] : vector<8x8xf32> to vector<8xf32>
    %58 = vector.shape_cast %57 : vector<8xf32> to vector<8x1xf32>
    %59 = tpu.reciprocal %58 {approx = true} : vector<8x1xf32> -> vector<8x1xf32>
    %60 = vector.broadcast %59 : vector<8x1xf32> to vector<8x8xf32>
    %61 = arith.mulf %56, %60 : vector<8x8xf32>
    %62 = arith.truncf %61 : vector<8x8xf32> to vector<8x8xbf16>
    %cst_28 = arith.constant dense<0.000000e+00> : vector<8x8xf32>
    %63 = tpu.matmul %62, %48, %cst_28 {dimension_numbers = #tpu.dot_dimension_numbers<[1], [0], [0], [1], [0, 0, 1, 1], [], []>} : vector<8x8xbf16>, vector<8x8xbf16>, vector<8x8xf32> -> vector<8x8xf32>
    %64 = vector.extract_strided_slice %40 {offsets = [0, 8], sizes = [8, 8], strides = [1, 1]} : vector<8x32xf32> to vector<8x8xf32>
    %65 = arith.truncf %64 : vector<8x8xf32> to vector<8x8xbf16>
    %66 = vector.extract_strided_slice %41 {offsets = [0, 8], sizes = [8, 8], strides = [1, 1]} : vector<8x32xf32> to vector<8x8xf32>
    %67 = arith.truncf %66 : vector<8x8xf32> to vector<8x8xbf16>
    %68 = vector.extract_strided_slice %42 {offsets = [0, 8], sizes = [8, 8], strides = [1, 1]} : vector<8x32xf32> to vector<8x8xf32>
    %69 = arith.truncf %68 : vector<8x8xf32> to vector<8x8xbf16>
    %cst_29 = arith.constant dense<0.000000e+00> : vector<8x8xf32>
    %70 = tpu.matmul %65, %67, %cst_29 {dimension_numbers = #tpu.dot_dimension_numbers<[1], [1], [0], [0], [0, 0, 1, 0], [], []>} : vector<8x8xbf16>, vector<8x8xbf16>, vector<8x8xf32> -> vector<8x8xf32>
    %71 = vector.broadcast %5 : vector<1x8xf32> to vector<8x8xf32>
    %72 = arith.addf %70, %71 : vector<8x8xf32>
    %cst_30 = arith.constant dense<0xFF800000> : vector<8xf32>
    %73 = vector.multi_reduction <maximumf>, %72, %cst_30 [1] : vector<8x8xf32> to vector<8xf32>
    %74 = vector.shape_cast %73 : vector<8xf32> to vector<8x1xf32>
    %75 = vector.broadcast %74 : vector<8x1xf32> to vector<8x8xf32>
    %76 = arith.subf %72, %75 : vector<8x8xf32>
    %77 = math.exp %76 : vector<8x8xf32>
    %cst_31 = arith.constant dense<0.000000e+00> : vector<8xf32>
    %78 = vector.multi_reduction <add>, %77, %cst_31 [1] : vector<8x8xf32> to vector<8xf32>
    %79 = vector.shape_cast %78 : vector<8xf32> to vector<8x1xf32>
    %80 = tpu.reciprocal %79 {approx = true} : vector<8x1xf32> -> vector<8x1xf32>
    %81 = vector.broadcast %80 : vector<8x1xf32> to vector<8x8xf32>
    %82 = arith.mulf %77, %81 : vector<8x8xf32>
    %83 = arith.truncf %82 : vector<8x8xf32> to vector<8x8xbf16>
    %cst_32 = arith.constant dense<0.000000e+00> : vector<8x8xf32>
    %84 = tpu.matmul %83, %69, %cst_32 {dimension_numbers = #tpu.dot_dimension_numbers<[1], [0], [0], [1], [0, 0, 1, 1], [], []>} : vector<8x8xbf16>, vector<8x8xbf16>, vector<8x8xf32> -> vector<8x8xf32>
    %85 = vector.extract_strided_slice %40 {offsets = [0, 16], sizes = [8, 8], strides = [1, 1]} : vector<8x32xf32> to vector<8x8xf32>
    %86 = arith.truncf %85 : vector<8x8xf32> to vector<8x8xbf16>
    %87 = vector.extract_strided_slice %41 {offsets = [0, 16], sizes = [8, 8], strides = [1, 1]} : vector<8x32xf32> to vector<8x8xf32>
    %88 = arith.truncf %87 : vector<8x8xf32> to vector<8x8xbf16>
    %89 = vector.extract_strided_slice %42 {offsets = [0, 16], sizes = [8, 8], strides = [1, 1]} : vector<8x32xf32> to vector<8x8xf32>
    %90 = arith.truncf %89 : vector<8x8xf32> to vector<8x8xbf16>
    %cst_33 = arith.constant dense<0.000000e+00> : vector<8x8xf32>
    %91 = tpu.matmul %86, %88, %cst_33 {dimension_numbers = #tpu.dot_dimension_numbers<[1], [1], [0], [0], [0, 0, 1, 0], [], []>} : vector<8x8xbf16>, vector<8x8xbf16>, vector<8x8xf32> -> vector<8x8xf32>
    %92 = vector.broadcast %5 : vector<1x8xf32> to vector<8x8xf32>
    %93 = arith.addf %91, %92 : vector<8x8xf32>
    %cst_34 = arith.constant dense<0xFF800000> : vector<8xf32>
    %94 = vector.multi_reduction <maximumf>, %93, %cst_34 [1] : vector<8x8xf32> to vector<8xf32>
    %95 = vector.shape_cast %94 : vector<8xf32> to vector<8x1xf32>
    %96 = vector.broadcast %95 : vector<8x1xf32> to vector<8x8xf32>
    %97 = arith.subf %93, %96 : vector<8x8xf32>
    %98 = math.exp %97 : vector<8x8xf32>
    %cst_35 = arith.constant dense<0.000000e+00> : vector<8xf32>
    %99 = vector.multi_reduction <add>, %98, %cst_35 [1] : vector<8x8xf32> to vector<8xf32>
    %100 = vector.shape_cast %99 : vector<8xf32> to vector<8x1xf32>
    %101 = tpu.reciprocal %100 {approx = true} : vector<8x1xf32> -> vector<8x1xf32>
    %102 = vector.broadcast %101 : vector<8x1xf32> to vector<8x8xf32>
    %103 = arith.mulf %98, %102 : vector<8x8xf32>
    %104 = arith.truncf %103 : vector<8x8xf32> to vector<8x8xbf16>
    %cst_36 = arith.constant dense<0.000000e+00> : vector<8x8xf32>
    %105 = tpu.matmul %104, %90, %cst_36 {dimension_numbers = #tpu.dot_dimension_numbers<[1], [0], [0], [1], [0, 0, 1, 1], [], []>} : vector<8x8xbf16>, vector<8x8xbf16>, vector<8x8xf32> -> vector<8x8xf32>
    %106 = vector.extract_strided_slice %40 {offsets = [0, 24], sizes = [8, 8], strides = [1, 1]} : vector<8x32xf32> to vector<8x8xf32>
    %107 = arith.truncf %106 : vector<8x8xf32> to vector<8x8xbf16>
    %108 = vector.extract_strided_slice %41 {offsets = [0, 24], sizes = [8, 8], strides = [1, 1]} : vector<8x32xf32> to vector<8x8xf32>
    %109 = arith.truncf %108 : vector<8x8xf32> to vector<8x8xbf16>
    %110 = vector.extract_strided_slice %42 {offsets = [0, 24], sizes = [8, 8], strides = [1, 1]} : vector<8x32xf32> to vector<8x8xf32>
    %111 = arith.truncf %110 : vector<8x8xf32> to vector<8x8xbf16>
    %cst_37 = arith.constant dense<0.000000e+00> : vector<8x8xf32>
    %112 = tpu.matmul %107, %109, %cst_37 {dimension_numbers = #tpu.dot_dimension_numbers<[1], [1], [0], [0], [0, 0, 1, 0], [], []>} : vector<8x8xbf16>, vector<8x8xbf16>, vector<8x8xf32> -> vector<8x8xf32>
    %113 = vector.broadcast %5 : vector<1x8xf32> to vector<8x8xf32>
    %114 = arith.addf %112, %113 : vector<8x8xf32>
    %cst_38 = arith.constant dense<0xFF800000> : vector<8xf32>
    %115 = vector.multi_reduction <maximumf>, %114, %cst_38 [1] : vector<8x8xf32> to vector<8xf32>
    %116 = vector.shape_cast %115 : vector<8xf32> to vector<8x1xf32>
    %117 = vector.broadcast %116 : vector<8x1xf32> to vector<8x8xf32>
    %118 = arith.subf %114, %117 : vector<8x8xf32>
    %119 = math.exp %118 : vector<8x8xf32>
    %cst_39 = arith.constant dense<0.000000e+00> : vector<8xf32>
    %120 = vector.multi_reduction <add>, %119, %cst_39 [1] : vector<8x8xf32> to vector<8xf32>
    %121 = vector.shape_cast %120 : vector<8xf32> to vector<8x1xf32>
    %122 = tpu.reciprocal %121 {approx = true} : vector<8x1xf32> -> vector<8x1xf32>
    %123 = vector.broadcast %122 : vector<8x1xf32> to vector<8x8xf32>
    %124 = arith.mulf %119, %123 : vector<8x8xf32>
    %125 = arith.truncf %124 : vector<8x8xf32> to vector<8x8xbf16>
    %cst_40 = arith.constant dense<0.000000e+00> : vector<8x8xf32>
    %126 = tpu.matmul %125, %111, %cst_40 {dimension_numbers = #tpu.dot_dimension_numbers<[1], [0], [0], [1], [0, 0, 1, 1], [], []>} : vector<8x8xbf16>, vector<8x8xbf16>, vector<8x8xf32> -> vector<8x8xf32>
    %127 = tpu.concatenate %63, %84, %105, %126 in 1 : vector<8x8xf32>, vector<8x8xf32>, vector<8x8xf32>, vector<8x8xf32> -> vector<8x32xf32>
    %128 = arith.truncf %127 : vector<8x32xf32> to vector<8x32xbf16>
    %c0_41 = arith.constant 0 : index
    %c0_42 = arith.constant 0 : index
    %c0_43 = arith.constant 0 : index
    %129 = vector.load %arg8[%c0_41, %c0_42, %c0_43] : memref<2x32x32xbf16, #tpu.memory_space<vmem>>, vector<1x32x32xbf16>
    %130 = vector.shape_cast %129 : vector<1x32x32xbf16> to vector<32x32xbf16>
    %cst_44 = arith.constant dense<0.000000e+00> : vector<8x32xf32>
    %131 = tpu.matmul %128, %130, %cst_44 {dimension_numbers = #tpu.dot_dimension_numbers<[1], [0], [0], [1], [0, 0, 1, 1], [], []>} : vector<8x32xbf16>, vector<32x32xbf16>, vector<8x32xf32> -> vector<8x32xf32>
    %c0_45 = arith.constant 0 : index
    %c0_46 = arith.constant 0 : index
    %c0_47 = arith.constant 0 : index
    %132 = vector.load %arg9[%c0_45, %c0_46, %c0_47] : memref<2x1x32xf32, #tpu.memory_space<vmem>>, vector<1x1x32xf32>
    %133 = vector.shape_cast %132 : vector<1x1x32xf32> to vector<1x32xf32>
    %134 = vector.broadcast %133 : vector<1x32xf32> to vector<8x32xf32>
    %135 = arith.addf %131, %134 : vector<8x32xf32>
    %136 = arith.addf %4, %135 : vector<8x32xf32>
    %c0_48 = arith.constant 0 : index
    %c0_49 = arith.constant 0 : index
    %c0_50 = arith.constant 0 : index
    %137 = vector.load %arg10[%c0_48, %c0_49, %c0_50] : memref<2x1x32xf32, #tpu.memory_space<vmem>>, vector<1x1x32xf32>
    %138 = vector.shape_cast %137 : vector<1x1x32xf32> to vector<1x32xf32>
    %c0_51 = arith.constant 0 : index
    %c0_52 = arith.constant 0 : index
    %c0_53 = arith.constant 0 : index
    %139 = vector.load %arg11[%c0_51, %c0_52, %c0_53] : memref<2x1x32xf32, #tpu.memory_space<vmem>>, vector<1x1x32xf32>
    %140 = vector.shape_cast %139 : vector<1x1x32xf32> to vector<1x32xf32>
    %cst_54 = arith.constant dense<0.000000e+00> : vector<8xf32>
    %141 = vector.multi_reduction <add>, %136, %cst_54 [1] : vector<8x32xf32> to vector<8xf32>
    %142 = vector.shape_cast %141 : vector<8xf32> to vector<8x1xf32>
    %cst_55 = arith.constant 3.200000e+01 : f32
    %143 = vector.broadcast %cst_55 : f32 to vector<8x1xf32>
    %144 = arith.divf %142, %143 : vector<8x1xf32>
    %145 = vector.broadcast %144 : vector<8x1xf32> to vector<8x32xf32>
    %146 = arith.subf %136, %145 : vector<8x32xf32>
    %147 = arith.mulf %146, %146 : vector<8x32xf32>
    %cst_56 = arith.constant dense<0.000000e+00> : vector<8xf32>
    %148 = vector.multi_reduction <add>, %147, %cst_56 [1] : vector<8x32xf32> to vector<8xf32>
    %149 = vector.shape_cast %148 : vector<8xf32> to vector<8x1xf32>
    %cst_57 = arith.constant 3.200000e+01 : f32
    %150 = vector.broadcast %cst_57 : f32 to vector<8x1xf32>
    %151 = arith.divf %149, %150 : vector<8x1xf32>
    %cst_58 = arith.constant 9.99999974E-6 : f32
    %152 = vector.broadcast %cst_58 : f32 to vector<8x1xf32>
    %153 = arith.addf %151, %152 : vector<8x1xf32>
    %154 = math.rsqrt %153 : vector<8x1xf32>
    %155 = vector.broadcast %154 : vector<8x1xf32> to vector<8x32xf32>
    %156 = arith.mulf %146, %155 : vector<8x32xf32>
    %157 = vector.broadcast %138 : vector<1x32xf32> to vector<8x32xf32>
    %158 = arith.mulf %156, %157 : vector<8x32xf32>
    %159 = vector.broadcast %140 : vector<1x32xf32> to vector<8x32xf32>
    %160 = arith.addf %158, %159 : vector<8x32xf32>
    %161 = arith.truncf %160 : vector<8x32xf32> to vector<8x32xbf16>
    %c0_59 = arith.constant 0 : index
    %c0_60 = arith.constant 0 : index
    %c0_61 = arith.constant 0 : index
    %162 = vector.load %arg12[%c0_59, %c0_60, %c0_61] : memref<2x32x128xbf16, #tpu.memory_space<vmem>>, vector<1x32x128xbf16>
    %163 = vector.shape_cast %162 : vector<1x32x128xbf16> to vector<32x128xbf16>
    %cst_62 = arith.constant dense<0.000000e+00> : vector<8x128xf32>
    %164 = tpu.matmul %161, %163, %cst_62 {dimension_numbers = #tpu.dot_dimension_numbers<[1], [0], [0], [1], [0, 0, 1, 1], [], []>} : vector<8x32xbf16>, vector<32x128xbf16>, vector<8x128xf32> -> vector<8x128xf32>
    %c0_63 = arith.constant 0 : index
    %c0_64 = arith.constant 0 : index
    %c0_65 = arith.constant 0 : index
    %165 = vector.load %arg13[%c0_63, %c0_64, %c0_65] : memref<2x1x128xf32, #tpu.memory_space<vmem>>, vector<1x1x128xf32>
    %166 = vector.shape_cast %165 : vector<1x1x128xf32> to vector<1x128xf32>
    %167 = vector.broadcast %166 : vector<1x128xf32> to vector<8x128xf32>
    %168 = arith.addf %164, %167 : vector<8x128xf32>
    %cst_66 = arith.constant 5.000000e-01 : f32
    %169 = vector.broadcast %cst_66 : f32 to vector<8x128xf32>
    %170 = arith.mulf %169, %168 : vector<8x128xf32>
    %cst_67 = arith.constant 4.471500e-02 : f32
    %171 = vector.broadcast %cst_67 : f32 to vector<8x128xf32>
    %172 = arith.mulf %171, %168 : vector<8x128xf32>
    %173 = arith.mulf %172, %168 : vector<8x128xf32>
    %174 = arith.mulf %173, %168 : vector<8x128xf32>
    %175 = arith.addf %168, %174 : vector<8x128xf32>
    %cst_68 = arith.constant 0.797884583 : f32
    %176 = vector.broadcast %cst_68 : f32 to vector<8x128xf32>
    %177 = arith.mulf %176, %175 : vector<8x128xf32>
    %178 = math.tanh %177 : vector<8x128xf32>
    %cst_69 = arith.constant 1.000000e+00 : f32
    %179 = vector.broadcast %cst_69 : f32 to vector<8x128xf32>
    %180 = arith.addf %179, %178 : vector<8x128xf32>
    %181 = arith.mulf %170, %180 : vector<8x128xf32>
    %182 = arith.truncf %181 : vector<8x128xf32> to vector<8x128xbf16>
    %c0_70 = arith.constant 0 : index
    %c0_71 = arith.constant 0 : index
    %c0_72 = arith.constant 0 : index
    %183 = vector.load %arg14[%c0_70, %c0_71, %c0_72] : memref<2x128x32xbf16, #tpu.memory_space<vmem>>, vector<1x128x32xbf16>
    %184 = vector.shape_cast %183 : vector<1x128x32xbf16> to vector<128x32xbf16>
    %cst_73 = arith.constant dense<0.000000e+00> : vector<8x32xf32>
    %185 = tpu.matmul %182, %184, %cst_73 {dimension_numbers = #tpu.dot_dimension_numbers<[1], [0], [0], [1], [0, 0, 1, 1], [], []>} : vector<8x128xbf16>, vector<128x32xbf16>, vector<8x32xf32> -> vector<8x32xf32>
    %c0_74 = arith.constant 0 : index
    %c0_75 = arith.constant 0 : index
    %c0_76 = arith.constant 0 : index
    %186 = vector.load %arg15[%c0_74, %c0_75, %c0_76] : memref<2x1x32xf32, #tpu.memory_space<vmem>>, vector<1x1x32xf32>
    %187 = vector.shape_cast %186 : vector<1x1x32xf32> to vector<1x32xf32>
    %188 = vector.broadcast %187 : vector<1x32xf32> to vector<8x32xf32>
    %189 = arith.addf %185, %188 : vector<8x32xf32>
    %190 = arith.addf %136, %189 : vector<8x32xf32>
    %c1 = arith.constant 1 : index
    %c0_77 = arith.constant 0 : index
    %c0_78 = arith.constant 0 : index
    %191 = vector.load %arg4[%c1, %c0_77, %c0_78] : memref<2x1x32xf32, #tpu.memory_space<vmem>>, vector<1x1x32xf32>
    %192 = vector.shape_cast %191 : vector<1x1x32xf32> to vector<1x32xf32>
    %c1_79 = arith.constant 1 : index
    %c0_80 = arith.constant 0 : index
    %c0_81 = arith.constant 0 : index
    %193 = vector.load %arg5[%c1_79, %c0_80, %c0_81] : memref<2x1x32xf32, #tpu.memory_space<vmem>>, vector<1x1x32xf32>
    %194 = vector.shape_cast %193 : vector<1x1x32xf32> to vector<1x32xf32>
    %cst_82 = arith.constant dense<0.000000e+00> : vector<8xf32>
    %195 = vector.multi_reduction <add>, %190, %cst_82 [1] : vector<8x32xf32> to vector<8xf32>
    %196 = vector.shape_cast %195 : vector<8xf32> to vector<8x1xf32>
    %cst_83 = arith.constant 3.200000e+01 : f32
    %197 = vector.broadcast %cst_83 : f32 to vector<8x1xf32>
    %198 = arith.divf %196, %197 : vector<8x1xf32>
    %199 = vector.broadcast %198 : vector<8x1xf32> to vector<8x32xf32>
    %200 = arith.subf %190, %199 : vector<8x32xf32>
    %201 = arith.mulf %200, %200 : vector<8x32xf32>
    %cst_84 = arith.constant dense<0.000000e+00> : vector<8xf32>
    %202 = vector.multi_reduction <add>, %201, %cst_84 [1] : vector<8x32xf32> to vector<8xf32>
    %203 = vector.shape_cast %202 : vector<8xf32> to vector<8x1xf32>
    %cst_85 = arith.constant 3.200000e+01 : f32
    %204 = vector.broadcast %cst_85 : f32 to vector<8x1xf32>
    %205 = arith.divf %203, %204 : vector<8x1xf32>
    %cst_86 = arith.constant 9.99999974E-6 : f32
    %206 = vector.broadcast %cst_86 : f32 to vector<8x1xf32>
    %207 = arith.addf %205, %206 : vector<8x1xf32>
    %208 = math.rsqrt %207 : vector<8x1xf32>
    %209 = vector.broadcast %208 : vector<8x1xf32> to vector<8x32xf32>
    %210 = arith.mulf %200, %209 : vector<8x32xf32>
    %211 = vector.broadcast %192 : vector<1x32xf32> to vector<8x32xf32>
    %212 = arith.mulf %210, %211 : vector<8x32xf32>
    %213 = vector.broadcast %194 : vector<1x32xf32> to vector<8x32xf32>
    %214 = arith.addf %212, %213 : vector<8x32xf32>
    %215 = arith.truncf %214 : vector<8x32xf32> to vector<8x32xbf16>
    %c1_87 = arith.constant 1 : index
    %c0_88 = arith.constant 0 : index
    %c0_89 = arith.constant 0 : index
    %216 = vector.load %arg6[%c1_87, %c0_88, %c0_89] : memref<2x32x96xbf16, #tpu.memory_space<vmem>>, vector<1x32x96xbf16>
    %217 = vector.shape_cast %216 : vector<1x32x96xbf16> to vector<32x96xbf16>
    %cst_90 = arith.constant dense<0.000000e+00> : vector<8x96xf32>
    %218 = tpu.matmul %215, %217, %cst_90 {dimension_numbers = #tpu.dot_dimension_numbers<[1], [0], [0], [1], [0, 0, 1, 1], [], []>} : vector<8x32xbf16>, vector<32x96xbf16>, vector<8x96xf32> -> vector<8x96xf32>
    %c1_91 = arith.constant 1 : index
    %c0_92 = arith.constant 0 : index
    %c0_93 = arith.constant 0 : index
    %219 = vector.load %arg7[%c1_91, %c0_92, %c0_93] : memref<2x1x96xf32, #tpu.memory_space<vmem>>, vector<1x1x96xf32>
    %220 = vector.shape_cast %219 : vector<1x1x96xf32> to vector<1x96xf32>
    %221 = vector.broadcast %220 : vector<1x96xf32> to vector<8x96xf32>
    %222 = arith.addf %218, %221 : vector<8x96xf32>
    %223 = vector.extract_strided_slice %222 {offsets = [0, 0], sizes = [8, 32], strides = [1, 1]} : vector<8x96xf32> to vector<8x32xf32>
    %cst_94 = arith.constant 0.353553385 : f32
    %224 = vector.broadcast %cst_94 : f32 to vector<8x32xf32>
    %225 = arith.mulf %223, %224 : vector<8x32xf32>
    %226 = vector.extract_strided_slice %222 {offsets = [0, 32], sizes = [8, 32], strides = [1, 1]} : vector<8x96xf32> to vector<8x32xf32>
    %227 = vector.extract_strided_slice %222 {offsets = [0, 64], sizes = [8, 32], strides = [1, 1]} : vector<8x96xf32> to vector<8x32xf32>
    %228 = vector.extract_strided_slice %225 {offsets = [0, 0], sizes = [8, 8], strides = [1, 1]} : vector<8x32xf32> to vector<8x8xf32>
    %229 = arith.truncf %228 : vector<8x8xf32> to vector<8x8xbf16>
    %230 = vector.extract_strided_slice %226 {offsets = [0, 0], sizes = [8, 8], strides = [1, 1]} : vector<8x32xf32> to vector<8x8xf32>
    %231 = arith.truncf %230 : vector<8x8xf32> to vector<8x8xbf16>
    %232 = vector.extract_strided_slice %227 {offsets = [0, 0], sizes = [8, 8], strides = [1, 1]} : vector<8x32xf32> to vector<8x8xf32>
    %233 = arith.truncf %232 : vector<8x8xf32> to vector<8x8xbf16>
    %cst_95 = arith.constant dense<0.000000e+00> : vector<8x8xf32>
    %234 = tpu.matmul %229, %231, %cst_95 {dimension_numbers = #tpu.dot_dimension_numbers<[1], [1], [0], [0], [0, 0, 1, 0], [], []>} : vector<8x8xbf16>, vector<8x8xbf16>, vector<8x8xf32> -> vector<8x8xf32>
    %235 = vector.broadcast %5 : vector<1x8xf32> to vector<8x8xf32>
    %236 = arith.addf %234, %235 : vector<8x8xf32>
    %cst_96 = arith.constant dense<0xFF800000> : vector<8xf32>
    %237 = vector.multi_reduction <maximumf>, %236, %cst_96 [1] : vector<8x8xf32> to vector<8xf32>
    %238 = vector.shape_cast %237 : vector<8xf32> to vector<8x1xf32>
    %239 = vector.broadcast %238 : vector<8x1xf32> to vector<8x8xf32>
    %240 = arith.subf %236, %239 : vector<8x8xf32>
    %241 = math.exp %240 : vector<8x8xf32>
    %cst_97 = arith.constant dense<0.000000e+00> : vector<8xf32>
    %242 = vector.multi_reduction <add>, %241, %cst_97 [1] : vector<8x8xf32> to vector<8xf32>
    %243 = vector.shape_cast %242 : vector<8xf32> to vector<8x1xf32>
    %244 = tpu.reciprocal %243 {approx = true} : vector<8x1xf32> -> vector<8x1xf32>
    %245 = vector.broadcast %244 : vector<8x1xf32> to vector<8x8xf32>
    %246 = arith.mulf %241, %245 : vector<8x8xf32>
    %247 = arith.truncf %246 : vector<8x8xf32> to vector<8x8xbf16>
    %cst_98 = arith.constant dense<0.000000e+00> : vector<8x8xf32>
    %248 = tpu.matmul %247, %233, %cst_98 {dimension_numbers = #tpu.dot_dimension_numbers<[1], [0], [0], [1], [0, 0, 1, 1], [], []>} : vector<8x8xbf16>, vector<8x8xbf16>, vector<8x8xf32> -> vector<8x8xf32>
    %249 = vector.extract_strided_slice %225 {offsets = [0, 8], sizes = [8, 8], strides = [1, 1]} : vector<8x32xf32> to vector<8x8xf32>
    %250 = arith.truncf %249 : vector<8x8xf32> to vector<8x8xbf16>
    %251 = vector.extract_strided_slice %226 {offsets = [0, 8], sizes = [8, 8], strides = [1, 1]} : vector<8x32xf32> to vector<8x8xf32>
    %252 = arith.truncf %251 : vector<8x8xf32> to vector<8x8xbf16>
    %253 = vector.extract_strided_slice %227 {offsets = [0, 8], sizes = [8, 8], strides = [1, 1]} : vector<8x32xf32> to vector<8x8xf32>
    %254 = arith.truncf %253 : vector<8x8xf32> to vector<8x8xbf16>
    %cst_99 = arith.constant dense<0.000000e+00> : vector<8x8xf32>
    %255 = tpu.matmul %250, %252, %cst_99 {dimension_numbers = #tpu.dot_dimension_numbers<[1], [1], [0], [0], [0, 0, 1, 0], [], []>} : vector<8x8xbf16>, vector<8x8xbf16>, vector<8x8xf32> -> vector<8x8xf32>
    %256 = vector.broadcast %5 : vector<1x8xf32> to vector<8x8xf32>
    %257 = arith.addf %255, %256 : vector<8x8xf32>
    %cst_100 = arith.constant dense<0xFF800000> : vector<8xf32>
    %258 = vector.multi_reduction <maximumf>, %257, %cst_100 [1] : vector<8x8xf32> to vector<8xf32>
    %259 = vector.shape_cast %258 : vector<8xf32> to vector<8x1xf32>
    %260 = vector.broadcast %259 : vector<8x1xf32> to vector<8x8xf32>
    %261 = arith.subf %257, %260 : vector<8x8xf32>
    %262 = math.exp %261 : vector<8x8xf32>
    %cst_101 = arith.constant dense<0.000000e+00> : vector<8xf32>
    %263 = vector.multi_reduction <add>, %262, %cst_101 [1] : vector<8x8xf32> to vector<8xf32>
    %264 = vector.shape_cast %263 : vector<8xf32> to vector<8x1xf32>
    %265 = tpu.reciprocal %264 {approx = true} : vector<8x1xf32> -> vector<8x1xf32>
    %266 = vector.broadcast %265 : vector<8x1xf32> to vector<8x8xf32>
    %267 = arith.mulf %262, %266 : vector<8x8xf32>
    %268 = arith.truncf %267 : vector<8x8xf32> to vector<8x8xbf16>
    %cst_102 = arith.constant dense<0.000000e+00> : vector<8x8xf32>
    %269 = tpu.matmul %268, %254, %cst_102 {dimension_numbers = #tpu.dot_dimension_numbers<[1], [0], [0], [1], [0, 0, 1, 1], [], []>} : vector<8x8xbf16>, vector<8x8xbf16>, vector<8x8xf32> -> vector<8x8xf32>
    %270 = vector.extract_strided_slice %225 {offsets = [0, 16], sizes = [8, 8], strides = [1, 1]} : vector<8x32xf32> to vector<8x8xf32>
    %271 = arith.truncf %270 : vector<8x8xf32> to vector<8x8xbf16>
    %272 = vector.extract_strided_slice %226 {offsets = [0, 16], sizes = [8, 8], strides = [1, 1]} : vector<8x32xf32> to vector<8x8xf32>
    %273 = arith.truncf %272 : vector<8x8xf32> to vector<8x8xbf16>
    %274 = vector.extract_strided_slice %227 {offsets = [0, 16], sizes = [8, 8], strides = [1, 1]} : vector<8x32xf32> to vector<8x8xf32>
    %275 = arith.truncf %274 : vector<8x8xf32> to vector<8x8xbf16>
    %cst_103 = arith.constant dense<0.000000e+00> : vector<8x8xf32>
    %276 = tpu.matmul %271, %273, %cst_103 {dimension_numbers = #tpu.dot_dimension_numbers<[1], [1], [0], [0], [0, 0, 1, 0], [], []>} : vector<8x8xbf16>, vector<8x8xbf16>, vector<8x8xf32> -> vector<8x8xf32>
    %277 = vector.broadcast %5 : vector<1x8xf32> to vector<8x8xf32>
    %278 = arith.addf %276, %277 : vector<8x8xf32>
    %cst_104 = arith.constant dense<0xFF800000> : vector<8xf32>
    %279 = vector.multi_reduction <maximumf>, %278, %cst_104 [1] : vector<8x8xf32> to vector<8xf32>
    %280 = vector.shape_cast %279 : vector<8xf32> to vector<8x1xf32>
    %281 = vector.broadcast %280 : vector<8x1xf32> to vector<8x8xf32>
    %282 = arith.subf %278, %281 : vector<8x8xf32>
    %283 = math.exp %282 : vector<8x8xf32>
    %cst_105 = arith.constant dense<0.000000e+00> : vector<8xf32>
    %284 = vector.multi_reduction <add>, %283, %cst_105 [1] : vector<8x8xf32> to vector<8xf32>
    %285 = vector.shape_cast %284 : vector<8xf32> to vector<8x1xf32>
    %286 = tpu.reciprocal %285 {approx = true} : vector<8x1xf32> -> vector<8x1xf32>
    %287 = vector.broadcast %286 : vector<8x1xf32> to vector<8x8xf32>
    %288 = arith.mulf %283, %287 : vector<8x8xf32>
    %289 = arith.truncf %288 : vector<8x8xf32> to vector<8x8xbf16>
    %cst_106 = arith.constant dense<0.000000e+00> : vector<8x8xf32>
    %290 = tpu.matmul %289, %275, %cst_106 {dimension_numbers = #tpu.dot_dimension_numbers<[1], [0], [0], [1], [0, 0, 1, 1], [], []>} : vector<8x8xbf16>, vector<8x8xbf16>, vector<8x8xf32> -> vector<8x8xf32>
    %291 = vector.extract_strided_slice %225 {offsets = [0, 24], sizes = [8, 8], strides = [1, 1]} : vector<8x32xf32> to vector<8x8xf32>
    %292 = arith.truncf %291 : vector<8x8xf32> to vector<8x8xbf16>
    %293 = vector.extract_strided_slice %226 {offsets = [0, 24], sizes = [8, 8], strides = [1, 1]} : vector<8x32xf32> to vector<8x8xf32>
    %294 = arith.truncf %293 : vector<8x8xf32> to vector<8x8xbf16>
    %295 = vector.extract_strided_slice %227 {offsets = [0, 24], sizes = [8, 8], strides = [1, 1]} : vector<8x32xf32> to vector<8x8xf32>
    %296 = arith.truncf %295 : vector<8x8xf32> to vector<8x8xbf16>
    %cst_107 = arith.constant dense<0.000000e+00> : vector<8x8xf32>
    %297 = tpu.matmul %292, %294, %cst_107 {dimension_numbers = #tpu.dot_dimension_numbers<[1], [1], [0], [0], [0, 0, 1, 0], [], []>} : vector<8x8xbf16>, vector<8x8xbf16>, vector<8x8xf32> -> vector<8x8xf32>
    %298 = vector.broadcast %5 : vector<1x8xf32> to vector<8x8xf32>
    %299 = arith.addf %297, %298 : vector<8x8xf32>
    %cst_108 = arith.constant dense<0xFF800000> : vector<8xf32>
    %300 = vector.multi_reduction <maximumf>, %299, %cst_108 [1] : vector<8x8xf32> to vector<8xf32>
    %301 = vector.shape_cast %300 : vector<8xf32> to vector<8x1xf32>
    %302 = vector.broadcast %301 : vector<8x1xf32> to vector<8x8xf32>
    %303 = arith.subf %299, %302 : vector<8x8xf32>
    %304 = math.exp %303 : vector<8x8xf32>
    %cst_109 = arith.constant dense<0.000000e+00> : vector<8xf32>
    %305 = vector.multi_reduction <add>, %304, %cst_109 [1] : vector<8x8xf32> to vector<8xf32>
    %306 = vector.shape_cast %305 : vector<8xf32> to vector<8x1xf32>
    %307 = tpu.reciprocal %306 {approx = true} : vector<8x1xf32> -> vector<8x1xf32>
    %308 = vector.broadcast %307 : vector<8x1xf32> to vector<8x8xf32>
    %309 = arith.mulf %304, %308 : vector<8x8xf32>
    %310 = arith.truncf %309 : vector<8x8xf32> to vector<8x8xbf16>
    %cst_110 = arith.constant dense<0.000000e+00> : vector<8x8xf32>
    %311 = tpu.matmul %310, %296, %cst_110 {dimension_numbers = #tpu.dot_dimension_numbers<[1], [0], [0], [1], [0, 0, 1, 1], [], []>} : vector<8x8xbf16>, vector<8x8xbf16>, vector<8x8xf32> -> vector<8x8xf32>
    %312 = tpu.concatenate %248, %269, %290, %311 in 1 : vector<8x8xf32>, vector<8x8xf32>, vector<8x8xf32>, vector<8x8xf32> -> vector<8x32xf32>
    %313 = arith.truncf %312 : vector<8x32xf32> to vector<8x32xbf16>
    %c1_111 = arith.constant 1 : index
    %c0_112 = arith.constant 0 : index
    %c0_113 = arith.constant 0 : index
    %314 = vector.load %arg8[%c1_111, %c0_112, %c0_113] : memref<2x32x32xbf16, #tpu.memory_space<vmem>>, vector<1x32x32xbf16>
    %315 = vector.shape_cast %314 : vector<1x32x32xbf16> to vector<32x32xbf16>
    %cst_114 = arith.constant dense<0.000000e+00> : vector<8x32xf32>
    %316 = tpu.matmul %313, %315, %cst_114 {dimension_numbers = #tpu.dot_dimension_numbers<[1], [0], [0], [1], [0, 0, 1, 1], [], []>} : vector<8x32xbf16>, vector<32x32xbf16>, vector<8x32xf32> -> vector<8x32xf32>
    %c1_115 = arith.constant 1 : index
    %c0_116 = arith.constant 0 : index
    %c0_117 = arith.constant 0 : index
    %317 = vector.load %arg9[%c1_115, %c0_116, %c0_117] : memref<2x1x32xf32, #tpu.memory_space<vmem>>, vector<1x1x32xf32>
    %318 = vector.shape_cast %317 : vector<1x1x32xf32> to vector<1x32xf32>
    %319 = vector.broadcast %318 : vector<1x32xf32> to vector<8x32xf32>
    %320 = arith.addf %316, %319 : vector<8x32xf32>
    %321 = arith.addf %190, %320 : vector<8x32xf32>
    %c1_118 = arith.constant 1 : index
    %c0_119 = arith.constant 0 : index
    %c0_120 = arith.constant 0 : index
    %322 = vector.load %arg10[%c1_118, %c0_119, %c0_120] : memref<2x1x32xf32, #tpu.memory_space<vmem>>, vector<1x1x32xf32>
    %323 = vector.shape_cast %322 : vector<1x1x32xf32> to vector<1x32xf32>
    %c1_121 = arith.constant 1 : index
    %c0_122 = arith.constant 0 : index
    %c0_123 = arith.constant 0 : index
    %324 = vector.load %arg11[%c1_121, %c0_122, %c0_123] : memref<2x1x32xf32, #tpu.memory_space<vmem>>, vector<1x1x32xf32>
    %325 = vector.shape_cast %324 : vector<1x1x32xf32> to vector<1x32xf32>
    %cst_124 = arith.constant dense<0.000000e+00> : vector<8xf32>
    %326 = vector.multi_reduction <add>, %321, %cst_124 [1] : vector<8x32xf32> to vector<8xf32>
    %327 = vector.shape_cast %326 : vector<8xf32> to vector<8x1xf32>
    %cst_125 = arith.constant 3.200000e+01 : f32
    %328 = vector.broadcast %cst_125 : f32 to vector<8x1xf32>
    %329 = arith.divf %327, %328 : vector<8x1xf32>
    %330 = vector.broadcast %329 : vector<8x1xf32> to vector<8x32xf32>
    %331 = arith.subf %321, %330 : vector<8x32xf32>
    %332 = arith.mulf %331, %331 : vector<8x32xf32>
    %cst_126 = arith.constant dense<0.000000e+00> : vector<8xf32>
    %333 = vector.multi_reduction <add>, %332, %cst_126 [1] : vector<8x32xf32> to vector<8xf32>
    %334 = vector.shape_cast %333 : vector<8xf32> to vector<8x1xf32>
    %cst_127 = arith.constant 3.200000e+01 : f32
    %335 = vector.broadcast %cst_127 : f32 to vector<8x1xf32>
    %336 = arith.divf %334, %335 : vector<8x1xf32>
    %cst_128 = arith.constant 9.99999974E-6 : f32
    %337 = vector.broadcast %cst_128 : f32 to vector<8x1xf32>
    %338 = arith.addf %336, %337 : vector<8x1xf32>
    %339 = math.rsqrt %338 : vector<8x1xf32>
    %340 = vector.broadcast %339 : vector<8x1xf32> to vector<8x32xf32>
    %341 = arith.mulf %331, %340 : vector<8x32xf32>
    %342 = vector.broadcast %323 : vector<1x32xf32> to vector<8x32xf32>
    %343 = arith.mulf %341, %342 : vector<8x32xf32>
    %344 = vector.broadcast %325 : vector<1x32xf32> to vector<8x32xf32>
    %345 = arith.addf %343, %344 : vector<8x32xf32>
    %346 = arith.truncf %345 : vector<8x32xf32> to vector<8x32xbf16>
    %c1_129 = arith.constant 1 : index
    %c0_130 = arith.constant 0 : index
    %c0_131 = arith.constant 0 : index
    %347 = vector.load %arg12[%c1_129, %c0_130, %c0_131] : memref<2x32x128xbf16, #tpu.memory_space<vmem>>, vector<1x32x128xbf16>
    %348 = vector.shape_cast %347 : vector<1x32x128xbf16> to vector<32x128xbf16>
    %cst_132 = arith.constant dense<0.000000e+00> : vector<8x128xf32>
    %349 = tpu.matmul %346, %348, %cst_132 {dimension_numbers = #tpu.dot_dimension_numbers<[1], [0], [0], [1], [0, 0, 1, 1], [], []>} : vector<8x32xbf16>, vector<32x128xbf16>, vector<8x128xf32> -> vector<8x128xf32>
    %c1_133 = arith.constant 1 : index
    %c0_134 = arith.constant 0 : index
    %c0_135 = arith.constant 0 : index
    %350 = vector.load %arg13[%c1_133, %c0_134, %c0_135] : memref<2x1x128xf32, #tpu.memory_space<vmem>>, vector<1x1x128xf32>
    %351 = vector.shape_cast %350 : vector<1x1x128xf32> to vector<1x128xf32>
    %352 = vector.broadcast %351 : vector<1x128xf32> to vector<8x128xf32>
    %353 = arith.addf %349, %352 : vector<8x128xf32>
    %cst_136 = arith.constant 5.000000e-01 : f32
    %354 = vector.broadcast %cst_136 : f32 to vector<8x128xf32>
    %355 = arith.mulf %354, %353 : vector<8x128xf32>
    %cst_137 = arith.constant 4.471500e-02 : f32
    %356 = vector.broadcast %cst_137 : f32 to vector<8x128xf32>
    %357 = arith.mulf %356, %353 : vector<8x128xf32>
    %358 = arith.mulf %357, %353 : vector<8x128xf32>
    %359 = arith.mulf %358, %353 : vector<8x128xf32>
    %360 = arith.addf %353, %359 : vector<8x128xf32>
    %cst_138 = arith.constant 0.797884583 : f32
    %361 = vector.broadcast %cst_138 : f32 to vector<8x128xf32>
    %362 = arith.mulf %361, %360 : vector<8x128xf32>
    %363 = math.tanh %362 : vector<8x128xf32>
    %cst_139 = arith.constant 1.000000e+00 : f32
    %364 = vector.broadcast %cst_139 : f32 to vector<8x128xf32>
    %365 = arith.addf %364, %363 : vector<8x128xf32>
    %366 = arith.mulf %355, %365 : vector<8x128xf32>
    %367 = arith.truncf %366 : vector<8x128xf32> to vector<8x128xbf16>
    %c1_140 = arith.constant 1 : index
    %c0_141 = arith.constant 0 : index
    %c0_142 = arith.constant 0 : index
    %368 = vector.load %arg14[%c1_140, %c0_141, %c0_142] : memref<2x128x32xbf16, #tpu.memory_space<vmem>>, vector<1x128x32xbf16>
    %369 = vector.shape_cast %368 : vector<1x128x32xbf16> to vector<128x32xbf16>
    %cst_143 = arith.constant dense<0.000000e+00> : vector<8x32xf32>
    %370 = tpu.matmul %367, %369, %cst_143 {dimension_numbers = #tpu.dot_dimension_numbers<[1], [0], [0], [1], [0, 0, 1, 1], [], []>} : vector<8x128xbf16>, vector<128x32xbf16>, vector<8x32xf32> -> vector<8x32xf32>
    %c1_144 = arith.constant 1 : index
    %c0_145 = arith.constant 0 : index
    %c0_146 = arith.constant 0 : index
    %371 = vector.load %arg15[%c1_144, %c0_145, %c0_146] : memref<2x1x32xf32, #tpu.memory_space<vmem>>, vector<1x1x32xf32>
    %372 = vector.shape_cast %371 : vector<1x1x32xf32> to vector<1x32xf32>
    %373 = vector.broadcast %372 : vector<1x32xf32> to vector<8x32xf32>
    %374 = arith.addf %370, %373 : vector<8x32xf32>
    %375 = arith.addf %321, %374 : vector<8x32xf32>
    %c0_147 = arith.constant 0 : index
    %c0_148 = arith.constant 0 : index
    %376 = vector.load %arg16[%c0_147, %c0_148] : memref<1x32xf32, #tpu.memory_space<vmem>>, vector<1x32xf32>
    %c0_149 = arith.constant 0 : index
    %c0_150 = arith.constant 0 : index
    %377 = vector.load %arg17[%c0_149, %c0_150] : memref<1x32xf32, #tpu.memory_space<vmem>>, vector<1x32xf32>
    %cst_151 = arith.constant dense<0.000000e+00> : vector<8xf32>
    %378 = vector.multi_reduction <add>, %375, %cst_151 [1] : vector<8x32xf32> to vector<8xf32>
    %379 = vector.shape_cast %378 : vector<8xf32> to vector<8x1xf32>
    %cst_152 = arith.constant 3.200000e+01 : f32
    %380 = vector.broadcast %cst_152 : f32 to vector<8x1xf32>
    %381 = arith.divf %379, %380 : vector<8x1xf32>
    %382 = vector.broadcast %381 : vector<8x1xf32> to vector<8x32xf32>
    %383 = arith.subf %375, %382 : vector<8x32xf32>
    %384 = arith.mulf %383, %383 : vector<8x32xf32>
    %cst_153 = arith.constant dense<0.000000e+00> : vector<8xf32>
    %385 = vector.multi_reduction <add>, %384, %cst_153 [1] : vector<8x32xf32> to vector<8xf32>
    %386 = vector.shape_cast %385 : vector<8xf32> to vector<8x1xf32>
    %cst_154 = arith.constant 3.200000e+01 : f32
    %387 = vector.broadcast %cst_154 : f32 to vector<8x1xf32>
    %388 = arith.divf %386, %387 : vector<8x1xf32>
    %cst_155 = arith.constant 9.99999974E-6 : f32
    %389 = vector.broadcast %cst_155 : f32 to vector<8x1xf32>
    %390 = arith.addf %388, %389 : vector<8x1xf32>
    %391 = math.rsqrt %390 : vector<8x1xf32>
    %392 = vector.broadcast %391 : vector<8x1xf32> to vector<8x32xf32>
    %393 = arith.mulf %383, %392 : vector<8x32xf32>
    %394 = vector.broadcast %376 : vector<1x32xf32> to vector<8x32xf32>
    %395 = arith.mulf %393, %394 : vector<8x32xf32>
    %396 = vector.broadcast %377 : vector<1x32xf32> to vector<8x32xf32>
    %397 = arith.addf %395, %396 : vector<8x32xf32>
    %398 = arith.truncf %397 : vector<8x32xf32> to vector<8x32xbf16>
    %c0_156 = arith.constant 0 : index
    %c0_157 = arith.constant 0 : index
    %399 = vector.load %arg18[%c0_156, %c0_157] : memref<32x32xbf16, #tpu.memory_space<vmem>>, vector<32x32xbf16>
    %cst_158 = arith.constant dense<0.000000e+00> : vector<8x32xf32>
    %400 = tpu.matmul %398, %399, %cst_158 {dimension_numbers = #tpu.dot_dimension_numbers<[1], [0], [0], [1], [0, 0, 1, 1], [], []>} : vector<8x32xbf16>, vector<32x32xbf16>, vector<8x32xf32> -> vector<8x32xf32>
    %c0_159 = arith.constant 0 : index
    %c0_160 = arith.constant 0 : index
    %401 = vector.load %arg19[%c0_159, %c0_160] : memref<1x32xf32, #tpu.memory_space<vmem>>, vector<1x32xf32>
    %402 = vector.broadcast %401 : vector<1x32xf32> to vector<8x32xf32>
    %403 = arith.addf %400, %402 : vector<8x32xf32>
    %c0_161 = arith.constant 0 : index
    %c0_162 = arith.constant 0 : index
    %c0_163 = arith.constant 0 : index
    %404 = vector.load %arg20[%c0_161, %c0_162, %c0_163] : memref<1x8x32xf32, #tpu.memory_space<vmem>>, vector<1x8x32xf32>
    %405 = vector.shape_cast %404 : vector<1x8x32xf32> to vector<8x32xf32>
    %406 = vector.shape_cast %403 : vector<8x32xf32> to vector<1x8x32xf32>
    tpu.vector_store %arg20[%c0_161, %c0_162, %c0_163], %406 {strides = array<i32>} : memref<1x8x32xf32, #tpu.memory_space<vmem>>, vector<1x8x32xf32>,
    return
  }
  func.func @transform_0(%arg0: i32) -> (i32, i32, i32) {
    %c0_i32 = arith.constant 0 : i32
    %c0_i32_0 = arith.constant 0 : i32
    %c0_i32_1 = arith.constant 0 : i32
    return %arg0, %c0_i32, %c0_i32_0 : i32, i32, i32
  }
  func.func @transform_1(%arg0: i32) -> (i32, i32, i32) {
    %c0_i32 = arith.constant 0 : i32
    %c0_i32_0 = arith.constant 0 : i32
    %c0_i32_1 = arith.constant 0 : i32
    %c0_i32_2 = arith.constant 0 : i32
    return %c0_i32, %c0_i32_0, %c0_i32_1 : i32, i32, i32
  }
  func.func @transform_2(%arg0: i32) -> (i32, i32) {
    %c0_i32 = arith.constant 0 : i32
    %c0_i32_0 = arith.constant 0 : i32
    %c0_i32_1 = arith.constant 0 : i32
    return %c0_i32, %c0_i32_0 : i32, i32
  }
  func.func @transform_3(%arg0: i32) -> (i32, i32, i32) {
    %c0_i32 = arith.constant 0 : i32
    %c0_i32_0 = arith.constant 0 : i32
    %c0_i32_1 = arith.constant 0 : i32
    %c0_i32_2 = arith.constant 0 : i32
    return %c0_i32, %c0_i32_0, %c0_i32_1 : i32, i32, i32
  }
  func.func @transform_4(%arg0: i32) -> (i32, i32, i32) {
    %c0_i32 = arith.constant 0 : i32
    %c0_i32_0 = arith.constant 0 : i32
    %c0_i32_1 = arith.constant 0 : i32
    %c0_i32_2 = arith.constant 0 : i32
    return %c0_i32, %c0_i32_0, %c0_i32_1 : i32, i32, i32
  }
  func.func @transform_5(%arg0: i32) -> (i32, i32, i32) {
    %c0_i32 = arith.constant 0 : i32
    %c0_i32_0 = arith.constant 0 : i32
    %c0_i32_1 = arith.constant 0 : i32
    %c0_i32_2 = arith.constant 0 : i32
    return %c0_i32, %c0_i32_0, %c0_i32_1 : i32, i32, i32
  }
  func.func @transform_6(%arg0: i32) -> (i32, i32, i32) {
    %c0_i32 = arith.constant 0 : i32
    %c0_i32_0 = arith.constant 0 : i32
    %c0_i32_1 = arith.constant 0 : i32
    %c0_i32_2 = arith.constant 0 : i32
    return %c0_i32, %c0_i32_0, %c0_i32_1 : i32, i32, i32
  }
  func.func @transform_7(%arg0: i32) -> (i32, i32, i32) {
    %c0_i32 = arith.constant 0 : i32
    %c0_i32_0 = arith.constant 0 : i32
    %c0_i32_1 = arith.constant 0 : i32
    %c0_i32_2 = arith.constant 0 : i32
    return %c0_i32, %c0_i32_0, %c0_i32_1 : i32, i32, i32
  }
  func.func @transform_8(%arg0: i32) -> (i32, i32, i32) {
    %c0_i32 = arith.constant 0 : i32
    %c0_i32_0 = arith.constant 0 : i32
    %c0_i32_1 = arith.constant 0 : i32
    %c0_i32_2 = arith.constant 0 : i32
    return %c0_i32, %c0_i32_0, %c0_i32_1 : i32, i32, i32
  }
  func.func @transform_9(%arg0: i32) -> (i32, i32, i32) {
    %c0_i32 = arith.constant 0 : i32
    %c0_i32_0 = arith.constant 0 : i32
    %c0_i32_1 = arith.constant 0 : i32
    %c0_i32_2 = arith.constant 0 : i32
    return %c0_i32, %c0_i32_0, %c0_i32_1 : i32, i32, i32
  }
  func.func @transform_10(%arg0: i32) -> (i32, i32, i32) {
    %c0_i32 = arith.constant 0 : i32
    %c0_i32_0 = arith.constant 0 : i32
    %c0_i32_1 = arith.constant 0 : i32
    %c0_i32_2 = arith.constant 0 : i32
    return %c0_i32, %c0_i32_0, %c0_i32_1 : i32, i32, i32
  }
  func.func @transform_11(%arg0: i32) -> (i32, i32, i32) {
    %c0_i32 = arith.constant 0 : i32
    %c0_i32_0 = arith.constant 0 : i32
    %c0_i32_1 = arith.constant 0 : i32
    %c0_i32_2 = arith.constant 0 : i32
    return %c0_i32, %c0_i32_0, %c0_i32_1 : i32, i32, i32
  }
  func.func @transform_12(%arg0: i32) -> (i32, i32, i32) {
    %c0_i32 = arith.constant 0 : i32
    %c0_i32_0 = arith.constant 0 : i32
    %c0_i32_1 = arith.constant 0 : i32
    %c0_i32_2 = arith.constant 0 : i32
    return %c0_i32, %c0_i32_0, %c0_i32_1 : i32, i32, i32
  }
  func.func @transform_13(%arg0: i32) -> (i32, i32, i32) {
    %c0_i32 = arith.constant 0 : i32
    %c0_i32_0 = arith.constant 0 : i32
    %c0_i32_1 = arith.constant 0 : i32
    %c0_i32_2 = arith.constant 0 : i32
    return %c0_i32, %c0_i32_0, %c0_i32_1 : i32, i32, i32
  }
  func.func @transform_14(%arg0: i32) -> (i32, i32, i32) {
    %c0_i32 = arith.constant 0 : i32
    %c0_i32_0 = arith.constant 0 : i32
    %c0_i32_1 = arith.constant 0 : i32
    %c0_i32_2 = arith.constant 0 : i32
    return %c0_i32, %c0_i32_0, %c0_i32_1 : i32, i32, i32
  }
  func.func @transform_15(%arg0: i32) -> (i32, i32) {
    %c0_i32 = arith.constant 0 : i32
    %c0_i32_0 = arith.constant 0 : i32
    %c0_i32_1 = arith.constant 0 : i32
    return %c0_i32, %c0_i32_0 : i32, i32
  }
  func.func @transform_16(%arg0: i32) -> (i32, i32) {
    %c0_i32 = arith.constant 0 : i32
    %c0_i32_0 = arith.constant 0 : i32
    %c0_i32_1 = arith.constant 0 : i32
    return %c0_i32, %c0_i32_0 : i32, i32
  }
  func.func @transform_17(%arg0: i32) -> (i32, i32) {
    %c0_i32 = arith.constant 0 : i32
    %c0_i32_0 = arith.constant 0 : i32
    %c0_i32_1 = arith.constant 0 : i32
    return %c0_i32, %c0_i32_0 : i32, i32
  }
  func.func @transform_18(%arg0: i32) -> (i32, i32) {
    %c0_i32 = arith.constant 0 : i32
    %c0_i32_0 = arith.constant 0 : i32
    %c0_i32_1 = arith.constant 0 : i32
    return %c0_i32, %c0_i32_0 : i32, i32
  }
  func.func @transform_19(%arg0: i32) -> (i32, i32, i32) {
    %c0_i32 = arith.constant 0 : i32
    %c0_i32_0 = arith.constant 0 : i32
    %c0_i32_1 = arith.constant 0 : i32
    return %arg0, %c0_i32, %c0_i32_0 : i32, i32, i32
  }
}

module attributes {stable_mosaic.version = 11 : i64} {
  func.func @_stack_kernel(%arg0: i32, %arg1: memref<1x24x32xf32, #tpu.memory_space<vmem>>, %arg2: memref<1x24x32xf32, #tpu.memory_space<vmem>>, %arg3: memref<1x24xf32, #tpu.memory_space<vmem>>, %arg4: memref<2x1x32xf32, #tpu.memory_space<vmem>>, %arg5: memref<2x1x32xf32, #tpu.memory_space<vmem>>, %arg6: memref<2x32x96xbf16, #tpu.memory_space<vmem>>, %arg7: memref<2x1x96xf32, #tpu.memory_space<vmem>>, %arg8: memref<2x32x32xbf16, #tpu.memory_space<vmem>>, %arg9: memref<2x1x32xf32, #tpu.memory_space<vmem>>, %arg10: memref<2x1x32xf32, #tpu.memory_space<vmem>>, %arg11: memref<2x1x32xf32, #tpu.memory_space<vmem>>, %arg12: memref<2x32x128xbf16, #tpu.memory_space<vmem>>, %arg13: memref<2x1x128xf32, #tpu.memory_space<vmem>>, %arg14: memref<2x128x32xbf16, #tpu.memory_space<vmem>>, %arg15: memref<2x1x32xf32, #tpu.memory_space<vmem>>, %arg16: memref<1x32xf32, #tpu.memory_space<vmem>>, %arg17: memref<1x32xf32, #tpu.memory_space<vmem>>, %arg18: memref<32x48xbf16, #tpu.memory_space<vmem>>, %arg19: memref<1x48xf32, #tpu.memory_space<vmem>>, %arg20: memref<1x24x48xf32, #tpu.memory_space<vmem>>) attributes {dimension_semantics = [#tpu.dimension_semantics<parallel>], iteration_bounds = array<i64: 2>, scalar_prefetch = 0 : i64, scratch_operands = 0 : i64, tpu.core_type = #tpu.core_type<tc>, window_params = [{transform_indices = @transform_0, window_bounds = array<i64: 1, 24, 32>}, {pipeline_mode = #tpu.pipeline_mode<synchronous>, transform_indices = @transform_1, window_bounds = array<i64: 1, 24, 32>}, {pipeline_mode = #tpu.pipeline_mode<synchronous>, transform_indices = @transform_2, window_bounds = array<i64: 1, 24>}, {pipeline_mode = #tpu.pipeline_mode<synchronous>, transform_indices = @transform_3, window_bounds = array<i64: 2, 1, 32>}, {pipeline_mode = #tpu.pipeline_mode<synchronous>, transform_indices = @transform_4, window_bounds = array<i64: 2, 1, 32>}, {pipeline_mode = #tpu.pipeline_mode<synchronous>, transform_indices = @transform_5, window_bounds = array<i64: 2, 32, 96>}, {pipeline_mode = #tpu.pipeline_mode<synchronous>, transform_indices = @transform_6, window_bounds = array<i64: 2, 1, 96>}, {pipeline_mode = #tpu.pipeline_mode<synchronous>, transform_indices = @transform_7, window_bounds = array<i64: 2, 32, 32>}, {pipeline_mode = #tpu.pipeline_mode<synchronous>, transform_indices = @transform_8, window_bounds = array<i64: 2, 1, 32>}, {pipeline_mode = #tpu.pipeline_mode<synchronous>, transform_indices = @transform_9, window_bounds = array<i64: 2, 1, 32>}, {pipeline_mode = #tpu.pipeline_mode<synchronous>, transform_indices = @transform_10, window_bounds = array<i64: 2, 1, 32>}, {pipeline_mode = #tpu.pipeline_mode<synchronous>, transform_indices = @transform_11, window_bounds = array<i64: 2, 32, 128>}, {pipeline_mode = #tpu.pipeline_mode<synchronous>, transform_indices = @transform_12, window_bounds = array<i64: 2, 1, 128>}, {pipeline_mode = #tpu.pipeline_mode<synchronous>, transform_indices = @transform_13, window_bounds = array<i64: 2, 128, 32>}, {pipeline_mode = #tpu.pipeline_mode<synchronous>, transform_indices = @transform_14, window_bounds = array<i64: 2, 1, 32>}, {pipeline_mode = #tpu.pipeline_mode<synchronous>, transform_indices = @transform_15, window_bounds = array<i64: 1, 32>}, {pipeline_mode = #tpu.pipeline_mode<synchronous>, transform_indices = @transform_16, window_bounds = array<i64: 1, 32>}, {pipeline_mode = #tpu.pipeline_mode<synchronous>, transform_indices = @transform_17, window_bounds = array<i64: 32, 48>}, {pipeline_mode = #tpu.pipeline_mode<synchronous>, transform_indices = @transform_18, window_bounds = array<i64: 1, 48>}, {transform_indices = @transform_19, window_bounds = array<i64: 1, 24, 48>}]} {
    %c0 = arith.constant 0 : index
    %c0_0 = arith.constant 0 : index
    %c0_1 = arith.constant 0 : index
    %0 = vector.load %arg1[%c0, %c0_0, %c0_1] : memref<1x24x32xf32, #tpu.memory_space<vmem>>, vector<1x24x32xf32>
    %1 = vector.shape_cast %0 : vector<1x24x32xf32> to vector<24x32xf32>
    %c0_2 = arith.constant 0 : index
    %c0_3 = arith.constant 0 : index
    %c0_4 = arith.constant 0 : index
    %2 = vector.load %arg2[%c0_2, %c0_3, %c0_4] : memref<1x24x32xf32, #tpu.memory_space<vmem>>, vector<1x24x32xf32>
    %3 = vector.shape_cast %2 : vector<1x24x32xf32> to vector<24x32xf32>
    %4 = arith.addf %1, %3 : vector<24x32xf32>
    %c0_5 = arith.constant 0 : index
    %c0_6 = arith.constant 0 : index
    %5 = vector.load %arg3[%c0_5, %c0_6] : memref<1x24xf32, #tpu.memory_space<vmem>>, vector<1x24xf32>
    %c0_7 = arith.constant 0 : index
    %c0_8 = arith.constant 0 : index
    %c0_9 = arith.constant 0 : index
    %6 = vector.load %arg4[%c0_7, %c0_8, %c0_9] : memref<2x1x32xf32, #tpu.memory_space<vmem>>, vector<1x1x32xf32>
    %7 = vector.shape_cast %6 : vector<1x1x32xf32> to vector<1x32xf32>
    %c0_10 = arith.constant 0 : index
    %c0_11 = arith.constant 0 : index
    %c0_12 = arith.constant 0 : index
    %8 = vector.load %arg5[%c0_10, %c0_11, %c0_12] : memref<2x1x32xf32, #tpu.memory_space<vmem>>, vector<1x1x32xf32>
    %9 = vector.shape_cast %8 : vector<1x1x32xf32> to vector<1x32xf32>
    %cst = arith.constant dense<0.000000e+00> : vector<24xf32>
    %10 = vector.multi_reduction <add>, %4, %cst [1] : vector<24x32xf32> to vector<24xf32>
    %11 = vector.shape_cast %10 : vector<24xf32> to vector<24x1xf32>
    %cst_13 = arith.constant 3.200000e+01 : f32
    %12 = vector.broadcast %cst_13 : f32 to vector<24x1xf32>
    %13 = arith.divf %11, %12 : vector<24x1xf32>
    %14 = vector.broadcast %13 : vector<24x1xf32> to vector<24x32xf32>
    %15 = arith.subf %4, %14 : vector<24x32xf32>
    %16 = arith.mulf %15, %15 : vector<24x32xf32>
    %cst_14 = arith.constant dense<0.000000e+00> : vector<24xf32>
    %17 = vector.multi_reduction <add>, %16, %cst_14 [1] : vector<24x32xf32> to vector<24xf32>
    %18 = vector.shape_cast %17 : vector<24xf32> to vector<24x1xf32>
    %cst_15 = arith.constant 3.200000e+01 : f32
    %19 = vector.broadcast %cst_15 : f32 to vector<24x1xf32>
    %20 = arith.divf %18, %19 : vector<24x1xf32>
    %cst_16 = arith.constant 9.99999974E-6 : f32
    %21 = vector.broadcast %cst_16 : f32 to vector<24x1xf32>
    %22 = arith.addf %20, %21 : vector<24x1xf32>
    %23 = math.rsqrt %22 : vector<24x1xf32>
    %24 = vector.broadcast %23 : vector<24x1xf32> to vector<24x32xf32>
    %25 = arith.mulf %15, %24 : vector<24x32xf32>
    %26 = vector.broadcast %7 : vector<1x32xf32> to vector<24x32xf32>
    %27 = arith.mulf %25, %26 : vector<24x32xf32>
    %28 = vector.broadcast %9 : vector<1x32xf32> to vector<24x32xf32>
    %29 = arith.addf %27, %28 : vector<24x32xf32>
    %30 = arith.truncf %29 : vector<24x32xf32> to vector<24x32xbf16>
    %c0_17 = arith.constant 0 : index
    %c0_18 = arith.constant 0 : index
    %c0_19 = arith.constant 0 : index
    %31 = vector.load %arg6[%c0_17, %c0_18, %c0_19] : memref<2x32x96xbf16, #tpu.memory_space<vmem>>, vector<1x32x96xbf16>
    %32 = vector.shape_cast %31 : vector<1x32x96xbf16> to vector<32x96xbf16>
    %cst_20 = arith.constant dense<0.000000e+00> : vector<24x96xf32>
    %33 = tpu.matmul %30, %32, %cst_20 {dimension_numbers = #tpu.dot_dimension_numbers<[1], [0], [0], [1], [0, 0, 1, 1], [], []>} : vector<24x32xbf16>, vector<32x96xbf16>, vector<24x96xf32> -> vector<24x96xf32>
    %c0_21 = arith.constant 0 : index
    %c0_22 = arith.constant 0 : index
    %c0_23 = arith.constant 0 : index
    %34 = vector.load %arg7[%c0_21, %c0_22, %c0_23] : memref<2x1x96xf32, #tpu.memory_space<vmem>>, vector<1x1x96xf32>
    %35 = vector.shape_cast %34 : vector<1x1x96xf32> to vector<1x96xf32>
    %36 = vector.broadcast %35 : vector<1x96xf32> to vector<24x96xf32>
    %37 = arith.addf %33, %36 : vector<24x96xf32>
    %38 = vector.extract_strided_slice %37 {offsets = [0, 0], sizes = [24, 32], strides = [1, 1]} : vector<24x96xf32> to vector<24x32xf32>
    %cst_24 = arith.constant 0.353553385 : f32
    %39 = vector.broadcast %cst_24 : f32 to vector<24x32xf32>
    %40 = arith.mulf %38, %39 : vector<24x32xf32>
    %41 = vector.extract_strided_slice %37 {offsets = [0, 32], sizes = [24, 32], strides = [1, 1]} : vector<24x96xf32> to vector<24x32xf32>
    %42 = vector.extract_strided_slice %37 {offsets = [0, 64], sizes = [24, 32], strides = [1, 1]} : vector<24x96xf32> to vector<24x32xf32>
    %43 = vector.extract_strided_slice %40 {offsets = [0, 0], sizes = [24, 8], strides = [1, 1]} : vector<24x32xf32> to vector<24x8xf32>
    %44 = arith.truncf %43 : vector<24x8xf32> to vector<24x8xbf16>
    %45 = vector.extract_strided_slice %41 {offsets = [0, 0], sizes = [24, 8], strides = [1, 1]} : vector<24x32xf32> to vector<24x8xf32>
    %46 = arith.truncf %45 : vector<24x8xf32> to vector<24x8xbf16>
    %47 = vector.extract_strided_slice %42 {offsets = [0, 0], sizes = [24, 8], strides = [1, 1]} : vector<24x32xf32> to vector<24x8xf32>
    %48 = arith.truncf %47 : vector<24x8xf32> to vector<24x8xbf16>
    %cst_25 = arith.constant dense<0.000000e+00> : vector<24x24xf32>
    %49 = tpu.matmul %44, %46, %cst_25 {dimension_numbers = #tpu.dot_dimension_numbers<[1], [1], [0], [0], [0, 0, 1, 0], [], []>} : vector<24x8xbf16>, vector<24x8xbf16>, vector<24x24xf32> -> vector<24x24xf32>
    %50 = vector.broadcast %5 : vector<1x24xf32> to vector<24x24xf32>
    %51 = arith.addf %49, %50 : vector<24x24xf32>
    %cst_26 = arith.constant dense<0xFF800000> : vector<24xf32>
    %52 = vector.multi_reduction <maximumf>, %51, %cst_26 [1] : vector<24x24xf32> to vector<24xf32>
    %53 = vector.shape_cast %52 : vector<24xf32> to vector<24x1xf32>
    %54 = vector.broadcast %53 : vector<24x1xf32> to vector<24x24xf32>
    %55 = arith.subf %51, %54 : vector<24x24xf32>
    %56 = math.exp %55 : vector<24x24xf32>
    %cst_27 = arith.constant dense<0.000000e+00> : vector<24xf32>
    %57 = vector.multi_reduction <add>, %56, %cst_27 [1] : vector<24x24xf32> to vector<24xf32>
    %58 = vector.shape_cast %57 : vector<24xf32> to vector<24x1xf32>
    %59 = tpu.reciprocal %58 {approx = true} : vector<24x1xf32> -> vector<24x1xf32>
    %60 = vector.broadcast %59 : vector<24x1xf32> to vector<24x24xf32>
    %61 = arith.mulf %56, %60 : vector<24x24xf32>
    %62 = arith.truncf %61 : vector<24x24xf32> to vector<24x24xbf16>
    %cst_28 = arith.constant dense<0.000000e+00> : vector<24x8xf32>
    %63 = tpu.matmul %62, %48, %cst_28 {dimension_numbers = #tpu.dot_dimension_numbers<[1], [0], [0], [1], [0, 0, 1, 1], [], []>} : vector<24x24xbf16>, vector<24x8xbf16>, vector<24x8xf32> -> vector<24x8xf32>
    %64 = vector.extract_strided_slice %40 {offsets = [0, 8], sizes = [24, 8], strides = [1, 1]} : vector<24x32xf32> to vector<24x8xf32>
    %65 = arith.truncf %64 : vector<24x8xf32> to vector<24x8xbf16>
    %66 = vector.extract_strided_slice %41 {offsets = [0, 8], sizes = [24, 8], strides = [1, 1]} : vector<24x32xf32> to vector<24x8xf32>
    %67 = arith.truncf %66 : vector<24x8xf32> to vector<24x8xbf16>
    %68 = vector.extract_strided_slice %42 {offsets = [0, 8], sizes = [24, 8], strides = [1, 1]} : vector<24x32xf32> to vector<24x8xf32>
    %69 = arith.truncf %68 : vector<24x8xf32> to vector<24x8xbf16>
    %cst_29 = arith.constant dense<0.000000e+00> : vector<24x24xf32>
    %70 = tpu.matmul %65, %67, %cst_29 {dimension_numbers = #tpu.dot_dimension_numbers<[1], [1], [0], [0], [0, 0, 1, 0], [], []>} : vector<24x8xbf16>, vector<24x8xbf16>, vector<24x24xf32> -> vector<24x24xf32>
    %71 = vector.broadcast %5 : vector<1x24xf32> to vector<24x24xf32>
    %72 = arith.addf %70, %71 : vector<24x24xf32>
    %cst_30 = arith.constant dense<0xFF800000> : vector<24xf32>
    %73 = vector.multi_reduction <maximumf>, %72, %cst_30 [1] : vector<24x24xf32> to vector<24xf32>
    %74 = vector.shape_cast %73 : vector<24xf32> to vector<24x1xf32>
    %75 = vector.broadcast %74 : vector<24x1xf32> to vector<24x24xf32>
    %76 = arith.subf %72, %75 : vector<24x24xf32>
    %77 = math.exp %76 : vector<24x24xf32>
    %cst_31 = arith.constant dense<0.000000e+00> : vector<24xf32>
    %78 = vector.multi_reduction <add>, %77, %cst_31 [1] : vector<24x24xf32> to vector<24xf32>
    %79 = vector.shape_cast %78 : vector<24xf32> to vector<24x1xf32>
    %80 = tpu.reciprocal %79 {approx = true} : vector<24x1xf32> -> vector<24x1xf32>
    %81 = vector.broadcast %80 : vector<24x1xf32> to vector<24x24xf32>
    %82 = arith.mulf %77, %81 : vector<24x24xf32>
    %83 = arith.truncf %82 : vector<24x24xf32> to vector<24x24xbf16>
    %cst_32 = arith.constant dense<0.000000e+00> : vector<24x8xf32>
    %84 = tpu.matmul %83, %69, %cst_32 {dimension_numbers = #tpu.dot_dimension_numbers<[1], [0], [0], [1], [0, 0, 1, 1], [], []>} : vector<24x24xbf16>, vector<24x8xbf16>, vector<24x8xf32> -> vector<24x8xf32>
    %85 = vector.extract_strided_slice %40 {offsets = [0, 16], sizes = [24, 8], strides = [1, 1]} : vector<24x32xf32> to vector<24x8xf32>
    %86 = arith.truncf %85 : vector<24x8xf32> to vector<24x8xbf16>
    %87 = vector.extract_strided_slice %41 {offsets = [0, 16], sizes = [24, 8], strides = [1, 1]} : vector<24x32xf32> to vector<24x8xf32>
    %88 = arith.truncf %87 : vector<24x8xf32> to vector<24x8xbf16>
    %89 = vector.extract_strided_slice %42 {offsets = [0, 16], sizes = [24, 8], strides = [1, 1]} : vector<24x32xf32> to vector<24x8xf32>
    %90 = arith.truncf %89 : vector<24x8xf32> to vector<24x8xbf16>
    %cst_33 = arith.constant dense<0.000000e+00> : vector<24x24xf32>
    %91 = tpu.matmul %86, %88, %cst_33 {dimension_numbers = #tpu.dot_dimension_numbers<[1], [1], [0], [0], [0, 0, 1, 0], [], []>} : vector<24x8xbf16>, vector<24x8xbf16>, vector<24x24xf32> -> vector<24x24xf32>
    %92 = vector.broadcast %5 : vector<1x24xf32> to vector<24x24xf32>
    %93 = arith.addf %91, %92 : vector<24x24xf32>
    %cst_34 = arith.constant dense<0xFF800000> : vector<24xf32>
    %94 = vector.multi_reduction <maximumf>, %93, %cst_34 [1] : vector<24x24xf32> to vector<24xf32>
    %95 = vector.shape_cast %94 : vector<24xf32> to vector<24x1xf32>
    %96 = vector.broadcast %95 : vector<24x1xf32> to vector<24x24xf32>
    %97 = arith.subf %93, %96 : vector<24x24xf32>
    %98 = math.exp %97 : vector<24x24xf32>
    %cst_35 = arith.constant dense<0.000000e+00> : vector<24xf32>
    %99 = vector.multi_reduction <add>, %98, %cst_35 [1] : vector<24x24xf32> to vector<24xf32>
    %100 = vector.shape_cast %99 : vector<24xf32> to vector<24x1xf32>
    %101 = tpu.reciprocal %100 {approx = true} : vector<24x1xf32> -> vector<24x1xf32>
    %102 = vector.broadcast %101 : vector<24x1xf32> to vector<24x24xf32>
    %103 = arith.mulf %98, %102 : vector<24x24xf32>
    %104 = arith.truncf %103 : vector<24x24xf32> to vector<24x24xbf16>
    %cst_36 = arith.constant dense<0.000000e+00> : vector<24x8xf32>
    %105 = tpu.matmul %104, %90, %cst_36 {dimension_numbers = #tpu.dot_dimension_numbers<[1], [0], [0], [1], [0, 0, 1, 1], [], []>} : vector<24x24xbf16>, vector<24x8xbf16>, vector<24x8xf32> -> vector<24x8xf32>
    %106 = vector.extract_strided_slice %40 {offsets = [0, 24], sizes = [24, 8], strides = [1, 1]} : vector<24x32xf32> to vector<24x8xf32>
    %107 = arith.truncf %106 : vector<24x8xf32> to vector<24x8xbf16>
    %108 = vector.extract_strided_slice %41 {offsets = [0, 24], sizes = [24, 8], strides = [1, 1]} : vector<24x32xf32> to vector<24x8xf32>
    %109 = arith.truncf %108 : vector<24x8xf32> to vector<24x8xbf16>
    %110 = vector.extract_strided_slice %42 {offsets = [0, 24], sizes = [24, 8], strides = [1, 1]} : vector<24x32xf32> to vector<24x8xf32>
    %111 = arith.truncf %110 : vector<24x8xf32> to vector<24x8xbf16>
    %cst_37 = arith.constant dense<0.000000e+00> : vector<24x24xf32>
    %112 = tpu.matmul %107, %109, %cst_37 {dimension_numbers = #tpu.dot_dimension_numbers<[1], [1], [0], [0], [0, 0, 1, 0], [], []>} : vector<24x8xbf16>, vector<24x8xbf16>, vector<24x24xf32> -> vector<24x24xf32>
    %113 = vector.broadcast %5 : vector<1x24xf32> to vector<24x24xf32>
    %114 = arith.addf %112, %113 : vector<24x24xf32>
    %cst_38 = arith.constant dense<0xFF800000> : vector<24xf32>
    %115 = vector.multi_reduction <maximumf>, %114, %cst_38 [1] : vector<24x24xf32> to vector<24xf32>
    %116 = vector.shape_cast %115 : vector<24xf32> to vector<24x1xf32>
    %117 = vector.broadcast %116 : vector<24x1xf32> to vector<24x24xf32>
    %118 = arith.subf %114, %117 : vector<24x24xf32>
    %119 = math.exp %118 : vector<24x24xf32>
    %cst_39 = arith.constant dense<0.000000e+00> : vector<24xf32>
    %120 = vector.multi_reduction <add>, %119, %cst_39 [1] : vector<24x24xf32> to vector<24xf32>
    %121 = vector.shape_cast %120 : vector<24xf32> to vector<24x1xf32>
    %122 = tpu.reciprocal %121 {approx = true} : vector<24x1xf32> -> vector<24x1xf32>
    %123 = vector.broadcast %122 : vector<24x1xf32> to vector<24x24xf32>
    %124 = arith.mulf %119, %123 : vector<24x24xf32>
    %125 = arith.truncf %124 : vector<24x24xf32> to vector<24x24xbf16>
    %cst_40 = arith.constant dense<0.000000e+00> : vector<24x8xf32>
    %126 = tpu.matmul %125, %111, %cst_40 {dimension_numbers = #tpu.dot_dimension_numbers<[1], [0], [0], [1], [0, 0, 1, 1], [], []>} : vector<24x24xbf16>, vector<24x8xbf16>, vector<24x8xf32> -> vector<24x8xf32>
    %127 = tpu.concatenate %63, %84, %105, %126 in 1 : vector<24x8xf32>, vector<24x8xf32>, vector<24x8xf32>, vector<24x8xf32> -> vector<24x32xf32>
    %128 = arith.truncf %127 : vector<24x32xf32> to vector<24x32xbf16>
    %c0_41 = arith.constant 0 : index
    %c0_42 = arith.constant 0 : index
    %c0_43 = arith.constant 0 : index
    %129 = vector.load %arg8[%c0_41, %c0_42, %c0_43] : memref<2x32x32xbf16, #tpu.memory_space<vmem>>, vector<1x32x32xbf16>
    %130 = vector.shape_cast %129 : vector<1x32x32xbf16> to vector<32x32xbf16>
    %cst_44 = arith.constant dense<0.000000e+00> : vector<24x32xf32>
    %131 = tpu.matmul %128, %130, %cst_44 {dimension_numbers = #tpu.dot_dimension_numbers<[1], [0], [0], [1], [0, 0, 1, 1], [], []>} : vector<24x32xbf16>, vector<32x32xbf16>, vector<24x32xf32> -> vector<24x32xf32>
    %c0_45 = arith.constant 0 : index
    %c0_46 = arith.constant 0 : index
    %c0_47 = arith.constant 0 : index
    %132 = vector.load %arg9[%c0_45, %c0_46, %c0_47] : memref<2x1x32xf32, #tpu.memory_space<vmem>>, vector<1x1x32xf32>
    %133 = vector.shape_cast %132 : vector<1x1x32xf32> to vector<1x32xf32>
    %134 = vector.broadcast %133 : vector<1x32xf32> to vector<24x32xf32>
    %135 = arith.addf %131, %134 : vector<24x32xf32>
    %136 = arith.addf %4, %135 : vector<24x32xf32>
    %c0_48 = arith.constant 0 : index
    %c0_49 = arith.constant 0 : index
    %c0_50 = arith.constant 0 : index
    %137 = vector.load %arg10[%c0_48, %c0_49, %c0_50] : memref<2x1x32xf32, #tpu.memory_space<vmem>>, vector<1x1x32xf32>
    %138 = vector.shape_cast %137 : vector<1x1x32xf32> to vector<1x32xf32>
    %c0_51 = arith.constant 0 : index
    %c0_52 = arith.constant 0 : index
    %c0_53 = arith.constant 0 : index
    %139 = vector.load %arg11[%c0_51, %c0_52, %c0_53] : memref<2x1x32xf32, #tpu.memory_space<vmem>>, vector<1x1x32xf32>
    %140 = vector.shape_cast %139 : vector<1x1x32xf32> to vector<1x32xf32>
    %cst_54 = arith.constant dense<0.000000e+00> : vector<24xf32>
    %141 = vector.multi_reduction <add>, %136, %cst_54 [1] : vector<24x32xf32> to vector<24xf32>
    %142 = vector.shape_cast %141 : vector<24xf32> to vector<24x1xf32>
    %cst_55 = arith.constant 3.200000e+01 : f32
    %143 = vector.broadcast %cst_55 : f32 to vector<24x1xf32>
    %144 = arith.divf %142, %143 : vector<24x1xf32>
    %145 = vector.broadcast %144 : vector<24x1xf32> to vector<24x32xf32>
    %146 = arith.subf %136, %145 : vector<24x32xf32>
    %147 = arith.mulf %146, %146 : vector<24x32xf32>
    %cst_56 = arith.constant dense<0.000000e+00> : vector<24xf32>
    %148 = vector.multi_reduction <add>, %147, %cst_56 [1] : vector<24x32xf32> to vector<24xf32>
    %149 = vector.shape_cast %148 : vector<24xf32> to vector<24x1xf32>
    %cst_57 = arith.constant 3.200000e+01 : f32
    %150 = vector.broadcast %cst_57 : f32 to vector<24x1xf32>
    %151 = arith.divf %149, %150 : vector<24x1xf32>
    %cst_58 = arith.constant 9.99999974E-6 : f32
    %152 = vector.broadcast %cst_58 : f32 to vector<24x1xf32>
    %153 = arith.addf %151, %152 : vector<24x1xf32>
    %154 = math.rsqrt %153 : vector<24x1xf32>
    %155 = vector.broadcast %154 : vector<24x1xf32> to vector<24x32xf32>
    %156 = arith.mulf %146, %155 : vector<24x32xf32>
    %157 = vector.broadcast %138 : vector<1x32xf32> to vector<24x32xf32>
    %158 = arith.mulf %156, %157 : vector<24x32xf32>
    %159 = vector.broadcast %140 : vector<1x32xf32> to vector<24x32xf32>
    %160 = arith.addf %158, %159 : vector<24x32xf32>
    %161 = arith.truncf %160 : vector<24x32xf32> to vector<24x32xbf16>
    %c0_59 = arith.constant 0 : index
    %c0_60 = arith.constant 0 : index
    %c0_61 = arith.constant 0 : index
    %162 = vector.load %arg12[%c0_59, %c0_60, %c0_61] : memref<2x32x128xbf16, #tpu.memory_space<vmem>>, vector<1x32x128xbf16>
    %163 = vector.shape_cast %162 : vector<1x32x128xbf16> to vector<32x128xbf16>
    %cst_62 = arith.constant dense<0.000000e+00> : vector<24x128xf32>
    %164 = tpu.matmul %161, %163, %cst_62 {dimension_numbers = #tpu.dot_dimension_numbers<[1], [0], [0], [1], [0, 0, 1, 1], [], []>} : vector<24x32xbf16>, vector<32x128xbf16>, vector<24x128xf32> -> vector<24x128xf32>
    %c0_63 = arith.constant 0 : index
    %c0_64 = arith.constant 0 : index
    %c0_65 = arith.constant 0 : index
    %165 = vector.load %arg13[%c0_63, %c0_64, %c0_65] : memref<2x1x128xf32, #tpu.memory_space<vmem>>, vector<1x1x128xf32>
    %166 = vector.shape_cast %165 : vector<1x1x128xf32> to vector<1x128xf32>
    %167 = vector.broadcast %166 : vector<1x128xf32> to vector<24x128xf32>
    %168 = arith.addf %164, %167 : vector<24x128xf32>
    %cst_66 = arith.constant 5.000000e-01 : f32
    %169 = vector.broadcast %cst_66 : f32 to vector<24x128xf32>
    %170 = arith.mulf %169, %168 : vector<24x128xf32>
    %cst_67 = arith.constant 4.471500e-02 : f32
    %171 = vector.broadcast %cst_67 : f32 to vector<24x128xf32>
    %172 = arith.mulf %171, %168 : vector<24x128xf32>
    %173 = arith.mulf %172, %168 : vector<24x128xf32>
    %174 = arith.mulf %173, %168 : vector<24x128xf32>
    %175 = arith.addf %168, %174 : vector<24x128xf32>
    %cst_68 = arith.constant 0.797884583 : f32
    %176 = vector.broadcast %cst_68 : f32 to vector<24x128xf32>
    %177 = arith.mulf %176, %175 : vector<24x128xf32>
    %178 = math.tanh %177 : vector<24x128xf32>
    %cst_69 = arith.constant 1.000000e+00 : f32
    %179 = vector.broadcast %cst_69 : f32 to vector<24x128xf32>
    %180 = arith.addf %179, %178 : vector<24x128xf32>
    %181 = arith.mulf %170, %180 : vector<24x128xf32>
    %182 = arith.truncf %181 : vector<24x128xf32> to vector<24x128xbf16>
    %c0_70 = arith.constant 0 : index
    %c0_71 = arith.constant 0 : index
    %c0_72 = arith.constant 0 : index
    %183 = vector.load %arg14[%c0_70, %c0_71, %c0_72] : memref<2x128x32xbf16, #tpu.memory_space<vmem>>, vector<1x128x32xbf16>
    %184 = vector.shape_cast %183 : vector<1x128x32xbf16> to vector<128x32xbf16>
    %cst_73 = arith.constant dense<0.000000e+00> : vector<24x32xf32>
    %185 = tpu.matmul %182, %184, %cst_73 {dimension_numbers = #tpu.dot_dimension_numbers<[1], [0], [0], [1], [0, 0, 1, 1], [], []>} : vector<24x128xbf16>, vector<128x32xbf16>, vector<24x32xf32> -> vector<24x32xf32>
    %c0_74 = arith.constant 0 : index
    %c0_75 = arith.constant 0 : index
    %c0_76 = arith.constant 0 : index
    %186 = vector.load %arg15[%c0_74, %c0_75, %c0_76] : memref<2x1x32xf32, #tpu.memory_space<vmem>>, vector<1x1x32xf32>
    %187 = vector.shape_cast %186 : vector<1x1x32xf32> to vector<1x32xf32>
    %188 = vector.broadcast %187 : vector<1x32xf32> to vector<24x32xf32>
    %189 = arith.addf %185, %188 : vector<24x32xf32>
    %190 = arith.addf %136, %189 : vector<24x32xf32>
    %c1 = arith.constant 1 : index
    %c0_77 = arith.constant 0 : index
    %c0_78 = arith.constant 0 : index
    %191 = vector.load %arg4[%c1, %c0_77, %c0_78] : memref<2x1x32xf32, #tpu.memory_space<vmem>>, vector<1x1x32xf32>
    %192 = vector.shape_cast %191 : vector<1x1x32xf32> to vector<1x32xf32>
    %c1_79 = arith.constant 1 : index
    %c0_80 = arith.constant 0 : index
    %c0_81 = arith.constant 0 : index
    %193 = vector.load %arg5[%c1_79, %c0_80, %c0_81] : memref<2x1x32xf32, #tpu.memory_space<vmem>>, vector<1x1x32xf32>
    %194 = vector.shape_cast %193 : vector<1x1x32xf32> to vector<1x32xf32>
    %cst_82 = arith.constant dense<0.000000e+00> : vector<24xf32>
    %195 = vector.multi_reduction <add>, %190, %cst_82 [1] : vector<24x32xf32> to vector<24xf32>
    %196 = vector.shape_cast %195 : vector<24xf32> to vector<24x1xf32>
    %cst_83 = arith.constant 3.200000e+01 : f32
    %197 = vector.broadcast %cst_83 : f32 to vector<24x1xf32>
    %198 = arith.divf %196, %197 : vector<24x1xf32>
    %199 = vector.broadcast %198 : vector<24x1xf32> to vector<24x32xf32>
    %200 = arith.subf %190, %199 : vector<24x32xf32>
    %201 = arith.mulf %200, %200 : vector<24x32xf32>
    %cst_84 = arith.constant dense<0.000000e+00> : vector<24xf32>
    %202 = vector.multi_reduction <add>, %201, %cst_84 [1] : vector<24x32xf32> to vector<24xf32>
    %203 = vector.shape_cast %202 : vector<24xf32> to vector<24x1xf32>
    %cst_85 = arith.constant 3.200000e+01 : f32
    %204 = vector.broadcast %cst_85 : f32 to vector<24x1xf32>
    %205 = arith.divf %203, %204 : vector<24x1xf32>
    %cst_86 = arith.constant 9.99999974E-6 : f32
    %206 = vector.broadcast %cst_86 : f32 to vector<24x1xf32>
    %207 = arith.addf %205, %206 : vector<24x1xf32>
    %208 = math.rsqrt %207 : vector<24x1xf32>
    %209 = vector.broadcast %208 : vector<24x1xf32> to vector<24x32xf32>
    %210 = arith.mulf %200, %209 : vector<24x32xf32>
    %211 = vector.broadcast %192 : vector<1x32xf32> to vector<24x32xf32>
    %212 = arith.mulf %210, %211 : vector<24x32xf32>
    %213 = vector.broadcast %194 : vector<1x32xf32> to vector<24x32xf32>
    %214 = arith.addf %212, %213 : vector<24x32xf32>
    %215 = arith.truncf %214 : vector<24x32xf32> to vector<24x32xbf16>
    %c1_87 = arith.constant 1 : index
    %c0_88 = arith.constant 0 : index
    %c0_89 = arith.constant 0 : index
    %216 = vector.load %arg6[%c1_87, %c0_88, %c0_89] : memref<2x32x96xbf16, #tpu.memory_space<vmem>>, vector<1x32x96xbf16>
    %217 = vector.shape_cast %216 : vector<1x32x96xbf16> to vector<32x96xbf16>
    %cst_90 = arith.constant dense<0.000000e+00> : vector<24x96xf32>
    %218 = tpu.matmul %215, %217, %cst_90 {dimension_numbers = #tpu.dot_dimension_numbers<[1], [0], [0], [1], [0, 0, 1, 1], [], []>} : vector<24x32xbf16>, vector<32x96xbf16>, vector<24x96xf32> -> vector<24x96xf32>
    %c1_91 = arith.constant 1 : index
    %c0_92 = arith.constant 0 : index
    %c0_93 = arith.constant 0 : index
    %219 = vector.load %arg7[%c1_91, %c0_92, %c0_93] : memref<2x1x96xf32, #tpu.memory_space<vmem>>, vector<1x1x96xf32>
    %220 = vector.shape_cast %219 : vector<1x1x96xf32> to vector<1x96xf32>
    %221 = vector.broadcast %220 : vector<1x96xf32> to vector<24x96xf32>
    %222 = arith.addf %218, %221 : vector<24x96xf32>
    %223 = vector.extract_strided_slice %222 {offsets = [0, 0], sizes = [24, 32], strides = [1, 1]} : vector<24x96xf32> to vector<24x32xf32>
    %cst_94 = arith.constant 0.353553385 : f32
    %224 = vector.broadcast %cst_94 : f32 to vector<24x32xf32>
    %225 = arith.mulf %223, %224 : vector<24x32xf32>
    %226 = vector.extract_strided_slice %222 {offsets = [0, 32], sizes = [24, 32], strides = [1, 1]} : vector<24x96xf32> to vector<24x32xf32>
    %227 = vector.extract_strided_slice %222 {offsets = [0, 64], sizes = [24, 32], strides = [1, 1]} : vector<24x96xf32> to vector<24x32xf32>
    %228 = vector.extract_strided_slice %225 {offsets = [0, 0], sizes = [24, 8], strides = [1, 1]} : vector<24x32xf32> to vector<24x8xf32>
    %229 = arith.truncf %228 : vector<24x8xf32> to vector<24x8xbf16>
    %230 = vector.extract_strided_slice %226 {offsets = [0, 0], sizes = [24, 8], strides = [1, 1]} : vector<24x32xf32> to vector<24x8xf32>
    %231 = arith.truncf %230 : vector<24x8xf32> to vector<24x8xbf16>
    %232 = vector.extract_strided_slice %227 {offsets = [0, 0], sizes = [24, 8], strides = [1, 1]} : vector<24x32xf32> to vector<24x8xf32>
    %233 = arith.truncf %232 : vector<24x8xf32> to vector<24x8xbf16>
    %cst_95 = arith.constant dense<0.000000e+00> : vector<24x24xf32>
    %234 = tpu.matmul %229, %231, %cst_95 {dimension_numbers = #tpu.dot_dimension_numbers<[1], [1], [0], [0], [0, 0, 1, 0], [], []>} : vector<24x8xbf16>, vector<24x8xbf16>, vector<24x24xf32> -> vector<24x24xf32>
    %235 = vector.broadcast %5 : vector<1x24xf32> to vector<24x24xf32>
    %236 = arith.addf %234, %235 : vector<24x24xf32>
    %cst_96 = arith.constant dense<0xFF800000> : vector<24xf32>
    %237 = vector.multi_reduction <maximumf>, %236, %cst_96 [1] : vector<24x24xf32> to vector<24xf32>
    %238 = vector.shape_cast %237 : vector<24xf32> to vector<24x1xf32>
    %239 = vector.broadcast %238 : vector<24x1xf32> to vector<24x24xf32>
    %240 = arith.subf %236, %239 : vector<24x24xf32>
    %241 = math.exp %240 : vector<24x24xf32>
    %cst_97 = arith.constant dense<0.000000e+00> : vector<24xf32>
    %242 = vector.multi_reduction <add>, %241, %cst_97 [1] : vector<24x24xf32> to vector<24xf32>
    %243 = vector.shape_cast %242 : vector<24xf32> to vector<24x1xf32>
    %244 = tpu.reciprocal %243 {approx = true} : vector<24x1xf32> -> vector<24x1xf32>
    %245 = vector.broadcast %244 : vector<24x1xf32> to vector<24x24xf32>
    %246 = arith.mulf %241, %245 : vector<24x24xf32>
    %247 = arith.truncf %246 : vector<24x24xf32> to vector<24x24xbf16>
    %cst_98 = arith.constant dense<0.000000e+00> : vector<24x8xf32>
    %248 = tpu.matmul %247, %233, %cst_98 {dimension_numbers = #tpu.dot_dimension_numbers<[1], [0], [0], [1], [0, 0, 1, 1], [], []>} : vector<24x24xbf16>, vector<24x8xbf16>, vector<24x8xf32> -> vector<24x8xf32>
    %249 = vector.extract_strided_slice %225 {offsets = [0, 8], sizes = [24, 8], strides = [1, 1]} : vector<24x32xf32> to vector<24x8xf32>
    %250 = arith.truncf %249 : vector<24x8xf32> to vector<24x8xbf16>
    %251 = vector.extract_strided_slice %226 {offsets = [0, 8], sizes = [24, 8], strides = [1, 1]} : vector<24x32xf32> to vector<24x8xf32>
    %252 = arith.truncf %251 : vector<24x8xf32> to vector<24x8xbf16>
    %253 = vector.extract_strided_slice %227 {offsets = [0, 8], sizes = [24, 8], strides = [1, 1]} : vector<24x32xf32> to vector<24x8xf32>
    %254 = arith.truncf %253 : vector<24x8xf32> to vector<24x8xbf16>
    %cst_99 = arith.constant dense<0.000000e+00> : vector<24x24xf32>
    %255 = tpu.matmul %250, %252, %cst_99 {dimension_numbers = #tpu.dot_dimension_numbers<[1], [1], [0], [0], [0, 0, 1, 0], [], []>} : vector<24x8xbf16>, vector<24x8xbf16>, vector<24x24xf32> -> vector<24x24xf32>
    %256 = vector.broadcast %5 : vector<1x24xf32> to vector<24x24xf32>
    %257 = arith.addf %255, %256 : vector<24x24xf32>
    %cst_100 = arith.constant dense<0xFF800000> : vector<24xf32>
    %258 = vector.multi_reduction <maximumf>, %257, %cst_100 [1] : vector<24x24xf32> to vector<24xf32>
    %259 = vector.shape_cast %258 : vector<24xf32> to vector<24x1xf32>
    %260 = vector.broadcast %259 : vector<24x1xf32> to vector<24x24xf32>
    %261 = arith.subf %257, %260 : vector<24x24xf32>
    %262 = math.exp %261 : vector<24x24xf32>
    %cst_101 = arith.constant dense<0.000000e+00> : vector<24xf32>
    %263 = vector.multi_reduction <add>, %262, %cst_101 [1] : vector<24x24xf32> to vector<24xf32>
    %264 = vector.shape_cast %263 : vector<24xf32> to vector<24x1xf32>
    %265 = tpu.reciprocal %264 {approx = true} : vector<24x1xf32> -> vector<24x1xf32>
    %266 = vector.broadcast %265 : vector<24x1xf32> to vector<24x24xf32>
    %267 = arith.mulf %262, %266 : vector<24x24xf32>
    %268 = arith.truncf %267 : vector<24x24xf32> to vector<24x24xbf16>
    %cst_102 = arith.constant dense<0.000000e+00> : vector<24x8xf32>
    %269 = tpu.matmul %268, %254, %cst_102 {dimension_numbers = #tpu.dot_dimension_numbers<[1], [0], [0], [1], [0, 0, 1, 1], [], []>} : vector<24x24xbf16>, vector<24x8xbf16>, vector<24x8xf32> -> vector<24x8xf32>
    %270 = vector.extract_strided_slice %225 {offsets = [0, 16], sizes = [24, 8], strides = [1, 1]} : vector<24x32xf32> to vector<24x8xf32>
    %271 = arith.truncf %270 : vector<24x8xf32> to vector<24x8xbf16>
    %272 = vector.extract_strided_slice %226 {offsets = [0, 16], sizes = [24, 8], strides = [1, 1]} : vector<24x32xf32> to vector<24x8xf32>
    %273 = arith.truncf %272 : vector<24x8xf32> to vector<24x8xbf16>
    %274 = vector.extract_strided_slice %227 {offsets = [0, 16], sizes = [24, 8], strides = [1, 1]} : vector<24x32xf32> to vector<24x8xf32>
    %275 = arith.truncf %274 : vector<24x8xf32> to vector<24x8xbf16>
    %cst_103 = arith.constant dense<0.000000e+00> : vector<24x24xf32>
    %276 = tpu.matmul %271, %273, %cst_103 {dimension_numbers = #tpu.dot_dimension_numbers<[1], [1], [0], [0], [0, 0, 1, 0], [], []>} : vector<24x8xbf16>, vector<24x8xbf16>, vector<24x24xf32> -> vector<24x24xf32>
    %277 = vector.broadcast %5 : vector<1x24xf32> to vector<24x24xf32>
    %278 = arith.addf %276, %277 : vector<24x24xf32>
    %cst_104 = arith.constant dense<0xFF800000> : vector<24xf32>
    %279 = vector.multi_reduction <maximumf>, %278, %cst_104 [1] : vector<24x24xf32> to vector<24xf32>
    %280 = vector.shape_cast %279 : vector<24xf32> to vector<24x1xf32>
    %281 = vector.broadcast %280 : vector<24x1xf32> to vector<24x24xf32>
    %282 = arith.subf %278, %281 : vector<24x24xf32>
    %283 = math.exp %282 : vector<24x24xf32>
    %cst_105 = arith.constant dense<0.000000e+00> : vector<24xf32>
    %284 = vector.multi_reduction <add>, %283, %cst_105 [1] : vector<24x24xf32> to vector<24xf32>
    %285 = vector.shape_cast %284 : vector<24xf32> to vector<24x1xf32>
    %286 = tpu.reciprocal %285 {approx = true} : vector<24x1xf32> -> vector<24x1xf32>
    %287 = vector.broadcast %286 : vector<24x1xf32> to vector<24x24xf32>
    %288 = arith.mulf %283, %287 : vector<24x24xf32>
    %289 = arith.truncf %288 : vector<24x24xf32> to vector<24x24xbf16>
    %cst_106 = arith.constant dense<0.000000e+00> : vector<24x8xf32>
    %290 = tpu.matmul %289, %275, %cst_106 {dimension_numbers = #tpu.dot_dimension_numbers<[1], [0], [0], [1], [0, 0, 1, 1], [], []>} : vector<24x24xbf16>, vector<24x8xbf16>, vector<24x8xf32> -> vector<24x8xf32>
    %291 = vector.extract_strided_slice %225 {offsets = [0, 24], sizes = [24, 8], strides = [1, 1]} : vector<24x32xf32> to vector<24x8xf32>
    %292 = arith.truncf %291 : vector<24x8xf32> to vector<24x8xbf16>
    %293 = vector.extract_strided_slice %226 {offsets = [0, 24], sizes = [24, 8], strides = [1, 1]} : vector<24x32xf32> to vector<24x8xf32>
    %294 = arith.truncf %293 : vector<24x8xf32> to vector<24x8xbf16>
    %295 = vector.extract_strided_slice %227 {offsets = [0, 24], sizes = [24, 8], strides = [1, 1]} : vector<24x32xf32> to vector<24x8xf32>
    %296 = arith.truncf %295 : vector<24x8xf32> to vector<24x8xbf16>
    %cst_107 = arith.constant dense<0.000000e+00> : vector<24x24xf32>
    %297 = tpu.matmul %292, %294, %cst_107 {dimension_numbers = #tpu.dot_dimension_numbers<[1], [1], [0], [0], [0, 0, 1, 0], [], []>} : vector<24x8xbf16>, vector<24x8xbf16>, vector<24x24xf32> -> vector<24x24xf32>
    %298 = vector.broadcast %5 : vector<1x24xf32> to vector<24x24xf32>
    %299 = arith.addf %297, %298 : vector<24x24xf32>
    %cst_108 = arith.constant dense<0xFF800000> : vector<24xf32>
    %300 = vector.multi_reduction <maximumf>, %299, %cst_108 [1] : vector<24x24xf32> to vector<24xf32>
    %301 = vector.shape_cast %300 : vector<24xf32> to vector<24x1xf32>
    %302 = vector.broadcast %301 : vector<24x1xf32> to vector<24x24xf32>
    %303 = arith.subf %299, %302 : vector<24x24xf32>
    %304 = math.exp %303 : vector<24x24xf32>
    %cst_109 = arith.constant dense<0.000000e+00> : vector<24xf32>
    %305 = vector.multi_reduction <add>, %304, %cst_109 [1] : vector<24x24xf32> to vector<24xf32>
    %306 = vector.shape_cast %305 : vector<24xf32> to vector<24x1xf32>
    %307 = tpu.reciprocal %306 {approx = true} : vector<24x1xf32> -> vector<24x1xf32>
    %308 = vector.broadcast %307 : vector<24x1xf32> to vector<24x24xf32>
    %309 = arith.mulf %304, %308 : vector<24x24xf32>
    %310 = arith.truncf %309 : vector<24x24xf32> to vector<24x24xbf16>
    %cst_110 = arith.constant dense<0.000000e+00> : vector<24x8xf32>
    %311 = tpu.matmul %310, %296, %cst_110 {dimension_numbers = #tpu.dot_dimension_numbers<[1], [0], [0], [1], [0, 0, 1, 1], [], []>} : vector<24x24xbf16>, vector<24x8xbf16>, vector<24x8xf32> -> vector<24x8xf32>
    %312 = tpu.concatenate %248, %269, %290, %311 in 1 : vector<24x8xf32>, vector<24x8xf32>, vector<24x8xf32>, vector<24x8xf32> -> vector<24x32xf32>
    %313 = arith.truncf %312 : vector<24x32xf32> to vector<24x32xbf16>
    %c1_111 = arith.constant 1 : index
    %c0_112 = arith.constant 0 : index
    %c0_113 = arith.constant 0 : index
    %314 = vector.load %arg8[%c1_111, %c0_112, %c0_113] : memref<2x32x32xbf16, #tpu.memory_space<vmem>>, vector<1x32x32xbf16>
    %315 = vector.shape_cast %314 : vector<1x32x32xbf16> to vector<32x32xbf16>
    %cst_114 = arith.constant dense<0.000000e+00> : vector<24x32xf32>
    %316 = tpu.matmul %313, %315, %cst_114 {dimension_numbers = #tpu.dot_dimension_numbers<[1], [0], [0], [1], [0, 0, 1, 1], [], []>} : vector<24x32xbf16>, vector<32x32xbf16>, vector<24x32xf32> -> vector<24x32xf32>
    %c1_115 = arith.constant 1 : index
    %c0_116 = arith.constant 0 : index
    %c0_117 = arith.constant 0 : index
    %317 = vector.load %arg9[%c1_115, %c0_116, %c0_117] : memref<2x1x32xf32, #tpu.memory_space<vmem>>, vector<1x1x32xf32>
    %318 = vector.shape_cast %317 : vector<1x1x32xf32> to vector<1x32xf32>
    %319 = vector.broadcast %318 : vector<1x32xf32> to vector<24x32xf32>
    %320 = arith.addf %316, %319 : vector<24x32xf32>
    %321 = arith.addf %190, %320 : vector<24x32xf32>
    %c1_118 = arith.constant 1 : index
    %c0_119 = arith.constant 0 : index
    %c0_120 = arith.constant 0 : index
    %322 = vector.load %arg10[%c1_118, %c0_119, %c0_120] : memref<2x1x32xf32, #tpu.memory_space<vmem>>, vector<1x1x32xf32>
    %323 = vector.shape_cast %322 : vector<1x1x32xf32> to vector<1x32xf32>
    %c1_121 = arith.constant 1 : index
    %c0_122 = arith.constant 0 : index
    %c0_123 = arith.constant 0 : index
    %324 = vector.load %arg11[%c1_121, %c0_122, %c0_123] : memref<2x1x32xf32, #tpu.memory_space<vmem>>, vector<1x1x32xf32>
    %325 = vector.shape_cast %324 : vector<1x1x32xf32> to vector<1x32xf32>
    %cst_124 = arith.constant dense<0.000000e+00> : vector<24xf32>
    %326 = vector.multi_reduction <add>, %321, %cst_124 [1] : vector<24x32xf32> to vector<24xf32>
    %327 = vector.shape_cast %326 : vector<24xf32> to vector<24x1xf32>
    %cst_125 = arith.constant 3.200000e+01 : f32
    %328 = vector.broadcast %cst_125 : f32 to vector<24x1xf32>
    %329 = arith.divf %327, %328 : vector<24x1xf32>
    %330 = vector.broadcast %329 : vector<24x1xf32> to vector<24x32xf32>
    %331 = arith.subf %321, %330 : vector<24x32xf32>
    %332 = arith.mulf %331, %331 : vector<24x32xf32>
    %cst_126 = arith.constant dense<0.000000e+00> : vector<24xf32>
    %333 = vector.multi_reduction <add>, %332, %cst_126 [1] : vector<24x32xf32> to vector<24xf32>
    %334 = vector.shape_cast %333 : vector<24xf32> to vector<24x1xf32>
    %cst_127 = arith.constant 3.200000e+01 : f32
    %335 = vector.broadcast %cst_127 : f32 to vector<24x1xf32>
    %336 = arith.divf %334, %335 : vector<24x1xf32>
    %cst_128 = arith.constant 9.99999974E-6 : f32
    %337 = vector.broadcast %cst_128 : f32 to vector<24x1xf32>
    %338 = arith.addf %336, %337 : vector<24x1xf32>
    %339 = math.rsqrt %338 : vector<24x1xf32>
    %340 = vector.broadcast %339 : vector<24x1xf32> to vector<24x32xf32>
    %341 = arith.mulf %331, %340 : vector<24x32xf32>
    %342 = vector.broadcast %323 : vector<1x32xf32> to vector<24x32xf32>
    %343 = arith.mulf %341, %342 : vector<24x32xf32>
    %344 = vector.broadcast %325 : vector<1x32xf32> to vector<24x32xf32>
    %345 = arith.addf %343, %344 : vector<24x32xf32>
    %346 = arith.truncf %345 : vector<24x32xf32> to vector<24x32xbf16>
    %c1_129 = arith.constant 1 : index
    %c0_130 = arith.constant 0 : index
    %c0_131 = arith.constant 0 : index
    %347 = vector.load %arg12[%c1_129, %c0_130, %c0_131] : memref<2x32x128xbf16, #tpu.memory_space<vmem>>, vector<1x32x128xbf16>
    %348 = vector.shape_cast %347 : vector<1x32x128xbf16> to vector<32x128xbf16>
    %cst_132 = arith.constant dense<0.000000e+00> : vector<24x128xf32>
    %349 = tpu.matmul %346, %348, %cst_132 {dimension_numbers = #tpu.dot_dimension_numbers<[1], [0], [0], [1], [0, 0, 1, 1], [], []>} : vector<24x32xbf16>, vector<32x128xbf16>, vector<24x128xf32> -> vector<24x128xf32>
    %c1_133 = arith.constant 1 : index
    %c0_134 = arith.constant 0 : index
    %c0_135 = arith.constant 0 : index
    %350 = vector.load %arg13[%c1_133, %c0_134, %c0_135] : memref<2x1x128xf32, #tpu.memory_space<vmem>>, vector<1x1x128xf32>
    %351 = vector.shape_cast %350 : vector<1x1x128xf32> to vector<1x128xf32>
    %352 = vector.broadcast %351 : vector<1x128xf32> to vector<24x128xf32>
    %353 = arith.addf %349, %352 : vector<24x128xf32>
    %cst_136 = arith.constant 5.000000e-01 : f32
    %354 = vector.broadcast %cst_136 : f32 to vector<24x128xf32>
    %355 = arith.mulf %354, %353 : vector<24x128xf32>
    %cst_137 = arith.constant 4.471500e-02 : f32
    %356 = vector.broadcast %cst_137 : f32 to vector<24x128xf32>
    %357 = arith.mulf %356, %353 : vector<24x128xf32>
    %358 = arith.mulf %357, %353 : vector<24x128xf32>
    %359 = arith.mulf %358, %353 : vector<24x128xf32>
    %360 = arith.addf %353, %359 : vector<24x128xf32>
    %cst_138 = arith.constant 0.797884583 : f32
    %361 = vector.broadcast %cst_138 : f32 to vector<24x128xf32>
    %362 = arith.mulf %361, %360 : vector<24x128xf32>
    %363 = math.tanh %362 : vector<24x128xf32>
    %cst_139 = arith.constant 1.000000e+00 : f32
    %364 = vector.broadcast %cst_139 : f32 to vector<24x128xf32>
    %365 = arith.addf %364, %363 : vector<24x128xf32>
    %366 = arith.mulf %355, %365 : vector<24x128xf32>
    %367 = arith.truncf %366 : vector<24x128xf32> to vector<24x128xbf16>
    %c1_140 = arith.constant 1 : index
    %c0_141 = arith.constant 0 : index
    %c0_142 = arith.constant 0 : index
    %368 = vector.load %arg14[%c1_140, %c0_141, %c0_142] : memref<2x128x32xbf16, #tpu.memory_space<vmem>>, vector<1x128x32xbf16>
    %369 = vector.shape_cast %368 : vector<1x128x32xbf16> to vector<128x32xbf16>
    %cst_143 = arith.constant dense<0.000000e+00> : vector<24x32xf32>
    %370 = tpu.matmul %367, %369, %cst_143 {dimension_numbers = #tpu.dot_dimension_numbers<[1], [0], [0], [1], [0, 0, 1, 1], [], []>} : vector<24x128xbf16>, vector<128x32xbf16>, vector<24x32xf32> -> vector<24x32xf32>
    %c1_144 = arith.constant 1 : index
    %c0_145 = arith.constant 0 : index
    %c0_146 = arith.constant 0 : index
    %371 = vector.load %arg15[%c1_144, %c0_145, %c0_146] : memref<2x1x32xf32, #tpu.memory_space<vmem>>, vector<1x1x32xf32>
    %372 = vector.shape_cast %371 : vector<1x1x32xf32> to vector<1x32xf32>
    %373 = vector.broadcast %372 : vector<1x32xf32> to vector<24x32xf32>
    %374 = arith.addf %370, %373 : vector<24x32xf32>
    %375 = arith.addf %321, %374 : vector<24x32xf32>
    %c0_147 = arith.constant 0 : index
    %c0_148 = arith.constant 0 : index
    %376 = vector.load %arg16[%c0_147, %c0_148] : memref<1x32xf32, #tpu.memory_space<vmem>>, vector<1x32xf32>
    %c0_149 = arith.constant 0 : index
    %c0_150 = arith.constant 0 : index
    %377 = vector.load %arg17[%c0_149, %c0_150] : memref<1x32xf32, #tpu.memory_space<vmem>>, vector<1x32xf32>
    %cst_151 = arith.constant dense<0.000000e+00> : vector<24xf32>
    %378 = vector.multi_reduction <add>, %375, %cst_151 [1] : vector<24x32xf32> to vector<24xf32>
    %379 = vector.shape_cast %378 : vector<24xf32> to vector<24x1xf32>
    %cst_152 = arith.constant 3.200000e+01 : f32
    %380 = vector.broadcast %cst_152 : f32 to vector<24x1xf32>
    %381 = arith.divf %379, %380 : vector<24x1xf32>
    %382 = vector.broadcast %381 : vector<24x1xf32> to vector<24x32xf32>
    %383 = arith.subf %375, %382 : vector<24x32xf32>
    %384 = arith.mulf %383, %383 : vector<24x32xf32>
    %cst_153 = arith.constant dense<0.000000e+00> : vector<24xf32>
    %385 = vector.multi_reduction <add>, %384, %cst_153 [1] : vector<24x32xf32> to vector<24xf32>
    %386 = vector.shape_cast %385 : vector<24xf32> to vector<24x1xf32>
    %cst_154 = arith.constant 3.200000e+01 : f32
    %387 = vector.broadcast %cst_154 : f32 to vector<24x1xf32>
    %388 = arith.divf %386, %387 : vector<24x1xf32>
    %cst_155 = arith.constant 9.99999974E-6 : f32
    %389 = vector.broadcast %cst_155 : f32 to vector<24x1xf32>
    %390 = arith.addf %388, %389 : vector<24x1xf32>
    %391 = math.rsqrt %390 : vector<24x1xf32>
    %392 = vector.broadcast %391 : vector<24x1xf32> to vector<24x32xf32>
    %393 = arith.mulf %383, %392 : vector<24x32xf32>
    %394 = vector.broadcast %376 : vector<1x32xf32> to vector<24x32xf32>
    %395 = arith.mulf %393, %394 : vector<24x32xf32>
    %396 = vector.broadcast %377 : vector<1x32xf32> to vector<24x32xf32>
    %397 = arith.addf %395, %396 : vector<24x32xf32>
    %398 = arith.truncf %397 : vector<24x32xf32> to vector<24x32xbf16>
    %c0_156 = arith.constant 0 : index
    %c0_157 = arith.constant 0 : index
    %399 = vector.load %arg18[%c0_156, %c0_157] : memref<32x48xbf16, #tpu.memory_space<vmem>>, vector<32x48xbf16>
    %cst_158 = arith.constant dense<0.000000e+00> : vector<24x48xf32>
    %400 = tpu.matmul %398, %399, %cst_158 {dimension_numbers = #tpu.dot_dimension_numbers<[1], [0], [0], [1], [0, 0, 1, 1], [], []>} : vector<24x32xbf16>, vector<32x48xbf16>, vector<24x48xf32> -> vector<24x48xf32>
    %c0_159 = arith.constant 0 : index
    %c0_160 = arith.constant 0 : index
    %401 = vector.load %arg19[%c0_159, %c0_160] : memref<1x48xf32, #tpu.memory_space<vmem>>, vector<1x48xf32>
    %402 = vector.broadcast %401 : vector<1x48xf32> to vector<24x48xf32>
    %403 = arith.addf %400, %402 : vector<24x48xf32>
    %c0_161 = arith.constant 0 : index
    %c0_162 = arith.constant 0 : index
    %c0_163 = arith.constant 0 : index
    %404 = vector.load %arg20[%c0_161, %c0_162, %c0_163] : memref<1x24x48xf32, #tpu.memory_space<vmem>>, vector<1x24x48xf32>
    %405 = vector.shape_cast %404 : vector<1x24x48xf32> to vector<24x48xf32>
    %406 = vector.shape_cast %403 : vector<24x48xf32> to vector<1x24x48xf32>
    tpu.vector_store %arg20[%c0_161, %c0_162, %c0_163], %406 {strides = array<i32>} : memref<1x24x48xf32, #tpu.memory_space<vmem>>, vector<1x24x48xf32>,
    return
  }
  func.func @transform_0(%arg0: i32) -> (i32, i32, i32) {
    %c0_i32 = arith.constant 0 : i32
    %c0_i32_0 = arith.constant 0 : i32
    %c0_i32_1 = arith.constant 0 : i32
    return %arg0, %c0_i32, %c0_i32_0 : i32, i32, i32
  }
  func.func @transform_1(%arg0: i32) -> (i32, i32, i32) {
    %c0_i32 = arith.constant 0 : i32
    %c0_i32_0 = arith.constant 0 : i32
    %c0_i32_1 = arith.constant 0 : i32
    %c0_i32_2 = arith.constant 0 : i32
    return %c0_i32, %c0_i32_0, %c0_i32_1 : i32, i32, i32
  }
  func.func @transform_2(%arg0: i32) -> (i32, i32) {
    %c0_i32 = arith.constant 0 : i32
    %c0_i32_0 = arith.constant 0 : i32
    %c0_i32_1 = arith.constant 0 : i32
    return %c0_i32, %c0_i32_0 : i32, i32
  }
  func.func @transform_3(%arg0: i32) -> (i32, i32, i32) {
    %c0_i32 = arith.constant 0 : i32
    %c0_i32_0 = arith.constant 0 : i32
    %c0_i32_1 = arith.constant 0 : i32
    %c0_i32_2 = arith.constant 0 : i32
    return %c0_i32, %c0_i32_0, %c0_i32_1 : i32, i32, i32
  }
  func.func @transform_4(%arg0: i32) -> (i32, i32, i32) {
    %c0_i32 = arith.constant 0 : i32
    %c0_i32_0 = arith.constant 0 : i32
    %c0_i32_1 = arith.constant 0 : i32
    %c0_i32_2 = arith.constant 0 : i32
    return %c0_i32, %c0_i32_0, %c0_i32_1 : i32, i32, i32
  }
  func.func @transform_5(%arg0: i32) -> (i32, i32, i32) {
    %c0_i32 = arith.constant 0 : i32
    %c0_i32_0 = arith.constant 0 : i32
    %c0_i32_1 = arith.constant 0 : i32
    %c0_i32_2 = arith.constant 0 : i32
    return %c0_i32, %c0_i32_0, %c0_i32_1 : i32, i32, i32
  }
  func.func @transform_6(%arg0: i32) -> (i32, i32, i32) {
    %c0_i32 = arith.constant 0 : i32
    %c0_i32_0 = arith.constant 0 : i32
    %c0_i32_1 = arith.constant 0 : i32
    %c0_i32_2 = arith.constant 0 : i32
    return %c0_i32, %c0_i32_0, %c0_i32_1 : i32, i32, i32
  }
  func.func @transform_7(%arg0: i32) -> (i32, i32, i32) {
    %c0_i32 = arith.constant 0 : i32
    %c0_i32_0 = arith.constant 0 : i32
    %c0_i32_1 = arith.constant 0 : i32
    %c0_i32_2 = arith.constant 0 : i32
    return %c0_i32, %c0_i32_0, %c0_i32_1 : i32, i32, i32
  }
  func.func @transform_8(%arg0: i32) -> (i32, i32, i32) {
    %c0_i32 = arith.constant 0 : i32
    %c0_i32_0 = arith.constant 0 : i32
    %c0_i32_1 = arith.constant 0 : i32
    %c0_i32_2 = arith.constant 0 : i32
    return %c0_i32, %c0_i32_0, %c0_i32_1 : i32, i32, i32
  }
  func.func @transform_9(%arg0: i32) -> (i32, i32, i32) {
    %c0_i32 = arith.constant 0 : i32
    %c0_i32_0 = arith.constant 0 : i32
    %c0_i32_1 = arith.constant 0 : i32
    %c0_i32_2 = arith.constant 0 : i32
    return %c0_i32, %c0_i32_0, %c0_i32_1 : i32, i32, i32
  }
  func.func @transform_10(%arg0: i32) -> (i32, i32, i32) {
    %c0_i32 = arith.constant 0 : i32
    %c0_i32_0 = arith.constant 0 : i32
    %c0_i32_1 = arith.constant 0 : i32
    %c0_i32_2 = arith.constant 0 : i32
    return %c0_i32, %c0_i32_0, %c0_i32_1 : i32, i32, i32
  }
  func.func @transform_11(%arg0: i32) -> (i32, i32, i32) {
    %c0_i32 = arith.constant 0 : i32
    %c0_i32_0 = arith.constant 0 : i32
    %c0_i32_1 = arith.constant 0 : i32
    %c0_i32_2 = arith.constant 0 : i32
    return %c0_i32, %c0_i32_0, %c0_i32_1 : i32, i32, i32
  }
  func.func @transform_12(%arg0: i32) -> (i32, i32, i32) {
    %c0_i32 = arith.constant 0 : i32
    %c0_i32_0 = arith.constant 0 : i32
    %c0_i32_1 = arith.constant 0 : i32
    %c0_i32_2 = arith.constant 0 : i32
    return %c0_i32, %c0_i32_0, %c0_i32_1 : i32, i32, i32
  }
  func.func @transform_13(%arg0: i32) -> (i32, i32, i32) {
    %c0_i32 = arith.constant 0 : i32
    %c0_i32_0 = arith.constant 0 : i32
    %c0_i32_1 = arith.constant 0 : i32
    %c0_i32_2 = arith.constant 0 : i32
    return %c0_i32, %c0_i32_0, %c0_i32_1 : i32, i32, i32
  }
  func.func @transform_14(%arg0: i32) -> (i32, i32, i32) {
    %c0_i32 = arith.constant 0 : i32
    %c0_i32_0 = arith.constant 0 : i32
    %c0_i32_1 = arith.constant 0 : i32
    %c0_i32_2 = arith.constant 0 : i32
    return %c0_i32, %c0_i32_0, %c0_i32_1 : i32, i32, i32
  }
  func.func @transform_15(%arg0: i32) -> (i32, i32) {
    %c0_i32 = arith.constant 0 : i32
    %c0_i32_0 = arith.constant 0 : i32
    %c0_i32_1 = arith.constant 0 : i32
    return %c0_i32, %c0_i32_0 : i32, i32
  }
  func.func @transform_16(%arg0: i32) -> (i32, i32) {
    %c0_i32 = arith.constant 0 : i32
    %c0_i32_0 = arith.constant 0 : i32
    %c0_i32_1 = arith.constant 0 : i32
    return %c0_i32, %c0_i32_0 : i32, i32
  }
  func.func @transform_17(%arg0: i32) -> (i32, i32) {
    %c0_i32 = arith.constant 0 : i32
    %c0_i32_0 = arith.constant 0 : i32
    %c0_i32_1 = arith.constant 0 : i32
    return %c0_i32, %c0_i32_0 : i32, i32
  }
  func.func @transform_18(%arg0: i32) -> (i32, i32) {
    %c0_i32 = arith.constant 0 : i32
    %c0_i32_0 = arith.constant 0 : i32
    %c0_i32_1 = arith.constant 0 : i32
    return %c0_i32, %c0_i32_0 : i32, i32
  }
  func.func @transform_19(%arg0: i32) -> (i32, i32, i32) {
    %c0_i32 = arith.constant 0 : i32
    %c0_i32_0 = arith.constant 0 : i32
    %c0_i32_1 = arith.constant 0 : i32
    return %arg0, %c0_i32, %c0_i32_0 : i32, i32, i32
  }
}

module attributes {stable_mosaic.version = 11 : i64} {
  func.func @_loss_kernel(%arg0: i32, %arg1: memref<2x16x48xf32, #tpu.memory_space<vmem>>, %arg2: memref<2x16x48xf32, #tpu.memory_space<vmem>>, %arg3: memref<2x16xf32, #tpu.memory_space<vmem>>, %arg4: memref<1x1xf32, #tpu.memory_space<vmem>>) attributes {dimension_semantics = [#tpu.dimension_semantics<arbitrary>], iteration_bounds = array<i64: 1>, scalar_prefetch = 0 : i64, scratch_operands = 0 : i64, tpu.core_type = #tpu.core_type<tc>, window_params = [{pipeline_mode = #tpu.pipeline_mode<synchronous>, transform_indices = @transform_0, window_bounds = array<i64: 2, 16, 48>}, {pipeline_mode = #tpu.pipeline_mode<synchronous>, transform_indices = @transform_1, window_bounds = array<i64: 2, 16, 48>}, {pipeline_mode = #tpu.pipeline_mode<synchronous>, transform_indices = @transform_2, window_bounds = array<i64: 2, 16>}, {pipeline_mode = #tpu.pipeline_mode<synchronous>, transform_indices = @transform_3, window_bounds = array<i64: 1, 1>}]} {
    %c0 = arith.constant 0 : index
    %c0_0 = arith.constant 0 : index
    %c0_1 = arith.constant 0 : index
    %0 = vector.load %arg1[%c0, %c0_0, %c0_1] : memref<2x16x48xf32, #tpu.memory_space<vmem>>, vector<2x16x48xf32>
    %c0_2 = arith.constant 0 : index
    %c0_3 = arith.constant 0 : index
    %c0_4 = arith.constant 0 : index
    %1 = vector.load %arg2[%c0_2, %c0_3, %c0_4] : memref<2x16x48xf32, #tpu.memory_space<vmem>>, vector<2x16x48xf32>
    %2 = arith.subf %0, %1 : vector<2x16x48xf32>
    %3 = arith.mulf %2, %2 : vector<2x16x48xf32>
    %cst = arith.constant dense<0.000000e+00> : vector<2x16xf32>
    %4 = vector.multi_reduction <add>, %3, %cst [2] : vector<2x16x48xf32> to vector<2x16xf32>
    %cst_5 = arith.constant 4.800000e+01 : f32
    %5 = vector.broadcast %cst_5 : f32 to vector<2x16xf32>
    %6 = arith.divf %4, %5 : vector<2x16xf32>
    %c0_6 = arith.constant 0 : index
    %c0_7 = arith.constant 0 : index
    %7 = vector.load %arg3[%c0_6, %c0_7] : memref<2x16xf32, #tpu.memory_space<vmem>>, vector<2x16xf32>
    %8 = arith.mulf %6, %7 : vector<2x16xf32>
    %9 = vector.shape_cast %8 : vector<2x16xf32> to vector<1x2x16xf32>
    %cst_8 = arith.constant dense<0.000000e+00> : vector<1xf32>
    %10 = vector.multi_reduction <add>, %9, %cst_8 [1, 2] : vector<1x2x16xf32> to vector<1xf32>
    %11 = vector.shape_cast %10 : vector<1xf32> to vector<1x1x1xf32>
    %12 = vector.extract %11[0, 0, 0] : f32 from vector<1x1x1xf32>
    %13 = vector.shape_cast %7 : vector<2x16xf32> to vector<1x2x16xf32>
    %cst_9 = arith.constant dense<0.000000e+00> : vector<1xf32>
    %14 = vector.multi_reduction <add>, %13, %cst_9 [1, 2] : vector<1x2x16xf32> to vector<1xf32>
    %15 = vector.shape_cast %14 : vector<1xf32> to vector<1x1x1xf32>
    %16 = vector.extract %15[0, 0, 0] : f32 from vector<1x1x1xf32>
    %17 = arith.divf %12, %16 : f32
    %cst_10 = arith.constant 1.000000e+00 : f32
    %18 = vector.broadcast %cst_10 : f32 to vector<1x1xf32>
    %19 = vector.broadcast %17 : f32 to vector<1x1xf32>
    %20 = arith.mulf %19, %18 : vector<1x1xf32>
    %c0_11 = arith.constant 0 : index
    %c0_12 = arith.constant 0 : index
    %21 = vector.load %arg4[%c0_11, %c0_12] : memref<1x1xf32, #tpu.memory_space<vmem>>, vector<1x1xf32>
    tpu.vector_store %arg4[%c0_11, %c0_12], %20 {strides = array<i32>} : memref<1x1xf32, #tpu.memory_space<vmem>>, vector<1x1xf32>,
    return
  }
  func.func @transform_0(%arg0: i32) -> (i32, i32, i32) {
    %c0_i32 = arith.constant 0 : i32
    %c0_i32_0 = arith.constant 0 : i32
    %c0_i32_1 = arith.constant 0 : i32
    %c0_i32_2 = arith.constant 0 : i32
    return %c0_i32, %c0_i32_0, %c0_i32_1 : i32, i32, i32
  }
  func.func @transform_1(%arg0: i32) -> (i32, i32, i32) {
    %c0_i32 = arith.constant 0 : i32
    %c0_i32_0 = arith.constant 0 : i32
    %c0_i32_1 = arith.constant 0 : i32
    %c0_i32_2 = arith.constant 0 : i32
    return %c0_i32, %c0_i32_0, %c0_i32_1 : i32, i32, i32
  }
  func.func @transform_2(%arg0: i32) -> (i32, i32) {
    %c0_i32 = arith.constant 0 : i32
    %c0_i32_0 = arith.constant 0 : i32
    %c0_i32_1 = arith.constant 0 : i32
    return %c0_i32, %c0_i32_0 : i32, i32
  }
  func.func @transform_3(%arg0: i32) -> (i32, i32) {
    %c0_i32 = arith.constant 0 : i32
    %c0_i32_0 = arith.constant 0 : i32
    %c0_i32_1 = arith.constant 0 : i32
    return %c0_i32, %c0_i32_0 : i32, i32
  }
}

</mosaic_0001>

<llo_original>
// kernel: forward.4
$region0: #{forward.4}
  #allocation0 [shape = 'u32[]', space=smem, size = 0x4, offset = 0x4, fixed_abs, tag = 'smem constant byte address 0x4 - core index']
  #allocation1 [shape = 'u32[144,128]{1,0:T(1,128)}', space=vmem, size = 0x12000, scoped, tag = 'internal scratch']
  %s0 = inlined_call_operand.vmem [shape: f32[32,48], index: 0, kind: input, shape index: {}]
  %s1 = inlined_call_operand.vmem [shape: bf16[48,32], index: 1, kind: input, shape index: {}]
  %s2 = inlined_call_operand.vmem [shape: f32[1,32], index: 2, kind: input, shape index: {}]
  %s3 = inlined_call_operand.vmem [shape: f32[32,32], index: 3, kind: input, shape index: {}]
  %s4 = inlined_call_operand.vmem [shape: f32[32,32], index: 4, kind: output, shape index: {}]
  %s5 = sld [smem:[#allocation0]]
  $region26: #{forward.4} parent=0
    _
  %s7 = ssub.s32 1, %s5
  %s8 = scalar_select 0, %s7, %s5
  // Predicated region
  $region2: #{forward.4} parent=0 // pred_check
    _
  $region3: #{forward.4} parent=0 // pred_check_branch
    %10 = sbr.rel (0) target = $region5
  $region4: #{forward.4} parent=0 // pred_region
    _
  $region5: #{forward.4} parent=0 // pred_fallthru
    _
  // Predicated region
  $region6: #{forward.4} parent=0 // pred_check
    _
  $region7: #{forward.4} parent=0 // pred_check_branch
    %12 = sbr.rel (0) target = $region9
  $region8: #{forward.4} parent=0 // pred_region
    _
  $region9: #{forward.4} parent=0 // pred_fallthru
    _
  // Predicated region
  $region10: #{forward.4} parent=0 // pred_check
    _
  $region11: #{forward.4} parent=0 // pred_check_branch
    %14 = sbr.rel (0) target = $region13
  $region12: #{forward.4} parent=0 // pred_region
    _
  $region13: #{forward.4} parent=0 // pred_fallthru
    _
  // Predicated region
  $region14: #{forward.4} parent=0 // pred_check
    _
  $region15: #{forward.4} parent=0 // pred_check_branch
    %16 = sbr.rel (0) target = $region17
  $region16: #{forward.4} parent=0 // pred_region
    _
  $region17: #{forward.4} parent=0 // pred_fallthru
    _
  %v18 = vld [vmem:[%s0] sm:$0xff]
  %v19 = vld [vmem:[%s0 + $0x8] sm:$0xff]
  %v20 = vld [vmem:[%s0 + $0x10] sm:$0xff]
  %v21 = vld [vmem:[%s0 + $0x18] sm:$0xff]
  %v22 = vpack.c.bf16 %v19, %v18
  %v23 = vpack.c.bf16 %v21, %v20
  %v24 = vld [vmem:[%s1] sm:$0xf]
  %v25 = vld [vmem:[%s1 + $0x4] sm:$0xf]
  %v26 = vld [vmem:[%s1 + $0x8] sm:$0xf]
  %v27 = vld [vmem:[%s1 + $0xc] sm:$0xf]
  %v28 = vld [vmem:[%s1 + $0x10] sm:$0xf]
  %v29 = vld [vmem:[%s1 + $0x14] sm:$0xf]
  %v30 = vld [vmem:[%s2] sm:$0x1]
  %v32 = vlaneseq
  %v33 = vshrl.u32 %v32, 7
  %v34 = vsub.s32 0, %v33
  %v35 = vrot.slane %v30, %v34
  %v43 = vunpack.c.l.b16 %v24
  %v44 = vunpack.c.l.b16 %v25
  %v45 = vunpack.c.l.b16 %v26
  %v46 = vunpack.c.l.b16 %v27
  %v47 = vunpack.c.l.b16 %v28
  %v48 = vunpack.c.l.b16 %v29
  %v49 = vpack.c.b16 %v44, %v43
  %v50 = vpack.c.b16 %v46, %v45
  %v51 = vpack.c.b16 %v48, %v47
  %vm55 = vcmask 392192
  %v57 = vsel %vm55, %v22, 0
  %v60 = vsel %vm55, %v23, 0
  %62 = vmatprep.subr.bf16.mxu0 0
  %63 = vmatpush1.bf16.msra.mxu0 %v49
  %64 = vmatprep.subr.bf16.mxu0 0
  %65 = vmatpush1.bf16.msra.mxu0 %v50
  %66 = vmatprep.subr.bf16.mxu0 0
  %67 = vmatpush1.bf16.msra.mxu0 %v51
  %68 = vmatprep.subr.bf16.mxu0 0
  %69 = vmatpush1.bf16.msra.mxu0 0
  %70 = vmatprep.subr.bf16.mxu0 0
  %71 = vmatpush1.bf16.msra.mxu0 0
  %72 = vmatprep.subr.bf16.mxu0 0
  %73 = vmatpush1.bf16.msra.mxu0 0
  %74 = vmatprep.subr.bf16.mxu0 0
  %75 = vmatpush1.bf16.msra.mxu0 0
  %76 = vmatprep.subr.bf16.mxu0 0
  %77 = vmatpush1.bf16.msra.mxu0 0
  %78 = vmatprep.subr.bf16.mxu0 0
  %79 = vmatpush1.bf16.msra.mxu0 0
  %80 = vmatprep.subr.bf16.mxu0 0
  %81 = vmatpush1.bf16.msra.mxu0 0
  %82 = vmatprep.subr.bf16.mxu0 0
  %83 = vmatpush1.bf16.msra.mxu0 0
  %84 = vmatprep.subr.bf16.mxu0 0
  %85 = vmatpush1.bf16.msra.mxu0 0
  %86 = vmatprep.subr.bf16.mxu0 0
  %87 = vmatpush1.bf16.msra.mxu0 0
  %88 = vmatprep.subr.bf16.mxu0 0
  %89 = vmatpush1.bf16.msra.mxu0 0
  %90 = vmatprep.subr.bf16.mxu0 0
  %91 = vmatpush1.bf16.msra.mxu0 0
  %92 = vmatprep.subr.bf16.mxu0 0
  %93 = vmatpush1.bf16.msra.mxu0 0
  %94 = vmatprep.mubr.bf16.mxu0 0
  %95 = vmatmul.mubr.bf16.gmra.mrb[0].mxu0 %v57
  %v96 = vpop.f32.mrb[0].mxu0
  %v97 = vadd.f32 %v35, %v96
  %v98 = vpop.f32.mrb[0].mxu0
  %v99 = vpop.f32.mrb[0].mxu0
  %v100 = vadd.f32 %v35, %v99
  %v101 = vpop.f32.mrb[0].mxu0
  %102 = vmatprep.mubr.bf16.mxu0 0
  %103 = vmatmul.mubr.bf16.gmra.mrb[0].mxu0 %v60
  %v104 = vpop.f32.mrb[0].mxu0
  %v105 = vadd.f32 %v35, %v104
  %v106 = vpop.f32.mrb[0].mxu0
  %v107 = vpop.f32.mrb[0].mxu0
  %v108 = vadd.f32 %v35, %v107
  %v109 = vpop.f32.mrb[0].mxu0
  %110 = vdwg.mxu0
  %v111 = vld [vmem:[%s3] sm:$0xff]
  %v112 = vld [vmem:[%s3 + $0x8] sm:$0xff]
  %v113 = vld [vmem:[%s3 + $0x10] sm:$0xff]
  %v114 = vld [vmem:[%s3 + $0x18] sm:$0xff]
  %v115 = vadd.f32 %v97, %v111
  %v116 = vadd.f32 %v100, %v112
  %v117 = vadd.f32 %v105, %v113
  %v118 = vadd.f32 %v108, %v114
  %vm119 = vcmask 261120
  %120 = vst.msk [vmem:[%s4] sm:$0xff] %vm119, %v115
  %121 = vst.msk [vmem:[%s4 + $0x8] sm:$0xff] %vm119, %v116
  %122 = vst.msk [vmem:[%s4 + $0x10] sm:$0xff] %vm119, %v117
  %123 = vst.msk [vmem:[%s4 + $0x18] sm:$0xff] %vm119, %v118
  // Predicated region
  $region18: #{forward.4} parent=0 // pred_check
    _
  $region19: #{forward.4} parent=0 // pred_check_branch
    %125 = sbr.rel (0) target = $region21
  $region20: #{forward.4} parent=0 // pred_region
    _
  $region21: #{forward.4} parent=0 // pred_fallthru
    _
  // Predicated region
  $region22: #{forward.4} parent=0 // pred_check
    _
  $region23: #{forward.4} parent=0 // pred_check_branch
    %127 = sbr.rel (0) target = $region25
  $region24: #{forward.4} parent=0 // pred_region
    _
  $region25: #{forward.4} parent=0 // pred_fallthru
    _

// kernel: forward.5
$region0: #{forward.5}
  #allocation0 [shape = 'u32[]', space=smem, size = 0x4, offset = 0x4, fixed_abs, tag = 'smem constant byte address 0x4 - core index']
  #allocation1 [shape = 'u32[144,128]{1,0:T(1,128)}', space=vmem, size = 0x12000, scoped, tag = 'internal scratch']
  %s0 = inlined_call_operand.vmem [shape: f32[2,8,32], index: 0, kind: input, shape index: {}]
  %s1 = inlined_call_operand.vmem [shape: f32[1,8,32], index: 1, kind: input, shape index: {}]
  %s2 = inlined_call_operand.vmem [shape: f32[1,8], index: 2, kind: input, shape index: {}]
  %s3 = inlined_call_operand.vmem [shape: f32[2,1,32], index: 3, kind: input, shape index: {}]
  %s4 = inlined_call_operand.vmem [shape: f32[2,1,32], index: 4, kind: input, shape index: {}]
  %s5 = inlined_call_operand.vmem [shape: bf16[2,32,96], index: 5, kind: input, shape index: {}]
  %s6 = inlined_call_operand.vmem [shape: f32[2,1,96], index: 6, kind: input, shape index: {}]
  %s7 = inlined_call_operand.vmem [shape: bf16[2,32,32], index: 7, kind: input, shape index: {}]
  %s8 = inlined_call_operand.vmem [shape: f32[2,1,32], index: 8, kind: input, shape index: {}]
  %s9 = inlined_call_operand.vmem [shape: f32[2,1,32], index: 9, kind: input, shape index: {}]
  %s10 = inlined_call_operand.vmem [shape: f32[2,1,32], index: 10, kind: input, shape index: {}]
  %s11 = inlined_call_operand.vmem [shape: bf16[2,32,128], index: 11, kind: input, shape index: {}]
  %s12 = inlined_call_operand.vmem [shape: f32[2,1,128], index: 12, kind: input, shape index: {}]
  %s13 = inlined_call_operand.vmem [shape: bf16[2,128,32], index: 13, kind: input, shape index: {}]
  %s14 = inlined_call_operand.vmem [shape: f32[2,1,32], index: 14, kind: input, shape index: {}]
  %s15 = inlined_call_operand.vmem [shape: f32[1,32], index: 15, kind: input, shape index: {}]
  %s16 = inlined_call_operand.vmem [shape: f32[1,32], index: 16, kind: input, shape index: {}]
  %s17 = inlined_call_operand.vmem [shape: bf16[32,32], index: 17, kind: input, shape index: {}]
  %s18 = inlined_call_operand.vmem [shape: f32[1,32], index: 18, kind: input, shape index: {}]
  %s19 = inlined_call_operand.vmem [shape: f32[2,8,32], index: 19, kind: output, shape index: {}]
  %s20 = sld [smem:[#allocation0]]
  $region109: #{forward.5} parent=0
    _
  %s22 = ssub.s32 1, %s20
  %s23 = scalar_select 0, %s22, %s20
  loop: start=0, step=1, limit=4
  $region2: #{forward.5} parent=0 // loop_pre_header
    _
  $region3: #{forward.5} parent=0 // loop_header
    %s25 = sphi 0, %s29
    %p26 = scmp.ge.s32.totalorder %s25, 4
    %s35 = sphi 0, %s37
    %s38 = sphi 0, %s35
    %s39 = sphi 0, %s38
    %s55 = sphi 0, %s39
    %s59 = sphi 0, %s59
    %s61 = sphi 0, %s59
    %s62 = sphi 0, %s61
    %s76 = sphi 0, %s62
    %s80 = sphi 0, %s80
    %s82 = sphi 0, %s80
    %s83 = sphi 0, %s82
    %s97 = sphi 0, %s83
    %s101 = sphi 0, %s101
    %s103 = sphi 0, %s101
    %s104 = sphi 0, %s103
    %s118 = sphi 0, %s104
    %s122 = sphi 0, %s122
    %s124 = sphi 0, %s122
    %s125 = sphi 0, %s124
    %s139 = sphi 0, %s125
    %s143 = sphi 0, %s143
    %s145 = sphi 0, %s143
    %s146 = sphi 0, %s145
    %s160 = sphi 0, %s146
    %s164 = sphi 0, %s164
    %s166 = sphi 0, %s164
    %s167 = sphi 0, %s166
    %s181 = sphi 0, %s167
    %s185 = sphi 0, %s185
    %s187 = sphi 0, %s185
    %s188 = sphi 0, %s187
    %s202 = sphi 0, %s188
    %s206 = sphi 0, %s206
    %s208 = sphi 0, %s206
    %s209 = sphi 0, %s208
    %s223 = sphi 0, %s209
    %s227 = sphi 0, %s227
    %s229 = sphi 0, %s227
    %s230 = sphi 0, %s229
    %s244 = sphi 0, %s230
    %s248 = sphi 0, %s248
    %s250 = sphi 0, %s248
    %s251 = sphi 0, %s250
    %s265 = sphi 0, %s251
    %s269 = sphi 0, %s269
    %s271 = sphi 0, %s269
    %s272 = sphi 0, %s271
    %s286 = sphi 0, %s272
    %s290 = sphi 0, %s290
    %s292 = sphi 0, %s290
    %s293 = sphi 0, %s292
    %s307 = sphi 0, %s293
    %s311 = sphi 0, %s311
    %s313 = sphi 0, %s311
    %s314 = sphi 0, %s313
    %s328 = sphi 0, %s314
    %s332 = sphi 0, %s332
    %s334 = sphi 0, %s332
    %s335 = sphi 0, %s334
    %s349 = sphi 0, %s335
    %s353 = sphi 0, %s353
    %s355 = sphi 0, %s353
    %s356 = sphi 0, %s355
    %s370 = sphi 0, %s356
    %s374 = sphi 0, %s374
    %s376 = sphi 0, %s374
    %s377 = sphi 0, %s376
    %s391 = sphi 0, %s377
    %s395 = sphi 0, %s395
    %s397 = sphi 0, %s395
    %s398 = sphi 0, %s397
    %s412 = sphi 0, %s398
    %s416 = sphi 0, %s416
    %s418 = sphi 0, %s416
    %s419 = sphi 0, %s418
    %s433 = sphi 0, %s419
    %s439 = sphi 0, %s441
    %s442 = sphi 0, %s439
    %s443 = sphi 0, %s442
    %s459 = sphi 0, %s443
  $region4: #{forward.5} parent=0 // loop_header_branch
    %28 = sbr.rel (%p26) target = $region8
  $region5: #{forward.5} parent=0 // loop_body
    %s30 = ssub.s32 %s25, 1
    %s31 = ssub.s32 %s25, 2
    %s32 = sadd.s32 %s25, 1
    %s33 = ssub.s32 %s25, %s32
    %p34 = scmp.eq.s32.totalorder %s33, 0
    %s36 = sadd.s32 %s35, 1
    %s37 = scalar_select %p34, %s35, %s36
    %p40 = pneg %p34
    %p41 = scmp.eq.s32.totalorder %s25, 1
    %p42 = por %p40, %p41
    %p43 = scmp.ne.s32.totalorder %s35, %s38
    %p44 = scmp.eq.s32.totalorder %s25, 0
    %p45 = por %p43, %p44
    %p46 = scmp.ne.s32.totalorder %s35, %s38
    %p47 = scmp.eq.s32.totalorder %s30, 1
    %p48 = por %p46, %p47
    %p49 = scmp.ne.s32.totalorder %s38, %s39
    %p50 = scmp.eq.s32.totalorder %s30, 0
    %p51 = por %p49, %p50
    %p52 = scmp.ne.s32.totalorder %s38, %s39
    %p53 = scmp.eq.s32.totalorder %s31, 1
    %p54 = por %p52, %p53
    %p56 = scmp.ne.s32.totalorder %s39, %s55
    %p57 = scmp.eq.s32.totalorder %s31, 0
    %p58 = por %p56, %p57
    %s60 = sadd.s32 %s59, 1
    %p63 = scmp.eq.s32.totalorder %s25, 1
    %p64 = scmp.ne.s32.totalorder %s59, %s61
    %p65 = scmp.eq.s32.totalorder %s25, 0
    %p66 = por %p64, %p65
    %p67 = scmp.ne.s32.totalorder %s59, %s61
    %p68 = scmp.eq.s32.totalorder %s30, 1
    %p69 = por %p67, %p68
    %p70 = scmp.ne.s32.totalorder %s61, %s62
    %p71 = scmp.eq.s32.totalorder %s30, 0
    %p72 = por %p70, %p71
    %p73 = scmp.ne.s32.totalorder %s61, %s62
    %p74 = scmp.eq.s32.totalorder %s31, 1
    %p75 = por %p73, %p74
    %p77 = scmp.ne.s32.totalorder %s62, %s76
    %p78 = scmp.eq.s32.totalorder %s31, 0
    %p79 = por %p77, %p78
    %s81 = sadd.s32 %s80, 1
    %p84 = scmp.eq.s32.totalorder %s25, 1
    %p85 = scmp.ne.s32.totalorder %s80, %s82
    %p86 = scmp.eq.s32.totalorder %s25, 0
    %p87 = por %p85, %p86
    %p88 = scmp.ne.s32.totalorder %s80, %s82
    %p89 = scmp.eq.s32.totalorder %s30, 1
    %p90 = por %p88, %p89
    %p91 = scmp.ne.s32.totalorder %s82, %s83
    %p92 = scmp.eq.s32.totalorder %s30, 0
    %p93 = por %p91, %p92
    %p94 = scmp.ne.s32.totalorder %s82, %s83
    %p95 = scmp.eq.s32.totalorder %s31, 1
    %p96 = por %p94, %p95
    %p98 = scmp.ne.s32.totalorder %s83, %s97
    %p99 = scmp.eq.s32.totalorder %s31, 0
    %p100 = por %p98, %p99
    %s102 = sadd.s32 %s101, 1
    %p105 = scmp.eq.s32.totalorder %s25, 1
    %p106 = scmp.ne.s32.totalorder %s101, %s103
    %p107 = scmp.eq.s32.totalorder %s25, 0
    %p108 = por %p106, %p107
    %p109 = scmp.ne.s32.totalorder %s101, %s103
    %p110 = scmp.eq.s32.totalorder %s30, 1
    %p111 = por %p109, %p110
    %p112 = scmp.ne.s32.totalorder %s103, %s104
    %p113 = scmp.eq.s32.totalorder %s30, 0
    %p114 = por %p112, %p113
    %p115 = scmp.ne.s32.totalorder %s103, %s104
    %p116 = scmp.eq.s32.totalorder %s31, 1
    %p117 = por %p115, %p116
    %p119 = scmp.ne.s32.totalorder %s104, %s118
    %p120 = scmp.eq.s32.totalorder %s31, 0
    %p121 = por %p119, %p120
    %s123 = sadd.s32 %s122, 1
    %p126 = scmp.eq.s32.totalorder %s25, 1
    %p127 = scmp.ne.s32.totalorder %s122, %s124
    %p128 = scmp.eq.s32.totalorder %s25, 0
    %p129 = por %p127, %p128
    %p130 = scmp.ne.s32.totalorder %s122, %s124
    %p131 = scmp.eq.s32.totalorder %s30, 1
    %p132 = por %p130, %p131
    %p133 = scmp.ne.s32.totalorder %s124, %s125
    %p134 = scmp.eq.s32.totalorder %s30, 0
    %p135 = por %p133, %p134
    %p136 = scmp.ne.s32.totalorder %s124, %s125
    %p137 = scmp.eq.s32.totalorder %s31, 1
    %p138 = por %p136, %p137
    %p140 = scmp.ne.s32.totalorder %s125, %s139
    %p141 = scmp.eq.s32.totalorder %s31, 0
    %p142 = por %p140, %p141
    %s144 = sadd.s32 %s143, 1
    %p147 = scmp.eq.s32.totalorder %s25, 1
    %p148 = scmp.ne.s32.totalorder %s143, %s145
    %p149 = scmp.eq.s32.totalorder %s25, 0
    %p150 = por %p148, %p149
    %p151 = scmp.ne.s32.totalorder %s143, %s145
    %p152 = scmp.eq.s32.totalorder %s30, 1
    %p153 = por %p151, %p152
    %p154 = scmp.ne.s32.totalorder %s145, %s146
    %p155 = scmp.eq.s32.totalorder %s30, 0
    %p156 = por %p154, %p155
    %p157 = scmp.ne.s32.totalorder %s145, %s146
    %p158 = scmp.eq.s32.totalorder %s31, 1
    %p159 = por %p157, %p158
    %p161 = scmp.ne.s32.totalorder %s146, %s160
    %p162 = scmp.eq.s32.totalorder %s31, 0
    %p163 = por %p161, %p162
    %s165 = sadd.s32 %s164, 1
    %p168 = scmp.eq.s32.totalorder %s25, 1
    %p169 = scmp.ne.s32.totalorder %s164, %s166
    %p170 = scmp.eq.s32.totalorder %s25, 0
    %p171 = por %p169, %p170
    %p172 = scmp.ne.s32.totalorder %s164, %s166
    %p173 = scmp.eq.s32.totalorder %s30, 1
    %p174 = por %p172, %p173
    %p175 = scmp.ne.s32.totalorder %s166, %s167
    %p176 = scmp.eq.s32.totalorder %s30, 0
    %p177 = por %p175, %p176
    %p178 = scmp.ne.s32.totalorder %s166, %s167
    %p179 = scmp.eq.s32.totalorder %s31, 1
    %p180 = por %p178, %p179
    %p182 = scmp.ne.s32.totalorder %s167, %s181
    %p183 = scmp.eq.s32.totalorder %s31, 0
    %p184 = por %p182, %p183
    %s186 = sadd.s32 %s185, 1
    %p189 = scmp.eq.s32.totalorder %s25, 1
    %p190 = scmp.ne.s32.totalorder %s185, %s187
    %p191 = scmp.eq.s32.totalorder %s25, 0
    %p192 = por %p190, %p191
    %p193 = scmp.ne.s32.totalorder %s185, %s187
    %p194 = scmp.eq.s32.totalorder %s30, 1
    %p195 = por %p193, %p194
    %p196 = scmp.ne.s32.totalorder %s187, %s188
    %p197 = scmp.eq.s32.totalorder %s30, 0
    %p198 = por %p196, %p197
    %p199 = scmp.ne.s32.totalorder %s187, %s188
    %p200 = scmp.eq.s32.totalorder %s31, 1
    %p201 = por %p199, %p200
    %p203 = scmp.ne.s32.totalorder %s188, %s202
    %p204 = scmp.eq.s32.totalorder %s31, 0
    %p205 = por %p203, %p204
    %s207 = sadd.s32 %s206, 1
    %p210 = scmp.eq.s32.totalorder %s25, 1
    %p211 = scmp.ne.s32.totalorder %s206, %s208
    %p212 = scmp.eq.s32.totalorder %s25, 0
    %p213 = por %p211, %p212
    %p214 = scmp.ne.s32.totalorder %s206, %s208
    %p215 = scmp.eq.s32.totalorder %s30, 1
    %p216 = por %p214, %p215
    %p217 = scmp.ne.s32.totalorder %s208, %s209
    %p218 = scmp.eq.s32.totalorder %s30, 0
    %p219 = por %p217, %p218
    %p220 = scmp.ne.s32.totalorder %s208, %s209
    %p221 = scmp.eq.s32.totalorder %s31, 1
    %p222 = por %p220, %p221
    %p224 = scmp.ne.s32.totalorder %s209, %s223
    %p225 = scmp.eq.s32.totalorder %s31, 0
    %p226 = por %p224, %p225
    %s228 = sadd.s32 %s227, 1
    %p231 = scmp.eq.s32.totalorder %s25, 1
    %p232 = scmp.ne.s32.totalorder %s227, %s229
    %p233 = scmp.eq.s32.totalorder %s25, 0
    %p234 = por %p232, %p233
    %p235 = scmp.ne.s32.totalorder %s227, %s229
    %p236 = scmp.eq.s32.totalorder %s30, 1
    %p237 = por %p235, %p236
    %p238 = scmp.ne.s32.totalorder %s229, %s230
    %p239 = scmp.eq.s32.totalorder %s30, 0
    %p240 = por %p238, %p239
    %p241 = scmp.ne.s32.totalorder %s229, %s230
    %p242 = scmp.eq.s32.totalorder %s31, 1
    %p243 = por %p241, %p242
    %p245 = scmp.ne.s32.totalorder %s230, %s244
    %p246 = scmp.eq.s32.totalorder %s31, 0
    %p247 = por %p245, %p246
    %s249 = sadd.s32 %s248, 1
    %p252 = scmp.eq.s32.totalorder %s25, 1
    %p253 = scmp.ne.s32.totalorder %s248, %s250
    %p254 = scmp.eq.s32.totalorder %s25, 0
    %p255 = por %p253, %p254
    %p256 = scmp.ne.s32.totalorder %s248, %s250
    %p257 = scmp.eq.s32.totalorder %s30, 1
    %p258 = por %p256, %p257
    %p259 = scmp.ne.s32.totalorder %s250, %s251
    %p260 = scmp.eq.s32.totalorder %s30, 0
    %p261 = por %p259, %p260
    %p262 = scmp.ne.s32.totalorder %s250, %s251
    %p263 = scmp.eq.s32.totalorder %s31, 1
    %p264 = por %p262, %p263
    %p266 = scmp.ne.s32.totalorder %s251, %s265
    %p267 = scmp.eq.s32.totalorder %s31, 0
    %p268 = por %p266, %p267
    %s270 = sadd.s32 %s269, 1
    %p273 = scmp.eq.s32.totalorder %s25, 1
    %p274 = scmp.ne.s32.totalorder %s269, %s271
    %p275 = scmp.eq.s32.totalorder %s25, 0
    %p276 = por %p274, %p275
    %p277 = scmp.ne.s32.totalorder %s269, %s271
    %p278 = scmp.eq.s32.totalorder %s30, 1
    %p279 = por %p277, %p278
    %p280 = scmp.ne.s32.totalorder %s271, %s272
    %p281 = scmp.eq.s32.totalorder %s30, 0
    %p282 = por %p280, %p281
    %p283 = scmp.ne.s32.totalorder %s271, %s272
    %p284 = scmp.eq.s32.totalorder %s31, 1
    %p285 = por %p283, %p284
    %p287 = scmp.ne.s32.totalorder %s272, %s286
    %p288 = scmp.eq.s32.totalorder %s31, 0
    %p289 = por %p287, %p288
    %s291 = sadd.s32 %s290, 1
    %p294 = scmp.eq.s32.totalorder %s25, 1
    %p295 = scmp.ne.s32.totalorder %s290, %s292
    %p296 = scmp.eq.s32.totalorder %s25, 0
    %p297 = por %p295, %p296
    %p298 = scmp.ne.s32.totalorder %s290, %s292
    %p299 = scmp.eq.s32.totalorder %s30, 1
    %p300 = por %p298, %p299
    %p301 = scmp.ne.s32.totalorder %s292, %s293
    %p302 = scmp.eq.s32.totalorder %s30, 0
    %p303 = por %p301, %p302
    %p304 = scmp.ne.s32.totalorder %s292, %s293
    %p305 = scmp.eq.s32.totalorder %s31, 1
    %p306 = por %p304, %p305
    %p308 = scmp.ne.s32.totalorder %s293, %s307
    %p309 = scmp.eq.s32.totalorder %s31, 0
    %p310 = por %p308, %p309
    %s312 = sadd.s32 %s311, 1
    %p315 = scmp.eq.s32.totalorder %s25, 1
    %p316 = scmp.ne.s32.totalorder %s311, %s313
    %p317 = scmp.eq.s32.totalorder %s25, 0
    %p318 = por %p316, %p317
    %p319 = scmp.ne.s32.totalorder %s311, %s313
    %p320 = scmp.eq.s32.totalorder %s30, 1
    %p321 = por %p319, %p320
    %p322 = scmp.ne.s32.totalorder %s313, %s314
    %p323 = scmp.eq.s32.totalorder %s30, 0
    %p324 = por %p322, %p323
    %p325 = scmp.ne.s32.totalorder %s313, %s314
    %p326 = scmp.eq.s32.totalorder %s31, 1
    %p327 = por %p325, %p326
    %p329 = scmp.ne.s32.totalorder %s314, %s328
    %p330 = scmp.eq.s32.totalorder %s31, 0
    %p331 = por %p329, %p330
    %s333 = sadd.s32 %s332, 1
    %p336 = scmp.eq.s32.totalorder %s25, 1
    %p337 = scmp.ne.s32.totalorder %s332, %s334
    %p338 = scmp.eq.s32.totalorder %s25, 0
    %p339 = por %p337, %p338
    %p340 = scmp.ne.s32.totalorder %s332, %s334
    %p341 = scmp.eq.s32.totalorder %s30, 1
    %p342 = por %p340, %p341
    %p343 = scmp.ne.s32.totalorder %s334, %s335
    %p344 = scmp.eq.s32.totalorder %s30, 0
    %p345 = por %p343, %p344
    %p346 = scmp.ne.s32.totalorder %s334, %s335
    %p347 = scmp.eq.s32.totalorder %s31, 1
    %p348 = por %p346, %p347
    %p350 = scmp.ne.s32.totalorder %s335, %s349
    %p351 = scmp.eq.s32.totalorder %s31, 0
    %p352 = por %p350, %p351
    %s354 = sadd.s32 %s353, 1
    %p357 = scmp.eq.s32.totalorder %s25, 1
    %p358 = scmp.ne.s32.totalorder %s353, %s355
    %p359 = scmp.eq.s32.totalorder %s25, 0
    %p360 = por %p358, %p359
    %p361 = scmp.ne.s32.totalorder %s353, %s355
    %p362 = scmp.eq.s32.totalorder %s30, 1
    %p363 = por %p361, %p362
    %p364 = scmp.ne.s32.totalorder %s355, %s356
    %p365 = scmp.eq.s32.totalorder %s30, 0
    %p366 = por %p364, %p365
    %p367 = scmp.ne.s32.totalorder %s355, %s356
    %p368 = scmp.eq.s32.totalorder %s31, 1
    %p369 = por %p367, %p368
    %p371 = scmp.ne.s32.totalorder %s356, %s370
    %p372 = scmp.eq.s32.totalorder %s31, 0
    %p373 = por %p371, %p372
    %s375 = sadd.s32 %s374, 1
    %p378 = scmp.eq.s32.totalorder %s25, 1
    %p379 = scmp.ne.s32.totalorder %s374, %s376
    %p380 = scmp.eq.s32.totalorder %s25, 0
    %p381 = por %p379, %p380
    %p382 = scmp.ne.s32.totalorder %s374, %s376
    %p383 = scmp.eq.s32.totalorder %s30, 1
    %p384 = por %p382, %p383
    %p385 = scmp.ne.s32.totalorder %s376, %s377
    %p386 = scmp.eq.s32.totalorder %s30, 0
    %p387 = por %p385, %p386
    %p388 = scmp.ne.s32.totalorder %s376, %s377
    %p389 = scmp.eq.s32.totalorder %s31, 1
    %p390 = por %p388, %p389
    %p392 = scmp.ne.s32.totalorder %s377, %s391
    %p393 = scmp.eq.s32.totalorder %s31, 0
    %p394 = por %p392, %p393
    %s396 = sadd.s32 %s395, 1
    %p399 = scmp.eq.s32.totalorder %s25, 1
    %p400 = scmp.ne.s32.totalorder %s395, %s397
    %p401 = scmp.eq.s32.totalorder %s25, 0
    %p402 = por %p400, %p401
    %p403 = scmp.ne.s32.totalorder %s395, %s397
    %p404 = scmp.eq.s32.totalorder %s30, 1
    %p405 = por %p403, %p404
    %p406 = scmp.ne.s32.totalorder %s397, %s398
    %p407 = scmp.eq.s32.totalorder %s30, 0
    %p408 = por %p406, %p407
    %p409 = scmp.ne.s32.totalorder %s397, %s398
    %p410 = scmp.eq.s32.totalorder %s31, 1
    %p411 = por %p409, %p410
    %p413 = scmp.ne.s32.totalorder %s398, %s412
    %p414 = scmp.eq.s32.totalorder %s31, 0
    %p415 = por %p413, %p414
    %s417 = sadd.s32 %s416, 1
    %p420 = scmp.eq.s32.totalorder %s25, 1
    %p421 = scmp.ne.s32.totalorder %s416, %s418
    %p422 = scmp.eq.s32.totalorder %s25, 0
    %p423 = por %p421, %p422
    %p424 = scmp.ne.s32.totalorder %s416, %s418
    %p425 = scmp.eq.s32.totalorder %s30, 1
    %p426 = por %p424, %p425
    %p427 = scmp.ne.s32.totalorder %s418, %s419
    %p428 = scmp.eq.s32.totalorder %s30, 0
    %p429 = por %p427, %p428
    %p430 = scmp.ne.s32.totalorder %s418, %s419
    %p431 = scmp.eq.s32.totalorder %s31, 1
    %p432 = por %p430, %p431
    %p434 = scmp.ne.s32.totalorder %s419, %s433
    %p435 = scmp.eq.s32.totalorder %s31, 0
    %p436 = por %p434, %p435
    %s437 = ssub.s32 %s25, %s32
    %p438 = scmp.eq.s32.totalorder %s437, 0
    %s440 = sadd.s32 %s439, 1
    %s441 = scalar_select %p438, %s439, %s440
    %p444 = pneg %p438
    %p445 = scmp.eq.s32.totalorder %s25, 1
    %p446 = por %p444, %p445
    %p447 = scmp.ne.s32.totalorder %s439, %s442
    %p448 = scmp.eq.s32.totalorder %s25, 0
    %p449 = por %p447, %p448
    %p450 = scmp.ne.s32.totalorder %s439, %s442
    %p451 = scmp.eq.s32.totalorder %s30, 1
    %p452 = por %p450, %p451
    %p453 = scmp.ne.s32.totalorder %s442, %s443
    %p454 = scmp.eq.s32.totalorder %s30, 0
    %p455 = por %p453, %p454
    %p456 = scmp.ne.s32.totalorder %s442, %s443
    %p457 = scmp.eq.s32.totalorder %s31, 1
    %p458 = por %p456, %p457
    %p460 = scmp.ne.s32.totalorder %s443, %s459
    %p461 = scmp.eq.s32.totalorder %s31, 0
    %p462 = por %p460, %p461
    %p463 = scmp.le.s32.totalorder 1, %s25
    %p464 = scmp.lt.s32.totalorder %s25, 3
    %p465 = pnand %p463, %p464
    %p466 = pneg %p465
    // Predicated region
    $region9: #{forward.5} parent=5 // pred_check
      _
    $region10: #{forward.5} parent=5 // pred_check_branch
      %468 = sbr.rel (%p465) target = $region12
    $region11: #{forward.5} parent=5 // pred_region
      %s469 = ssub.s32 %s25, 1
      // Predicated region
      $region13: #{forward.5} parent=11 // pred_check
        %p470 = pneg %p72
      $region14: #{forward.5} parent=11 // pred_check_branch
        %472 = sbr.rel (%p470) target = $region16
      $region15: #{forward.5} parent=11 // pred_region
        _
      $region16: #{forward.5} parent=11 // pred_fallthru
        _
      // Predicated region
      $region17: #{forward.5} parent=11 // pred_check
        %p473 = pneg %p93
      $region18: #{forward.5} parent=11 // pred_check_branch
        %475 = sbr.rel (%p473) target = $region20
      $region19: #{forward.5} parent=11 // pred_region
        _
      $region20: #{forward.5} parent=11 // pred_fallthru
        _
      // Predicated region
      $region21: #{forward.5} parent=11 // pred_check
        %p476 = pneg %p114
      $region22: #{forward.5} parent=11 // pred_check_branch
        %478 = sbr.rel (%p476) target = $region24
      $region23: #{forward.5} parent=11 // pred_region
        _
      $region24: #{forward.5} parent=11 // pred_fallthru
        _
      // Predicated region
      $region25: #{forward.5} parent=11 // pred_check
        %p479 = pneg %p135
      $region26: #{forward.5} parent=11 // pred_check_branch
        %481 = sbr.rel (%p479) target = $region28
      $region27: #{forward.5} parent=11 // pred_region
        _
      $region28: #{forward.5} parent=11 // pred_fallthru
        _
      // Predicated region
      $region29: #{forward.5} parent=11 // pred_check
        %p482 = pneg %p156
      $region30: #{forward.5} parent=11 // pred_check_branch
        %484 = sbr.rel (%p482) target = $region32
      $region31: #{forward.5} parent=11 // pred_region
        _
      $region32: #{forward.5} parent=11 // pred_fallthru
        _
      // Predicated region
      $region33: #{forward.5} parent=11 // pred_check
        %p485 = pneg %p177
      $region34: #{forward.5} parent=11 // pred_check_branch
        %487 = sbr.rel (%p485) target = $region36
      $region35: #{forward.5} parent=11 // pred_region
        _
      $region36: #{forward.5} parent=11 // pred_fallthru
        _
      // Predicated region
      $region37: #{forward.5} parent=11 // pred_check
        %p488 = pneg %p198
      $region38: #{forward.5} parent=11 // pred_check_branch
        %490 = sbr.rel (%p488) target = $region40
      $region39: #{forward.5} parent=11 // pred_region
        _
      $region40: #{forward.5} parent=11 // pred_fallthru
        _
      // Predicated region
      $region41: #{forward.5} parent=11 // pred_check
        %p491 = pneg %p219
      $region42: #{forward.5} parent=11 // pred_check_branch
        %493 = sbr.rel (%p491) target = $region44
      $region43: #{forward.5} parent=11 // pred_region
        _
      $region44: #{forward.5} parent=11 // pred_fallthru
        _
      // Predicated region
      $region45: #{forward.5} parent=11 // pred_check
        %p494 = pneg %p240
      $region46: #{forward.5} parent=11 // pred_check_branch
        %496 = sbr.rel (%p494) target = $region48
      $region47: #{forward.5} parent=11 // pred_region
        _
      $region48: #{forward.5} parent=11 // pred_fallthru
        _
      // Predicated region
      $region49: #{forward.5} parent=11 // pred_check
        %p497 = pneg %p261
      $region50: #{forward.5} parent=11 // pred_check_branch
        %499 = sbr.rel (%p497) target = $region52
      $region51: #{forward.5} parent=11 // pred_region
        _
      $region52: #{forward.5} parent=11 // pred_fallthru
        _
      // Predicated region
      $region53: #{forward.5} parent=11 // pred_check
        %p500 = pneg %p282
      $region54: #{forward.5} parent=11 // pred_check_branch
        %502 = sbr.rel (%p500) target = $region56
      $region55: #{forward.5} parent=11 // pred_region
        _
      $region56: #{forward.5} parent=11 // pred_fallthru
        _
      // Predicated region
      $region57: #{forward.5} parent=11 // pred_check
        %p503 = pneg %p303
      $region58: #{forward.5} parent=11 // pred_check_branch
        %505 = sbr.rel (%p503) target = $region60
      $region59: #{forward.5} parent=11 // pred_region
        _
      $region60: #{forward.5} parent=11 // pred_fallthru
        _
      // Predicated region
      $region61: #{forward.5} parent=11 // pred_check
        %p506 = pneg %p324
      $region62: #{forward.5} parent=11 // pred_check_branch
        %508 = sbr.rel (%p506) target = $region64
      $region63: #{forward.5} parent=11 // pred_region
        _
      $region64: #{forward.5} parent=11 // pred_fallthru
        _
      // Predicated region
      $region65: #{forward.5} parent=11 // pred_check
        %p509 = pneg %p345
      $region66: #{forward.5} parent=11 // pred_check_branch
        %511 = sbr.rel (%p509) target = $region68
      $region67: #{forward.5} parent=11 // pred_region
        _
      $region68: #{forward.5} parent=11 // pred_fallthru
        _
      // Predicated region
      $region69: #{forward.5} parent=11 // pred_check
        %p512 = pneg %p366
      $region70: #{forward.5} parent=11 // pred_check_branch
        %514 = sbr.rel (%p512) target = $region72
      $region71: #{forward.5} parent=11 // pred_region
        _
      $region72: #{forward.5} parent=11 // pred_fallthru
        _
      // Predicated region
      $region73: #{forward.5} parent=11 // pred_check
        %p515 = pneg %p387
      $region74: #{forward.5} parent=11 // pred_check_branch
        %517 = sbr.rel (%p515) target = $region76
      $region75: #{forward.5} parent=11 // pred_region
        _
      $region76: #{forward.5} parent=11 // pred_fallthru
        _
      // Predicated region
      $region77: #{forward.5} parent=11 // pred_check
        %p518 = pneg %p408
      $region78: #{forward.5} parent=11 // pred_check_branch
        %520 = sbr.rel (%p518) target = $region80
      $region79: #{forward.5} parent=11 // pred_region
        _
      $region80: #{forward.5} parent=11 // pred_fallthru
        _
      // Predicated region
      $region81: #{forward.5} parent=11 // pred_check
        %p521 = pneg %p429
      $region82: #{forward.5} parent=11 // pred_check_branch
        %523 = sbr.rel (%p521) target = $region84
      $region83: #{forward.5} parent=11 // pred_region
        _
      $region84: #{forward.5} parent=11 // pred_fallthru
        _
    $region12: #{forward.5} parent=5 // pred_fallthru
      _
    %p524 = scmp.lt.s32.totalorder %s25, 2
    // Predicated region
    $region85: #{forward.5} parent=5 // pred_check
      %p525 = pneg %p524
    $region86: #{forward.5} parent=5 // pred_check_branch
      %527 = sbr.rel (%p525) target = $region88
    $region87: #{forward.5} parent=5 // pred_region
      // Predicated region
      $region89: #{forward.5} parent=87 // pred_check
        %p528 = pneg %p45
      $region90: #{forward.5} parent=87 // pred_check_branch
        %530 = sbr.rel (%p528) target = $region92
      $region91: #{forward.5} parent=87 // pred_region
        %p531 = scmp.lt.s32.totalorder %s25, 1
        %s532 = scalar_select %p531, %s25, 1
        %s533 = smul.addr %s532, 8
        %s534 = scalar_lea.vmem %s0, %s533
      $region92: #{forward.5} parent=87 // pred_fallthru
        _
    $region88: #{forward.5} parent=5 // pred_fallthru
      _
    %p535 = scmp.le.s32.totalorder 1, %s25
    %p536 = scmp.lt.s32.totalorder %s25, 3
    %p537 = pnand %p535, %p536
    %p538 = pneg %p537
    // Predicated region
    $region93: #{forward.5} parent=5 // pred_check
      _
    $region94: #{forward.5} parent=5 // pred_check_branch
      %540 = sbr.rel (%p537) target = $region96
    $region95: #{forward.5} parent=5 // pred_region
      %s541 = ssub.s32 %s25, 1
      %p542 = scmp.lt.s32.totalorder %s30, 1
      %s543 = scalar_select %p542, %s30, 1
      %s544 = smul.addr %s543, 8
      %s545 = scalar_lea.vmem %s0, %s544
      %p546 = pneg %p51
      %p547 = pneg %p48
      %p548 = pneg %p72
      %p549 = pneg %p69
      %p550 = pneg %p93
      %p551 = pneg %p90
      %p552 = pneg %p114
      %p553 = pneg %p111
      %p554 = pneg %p135
      %p555 = pneg %p132
      %p556 = pneg %p156
      %p557 = pneg %p153
      %p558 = pneg %p177
      %p559 = pneg %p174
      %p560 = pneg %p198
      %p561 = pneg %p195
      %p562 = pneg %p219
      %p563 = pneg %p216
      %p564 = pneg %p240
      %p565 = pneg %p237
      %p566 = pneg %p261
      %p567 = pneg %p258
      %p568 = pneg %p282
      %p569 = pneg %p279
      %p570 = pneg %p303
      %p571 = pneg %p300
      %p572 = pneg %p324
      %p573 = pneg %p321
      %p574 = pneg %p345
      %p575 = pneg %p342
      %p576 = pneg %p366
      %p577 = pneg %p363
      %p578 = pneg %p387
      %p579 = pneg %p384
      %p580 = pneg %p408
      %p581 = pneg %p405
      %p582 = pneg %p429
      %p583 = pneg %p426
      %p584 = pneg %p455
      %p585 = pneg %p452
      %p586 = scmp.lt.s32.totalorder %s30, 1
      %s587 = scalar_select %p586, %s30, 1
      %s588 = smul.addr %s587, 8
      %s589 = scalar_lea.vmem %s19, %s588
      %p590 = scmp.lt.s32.totalorder %s30, 1
      %s591 = scalar_select %p590, %s30, 1
      %s592 = smul.addr %s591, 8
      %s593 = scalar_lea.vmem %s0, %s592
      %p594 = scmp.lt.s32.totalorder %s30, 1
      %s595 = scalar_select %p594, %s30, 1
      %s596 = smul.addr %s595, 8
      %s597 = scalar_lea.vmem %s19, %s596
      %v599 = vld [vmem:[%s593] sm:$0xff]
      %v600 = vld [vmem:[%s1] sm:$0xff]
      %v601 = vadd.f32 %v599, %v600
      %v602 = vld [vmem:[%s2] sm:$0x1]
      %v603 = vld [vmem:[%s3] sm:$0x1]
      %v604 = vld [vmem:[%s4] sm:$0x1]
      %vm605 = vcmask 261120
      %v606 = vsel %vm605, %v601, 0.0
      %607 = vadd.xlane.f32.xlu0 %v606
      %v608 = vpop.xlane.xlu0 %607
      %v609 = vrcp.pop 32.0
      %v610 = vmul.f32 %v608, %v609
      %v611 = vsub.f32 %v601, %v610
      %v612 = vmul.f32 %v611, %v611
      %v613 = vsel %vm605, %v612, 0.0
      %614 = vadd.xlane.f32.xlu0 %v613
      %v615 = vpop.xlane.xlu0 %614
      %v616 = vmul.f32 %v615, %v609
      %v617 = vadd.f32 %v616, 1e-05
      %v618 = vrsqrt.pop %v617
      %v619 = vmul.f32 %v611, %v618
      %v621 = vlaneseq
      %v622 = vshrl.u32 %v621, 7
      %v623 = vsub.s32 0, %v622
      %v624 = vrot.slane %v603, %v623
      %v626 = vmul.f32 %v619, %v624
      %v628 = vlaneseq
      %v629 = vshrl.u32 %v628, 7
      %v630 = vsub.s32 0, %v629
      %v631 = vrot.slane %v604, %v630
      %v633 = vadd.f32 %v626, %v631
      %v634 = vpack.c.bf16 %v633, %v633
      %v635 = vld [vmem:[%s5] sm:$0xf]
      %v636 = vld [vmem:[%s5 + $0x4] sm:$0xf]
      %v637 = vld [vmem:[%s5 + $0x8] sm:$0xf]
      %v638 = vld [vmem:[%s5 + $0xc] sm:$0xf]
      %v639 = vld [vmem:[%s6] sm:$0x1]
      %v641 = vlaneseq
      %v642 = vshrl.u32 %v641, 7
      %v643 = vsub.s32 0, %v642
      %v644 = vrot.slane %v639, %v643
      %v650 = vunpack.c.l.b16 %v635
      %v651 = vunpack.c.l.b16 %v636
      %v652 = vunpack.c.l.b16 %v637
      %v653 = vunpack.c.l.b16 %v638
      %v654 = vpack.c.b16 %v651, %v650
      %v655 = vpack.c.b16 %v653, %v652
      %v659 = vsel %vm605, %v634, 0
      %661 = vmatprep.subr.bf16.mxu0 0
      %662 = vmatpush1.bf16.msra.mxu0 %v654
      %663 = vmatprep.subr.bf16.mxu0 0
      %664 = vmatpush1.bf16.msra.mxu0 %v655
      %665 = vmatprep.subr.bf16.mxu0 0
      %666 = vmatpush1.bf16.msra.mxu0 0
      %667 = vmatprep.subr.bf16.mxu0 0
      %668 = vmatpush1.bf16.msra.mxu0 0
      %669 = vmatprep.subr.bf16.mxu0 0
      %670 = vmatpush1.bf16.msra.mxu0 0
      %671 = vmatprep.subr.bf16.mxu0 0
      %672 = vmatpush1.bf16.msra.mxu0 0
      %673 = vmatprep.subr.bf16.mxu0 0
      %674 = vmatpush1.bf16.msra.mxu0 0
      %675 = vmatprep.subr.bf16.mxu0 0
      %676 = vmatpush1.bf16.msra.mxu0 0
      %677 = vmatprep.subr.bf16.mxu0 0
      %678 = vmatpush1.bf16.msra.mxu0 0
      %679 = vmatprep.subr.bf16.mxu0 0
      %680 = vmatpush1.bf16.msra.mxu0 0
      %681 = vmatprep.subr.bf16.mxu0 0
      %682 = vmatpush1.bf16.msra.mxu0 0
      %683 = vmatprep.subr.bf16.mxu0 0
      %684 = vmatpush1.bf16.msra.mxu0 0
      %685 = vmatprep.subr.bf16.mxu0 0
      %686 = vmatpush1.bf16.msra.mxu0 0
      %687 = vmatprep.subr.bf16.mxu0 0
      %688 = vmatpush1.bf16.msra.mxu0 0
      %689 = vmatprep.subr.bf16.mxu0 0
      %690 = vmatpush1.bf16.msra.mxu0 0
      %691 = vmatprep.subr.bf16.mxu0 0
      %692 = vmatpush1.bf16.msra.mxu0 0
      %693 = vmatprep.mubr.bf16.mxu0 0
      %694 = vmatmul.mubr.bf16.gmra.mrb[0].mxu0 %v659
      %v695 = vpop.f32.mrb[0].mxu0
      %v696 = vadd.f32 %v644, %v695
      %v697 = vpop.f32.mrb[0].mxu0
      %v698 = vpop.f32.mrb[0].mxu0
      %v699 = vpop.f32.mrb[0].mxu0
      %700 = vdwg.mxu0
      %v701 = vmul.f32 %v696, 0.35355338
      %v702 = vpack.c.bf16 %v701, %v701
      %v703 = vpack.c.bf16 %v696, %v696
      %v705 = vlaneseq
      %v706 = vshrl.u32 %v705, 7
      %v707 = vsub.s32 0, %v706
      %v708 = vrot.slane %v602, %v707
      %711 = vrot.lane.b32.xlu0 %v703, 96
      %v712 = vpop.permute.xlu0 %711
      %vm713 = vcmask 64512
      %v715 = vsel %vm713, %v702, 0
      %v718 = vsel %vm713, %v712, 0
      %720 = vmatprep.subr.bf16.mxu0 0
      %721 = vmatpush1.bf16.xpose.msra.mxu0 %v718
      %722 = vmatprep.subr.bf16.mxu0 0
      %723 = vmatpush1.bf16.xpose.msra.mxu0 0
      %724 = vmatprep.subr.bf16.mxu0 0
      %725 = vmatpush1.bf16.xpose.msra.mxu0 0
      %726 = vmatprep.subr.bf16.mxu0 0
      %727 = vmatpush1.bf16.xpose.msra.mxu0 0
      %728 = vmatprep.subr.bf16.mxu0 0
      %729 = vmatpush1.bf16.xpose.msra.mxu0 0
      %730 = vmatprep.subr.bf16.mxu0 0
      %731 = vmatpush1.bf16.xpose.msra.mxu0 0
      %732 = vmatprep.subr.bf16.mxu0 0
      %733 = vmatpush1.bf16.xpose.msra.mxu0 0
      %734 = vmatprep.subr.bf16.mxu0 0
      %735 = vmatpush1.bf16.xpose.msra.mxu0 0
      %736 = vmatprep.subr.bf16.mxu0 0
      %737 = vmatpush1.bf16.xpose.msra.mxu0 0
      %738 = vmatprep.subr.bf16.mxu0 0
      %739 = vmatpush1.bf16.xpose.msra.mxu0 0
      %740 = vmatprep.subr.bf16.mxu0 0
      %741 = vmatpush1.bf16.xpose.msra.mxu0 0
      %742 = vmatprep.subr.bf16.mxu0 0
      %743 = vmatpush1.bf16.xpose.msra.mxu0 0
      %744 = vmatprep.subr.bf16.mxu0 0
      %745 = vmatpush1.bf16.xpose.msra.mxu0 0
      %746 = vmatprep.subr.bf16.mxu0 0
      %747 = vmatpush1.bf16.xpose.msra.mxu0 0
      %748 = vmatprep.subr.bf16.mxu0 0
      %749 = vmatpush1.bf16.xpose.msra.mxu0 0
      %750 = vmatprep.subr.bf16.mxu0 0
      %751 = vmatpush1.bf16.xpose.msra.mxu0 0
      %752 = vmatprep.mubr.bf16.mxu0 0
      %753 = vmatmul.mubr.bf16.gmra.mrb[0].mxu0 %v715
      %v754 = vpop.f32.mrb[0].mxu0
      %v755 = vadd.f32 %v708, %v754
      %v756 = vpop.f32.mrb[0].mxu0
      %v757 = vpop.f32.mrb[0].mxu0
      %v758 = vpop.f32.mrb[0].mxu0
      %759 = vdwg.mxu0
      %v760 = vsel %vm713, %v755, -inf
      %761 = vmax.xlane.f32.xlu0 %v760
      %v762 = vpop.xlane.xlu0 %761
      %v763 = vsub.f32 %v755, %v762
      %v764 = vmul.f32 %v763, 1.442695
      %v765 = vpow.pop %v764
      %v766 = vsel %vm713, %v765, 0.0
      %767 = vadd.xlane.f32.xlu0 %v766
      %v768 = vpop.xlane.xlu0 %767
      %v769 = vrcp.pop %v768
      %v770 = vmul.f32 %v765, %v769
      %v771 = vpack.c.bf16 %v770, %v770
      %772 = vrot.lane.b32.xlu0 %v703, 64
      %v773 = vpop.permute.xlu0 %772
      %v775 = vsel %vm713, %v771, 0
      %vm777 = vcmask 1043456
      %v779 = vsel %vm777, %v773, 0
      %781 = vmatprep.subr.bf16.mxu0 0
      %782 = vmatpush1.bf16.msra.mxu0 %v779
      %783 = vmatprep.subr.bf16.mxu0 0
      %784 = vmatpush1.bf16.msra.mxu0 0
      %785 = vmatprep.subr.bf16.mxu0 0
      %786 = vmatpush1.bf16.msra.mxu0 0
      %787 = vmatprep.subr.bf16.mxu0 0
      %788 = vmatpush1.bf16.msra.mxu0 0
      %789 = vmatprep.subr.bf16.mxu0 0
      %790 = vmatpush1.bf16.msra.mxu0 0
      %791 = vmatprep.subr.bf16.mxu0 0
      %792 = vmatpush1.bf16.msra.mxu0 0
      %793 = vmatprep.subr.bf16.mxu0 0
      %794 = vmatpush1.bf16.msra.mxu0 0
      %795 = vmatprep.subr.bf16.mxu0 0
      %796 = vmatpush1.bf16.msra.mxu0 0
      %797 = vmatprep.subr.bf16.mxu0 0
      %798 = vmatpush1.bf16.msra.mxu0 0
      %799 = vmatprep.subr.bf16.mxu0 0
      %800 = vmatpush1.bf16.msra.mxu0 0
      %801 = vmatprep.subr.bf16.mxu0 0
      %802 = vmatpush1.bf16.msra.mxu0 0
      %803 = vmatprep.subr.bf16.mxu0 0
      %804 = vmatpush1.bf16.msra.mxu0 0
      %805 = vmatprep.subr.bf16.mxu0 0
      %806 = vmatpush1.bf16.msra.mxu0 0
      %807 = vmatprep.subr.bf16.mxu0 0
      %808 = vmatpush1.bf16.msra.mxu0 0
      %809 = vmatprep.subr.bf16.mxu0 0
      %810 = vmatpush1.bf16.msra.mxu0 0
      %811 = vmatprep.subr.bf16.mxu0 0
      %812 = vmatpush1.bf16.msra.mxu0 0
      %813 = vmatprep.mubr.bf16.mxu0 0
      %814 = vmatmul.mubr.bf16.gmra.mrb[0].mxu0 %v775
      %v815 = vpop.f32.mrb[0].mxu0
      %v816 = vadd.f32 0.0, %v815
      %v817 = vpop.f32.mrb[0].mxu0
      %v818 = vpop.f32.mrb[0].mxu0
      %v819 = vpop.f32.mrb[0].mxu0
      %820 = vdwg.mxu0
      %822 = vrot.lane.b32.xlu0 %v702, 120
      %v823 = vpop.permute.xlu0 %822
      %824 = vrot.lane.b32.xlu0 %v703, 88
      %v825 = vpop.permute.xlu0 %824
      %v827 = vsel %vm713, %v823, 0
      %v830 = vsel %vm713, %v825, 0
      %832 = vmatprep.subr.bf16.mxu0 0
      %833 = vmatpush1.bf16.xpose.msra.mxu0 %v830
      %834 = vmatprep.subr.bf16.mxu0 0
      %835 = vmatpush1.bf16.xpose.msra.mxu0 0
      %836 = vmatprep.subr.bf16.mxu0 0
      %837 = vmatpush1.bf16.xpose.msra.mxu0 0
      %838 = vmatprep.subr.bf16.mxu0 0
      %839 = vmatpush1.bf16.xpose.msra.mxu0 0
      %840 = vmatprep.subr.bf16.mxu0 0
      %841 = vmatpush1.bf16.xpose.msra.mxu0 0
      %842 = vmatprep.subr.bf16.mxu0 0
      %843 = vmatpush1.bf16.xpose.msra.mxu0 0
      %844 = vmatprep.subr.bf16.mxu0 0
      %845 = vmatpush1.bf16.xpose.msra.mxu0 0
      %846 = vmatprep.subr.bf16.mxu0 0
      %847 = vmatpush1.bf16.xpose.msra.mxu0 0
      %848 = vmatprep.subr.bf16.mxu0 0
      %849 = vmatpush1.bf16.xpose.msra.mxu0 0
      %850 = vmatprep.subr.bf16.mxu0 0
      %851 = vmatpush1.bf16.xpose.msra.mxu0 0
      %852 = vmatprep.subr.bf16.mxu0 0
      %853 = vmatpush1.bf16.xpose.msra.mxu0 0
      %854 = vmatprep.subr.bf16.mxu0 0
      %855 = vmatpush1.bf16.xpose.msra.mxu0 0
      %856 = vmatprep.subr.bf16.mxu0 0
      %857 = vmatpush1.bf16.xpose.msra.mxu0 0
      %858 = vmatprep.subr.bf16.mxu0 0
      %859 = vmatpush1.bf16.xpose.msra.mxu0 0
      %860 = vmatprep.subr.bf16.mxu0 0
      %861 = vmatpush1.bf16.xpose.msra.mxu0 0
      %862 = vmatprep.subr.bf16.mxu0 0
      %863 = vmatpush1.bf16.xpose.msra.mxu0 0
      %864 = vmatprep.mubr.bf16.mxu0 0
      %865 = vmatmul.mubr.bf16.gmra.mrb[0].mxu0 %v827
      %v866 = vpop.f32.mrb[0].mxu0
      %v867 = vadd.f32 %v708, %v866
      %v868 = vpop.f32.mrb[0].mxu0
      %v869 = vpop.f32.mrb[0].mxu0
      %v870 = vpop.f32.mrb[0].mxu0
      %871 = vdwg.mxu0
      %v872 = vsel %vm713, %v867, -inf
      %873 = vmax.xlane.f32.xlu0 %v872
      %v874 = vpop.xlane.xlu0 %873
      %v875 = vsub.f32 %v867, %v874
      %v876 = vmul.f32 %v875, 1.442695
      %v877 = vpow.pop %v876
      %v878 = vsel %vm713, %v877, 0.0
      %879 = vadd.xlane.f32.xlu0 %v878
      %v880 = vpop.xlane.xlu0 %879
      %v881 = vrcp.pop %v880
      %v882 = vmul.f32 %v877, %v881
      %v883 = vpack.c.bf16 %v882, %v882
      %884 = vrot.lane.b32.xlu0 %v703, 56
      %v885 = vpop.permute.xlu0 %884
      %v887 = vsel %vm713, %v883, 0
      %v890 = vsel %vm777, %v885, 0
      %892 = vmatprep.subr.bf16.mxu0 0
      %893 = vmatpush1.bf16.msra.mxu0 %v890
      %894 = vmatprep.subr.bf16.mxu0 0
      %895 = vmatpush1.bf16.msra.mxu0 0
      %896 = vmatprep.subr.bf16.mxu0 0
      %897 = vmatpush1.bf16.msra.mxu0 0
      %898 = vmatprep.subr.bf16.mxu0 0
      %899 = vmatpush1.bf16.msra.mxu0 0
      %900 = vmatprep.subr.bf16.mxu0 0
      %901 = vmatpush1.bf16.msra.mxu0 0
      %902 = vmatprep.subr.bf16.mxu0 0
      %903 = vmatpush1.bf16.msra.mxu0 0
      %904 = vmatprep.subr.bf16.mxu0 0
      %905 = vmatpush1.bf16.msra.mxu0 0
      %906 = vmatprep.subr.bf16.mxu0 0
      %907 = vmatpush1.bf16.msra.mxu0 0
      %908 = vmatprep.subr.bf16.mxu0 0
      %909 = vmatpush1.bf16.msra.mxu0 0
      %910 = vmatprep.subr.bf16.mxu0 0
      %911 = vmatpush1.bf16.msra.mxu0 0
      %912 = vmatprep.subr.bf16.mxu0 0
      %913 = vmatpush1.bf16.msra.mxu0 0
      %914 = vmatprep.subr.bf16.mxu0 0
      %915 = vmatpush1.bf16.msra.mxu0 0
      %916 = vmatprep.subr.bf16.mxu0 0
      %917 = vmatpush1.bf16.msra.mxu0 0
      %918 = vmatprep.subr.bf16.mxu0 0
      %919 = vmatpush1.bf16.msra.mxu0 0
      %920 = vmatprep.subr.bf16.mxu0 0
      %921 = vmatpush1.bf16.msra.mxu0 0
      %922 = vmatprep.subr.bf16.mxu0 0
      %923 = vmatpush1.bf16.msra.mxu0 0
      %924 = vmatprep.mubr.bf16.mxu0 0
      %925 = vmatmul.mubr.bf16.gmra.mrb[0].mxu0 %v887
      %v926 = vpop.f32.mrb[0].mxu0
      %v927 = vadd.f32 0.0, %v926
      %v928 = vpop.f32.mrb[0].mxu0
      %v929 = vpop.f32.mrb[0].mxu0
      %v930 = vpop.f32.mrb[0].mxu0
      %931 = vdwg.mxu0
      %932 = vrot.lane.b32.xlu0 %v702, 112
      %v933 = vpop.permute.xlu0 %932
      %934 = vrot.lane.b32.xlu0 %v703, 80
      %v935 = vpop.permute.xlu0 %934
      %v937 = vsel %vm713, %v933, 0
      %v940 = vsel %vm713, %v935, 0
      %942 = vmatprep.subr.bf16.mxu0 0
      %943 = vmatpush1.bf16.xpose.msra.mxu0 %v940
      %944 = vmatprep.subr.bf16.mxu0 0
      %945 = vmatpush1.bf16.xpose.msra.mxu0 0
      %946 = vmatprep.subr.bf16.mxu0 0
      %947 = vmatpush1.bf16.xpose.msra.mxu0 0
      %948 = vmatprep.subr.bf16.mxu0 0
      %949 = vmatpush1.bf16.xpose.msra.mxu0 0
      %950 = vmatprep.subr.bf16.mxu0 0
      %951 = vmatpush1.bf16.xpose.msra.mxu0 0
      %952 = vmatprep.subr.bf16.mxu0 0
      %953 = vmatpush1.bf16.xpose.msra.mxu0 0
      %954 = vmatprep.subr.bf16.mxu0 0
      %955 = vmatpush1.bf16.xpose.msra.mxu0 0
      %956 = vmatprep.subr.bf16.mxu0 0
      %957 = vmatpush1.bf16.xpose.msra.mxu0 0
      %958 = vmatprep.subr.bf16.mxu0 0
      %959 = vmatpush1.bf16.xpose.msra.mxu0 0
      %960 = vmatprep.subr.bf16.mxu0 0
      %961 = vmatpush1.bf16.xpose.msra.mxu0 0
      %962 = vmatprep.subr.bf16.mxu0 0
      %963 = vmatpush1.bf16.xpose.msra.mxu0 0
      %964 = vmatprep.subr.bf16.mxu0 0
      %965 = vmatpush1.bf16.xpose.msra.mxu0 0
      %966 = vmatprep.subr.bf16.mxu0 0
      %967 = vmatpush1.bf16.xpose.msra.mxu0 0
      %968 = vmatprep.subr.bf16.mxu0 0
      %969 = vmatpush1.bf16.xpose.msra.mxu0 0
      %970 = vmatprep.subr.bf16.mxu0 0
      %971 = vmatpush1.bf16.xpose.msra.mxu0 0
      %972 = vmatprep.subr.bf16.mxu0 0
      %973 = vmatpush1.bf16.xpose.msra.mxu0 0
      %974 = vmatprep.mubr.bf16.mxu0 0
      %975 = vmatmul.mubr.bf16.gmra.mrb[0].mxu0 %v937
      %v976 = vpop.f32.mrb[0].mxu0
      %v977 = vadd.f32 %v708, %v976
      %v978 = vpop.f32.mrb[0].mxu0
      %v979 = vpop.f32.mrb[0].mxu0
      %v980 = vpop.f32.mrb[0].mxu0
      %981 = vdwg.mxu0
      %v982 = vsel %vm713, %v977, -inf
      %983 = vmax.xlane.f32.xlu0 %v982
      %v984 = vpop.xlane.xlu0 %983
      %v985 = vsub.f32 %v977, %v984
      %v986 = vmul.f32 %v985, 1.442695
      %v987 = vpow.pop %v986
      %v988 = vsel %vm713, %v987, 0.0
      %989 = vadd.xlane.f32.xlu0 %v988
      %v990 = vpop.xlane.xlu0 %989
      %v991 = vrcp.pop %v990
      %v992 = vmul.f32 %v987, %v991
      %v993 = vpack.c.bf16 %v992, %v992
      %994 = vrot.lane.b32.xlu0 %v703, 48
      %v995 = vpop.permute.xlu0 %994
      %v997 = vsel %vm713, %v993, 0
      %v1000 = vsel %vm777, %v995, 0
      %1002 = vmatprep.subr.bf16.mxu0 0
      %1003 = vmatpush1.bf16.msra.mxu0 %v1000
      %1004 = vmatprep.subr.bf16.mxu0 0
      %1005 = vmatpush1.bf16.msra.mxu0 0
      %1006 = vmatprep.subr.bf16.mxu0 0
      %1007 = vmatpush1.bf16.msra.mxu0 0
      %1008 = vmatprep.subr.bf16.mxu0 0
      %1009 = vmatpush1.bf16.msra.mxu0 0
      %1010 = vmatprep.subr.bf16.mxu0 0
      %1011 = vmatpush1.bf16.msra.mxu0 0
      %1012 = vmatprep.subr.bf16.mxu0 0
      %1013 = vmatpush1.bf16.msra.mxu0 0
      %1014 = vmatprep.subr.bf16.mxu0 0
      %1015 = vmatpush1.bf16.msra.mxu0 0
      %1016 = vmatprep.subr.bf16.mxu0 0
      %1017 = vmatpush1.bf16.msra.mxu0 0
      %1018 = vmatprep.subr.bf16.mxu0 0
      %1019 = vmatpush1.bf16.msra.mxu0 0
      %1020 = vmatprep.subr.bf16.mxu0 0
      %1021 = vmatpush1.bf16.msra.mxu0 0
      %1022 = vmatprep.subr.bf16.mxu0 0
      %1023 = vmatpush1.bf16.msra.mxu0 0
      %1024 = vmatprep.subr.bf16.mxu0 0
      %1025 = vmatpush1.bf16.msra.mxu0 0
      %1026 = vmatprep.subr.bf16.mxu0 0
      %1027 = vmatpush1.bf16.msra.mxu0 0
      %1028 = vmatprep.subr.bf16.mxu0 0
      %1029 = vmatpush1.bf16.msra.mxu0 0
      %1030 = vmatprep.subr.bf16.mxu0 0
      %1031 = vmatpush1.bf16.msra.mxu0 0
      %1032 = vmatprep.subr.bf16.mxu0 0
      %1033 = vmatpush1.bf16.msra.mxu0 0
      %1034 = vmatprep.mubr.bf16.mxu0 0
      %1035 = vmatmul.mubr.bf16.gmra.mrb[0].mxu0 %v997
      %v1036 = vpop.f32.mrb[0].mxu0
      %v1037 = vadd.f32 0.0, %v1036
      %v1038 = vpop.f32.mrb[0].mxu0
      %v1039 = vpop.f32.mrb[0].mxu0
      %v1040 = vpop.f32.mrb[0].mxu0
      %1041 = vdwg.mxu0
      %1042 = vrot.lane.b32.xlu0 %v702, 104
      %v1043 = vpop.permute.xlu0 %1042
      %1044 = vrot.lane.b32.xlu0 %v703, 72
      %v1045 = vpop.permute.xlu0 %1044
      %v1047 = vsel %vm713, %v1043, 0
      %v1050 = vsel %vm713, %v1045, 0
      %1052 = vmatprep.subr.bf16.mxu0 0
      %1053 = vmatpush1.bf16.xpose.msra.mxu0 %v1050
      %1054 = vmatprep.subr.bf16.mxu0 0
      %1055 = vmatpush1.bf16.xpose.msra.mxu0 0
      %1056 = vmatprep.subr.bf16.mxu0 0
      %1057 = vmatpush1.bf16.xpose.msra.mxu0 0
      %1058 = vmatprep.subr.bf16.mxu0 0
      %1059 = vmatpush1.bf16.xpose.msra.mxu0 0
      %1060 = vmatprep.subr.bf16.mxu0 0
      %1061 = vmatpush1.bf16.xpose.msra.mxu0 0
      %1062 = vmatprep.subr.bf16.mxu0 0
      %1063 = vmatpush1.bf16.xpose.msra.mxu0 0
      %1064 = vmatprep.subr.bf16.mxu0 0
      %1065 = vmatpush1.bf16.xpose.msra.mxu0 0
      %1066 = vmatprep.subr.bf16.mxu0 0
      %1067 = vmatpush1.bf16.xpose.msra.mxu0 0
      %1068 = vmatprep.subr.bf16.mxu0 0
      %1069 = vmatpush1.bf16.xpose.msra.mxu0 0
      %1070 = vmatprep.subr.bf16.mxu0 0
      %1071 = vmatpush1.bf16.xpose.msra.mxu0 0
      %1072 = vmatprep.subr.bf16.mxu0 0
      %1073 = vmatpush1.bf16.xpose.msra.mxu0 0
      %1074 = vmatprep.subr.bf16.mxu0 0
      %1075 = vmatpush1.bf16.xpose.msra.mxu0 0
      %1076 = vmatprep.subr.bf16.mxu0 0
      %1077 = vmatpush1.bf16.xpose.msra.mxu0 0
      %1078 = vmatprep.subr.bf16.mxu0 0
      %1079 = vmatpush1.bf16.xpose.msra.mxu0 0
      %1080 = vmatprep.subr.bf16.mxu0 0
      %1081 = vmatpush1.bf16.xpose.msra.mxu0 0
      %1082 = vmatprep.subr.bf16.mxu0 0
      %1083 = vmatpush1.bf16.xpose.msra.mxu0 0
      %1084 = vmatprep.mubr.bf16.mxu0 0
      %1085 = vmatmul.mubr.bf16.gmra.mrb[0].mxu0 %v1047
      %v1086 = vpop.f32.mrb[0].mxu0
      %v1087 = vadd.f32 %v708, %v1086
      %v1088 = vpop.f32.mrb[0].mxu0
      %v1089 = vpop.f32.mrb[0].mxu0
      %v1090 = vpop.f32.mrb[0].mxu0
      %1091 = vdwg.mxu0
      %v1092 = vsel %vm713, %v1087, -inf
      %1093 = vmax.xlane.f32.xlu0 %v1092
      %v1094 = vpop.xlane.xlu0 %1093
      %v1095 = vsub.f32 %v1087, %v1094
      %v1096 = vmul.f32 %v1095, 1.442695
      %v1097 = vpow.pop %v1096
      %v1098 = vsel %vm713, %v1097, 0.0
      %1099 = vadd.xlane.f32.xlu0 %v1098
      %v1100 = vpop.xlane.xlu0 %1099
      %v1101 = vrcp.pop %v1100
      %v1102 = vmul.f32 %v1097, %v1101
      %v1103 = vpack.c.bf16 %v1102, %v1102
      %1104 = vrot.lane.b32.xlu0 %v703, 40
      %v1105 = vpop.permute.xlu0 %1104
      %v1107 = vsel %vm713, %v1103, 0
      %v1110 = vsel %vm777, %v1105, 0
      %1112 = vmatprep.subr.bf16.mxu0 0
      %1113 = vmatpush1.bf16.msra.mxu0 %v1110
      %1114 = vmatprep.subr.bf16.mxu0 0
      %1115 = vmatpush1.bf16.msra.mxu0 0
      %1116 = vmatprep.subr.bf16.mxu0 0
      %1117 = vmatpush1.bf16.msra.mxu0 0
      %1118 = vmatprep.subr.bf16.mxu0 0
      %1119 = vmatpush1.bf16.msra.mxu0 0
      %1120 = vmatprep.subr.bf16.mxu0 0
      %1121 = vmatpush1.bf16.msra.mxu0 0
      %1122 = vmatprep.subr.bf16.mxu0 0
      %1123 = vmatpush1.bf16.msra.mxu0 0
      %1124 = vmatprep.subr.bf16.mxu0 0
      %1125 = vmatpush1.bf16.msra.mxu0 0
      %1126 = vmatprep.subr.bf16.mxu0 0
      %1127 = vmatpush1.bf16.msra.mxu0 0
      %1128 = vmatprep.subr.bf16.mxu0 0
      %1129 = vmatpush1.bf16.msra.mxu0 0
      %1130 = vmatprep.subr.bf16.mxu0 0
      %1131 = vmatpush1.bf16.msra.mxu0 0
      %1132 = vmatprep.subr.bf16.mxu0 0
      %1133 = vmatpush1.bf16.msra.mxu0 0
      %1134 = vmatprep.subr.bf16.mxu0 0
      %1135 = vmatpush1.bf16.msra.mxu0 0
      %1136 = vmatprep.subr.bf16.mxu0 0
      %1137 = vmatpush1.bf16.msra.mxu0 0
      %1138 = vmatprep.subr.bf16.mxu0 0
      %1139 = vmatpush1.bf16.msra.mxu0 0
      %1140 = vmatprep.subr.bf16.mxu0 0
      %1141 = vmatpush1.bf16.msra.mxu0 0
      %1142 = vmatprep.subr.bf16.mxu0 0
      %1143 = vmatpush1.bf16.msra.mxu0 0
      %1144 = vmatprep.mubr.bf16.mxu0 0
      %1145 = vmatmul.mubr.bf16.gmra.mrb[0].mxu0 %v1107
      %v1146 = vpop.f32.mrb[0].mxu0
      %v1147 = vadd.f32 0.0, %v1146
      %v1148 = vpop.f32.mrb[0].mxu0
      %v1149 = vpop.f32.mrb[0].mxu0
      %v1150 = vpop.f32.mrb[0].mxu0
      %1151 = vdwg.mxu0
      %1153 = vrot.lane.b32.xlu0 %v927, 8
      %v1154 = vpop.permute.xlu0 %1153
      %1157 = vrot.lane.b32.xlu0 %v1037, 16
      %v1158 = vpop.permute.xlu0 %1157
      %1161 = vrot.lane.b32.xlu0 %v1147, 24
      %v1162 = vpop.permute.xlu0 %1161
      %v1164 = vsel %vm713, %v816, %v1154
      %vm1165 = vcmask 130048
      %v1166 = vsel %vm1165, %v1164, %v1158
      %vm1167 = vcmask 195584
      %v1168 = vsel %vm1167, %v1166, %v1162
      %v1169 = vpack.c.bf16 %v1168, %v1168
      %v1170 = vld [vmem:[%s7] sm:$0xf]
      %v1171 = vld [vmem:[%s7 + $0x4] sm:$0xf]
      %v1172 = vld [vmem:[%s7 + $0x8] sm:$0xf]
      %v1173 = vld [vmem:[%s7 + $0xc] sm:$0xf]
      %v1174 = vld [vmem:[%s8] sm:$0x1]
      %v1176 = vlaneseq
      %v1177 = vshrl.u32 %v1176, 7
      %v1178 = vsub.s32 0, %v1177
      %v1179 = vrot.slane %v1174, %v1178
      %v1185 = vunpack.c.l.b16 %v1170
      %v1186 = vunpack.c.l.b16 %v1171
      %v1187 = vunpack.c.l.b16 %v1172
      %v1188 = vunpack.c.l.b16 %v1173
      %v1189 = vpack.c.b16 %v1186, %v1185
      %v1190 = vpack.c.b16 %v1188, %v1187
      %v1194 = vsel %vm605, %v1169, 0
      %1196 = vmatprep.subr.bf16.mxu0 0
      %1197 = vmatpush1.bf16.msra.mxu0 %v1189
      %1198 = vmatprep.subr.bf16.mxu0 0
      %1199 = vmatpush1.bf16.msra.mxu0 %v1190
      %1200 = vmatprep.subr.bf16.mxu0 0
      %1201 = vmatpush1.bf16.msra.mxu0 0
      %1202 = vmatprep.subr.bf16.mxu0 0
      %1203 = vmatpush1.bf16.msra.mxu0 0
      %1204 = vmatprep.subr.bf16.mxu0 0
      %1205 = vmatpush1.bf16.msra.mxu0 0
      %1206 = vmatprep.subr.bf16.mxu0 0
      %1207 = vmatpush1.bf16.msra.mxu0 0
      %1208 = vmatprep.subr.bf16.mxu0 0
      %1209 = vmatpush1.bf16.msra.mxu0 0
      %1210 = vmatprep.subr.bf16.mxu0 0
      %1211 = vmatpush1.bf16.msra.mxu0 0
      %1212 = vmatprep.subr.bf16.mxu0 0
      %1213 = vmatpush1.bf16.msra.mxu0 0
      %1214 = vmatprep.subr.bf16.mxu0 0
      %1215 = vmatpush1.bf16.msra.mxu0 0
      %1216 = vmatprep.subr.bf16.mxu0 0
      %1217 = vmatpush1.bf16.msra.mxu0 0
      %1218 = vmatprep.subr.bf16.mxu0 0
      %1219 = vmatpush1.bf16.msra.mxu0 0
      %1220 = vmatprep.subr.bf16.mxu0 0
      %1221 = vmatpush1.bf16.msra.mxu0 0
      %1222 = vmatprep.subr.bf16.mxu0 0
      %1223 = vmatpush1.bf16.msra.mxu0 0
      %1224 = vmatprep.subr.bf16.mxu0 0
      %1225 = vmatpush1.bf16.msra.mxu0 0
      %1226 = vmatprep.subr.bf16.mxu0 0
      %1227 = vmatpush1.bf16.msra.mxu0 0
      %1228 = vmatprep.mubr.bf16.mxu0 0
      %1229 = vmatmul.mubr.bf16.gmra.mrb[0].mxu0 %v1194
      %v1230 = vpop.f32.mrb[0].mxu0
      %v1231 = vadd.f32 %v1179, %v1230
      %v1232 = vpop.f32.mrb[0].mxu0
      %v1233 = vpop.f32.mrb[0].mxu0
      %v1234 = vpop.f32.mrb[0].mxu0
      %1235 = vdwg.mxu0
      %v1236 = vadd.f32 %v601, %v1231
      %v1237 = vld [vmem:[%s9] sm:$0x1]
      %v1238 = vld [vmem:[%s10] sm:$0x1]
      %v1239 = vsel %vm605, %v1236, 0.0
      %1240 = vadd.xlane.f32.xlu0 %v1239
      %v1241 = vpop.xlane.xlu0 %1240
      %v1242 = vmul.f32 %v1241, %v609
      %v1243 = vsub.f32 %v1236, %v1242
      %v1244 = vmul.f32 %v1243, %v1243
      %v1245 = vsel %vm605, %v1244, 0.0
      %1246 = vadd.xlane.f32.xlu0 %v1245
      %v1247 = vpop.xlane.xlu0 %1246
      %v1248 = vmul.f32 %v1247, %v609
      %v1249 = vadd.f32 %v1248, 1e-05
      %v1250 = vrsqrt.pop %v1249
      %v1251 = vmul.f32 %v1243, %v1250
      %v1253 = vlaneseq
      %v1254 = vshrl.u32 %v1253, 7
      %v1255 = vsub.s32 0, %v1254
      %v1256 = vrot.slane %v1237, %v1255
      %v1258 = vmul.f32 %v1251, %v1256
      %v1260 = vlaneseq
      %v1261 = vshrl.u32 %v1260, 7
      %v1262 = vsub.s32 0, %v1261
      %v1263 = vrot.slane %v1238, %v1262
      %v1265 = vadd.f32 %v1258, %v1263
      %v1266 = vpack.c.bf16 %v1265, %v1265
      %v1267 = vld [vmem:[%s11] sm:$0xf]
      %v1268 = vld [vmem:[%s11 + $0x4] sm:$0xf]
      %v1269 = vld [vmem:[%s11 + $0x8] sm:$0xf]
      %v1270 = vld [vmem:[%s11 + $0xc] sm:$0xf]
      %v1271 = vld [vmem:[%s12] sm:$0x1]
      %v1273 = vlaneseq
      %v1274 = vshrl.u32 %v1273, 7
      %v1275 = vsub.s32 0, %v1274
      %v1276 = vrot.slane %v1271, %v1275
      %v1282 = vunpack.c.l.b16 %v1267
      %v1283 = vunpack.c.l.b16 %v1268
      %v1284 = vunpack.c.l.b16 %v1269
      %v1285 = vunpack.c.l.b16 %v1270
      %v1286 = vpack.c.b16 %v1283, %v1282
      %v1287 = vpack.c.b16 %v1285, %v1284
      %v1291 = vsel %vm605, %v1266, 0
      %1293 = vmatprep.subr.bf16.mxu0 0
      %1294 = vmatpush1.bf16.msra.mxu0 %v1286
      %1295 = vmatprep.subr.bf16.mxu0 0
      %1296 = vmatpush1.bf16.msra.mxu0 %v1287
      %1297 = vmatprep.subr.bf16.mxu0 0
      %1298 = vmatpush1.bf16.msra.mxu0 0
      %1299 = vmatprep.subr.bf16.mxu0 0
      %1300 = vmatpush1.bf16.msra.mxu0 0
      %1301 = vmatprep.subr.bf16.mxu0 0
      %1302 = vmatpush1.bf16.msra.mxu0 0
      %1303 = vmatprep.subr.bf16.mxu0 0
      %1304 = vmatpush1.bf16.msra.mxu0 0
      %1305 = vmatprep.subr.bf16.mxu0 0
      %1306 = vmatpush1.bf16.msra.mxu0 0
      %1307 = vmatprep.subr.bf16.mxu0 0
      %1308 = vmatpush1.bf16.msra.mxu0 0
      %1309 = vmatprep.subr.bf16.mxu0 0
      %1310 = vmatpush1.bf16.msra.mxu0 0
      %1311 = vmatprep.subr.bf16.mxu0 0
      %1312 = vmatpush1.bf16.msra.mxu0 0
      %1313 = vmatprep.subr.bf16.mxu0 0
      %1314 = vmatpush1.bf16.msra.mxu0 0
      %1315 = vmatprep.subr.bf16.mxu0 0
      %1316 = vmatpush1.bf16.msra.mxu0 0
      %1317 = vmatprep.subr.bf16.mxu0 0
      %1318 = vmatpush1.bf16.msra.mxu0 0
      %1319 = vmatprep.subr.bf16.mxu0 0
      %1320 = vmatpush1.bf16.msra.mxu0 0
      %1321 = vmatprep.subr.bf16.mxu0 0
      %1322 = vmatpush1.bf16.msra.mxu0 0
      %1323 = vmatprep.subr.bf16.mxu0 0
      %1324 = vmatpush1.bf16.msra.mxu0 0
      %1325 = vmatprep.mubr.bf16.mxu0 0
      %1326 = vmatmul.mubr.bf16.gmra.mrb[0].mxu0 %v1291
      %v1327 = vpop.f32.mrb[0].mxu0
      %v1328 = vadd.f32 %v1276, %v1327
      %v1329 = vpop.f32.mrb[0].mxu0
      %v1330 = vpop.f32.mrb[0].mxu0
      %v1331 = vpop.f32.mrb[0].mxu0
      %1332 = vdwg.mxu0
      %v1333 = vmul.f32 %v1328, 0.5
      %v1334 = vmul.f32 %v1328, 0.044715
      %v1335 = vmul.f32 %v1334, %v1328
      %v1336 = vmul.f32 %v1335, %v1328
      %v1337 = vadd.f32 %v1328, %v1336
      %v1338 = vmul.f32 %v1337, 0.7978846
      %v1339 = vtanh.pop %v1338
      %v1340 = vadd.f32 %v1339, 1.0
      %v1341 = vmul.f32 %v1333, %v1340
      %v1342 = vpack.c.bf16 %v1341, %v1341
      %v1343 = vld [vmem:[%s13] sm:$0xf]
      %v1344 = vld [vmem:[%s13 + $0x4] sm:$0xf]
      %v1345 = vld [vmem:[%s13 + $0x8] sm:$0xf]
      %v1346 = vld [vmem:[%s13 + $0xc] sm:$0xf]
      %v1347 = vld [vmem:[%s13 + $0x10] sm:$0xf]
      %v1348 = vld [vmem:[%s13 + $0x14] sm:$0xf]
      %v1349 = vld [vmem:[%s13 + $0x18] sm:$0xf]
      %v1350 = vld [vmem:[%s13 + $0x1c] sm:$0xf]
      %v1351 = vld [vmem:[%s13 + $0x20] sm:$0xf]
      %v1352 = vld [vmem:[%s13 + $0x24] sm:$0xf]
      %v1353 = vld [vmem:[%s13 + $0x28] sm:$0xf]
      %v1354 = vld [vmem:[%s13 + $0x2c] sm:$0xf]
      %v1355 = vld [vmem:[%s13 + $0x30] sm:$0xf]
      %v1356 = vld [vmem:[%s13 + $0x34] sm:$0xf]
      %v1357 = vld [vmem:[%s13 + $0x38] sm:$0xf]
      %v1358 = vld [vmem:[%s13 + $0x3c] sm:$0xf]
      %v1359 = vld [vmem:[%s14] sm:$0x1]
      %v1361 = vlaneseq
      %v1362 = vshrl.u32 %v1361, 7
      %v1363 = vsub.s32 0, %v1362
      %v1364 = vrot.slane %v1359, %v1363
      %v1382 = vunpack.c.l.b16 %v1343
      %v1383 = vunpack.c.l.b16 %v1344
      %v1384 = vunpack.c.l.b16 %v1345
      %v1385 = vunpack.c.l.b16 %v1346
      %v1386 = vunpack.c.l.b16 %v1347
      %v1387 = vunpack.c.l.b16 %v1348
      %v1388 = vunpack.c.l.b16 %v1349
      %v1389 = vunpack.c.l.b16 %v1350
      %v1390 = vunpack.c.l.b16 %v1351
      %v1391 = vunpack.c.l.b16 %v1352
      %v1392 = vunpack.c.l.b16 %v1353
      %v1393 = vunpack.c.l.b16 %v1354
      %v1394 = vunpack.c.l.b16 %v1355
      %v1395 = vunpack.c.l.b16 %v1356
      %v1396 = vunpack.c.l.b16 %v1357
      %v1397 = vunpack.c.l.b16 %v1358
      %v1398 = vpack.c.b16 %v1383, %v1382
      %v1399 = vpack.c.b16 %v1385, %v1384
      %v1400 = vpack.c.b16 %v1387, %v1386
      %v1401 = vpack.c.b16 %v1389, %v1388
      %v1402 = vpack.c.b16 %v1391, %v1390
      %v1403 = vpack.c.b16 %v1393, %v1392
      %v1404 = vpack.c.b16 %v1395, %v1394
      %v1405 = vpack.c.b16 %v1397, %v1396
      %1414 = vmatprep.subr.bf16.mxu0 0
      %1415 = vmatpush1.bf16.msra.mxu0 %v1398
      %1416 = vmatprep.subr.bf16.mxu0 0
      %1417 = vmatpush1.bf16.msra.mxu0 %v1399
      %1418 = vmatprep.subr.bf16.mxu0 0
      %1419 = vmatpush1.bf16.msra.mxu0 %v1400
      %1420 = vmatprep.subr.bf16.mxu0 0
      %1421 = vmatpush1.bf16.msra.mxu0 %v1401
      %1422 = vmatprep.subr.bf16.mxu0 0
      %1423 = vmatpush1.bf16.msra.mxu0 %v1402
      %1424 = vmatprep.subr.bf16.mxu0 0
      %1425 = vmatpush1.bf16.msra.mxu0 %v1403
      %1426 = vmatprep.subr.bf16.mxu0 0
      %1427 = vmatpush1.bf16.msra.mxu0 %v1404
      %1428 = vmatprep.subr.bf16.mxu0 0
      %1429 = vmatpush1.bf16.msra.mxu0 %v1405
      %1430 = vmatprep.subr.bf16.mxu0 0
      %1431 = vmatpush1.bf16.msra.mxu0 0
      %1432 = vmatprep.subr.bf16.mxu0 0
      %1433 = vmatpush1.bf16.msra.mxu0 0
      %1434 = vmatprep.subr.bf16.mxu0 0
      %1435 = vmatpush1.bf16.msra.mxu0 0
      %1436 = vmatprep.subr.bf16.mxu0 0
      %1437 = vmatpush1.bf16.msra.mxu0 0
      %1438 = vmatprep.subr.bf16.mxu0 0
      %1439 = vmatpush1.bf16.msra.mxu0 0
      %1440 = vmatprep.subr.bf16.mxu0 0
      %1441 = vmatpush1.bf16.msra.mxu0 0
      %1442 = vmatprep.subr.bf16.mxu0 0
      %1443 = vmatpush1.bf16.msra.mxu0 0
      %1444 = vmatprep.subr.bf16.mxu0 0
      %1445 = vmatpush1.bf16.msra.mxu0 0
      %1446 = vmatprep.mubr.bf16.mxu0 0
      %1447 = vmatmul.mubr.bf16.gmra.mrb[0].mxu0 %v1342
      %v1448 = vpop.f32.mrb[0].mxu0
      %v1449 = vadd.f32 %v1364, %v1448
      %v1450 = vpop.f32.mrb[0].mxu0
      %v1451 = vpop.f32.mrb[0].mxu0
      %v1452 = vpop.f32.mrb[0].mxu0
      %1453 = vdwg.mxu0
      %v1454 = vadd.f32 %v1236, %v1449
      %s1455 = scalar_lea.vmem %s3, 1
      %v1456 = vld [vmem:[%s1455] sm:$0x1]
      %s1457 = scalar_lea.vmem %s4, 1
      %v1458 = vld [vmem:[%s1457] sm:$0x1]
      %v1459 = vsel %vm605, %v1454, 0.0
      %1460 = vadd.xlane.f32.xlu0 %v1459
      %v1461 = vpop.xlane.xlu0 %1460
      %v1462 = vmul.f32 %v1461, %v609
      %v1463 = vsub.f32 %v1454, %v1462
      %v1464 = vmul.f32 %v1463, %v1463
      %v1465 = vsel %vm605, %v1464, 0.0
      %1466 = vadd.xlane.f32.xlu0 %v1465
      %v1467 = vpop.xlane.xlu0 %1466
      %v1468 = vmul.f32 %v1467, %v609
      %v1469 = vadd.f32 %v1468, 1e-05
      %v1470 = vrsqrt.pop %v1469
      %v1471 = vmul.f32 %v1463, %v1470
      %v1473 = vlaneseq
      %v1474 = vshrl.u32 %v1473, 7
      %v1475 = vsub.s32 0, %v1474
      %v1476 = vrot.slane %v1456, %v1475
      %v1478 = vmul.f32 %v1471, %v1476
      %v1480 = vlaneseq
      %v1481 = vshrl.u32 %v1480, 7
      %v1482 = vsub.s32 0, %v1481
      %v1483 = vrot.slane %v1458, %v1482
      %v1485 = vadd.f32 %v1478, %v1483
      %v1486 = vpack.c.bf16 %v1485, %v1485
      %s1487 = scalar_lea.vmem %s5, 16
      %v1488 = vld [vmem:[%s1487] sm:$0xf]
      %v1489 = vld [vmem:[%s1487 + $0x4] sm:$0xf]
      %v1490 = vld [vmem:[%s1487 + $0x8] sm:$0xf]
      %v1491 = vld [vmem:[%s1487 + $0xc] sm:$0xf]
      %s1492 = scalar_lea.vmem %s6, 1
      %v1493 = vld [vmem:[%s1492] sm:$0x1]
      %v1495 = vlaneseq
      %v1496 = vshrl.u32 %v1495, 7
      %v1497 = vsub.s32 0, %v1496
      %v1498 = vrot.slane %v1493, %v1497
      %v1504 = vunpack.c.l.b16 %v1488
      %v1505 = vunpack.c.l.b16 %v1489
      %v1506 = vunpack.c.l.b16 %v1490
      %v1507 = vunpack.c.l.b16 %v1491
      %v1508 = vpack.c.b16 %v1505, %v1504
      %v1509 = vpack.c.b16 %v1507, %v1506
      %v1513 = vsel %vm605, %v1486, 0
      %1515 = vmatprep.subr.bf16.mxu0 0
      %1516 = vmatpush1.bf16.msra.mxu0 %v1508
      %1517 = vmatprep.subr.bf16.mxu0 0
      %1518 = vmatpush1.bf16.msra.mxu0 %v1509
      %1519 = vmatprep.subr.bf16.mxu0 0
      %1520 = vmatpush1.bf16.msra.mxu0 0
      %1521 = vmatprep.subr.bf16.mxu0 0
      %1522 = vmatpush1.bf16.msra.mxu0 0
      %1523 = vmatprep.subr.bf16.mxu0 0
      %1524 = vmatpush1.bf16.msra.mxu0 0
      %1525 = vmatprep.subr.bf16.mxu0 0
      %1526 = vmatpush1.bf16.msra.mxu0 0
      %1527 = vmatprep.subr.bf16.mxu0 0
      %1528 = vmatpush1.bf16.msra.mxu0 0
      %1529 = vmatprep.subr.bf16.mxu0 0
      %1530 = vmatpush1.bf16.msra.mxu0 0
      %1531 = vmatprep.subr.bf16.mxu0 0
      %1532 = vmatpush1.bf16.msra.mxu0 0
      %1533 = vmatprep.subr.bf16.mxu0 0
      %1534 = vmatpush1.bf16.msra.mxu0 0
      %1535 = vmatprep.subr.bf16.mxu0 0
      %1536 = vmatpush1.bf16.msra.mxu0 0
      %1537 = vmatprep.subr.bf16.mxu0 0
      %1538 = vmatpush1.bf16.msra.mxu0 0
      %1539 = vmatprep.subr.bf16.mxu0 0
      %1540 = vmatpush1.bf16.msra.mxu0 0
      %1541 = vmatprep.subr.bf16.mxu0 0
      %1542 = vmatpush1.bf16.msra.mxu0 0
      %1543 = vmatprep.subr.bf16.mxu0 0
      %1544 = vmatpush1.bf16.msra.mxu0 0
      %1545 = vmatprep.subr.bf16.mxu0 0
      %1546 = vmatpush1.bf16.msra.mxu0 0
      %1547 = vmatprep.mubr.bf16.mxu0 0
      %1548 = vmatmul.mubr.bf16.gmra.mrb[0].mxu0 %v1513
      %v1549 = vpop.f32.mrb[0].mxu0
      %v1550 = vadd.f32 %v1498, %v1549
      %v1551 = vpop.f32.mrb[0].mxu0
      %v1552 = vpop.f32.mrb[0].mxu0
      %v1553 = vpop.f32.mrb[0].mxu0
      %1554 = vdwg.mxu0
      %v1555 = vmul.f32 %v1550, 0.35355338
      %v1556 = vpack.c.bf16 %v1555, %v1555
      %v1557 = vpack.c.bf16 %v1550, %v1550
      %1559 = vrot.lane.b32.xlu0 %v1557, 96
      %v1560 = vpop.permute.xlu0 %1559
      %v1562 = vsel %vm713, %v1556, 0
      %v1565 = vsel %vm713, %v1560, 0
      %1567 = vmatprep.subr.bf16.mxu0 0
      %1568 = vmatpush1.bf16.xpose.msra.mxu0 %v1565
      %1569 = vmatprep.subr.bf16.mxu0 0
      %1570 = vmatpush1.bf16.xpose.msra.mxu0 0
      %1571 = vmatprep.subr.bf16.mxu0 0
      %1572 = vmatpush1.bf16.xpose.msra.mxu0 0
      %1573 = vmatprep.subr.bf16.mxu0 0
      %1574 = vmatpush1.bf16.xpose.msra.mxu0 0
      %1575 = vmatprep.subr.bf16.mxu0 0
      %1576 = vmatpush1.bf16.xpose.msra.mxu0 0
      %1577 = vmatprep.subr.bf16.mxu0 0
      %1578 = vmatpush1.bf16.xpose.msra.mxu0 0
      %1579 = vmatprep.subr.bf16.mxu0 0
      %1580 = vmatpush1.bf16.xpose.msra.mxu0 0
      %1581 = vmatprep.subr.bf16.mxu0 0
      %1582 = vmatpush1.bf16.xpose.msra.mxu0 0
      %1583 = vmatprep.subr.bf16.mxu0 0
      %1584 = vmatpush1.bf16.xpose.msra.mxu0 0
      %1585 = vmatprep.subr.bf16.mxu0 0
      %1586 = vmatpush1.bf16.xpose.msra.mxu0 0
      %1587 = vmatprep.subr.bf16.mxu0 0
      %1588 = vmatpush1.bf16.xpose.msra.mxu0 0
      %1589 = vmatprep.subr.bf16.mxu0 0
      %1590 = vmatpush1.bf16.xpose.msra.mxu0 0
      %1591 = vmatprep.subr.bf16.mxu0 0
      %1592 = vmatpush1.bf16.xpose.msra.mxu0 0
      %1593 = vmatprep.subr.bf16.mxu0 0
      %1594 = vmatpush1.bf16.xpose.msra.mxu0 0
      %1595 = vmatprep.subr.bf16.mxu0 0
      %1596 = vmatpush1.bf16.xpose.msra.mxu0 0
      %1597 = vmatprep.subr.bf16.mxu0 0
      %1598 = vmatpush1.bf16.xpose.msra.mxu0 0
      %1599 = vmatprep.mubr.bf16.mxu0 0
      %1600 = vmatmul.mubr.bf16.gmra.mrb[0].mxu0 %v1562
      %v1601 = vpop.f32.mrb[0].mxu0
      %v1602 = vadd.f32 %v708, %v1601
      %v1603 = vpop.f32.mrb[0].mxu0
      %v1604 = vpop.f32.mrb[0].mxu0
      %v1605 = vpop.f32.mrb[0].mxu0
      %1606 = vdwg.mxu0
      %v1607 = vsel %vm713, %v1602, -inf
      %1608 = vmax.xlane.f32.xlu0 %v1607
      %v1609 = vpop.xlane.xlu0 %1608
      %v1610 = vsub.f32 %v1602, %v1609
      %v1611 = vmul.f32 %v1610, 1.442695
      %v1612 = vpow.pop %v1611
      %v1613 = vsel %vm713, %v1612, 0.0
      %1614 = vadd.xlane.f32.xlu0 %v1613
      %v1615 = vpop.xlane.xlu0 %1614
      %v1616 = vrcp.pop %v1615
      %v1617 = vmul.f32 %v1612, %v1616
      %v1618 = vpack.c.bf16 %v1617, %v1617
      %1619 = vrot.lane.b32.xlu0 %v1557, 64
      %v1620 = vpop.permute.xlu0 %1619
      %v1622 = vsel %vm713, %v1618, 0
      %v1625 = vsel %vm777, %v1620, 0
      %1627 = vmatprep.subr.bf16.mxu0 0
      %1628 = vmatpush1.bf16.msra.mxu0 %v1625
      %1629 = vmatprep.subr.bf16.mxu0 0
      %1630 = vmatpush1.bf16.msra.mxu0 0
      %1631 = vmatprep.subr.bf16.mxu0 0
      %1632 = vmatpush1.bf16.msra.mxu0 0
      %1633 = vmatprep.subr.bf16.mxu0 0
      %1634 = vmatpush1.bf16.msra.mxu0 0
      %1635 = vmatprep.subr.bf16.mxu0 0
      %1636 = vmatpush1.bf16.msra.mxu0 0
      %1637 = vmatprep.subr.bf16.mxu0 0
      %1638 = vmatpush1.bf16.msra.mxu0 0
      %1639 = vmatprep.subr.bf16.mxu0 0
      %1640 = vmatpush1.bf16.msra.mxu0 0
      %1641 = vmatprep.subr.bf16.mxu0 0
      %1642 = vmatpush1.bf16.msra.mxu0 0
      %1643 = vmatprep.subr.bf16.mxu0 0
      %1644 = vmatpush1.bf16.msra.mxu0 0
      %1645 = vmatprep.subr.bf16.mxu0 0
      %1646 = vmatpush1.bf16.msra.mxu0 0
      %1647 = vmatprep.subr.bf16.mxu0 0
      %1648 = vmatpush1.bf16.msra.mxu0 0
      %1649 = vmatprep.subr.bf16.mxu0 0
      %1650 = vmatpush1.bf16.msra.mxu0 0
      %1651 = vmatprep.subr.bf16.mxu0 0
      %1652 = vmatpush1.bf16.msra.mxu0 0
      %1653 = vmatprep.subr.bf16.mxu0 0
      %1654 = vmatpush1.bf16.msra.mxu0 0
      %1655 = vmatprep.subr.bf16.mxu0 0
      %1656 = vmatpush1.bf16.msra.mxu0 0
      %1657 = vmatprep.subr.bf16.mxu0 0
      %1658 = vmatpush1.bf16.msra.mxu0 0
      %1659 = vmatprep.mubr.bf16.mxu0 0
      %1660 = vmatmul.mubr.bf16.gmra.mrb[0].mxu0 %v1622
      %v1661 = vpop.f32.mrb[0].mxu0
      %v1662 = vadd.f32 0.0, %v1661
      %v1663 = vpop.f32.mrb[0].mxu0
      %v1664 = vpop.f32.mrb[0].mxu0
      %v1665 = vpop.f32.mrb[0].mxu0
      %1666 = vdwg.mxu0
      %1668 = vrot.lane.b32.xlu0 %v1556, 120
      %v1669 = vpop.permute.xlu0 %1668
      %1670 = vrot.lane.b32.xlu0 %v1557, 88
      %v1671 = vpop.permute.xlu0 %1670
      %v1673 = vsel %vm713, %v1669, 0
      %v1676 = vsel %vm713, %v1671, 0
      %1678 = vmatprep.subr.bf16.mxu0 0
      %1679 = vmatpush1.bf16.xpose.msra.mxu0 %v1676
      %1680 = vmatprep.subr.bf16.mxu0 0
      %1681 = vmatpush1.bf16.xpose.msra.mxu0 0
      %1682 = vmatprep.subr.bf16.mxu0 0
      %1683 = vmatpush1.bf16.xpose.msra.mxu0 0
      %1684 = vmatprep.subr.bf16.mxu0 0
      %1685 = vmatpush1.bf16.xpose.msra.mxu0 0
      %1686 = vmatprep.subr.bf16.mxu0 0
      %1687 = vmatpush1.bf16.xpose.msra.mxu0 0
      %1688 = vmatprep.subr.bf16.mxu0 0
      %1689 = vmatpush1.bf16.xpose.msra.mxu0 0
      %1690 = vmatprep.subr.bf16.mxu0 0
      %1691 = vmatpush1.bf16.xpose.msra.mxu0 0
      %1692 = vmatprep.subr.bf16.mxu0 0
      %1693 = vmatpush1.bf16.xpose.msra.mxu0 0
      %1694 = vmatprep.subr.bf16.mxu0 0
      %1695 = vmatpush1.bf16.xpose.msra.mxu0 0
      %1696 = vmatprep.subr.bf16.mxu0 0
      %1697 = vmatpush1.bf16.xpose.msra.mxu0 0
      %1698 = vmatprep.subr.bf16.mxu0 0
      %1699 = vmatpush1.bf16.xpose.msra.mxu0 0
      %1700 = vmatprep.subr.bf16.mxu0 0
      %1701 = vmatpush1.bf16.xpose.msra.mxu0 0
      %1702 = vmatprep.subr.bf16.mxu0 0
      %1703 = vmatpush1.bf16.xpose.msra.mxu0 0
      %1704 = vmatprep.subr.bf16.mxu0 0
      %1705 = vmatpush1.bf16.xpose.msra.mxu0 0
      %1706 = vmatprep.subr.bf16.mxu0 0
      %1707 = vmatpush1.bf16.xpose.msra.mxu0 0
      %1708 = vmatprep.subr.bf16.mxu0 0
      %1709 = vmatpush1.bf16.xpose.msra.mxu0 0
      %1710 = vmatprep.mubr.bf16.mxu0 0
      %1711 = vmatmul.mubr.bf16.gmra.mrb[0].mxu0 %v1673
      %v1712 = vpop.f32.mrb[0].mxu0
      %v1713 = vadd.f32 %v708, %v1712
      %v1714 = vpop.f32.mrb[0].mxu0
      %v1715 = vpop.f32.mrb[0].mxu0
      %v1716 = vpop.f32.mrb[0].mxu0
      %1717 = vdwg.mxu0
      %v1718 = vsel %vm713, %v1713, -inf
      %1719 = vmax.xlane.f32.xlu0 %v1718
      %v1720 = vpop.xlane.xlu0 %1719
      %v1721 = vsub.f32 %v1713, %v1720
      %v1722 = vmul.f32 %v1721, 1.442695
      %v1723 = vpow.pop %v1722
      %v1724 = vsel %vm713, %v1723, 0.0
      %1725 = vadd.xlane.f32.xlu0 %v1724
      %v1726 = vpop.xlane.xlu0 %1725
      %v1727 = vrcp.pop %v1726
      %v1728 = vmul.f32 %v1723, %v1727
      %v1729 = vpack.c.bf16 %v1728, %v1728
      %1730 = vrot.lane.b32.xlu0 %v1557, 56
      %v1731 = vpop.permute.xlu0 %1730
      %v1733 = vsel %vm713, %v1729, 0
      %v1736 = vsel %vm777, %v1731, 0
      %1738 = vmatprep.subr.bf16.mxu0 0
      %1739 = vmatpush1.bf16.msra.mxu0 %v1736
      %1740 = vmatprep.subr.bf16.mxu0 0
      %1741 = vmatpush1.bf16.msra.mxu0 0
      %1742 = vmatprep.subr.bf16.mxu0 0
      %1743 = vmatpush1.bf16.msra.mxu0 0
      %1744 = vmatprep.subr.bf16.mxu0 0
      %1745 = vmatpush1.bf16.msra.mxu0 0
      %1746 = vmatprep.subr.bf16.mxu0 0
      %1747 = vmatpush1.bf16.msra.mxu0 0
      %1748 = vmatprep.subr.bf16.mxu0 0
      %1749 = vmatpush1.bf16.msra.mxu0 0
      %1750 = vmatprep.subr.bf16.mxu0 0
      %1751 = vmatpush1.bf16.msra.mxu0 0
      %1752 = vmatprep.subr.bf16.mxu0 0
      %1753 = vmatpush1.bf16.msra.mxu0 0
      %1754 = vmatprep.subr.bf16.mxu0 0
      %1755 = vmatpush1.bf16.msra.mxu0 0
      %1756 = vmatprep.subr.bf16.mxu0 0
      %1757 = vmatpush1.bf16.msra.mxu0 0
      %1758 = vmatprep.subr.bf16.mxu0 0
      %1759 = vmatpush1.bf16.msra.mxu0 0
      %1760 = vmatprep.subr.bf16.mxu0 0
      %1761 = vmatpush1.bf16.msra.mxu0 0
      %1762 = vmatprep.subr.bf16.mxu0 0
      %1763 = vmatpush1.bf16.msra.mxu0 0
      %1764 = vmatprep.subr.bf16.mxu0 0
      %1765 = vmatpush1.bf16.msra.mxu0 0
      %1766 = vmatprep.subr.bf16.mxu0 0
      %1767 = vmatpush1.bf16.msra.mxu0 0
      %1768 = vmatprep.subr.bf16.mxu0 0
      %1769 = vmatpush1.bf16.msra.mxu0 0
      %1770 = vmatprep.mubr.bf16.mxu0 0
      %1771 = vmatmul.mubr.bf16.gmra.mrb[0].mxu0 %v1733
      %v1772 = vpop.f32.mrb[0].mxu0
      %v1773 = vadd.f32 0.0, %v1772
      %v1774 = vpop.f32.mrb[0].mxu0
      %v1775 = vpop.f32.mrb[0].mxu0
      %v1776 = vpop.f32.mrb[0].mxu0
      %1777 = vdwg.mxu0
      %1778 = vrot.lane.b32.xlu0 %v1556, 112
      %v1779 = vpop.permute.xlu0 %1778
      %1780 = vrot.lane.b32.xlu0 %v1557, 80
      %v1781 = vpop.permute.xlu0 %1780
      %v1783 = vsel %vm713, %v1779, 0
      %v1786 = vsel %vm713, %v1781, 0
      %1788 = vmatprep.subr.bf16.mxu0 0
      %1789 = vmatpush1.bf16.xpose.msra.mxu0 %v1786
      %1790 = vmatprep.subr.bf16.mxu0 0
      %1791 = vmatpush1.bf16.xpose.msra.mxu0 0
      %1792 = vmatprep.subr.bf16.mxu0 0
      %1793 = vmatpush1.bf16.xpose.msra.mxu0 0
      %1794 = vmatprep.subr.bf16.mxu0 0
      %1795 = vmatpush1.bf16.xpose.msra.mxu0 0
      %1796 = vmatprep.subr.bf16.mxu0 0
      %1797 = vmatpush1.bf16.xpose.msra.mxu0 0
      %1798 = vmatprep.subr.bf16.mxu0 0
      %1799 = vmatpush1.bf16.xpose.msra.mxu0 0
      %1800 = vmatprep.subr.bf16.mxu0 0
      %1801 = vmatpush1.bf16.xpose.msra.mxu0 0
      %1802 = vmatprep.subr.bf16.mxu0 0
      %1803 = vmatpush1.bf16.xpose.msra.mxu0 0
      %1804 = vmatprep.subr.bf16.mxu0 0
      %1805 = vmatpush1.bf16.xpose.msra.mxu0 0
      %1806 = vmatprep.subr.bf16.mxu0 0
      %1807 = vmatpush1.bf16.xpose.msra.mxu0 0
      %1808 = vmatprep.subr.bf16.mxu0 0
      %1809 = vmatpush1.bf16.xpose.msra.mxu0 0
      %1810 = vmatprep.subr.bf16.mxu0 0
      %1811 = vmatpush1.bf16.xpose.msra.mxu0 0
      %1812 = vmatprep.subr.bf16.mxu0 0
      %1813 = vmatpush1.bf16.xpose.msra.mxu0 0
      %1814 = vmatprep.subr.bf16.mxu0 0
      %1815 = vmatpush1.bf16.xpose.msra.mxu0 0
      %1816 = vmatprep.subr.bf16.mxu0 0
      %1817 = vmatpush1.bf16.xpose.msra.mxu0 0
      %1818 = vmatprep.subr.bf16.mxu0 0
      %1819 = vmatpush1.bf16.xpose.msra.mxu0 0
      %1820 = vmatprep.mubr.bf16.mxu0 0
      %1821 = vmatmul.mubr.bf16.gmra.mrb[0].mxu0 %v1783
      %v1822 = vpop.f32.mrb[0].mxu0
      %v1823 = vadd.f32 %v708, %v1822
      %v1824 = vpop.f32.mrb[0].mxu0
      %v1825 = vpop.f32.mrb[0].mxu0
      %v1826 = vpop.f32.mrb[0].mxu0
      %1827 = vdwg.mxu0
      %v1828 = vsel %vm713, %v1823, -inf
      %1829 = vmax.xlane.f32.xlu0 %v1828
      %v1830 = vpop.xlane.xlu0 %1829
      %v1831 = vsub.f32 %v1823, %v1830
      %v1832 = vmul.f32 %v1831, 1.442695
      %v1833 = vpow.pop %v1832
      %v1834 = vsel %vm713, %v1833, 0.0
      %1835 = vadd.xlane.f32.xlu0 %v1834
      %v1836 = vpop.xlane.xlu0 %1835
      %v1837 = vrcp.pop %v1836
      %v1838 = vmul.f32 %v1833, %v1837
      %v1839 = vpack.c.bf16 %v1838, %v1838
      %1840 = vrot.lane.b32.xlu0 %v1557, 48
      %v1841 = vpop.permute.xlu0 %1840
      %v1843 = vsel %vm713, %v1839, 0
      %v1846 = vsel %vm777, %v1841, 0
      %1848 = vmatprep.subr.bf16.mxu0 0
      %1849 = vmatpush1.bf16.msra.mxu0 %v1846
      %1850 = vmatprep.subr.bf16.mxu0 0
      %1851 = vmatpush1.bf16.msra.mxu0 0
      %1852 = vmatprep.subr.bf16.mxu0 0
      %1853 = vmatpush1.bf16.msra.mxu0 0
      %1854 = vmatprep.subr.bf16.mxu0 0
      %1855 = vmatpush1.bf16.msra.mxu0 0
      %1856 = vmatprep.subr.bf16.mxu0 0
      %1857 = vmatpush1.bf16.msra.mxu0 0
      %1858 = vmatprep.subr.bf16.mxu0 0
      %1859 = vmatpush1.bf16.msra.mxu0 0
      %1860 = vmatprep.subr.bf16.mxu0 0
      %1861 = vmatpush1.bf16.msra.mxu0 0
      %1862 = vmatprep.subr.bf16.mxu0 0
      %1863 = vmatpush1.bf16.msra.mxu0 0
      %1864 = vmatprep.subr.bf16.mxu0 0
      %1865 = vmatpush1.bf16.msra.mxu0 0
      %1866 = vmatprep.subr.bf16.mxu0 0
      %1867 = vmatpush1.bf16.msra.mxu0 0
      %1868 = vmatprep.subr.bf16.mxu0 0
      %1869 = vmatpush1.bf16.msra.mxu0 0
      %1870 = vmatprep.subr.bf16.mxu0 0
      %1871 = vmatpush1.bf16.msra.mxu0 0
      %1872 = vmatprep.subr.bf16.mxu0 0
      %1873 = vmatpush1.bf16.msra.mxu0 0
      %1874 = vmatprep.subr.bf16.mxu0 0
      %1875 = vmatpush1.bf16.msra.mxu0 0
      %1876 = vmatprep.subr.bf16.mxu0 0
      %1877 = vmatpush1.bf16.msra.mxu0 0
      %1878 = vmatprep.subr.bf16.mxu0 0
      %1879 = vmatpush1.bf16.msra.mxu0 0
      %1880 = vmatprep.mubr.bf16.mxu0 0
      %1881 = vmatmul.mubr.bf16.gmra.mrb[0].mxu0 %v1843
      %v1882 = vpop.f32.mrb[0].mxu0
      %v1883 = vadd.f32 0.0, %v1882
      %v1884 = vpop.f32.mrb[0].mxu0
      %v1885 = vpop.f32.mrb[0].mxu0
      %v1886 = vpop.f32.mrb[0].mxu0
      %1887 = vdwg.mxu0
      %1888 = vrot.lane.b32.xlu0 %v1556, 104
      %v1889 = vpop.permute.xlu0 %1888
      %1890 = vrot.lane.b32.xlu0 %v1557, 72
      %v1891 = vpop.permute.xlu0 %1890
      %v1893 = vsel %vm713, %v1889, 0
      %v1896 = vsel %vm713, %v1891, 0
      %1898 = vmatprep.subr.bf16.mxu0 0
      %1899 = vmatpush1.bf16.xpose.msra.mxu0 %v1896
      %1900 = vmatprep.subr.bf16.mxu0 0
      %1901 = vmatpush1.bf16.xpose.msra.mxu0 0
      %1902 = vmatprep.subr.bf16.mxu0 0
      %1903 = vmatpush1.bf16.xpose.msra.mxu0 0
      %1904 = vmatprep.subr.bf16.mxu0 0
      %1905 = vmatpush1.bf16.xpose.msra.mxu0 0
      %1906 = vmatprep.subr.bf16.mxu0 0
      %1907 = vmatpush1.bf16.xpose.msra.mxu0 0
      %1908 = vmatprep.subr.bf16.mxu0 0
      %1909 = vmatpush1.bf16.xpose.msra.mxu0 0
      %1910 = vmatprep.subr.bf16.mxu0 0
      %1911 = vmatpush1.bf16.xpose.msra.mxu0 0
      %1912 = vmatprep.subr.bf16.mxu0 0
      %1913 = vmatpush1.bf16.xpose.msra.mxu0 0
      %1914 = vmatprep.subr.bf16.mxu0 0
      %1915 = vmatpush1.bf16.xpose.msra.mxu0 0
      %1916 = vmatprep.subr.bf16.mxu0 0
      %1917 = vmatpush1.bf16.xpose.msra.mxu0 0
      %1918 = vmatprep.subr.bf16.mxu0 0
      %1919 = vmatpush1.bf16.xpose.msra.mxu0 0
      %1920 = vmatprep.subr.bf16.mxu0 0
      %1921 = vmatpush1.bf16.xpose.msra.mxu0 0
      %1922 = vmatprep.subr.bf16.mxu0 0
      %1923 = vmatpush1.bf16.xpose.msra.mxu0 0
      %1924 = vmatprep.subr.bf16.mxu0 0
      %1925 = vmatpush1.bf16.xpose.msra.mxu0 0
      %1926 = vmatprep.subr.bf16.mxu0 0
      %1927 = vmatpush1.bf16.xpose.msra.mxu0 0
      %1928 = vmatprep.subr.bf16.mxu0 0
      %1929 = vmatpush1.bf16.xpose.msra.mxu0 0
      %1930 = vmatprep.mubr.bf16.mxu0 0
      %1931 = vmatmul.mubr.bf16.gmra.mrb[0].mxu0 %v1893
      %v1932 = vpop.f32.mrb[0].mxu0
      %v1933 = vadd.f32 %v708, %v1932
      %v1934 = vpop.f32.mrb[0].mxu0
      %v1935 = vpop.f32.mrb[0].mxu0
      %v1936 = vpop.f32.mrb[0].mxu0
      %1937 = vdwg.mxu0
      %v1938 = vsel %vm713, %v1933, -inf
      %1939 = vmax.xlane.f32.xlu0 %v1938
      %v1940 = vpop.xlane.xlu0 %1939
      %v1941 = vsub.f32 %v1933, %v1940
      %v1942 = vmul.f32 %v1941, 1.442695
      %v1943 = vpow.pop %v1942
      %v1944 = vsel %vm713, %v1943, 0.0
      %1945 = vadd.xlane.f32.xlu0 %v1944
      %v1946 = vpop.xlane.xlu0 %1945
      %v1947 = vrcp.pop %v1946
      %v1948 = vmul.f32 %v1943, %v1947
      %v1949 = vpack.c.bf16 %v1948, %v1948
      %1950 = vrot.lane.b32.xlu0 %v1557, 40
      %v1951 = vpop.permute.xlu0 %1950
      %v1953 = vsel %vm713, %v1949, 0
      %v1956 = vsel %vm777, %v1951, 0
      %1958 = vmatprep.subr.bf16.mxu0 0
      %1959 = vmatpush1.bf16.msra.mxu0 %v1956
      %1960 = vmatprep.subr.bf16.mxu0 0
      %1961 = vmatpush1.bf16.msra.mxu0 0
      %1962 = vmatprep.subr.bf16.mxu0 0
      %1963 = vmatpush1.bf16.msra.mxu0 0
      %1964 = vmatprep.subr.bf16.mxu0 0
      %1965 = vmatpush1.bf16.msra.mxu0 0
      %1966 = vmatprep.subr.bf16.mxu0 0
      %1967 = vmatpush1.bf16.msra.mxu0 0
      %1968 = vmatprep.subr.bf16.mxu0 0
      %1969 = vmatpush1.bf16.msra.mxu0 0
      %1970 = vmatprep.subr.bf16.mxu0 0
      %1971 = vmatpush1.bf16.msra.mxu0 0
      %1972 = vmatprep.subr.bf16.mxu0 0
      %1973 = vmatpush1.bf16.msra.mxu0 0
      %1974 = vmatprep.subr.bf16.mxu0 0
      %1975 = vmatpush1.bf16.msra.mxu0 0
      %1976 = vmatprep.subr.bf16.mxu0 0
      %1977 = vmatpush1.bf16.msra.mxu0 0
      %1978 = vmatprep.subr.bf16.mxu0 0
      %1979 = vmatpush1.bf16.msra.mxu0 0
      %1980 = vmatprep.subr.bf16.mxu0 0
      %1981 = vmatpush1.bf16.msra.mxu0 0
      %1982 = vmatprep.subr.bf16.mxu0 0
      %1983 = vmatpush1.bf16.msra.mxu0 0
      %1984 = vmatprep.subr.bf16.mxu0 0
      %1985 = vmatpush1.bf16.msra.mxu0 0
      %1986 = vmatprep.subr.bf16.mxu0 0
      %1987 = vmatpush1.bf16.msra.mxu0 0
      %1988 = vmatprep.subr.bf16.mxu0 0
      %1989 = vmatpush1.bf16.msra.mxu0 0
      %1990 = vmatprep.mubr.bf16.mxu0 0
      %1991 = vmatmul.mubr.bf16.gmra.mrb[0].mxu0 %v1953
      %v1992 = vpop.f32.mrb[0].mxu0
      %v1993 = vadd.f32 0.0, %v1992
      %v1994 = vpop.f32.mrb[0].mxu0
      %v1995 = vpop.f32.mrb[0].mxu0
      %v1996 = vpop.f32.mrb[0].mxu0
      %1997 = vdwg.mxu0
      %1999 = vrot.lane.b32.xlu0 %v1773, 8
      %v2000 = vpop.permute.xlu0 %1999
      %2003 = vrot.lane.b32.xlu0 %v1883, 16
      %v2004 = vpop.permute.xlu0 %2003
      %2007 = vrot.lane.b32.xlu0 %v1993, 24
      %v2008 = vpop.permute.xlu0 %2007
      %v2010 = vsel %vm713, %v1662, %v2000
      %v2011 = vsel %vm1165, %v2010, %v2004
      %v2012 = vsel %vm1167, %v2011, %v2008
      %v2013 = vpack.c.bf16 %v2012, %v2012
      %s2014 = scalar_lea.vmem %s7, 16
      %v2015 = vld [vmem:[%s2014] sm:$0xf]
      %v2016 = vld [vmem:[%s2014 + $0x4] sm:$0xf]
      %v2017 = vld [vmem:[%s2014 + $0x8] sm:$0xf]
      %v2018 = vld [vmem:[%s2014 + $0xc] sm:$0xf]
      %s2019 = scalar_lea.vmem %s8, 1
      %v2020 = vld [vmem:[%s2019] sm:$0x1]
      %v2022 = vlaneseq
      %v2023 = vshrl.u32 %v2022, 7
      %v2024 = vsub.s32 0, %v2023
      %v2025 = vrot.slane %v2020, %v2024
      %v2031 = vunpack.c.l.b16 %v2015
      %v2032 = vunpack.c.l.b16 %v2016
      %v2033 = vunpack.c.l.b16 %v2017
      %v2034 = vunpack.c.l.b16 %v2018
      %v2035 = vpack.c.b16 %v2032, %v2031
      %v2036 = vpack.c.b16 %v2034, %v2033
      %v2040 = vsel %vm605, %v2013, 0
      %2042 = vmatprep.subr.bf16.mxu0 0
      %2043 = vmatpush1.bf16.msra.mxu0 %v2035
      %2044 = vmatprep.subr.bf16.mxu0 0
      %2045 = vmatpush1.bf16.msra.mxu0 %v2036
      %2046 = vmatprep.subr.bf16.mxu0 0
      %2047 = vmatpush1.bf16.msra.mxu0 0
      %2048 = vmatprep.subr.bf16.mxu0 0
      %2049 = vmatpush1.bf16.msra.mxu0 0
      %2050 = vmatprep.subr.bf16.mxu0 0
      %2051 = vmatpush1.bf16.msra.mxu0 0
      %2052 = vmatprep.subr.bf16.mxu0 0
      %2053 = vmatpush1.bf16.msra.mxu0 0
      %2054 = vmatprep.subr.bf16.mxu0 0
      %2055 = vmatpush1.bf16.msra.mxu0 0
      %2056 = vmatprep.subr.bf16.mxu0 0
      %2057 = vmatpush1.bf16.msra.mxu0 0
      %2058 = vmatprep.subr.bf16.mxu0 0
      %2059 = vmatpush1.bf16.msra.mxu0 0
      %2060 = vmatprep.subr.bf16.mxu0 0
      %2061 = vmatpush1.bf16.msra.mxu0 0
      %2062 = vmatprep.subr.bf16.mxu0 0
      %2063 = vmatpush1.bf16.msra.mxu0 0
      %2064 = vmatprep.subr.bf16.mxu0 0
      %2065 = vmatpush1.bf16.msra.mxu0 0
      %2066 = vmatprep.subr.bf16.mxu0 0
      %2067 = vmatpush1.bf16.msra.mxu0 0
      %2068 = vmatprep.subr.bf16.mxu0 0
      %2069 = vmatpush1.bf16.msra.mxu0 0
      %2070 = vmatprep.subr.bf16.mxu0 0
      %2071 = vmatpush1.bf16.msra.mxu0 0
      %2072 = vmatprep.subr.bf16.mxu0 0
      %2073 = vmatpush1.bf16.msra.mxu0 0
      %2074 = vmatprep.mubr.bf16.mxu0 0
      %2075 = vmatmul.mubr.bf16.gmra.mrb[0].mxu0 %v2040
      %v2076 = vpop.f32.mrb[0].mxu0
      %v2077 = vadd.f32 %v2025, %v2076
      %v2078 = vpop.f32.mrb[0].mxu0
      %v2079 = vpop.f32.mrb[0].mxu0
      %v2080 = vpop.f32.mrb[0].mxu0
      %2081 = vdwg.mxu0
      %v2082 = vadd.f32 %v1454, %v2077
      %s2083 = scalar_lea.vmem %s9, 1
      %v2084 = vld [vmem:[%s2083] sm:$0x1]
      %s2085 = scalar_lea.vmem %s10, 1
      %v2086 = vld [vmem:[%s2085] sm:$0x1]
      %v2087 = vsel %vm605, %v2082, 0.0
      %2088 = vadd.xlane.f32.xlu0 %v2087
      %v2089 = vpop.xlane.xlu0 %2088
      %v2090 = vmul.f32 %v2089, %v609
      %v2091 = vsub.f32 %v2082, %v2090
      %v2092 = vmul.f32 %v2091, %v2091
      %v2093 = vsel %vm605, %v2092, 0.0
      %2094 = vadd.xlane.f32.xlu0 %v2093
      %v2095 = vpop.xlane.xlu0 %2094
      %v2096 = vmul.f32 %v2095, %v609
      %v2097 = vadd.f32 %v2096, 1e-05
      %v2098 = vrsqrt.pop %v2097
      %v2099 = vmul.f32 %v2091, %v2098
      %v2101 = vlaneseq
      %v2102 = vshrl.u32 %v2101, 7
      %v2103 = vsub.s32 0, %v2102
      %v2104 = vrot.slane %v2084, %v2103
      %v2106 = vmul.f32 %v2099, %v2104
      %v2108 = vlaneseq
      %v2109 = vshrl.u32 %v2108, 7
      %v2110 = vsub.s32 0, %v2109
      %v2111 = vrot.slane %v2086, %v2110
      %v2113 = vadd.f32 %v2106, %v2111
      %v2114 = vpack.c.bf16 %v2113, %v2113
      %s2115 = scalar_lea.vmem %s11, 16
      %v2116 = vld [vmem:[%s2115] sm:$0xf]
      %v2117 = vld [vmem:[%s2115 + $0x4] sm:$0xf]
      %v2118 = vld [vmem:[%s2115 + $0x8] sm:$0xf]
      %v2119 = vld [vmem:[%s2115 + $0xc] sm:$0xf]
      %s2120 = scalar_lea.vmem %s12, 1
      %v2121 = vld [vmem:[%s2120] sm:$0x1]
      %v2123 = vlaneseq
      %v2124 = vshrl.u32 %v2123, 7
      %v2125 = vsub.s32 0, %v2124
      %v2126 = vrot.slane %v2121, %v2125
      %v2132 = vunpack.c.l.b16 %v2116
      %v2133 = vunpack.c.l.b16 %v2117
      %v2134 = vunpack.c.l.b16 %v2118
      %v2135 = vunpack.c.l.b16 %v2119
      %v2136 = vpack.c.b16 %v2133, %v2132
      %v2137 = vpack.c.b16 %v2135, %v2134
      %v2141 = vsel %vm605, %v2114, 0
      %2143 = vmatprep.subr.bf16.mxu0 0
      %2144 = vmatpush1.bf16.msra.mxu0 %v2136
      %2145 = vmatprep.subr.bf16.mxu0 0
      %2146 = vmatpush1.bf16.msra.mxu0 %v2137
      %2147 = vmatprep.subr.bf16.mxu0 0
      %2148 = vmatpush1.bf16.msra.mxu0 0
      %2149 = vmatprep.subr.bf16.mxu0 0
      %2150 = vmatpush1.bf16.msra.mxu0 0
      %2151 = vmatprep.subr.bf16.mxu0 0
      %2152 = vmatpush1.bf16.msra.mxu0 0
      %2153 = vmatprep.subr.bf16.mxu0 0
      %2154 = vmatpush1.bf16.msra.mxu0 0
      %2155 = vmatprep.subr.bf16.mxu0 0
      %2156 = vmatpush1.bf16.msra.mxu0 0
      %2157 = vmatprep.subr.bf16.mxu0 0
      %2158 = vmatpush1.bf16.msra.mxu0 0
      %2159 = vmatprep.subr.bf16.mxu0 0
      %2160 = vmatpush1.bf16.msra.mxu0 0
      %2161 = vmatprep.subr.bf16.mxu0 0
      %2162 = vmatpush1.bf16.msra.mxu0 0
      %2163 = vmatprep.subr.bf16.mxu0 0
      %2164 = vmatpush1.bf16.msra.mxu0 0
      %2165 = vmatprep.subr.bf16.mxu0 0
      %2166 = vmatpush1.bf16.msra.mxu0 0
      %2167 = vmatprep.subr.bf16.mxu0 0
      %2168 = vmatpush1.bf16.msra.mxu0 0
      %2169 = vmatprep.subr.bf16.mxu0 0
      %2170 = vmatpush1.bf16.msra.mxu0 0
      %2171 = vmatprep.subr.bf16.mxu0 0
      %2172 = vmatpush1.bf16.msra.mxu0 0
      %2173 = vmatprep.subr.bf16.mxu0 0
      %2174 = vmatpush1.bf16.msra.mxu0 0
      %2175 = vmatprep.mubr.bf16.mxu0 0
      %2176 = vmatmul.mubr.bf16.gmra.mrb[0].mxu0 %v2141
      %v2177 = vpop.f32.mrb[0].mxu0
      %v2178 = vadd.f32 %v2126, %v2177
      %v2179 = vpop.f32.mrb[0].mxu0
      %v2180 = vpop.f32.mrb[0].mxu0
      %v2181 = vpop.f32.mrb[0].mxu0
      %2182 = vdwg.mxu0
      %v2183 = vmul.f32 %v2178, 0.5
      %v2184 = vmul.f32 %v2178, 0.044715
      %v2185 = vmul.f32 %v2184, %v2178
      %v2186 = vmul.f32 %v2185, %v2178
      %v2187 = vadd.f32 %v2178, %v2186
      %v2188 = vmul.f32 %v2187, 0.7978846
      %v2189 = vtanh.pop %v2188
      %v2190 = vadd.f32 %v2189, 1.0
      %v2191 = vmul.f32 %v2183, %v2190
      %v2192 = vpack.c.bf16 %v2191, %v2191
      %s2193 = scalar_lea.vmem %s13, 64
      %v2194 = vld [vmem:[%s2193] sm:$0xf]
      %v2195 = vld [vmem:[%s2193 + $0x4] sm:$0xf]
      %v2196 = vld [vmem:[%s2193 + $0x8] sm:$0xf]
      %v2197 = vld [vmem:[%s2193 + $0xc] sm:$0xf]
      %v2198 = vld [vmem:[%s2193 + $0x10] sm:$0xf]
      %v2199 = vld [vmem:[%s2193 + $0x14] sm:$0xf]
      %v2200 = vld [vmem:[%s2193 + $0x18] sm:$0xf]
      %v2201 = vld [vmem:[%s2193 + $0x1c] sm:$0xf]
      %v2202 = vld [vmem:[%s2193 + $0x20] sm:$0xf]
      %v2203 = vld [vmem:[%s2193 + $0x24] sm:$0xf]
      %v2204 = vld [vmem:[%s2193 + $0x28] sm:$0xf]
      %v2205 = vld [vmem:[%s2193 + $0x2c] sm:$0xf]
      %v2206 = vld [vmem:[%s2193 + $0x30] sm:$0xf]
      %v2207 = vld [vmem:[%s2193 + $0x34] sm:$0xf]
      %v2208 = vld [vmem:[%s2193 + $0x38] sm:$0xf]
      %v2209 = vld [vmem:[%s2193 + $0x3c] sm:$0xf]
      %s2210 = scalar_lea.vmem %s14, 1
      %v2211 = vld [vmem:[%s2210] sm:$0x1]
      %v2213 = vlaneseq
      %v2214 = vshrl.u32 %v2213, 7
      %v2215 = vsub.s32 0, %v2214
      %v2216 = vrot.slane %v2211, %v2215
      %v2234 = vunpack.c.l.b16 %v2194
      %v2235 = vunpack.c.l.b16 %v2195
      %v2236 = vunpack.c.l.b16 %v2196
      %v2237 = vunpack.c.l.b16 %v2197
      %v2238 = vunpack.c.l.b16 %v2198
      %v2239 = vunpack.c.l.b16 %v2199
      %v2240 = vunpack.c.l.b16 %v2200
      %v2241 = vunpack.c.l.b16 %v2201
      %v2242 = vunpack.c.l.b16 %v2202
      %v2243 = vunpack.c.l.b16 %v2203
      %v2244 = vunpack.c.l.b16 %v2204
      %v2245 = vunpack.c.l.b16 %v2205
      %v2246 = vunpack.c.l.b16 %v2206
      %v2247 = vunpack.c.l.b16 %v2207
      %v2248 = vunpack.c.l.b16 %v2208
      %v2249 = vunpack.c.l.b16 %v2209
      %v2250 = vpack.c.b16 %v2235, %v2234
      %v2251 = vpack.c.b16 %v2237, %v2236
      %v2252 = vpack.c.b16 %v2239, %v2238
      %v2253 = vpack.c.b16 %v2241, %v2240
      %v2254 = vpack.c.b16 %v2243, %v2242
      %v2255 = vpack.c.b16 %v2245, %v2244
      %v2256 = vpack.c.b16 %v2247, %v2246
      %v2257 = vpack.c.b16 %v2249, %v2248
      %2266 = vmatprep.subr.bf16.mxu0 0
      %2267 = vmatpush1.bf16.msra.mxu0 %v2250
      %2268 = vmatprep.subr.bf16.mxu0 0
      %2269 = vmatpush1.bf16.msra.mxu0 %v2251
      %2270 = vmatprep.subr.bf16.mxu0 0
      %2271 = vmatpush1.bf16.msra.mxu0 %v2252
      %2272 = vmatprep.subr.bf16.mxu0 0
      %2273 = vmatpush1.bf16.msra.mxu0 %v2253
      %2274 = vmatprep.subr.bf16.mxu0 0
      %2275 = vmatpush1.bf16.msra.mxu0 %v2254
      %2276 = vmatprep.subr.bf16.mxu0 0
      %2277 = vmatpush1.bf16.msra.mxu0 %v2255
      %2278 = vmatprep.subr.bf16.mxu0 0
      %2279 = vmatpush1.bf16.msra.mxu0 %v2256
      %2280 = vmatprep.subr.bf16.mxu0 0
      %2281 = vmatpush1.bf16.msra.mxu0 %v2257
      %2282 = vmatprep.subr.bf16.mxu0 0
      %2283 = vmatpush1.bf16.msra.mxu0 0
      %2284 = vmatprep.subr.bf16.mxu0 0
      %2285 = vmatpush1.bf16.msra.mxu0 0
      %2286 = vmatprep.subr.bf16.mxu0 0
      %2287 = vmatpush1.bf16.msra.mxu0 0
      %2288 = vmatprep.subr.bf16.mxu0 0
      %2289 = vmatpush1.bf16.msra.mxu0 0
      %2290 = vmatprep.subr.bf16.mxu0 0
      %2291 = vmatpush1.bf16.msra.mxu0 0
      %2292 = vmatprep.subr.bf16.mxu0 0
      %2293 = vmatpush1.bf16.msra.mxu0 0
      %2294 = vmatprep.subr.bf16.mxu0 0
      %2295 = vmatpush1.bf16.msra.mxu0 0
      %2296 = vmatprep.subr.bf16.mxu0 0
      %2297 = vmatpush1.bf16.msra.mxu0 0
      %2298 = vmatprep.mubr.bf16.mxu0 0
      %2299 = vmatmul.mubr.bf16.gmra.mrb[0].mxu0 %v2192
      %v2300 = vpop.f32.mrb[0].mxu0
      %v2301 = vadd.f32 %v2216, %v2300
      %v2302 = vpop.f32.mrb[0].mxu0
      %v2303 = vpop.f32.mrb[0].mxu0
      %v2304 = vpop.f32.mrb[0].mxu0
      %2305 = vdwg.mxu0
      %v2306 = vadd.f32 %v2082, %v2301
      %v2307 = vld [vmem:[%s15] sm:$0x1]
      %v2308 = vld [vmem:[%s16] sm:$0x1]
      %v2309 = vsel %vm605, %v2306, 0.0
      %2310 = vadd.xlane.f32.xlu0 %v2309
      %v2311 = vpop.xlane.xlu0 %2310
      %v2312 = vmul.f32 %v2311, %v609
      %v2313 = vsub.f32 %v2306, %v2312
      %v2314 = vmul.f32 %v2313, %v2313
      %v2315 = vsel %vm605, %v2314, 0.0
      %2316 = vadd.xlane.f32.xlu0 %v2315
      %v2317 = vpop.xlane.xlu0 %2316
      %v2318 = vmul.f32 %v2317, %v609
      %v2319 = vadd.f32 %v2318, 1e-05
      %v2320 = vrsqrt.pop %v2319
      %v2321 = vmul.f32 %v2313, %v2320
      %v2323 = vlaneseq
      %v2324 = vshrl.u32 %v2323, 7
      %v2325 = vsub.s32 0, %v2324
      %v2326 = vrot.slane %v2307, %v2325
      %v2328 = vmul.f32 %v2321, %v2326
      %v2330 = vlaneseq
      %v2331 = vshrl.u32 %v2330, 7
      %v2332 = vsub.s32 0, %v2331
      %v2333 = vrot.slane %v2308, %v2332
      %v2335 = vadd.f32 %v2328, %v2333
      %v2336 = vpack.c.bf16 %v2335, %v2335
      %v2337 = vld [vmem:[%s17] sm:$0xf]
      %v2338 = vld [vmem:[%s17 + $0x4] sm:$0xf]
      %v2339 = vld [vmem:[%s17 + $0x8] sm:$0xf]
      %v2340 = vld [vmem:[%s17 + $0xc] sm:$0xf]
      %v2341 = vld [vmem:[%s18] sm:$0x1]
      %v2343 = vlaneseq
      %v2344 = vshrl.u32 %v2343, 7
      %v2345 = vsub.s32 0, %v2344
      %v2346 = vrot.slane %v2341, %v2345
      %v2352 = vunpack.c.l.b16 %v2337
      %v2353 = vunpack.c.l.b16 %v2338
      %v2354 = vunpack.c.l.b16 %v2339
      %v2355 = vunpack.c.l.b16 %v2340
      %v2356 = vpack.c.b16 %v2353, %v2352
      %v2357 = vpack.c.b16 %v2355, %v2354
      %v2361 = vsel %vm605, %v2336, 0
      %2363 = vmatprep.subr.bf16.mxu0 0
      %2364 = vmatpush1.bf16.msra.mxu0 %v2356
      %2365 = vmatprep.subr.bf16.mxu0 0
      %2366 = vmatpush1.bf16.msra.mxu0 %v2357
      %2367 = vmatprep.subr.bf16.mxu0 0
      %2368 = vmatpush1.bf16.msra.mxu0 0
      %2369 = vmatprep.subr.bf16.mxu0 0
      %2370 = vmatpush1.bf16.msra.mxu0 0
      %2371 = vmatprep.subr.bf16.mxu0 0
      %2372 = vmatpush1.bf16.msra.mxu0 0
      %2373 = vmatprep.subr.bf16.mxu0 0
      %2374 = vmatpush1.bf16.msra.mxu0 0
      %2375 = vmatprep.subr.bf16.mxu0 0
      %2376 = vmatpush1.bf16.msra.mxu0 0
      %2377 = vmatprep.subr.bf16.mxu0 0
      %2378 = vmatpush1.bf16.msra.mxu0 0
      %2379 = vmatprep.subr.bf16.mxu0 0
      %2380 = vmatpush1.bf16.msra.mxu0 0
      %2381 = vmatprep.subr.bf16.mxu0 0
      %2382 = vmatpush1.bf16.msra.mxu0 0
      %2383 = vmatprep.subr.bf16.mxu0 0
      %2384 = vmatpush1.bf16.msra.mxu0 0
      %2385 = vmatprep.subr.bf16.mxu0 0
      %2386 = vmatpush1.bf16.msra.mxu0 0
      %2387 = vmatprep.subr.bf16.mxu0 0
      %2388 = vmatpush1.bf16.msra.mxu0 0
      %2389 = vmatprep.subr.bf16.mxu0 0
      %2390 = vmatpush1.bf16.msra.mxu0 0
      %2391 = vmatprep.subr.bf16.mxu0 0
      %2392 = vmatpush1.bf16.msra.mxu0 0
      %2393 = vmatprep.subr.bf16.mxu0 0
      %2394 = vmatpush1.bf16.msra.mxu0 0
      %2395 = vmatprep.mubr.bf16.mxu0 0
      %2396 = vmatmul.mubr.bf16.gmra.mrb[0].mxu0 %v2361
      %v2397 = vpop.f32.mrb[0].mxu0
      %v2398 = vadd.f32 %v2346, %v2397
      %v2399 = vpop.f32.mrb[0].mxu0
      %v2400 = vpop.f32.mrb[0].mxu0
      %v2401 = vpop.f32.mrb[0].mxu0
      %2402 = vdwg.mxu0
      %2403 = vst.msk [vmem:[%s597] sm:$0xff] %vm605, %v2398
      %p2404 = scmp.lt.s32.totalorder %s30, 1
      %s2405 = scalar_select %p2404, %s30, 1
      %s2406 = smul.addr %s2405, 8
      %s2407 = scalar_lea.vmem %s19, %s2406
      // Predicated region
      $region97: #{forward.5} parent=95 // pred_check
        %p2408 = pneg %p452
      $region98: #{forward.5} parent=95 // pred_check_branch
        %2410 = sbr.rel (%p2408) target = $region100
      $region99: #{forward.5} parent=95 // pred_region
        _
      $region100: #{forward.5} parent=95 // pred_fallthru
        _
    $region96: #{forward.5} parent=5 // pred_fallthru
      _
    %p2411 = scmp.le.s32.totalorder 2, %s25
    // Predicated region
    $region101: #{forward.5} parent=5 // pred_check
      %p2412 = pneg %p2411
    $region102: #{forward.5} parent=5 // pred_check_branch
      %2414 = sbr.rel (%p2412) target = $region104
    $region103: #{forward.5} parent=5 // pred_region
      %s2415 = ssub.s32 %s25, 2
      // Predicated region
      $region105: #{forward.5} parent=103 // pred_check
        %p2416 = pneg %p458
      $region106: #{forward.5} parent=103 // pred_check_branch
        %2418 = sbr.rel (%p2416) target = $region108
      $region107: #{forward.5} parent=103 // pred_region
        %p2419 = scmp.lt.s32.totalorder %s31, 1
        %s2420 = scalar_select %p2419, %s31, 1
        %s2421 = smul.addr %s2420, 8
        %s2422 = scalar_lea.vmem %s19, %s2421
      $region108: #{forward.5} parent=103 // pred_fallthru
        _
    $region104: #{forward.5} parent=5 // pred_fallthru
      _
  $region6: #{forward.5} parent=0 // loop_footer
    %s29 = sadd.s32 1, %s25
  $region7: #{forward.5} parent=0 // loop_footer_branch
    %24 = sbr.rel target = $region3
  $region8: #{forward.5} parent=0 // loop_exit
    _

// kernel: forward.6
$region0: #{forward.6}
  #allocation0 [shape = 'u32[]', space=smem, size = 0x4, offset = 0x4, fixed_abs, tag = 'smem constant byte address 0x4 - core index']
  #allocation1 [shape = 'u32[144,128]{1,0:T(1,128)}', space=vmem, size = 0x12000, scoped, tag = 'internal scratch']
  %s0 = inlined_call_operand.vmem [shape: f32[2,24,32], index: 0, kind: input, shape index: {}]
  %s1 = inlined_call_operand.vmem [shape: f32[1,24,32], index: 1, kind: input, shape index: {}]
  %s2 = inlined_call_operand.vmem [shape: f32[1,24], index: 2, kind: input, shape index: {}]
  %s3 = inlined_call_operand.vmem [shape: f32[2,1,32], index: 3, kind: input, shape index: {}]
  %s4 = inlined_call_operand.vmem [shape: f32[2,1,32], index: 4, kind: input, shape index: {}]
  %s5 = inlined_call_operand.vmem [shape: bf16[2,32,96], index: 5, kind: input, shape index: {}]
  %s6 = inlined_call_operand.vmem [shape: f32[2,1,96], index: 6, kind: input, shape index: {}]
  %s7 = inlined_call_operand.vmem [shape: bf16[2,32,32], index: 7, kind: input, shape index: {}]
  %s8 = inlined_call_operand.vmem [shape: f32[2,1,32], index: 8, kind: input, shape index: {}]
  %s9 = inlined_call_operand.vmem [shape: f32[2,1,32], index: 9, kind: input, shape index: {}]
  %s10 = inlined_call_operand.vmem [shape: f32[2,1,32], index: 10, kind: input, shape index: {}]
  %s11 = inlined_call_operand.vmem [shape: bf16[2,32,128], index: 11, kind: input, shape index: {}]
  %s12 = inlined_call_operand.vmem [shape: f32[2,1,128], index: 12, kind: input, shape index: {}]
  %s13 = inlined_call_operand.vmem [shape: bf16[2,128,32], index: 13, kind: input, shape index: {}]
  %s14 = inlined_call_operand.vmem [shape: f32[2,1,32], index: 14, kind: input, shape index: {}]
  %s15 = inlined_call_operand.vmem [shape: f32[1,32], index: 15, kind: input, shape index: {}]
  %s16 = inlined_call_operand.vmem [shape: f32[1,32], index: 16, kind: input, shape index: {}]
  %s17 = inlined_call_operand.vmem [shape: bf16[32,48], index: 17, kind: input, shape index: {}]
  %s18 = inlined_call_operand.vmem [shape: f32[1,48], index: 18, kind: input, shape index: {}]
  %s19 = inlined_call_operand.vmem [shape: f32[2,24,48], index: 19, kind: output, shape index: {}]
  %s20 = sld [smem:[#allocation0]]
  $region109: #{forward.6} parent=0
    _
  %s22 = ssub.s32 1, %s20
  %s23 = scalar_select 0, %s22, %s20
  loop: start=0, step=1, limit=4
  $region2: #{forward.6} parent=0 // loop_pre_header
    _
  $region3: #{forward.6} parent=0 // loop_header
    %s25 = sphi 0, %s29
    %p26 = scmp.ge.s32.totalorder %s25, 4
    %s35 = sphi 0, %s37
    %s38 = sphi 0, %s35
    %s39 = sphi 0, %s38
    %s55 = sphi 0, %s39
    %s59 = sphi 0, %s59
    %s61 = sphi 0, %s59
    %s62 = sphi 0, %s61
    %s76 = sphi 0, %s62
    %s80 = sphi 0, %s80
    %s82 = sphi 0, %s80
    %s83 = sphi 0, %s82
    %s97 = sphi 0, %s83
    %s101 = sphi 0, %s101
    %s103 = sphi 0, %s101
    %s104 = sphi 0, %s103
    %s118 = sphi 0, %s104
    %s122 = sphi 0, %s122
    %s124 = sphi 0, %s122
    %s125 = sphi 0, %s124
    %s139 = sphi 0, %s125
    %s143 = sphi 0, %s143
    %s145 = sphi 0, %s143
    %s146 = sphi 0, %s145
    %s160 = sphi 0, %s146
    %s164 = sphi 0, %s164
    %s166 = sphi 0, %s164
    %s167 = sphi 0, %s166
    %s181 = sphi 0, %s167
    %s185 = sphi 0, %s185
    %s187 = sphi 0, %s185
    %s188 = sphi 0, %s187
    %s202 = sphi 0, %s188
    %s206 = sphi 0, %s206
    %s208 = sphi 0, %s206
    %s209 = sphi 0, %s208
    %s223 = sphi 0, %s209
    %s227 = sphi 0, %s227
    %s229 = sphi 0, %s227
    %s230 = sphi 0, %s229
    %s244 = sphi 0, %s230
    %s248 = sphi 0, %s248
    %s250 = sphi 0, %s248
    %s251 = sphi 0, %s250
    %s265 = sphi 0, %s251
    %s269 = sphi 0, %s269
    %s271 = sphi 0, %s269
    %s272 = sphi 0, %s271
    %s286 = sphi 0, %s272
    %s290 = sphi 0, %s290
    %s292 = sphi 0, %s290
    %s293 = sphi 0, %s292
    %s307 = sphi 0, %s293
    %s311 = sphi 0, %s311
    %s313 = sphi 0, %s311
    %s314 = sphi 0, %s313
    %s328 = sphi 0, %s314
    %s332 = sphi 0, %s332
    %s334 = sphi 0, %s332
    %s335 = sphi 0, %s334
    %s349 = sphi 0, %s335
    %s353 = sphi 0, %s353
    %s355 = sphi 0, %s353
    %s356 = sphi 0, %s355
    %s370 = sphi 0, %s356
    %s374 = sphi 0, %s374
    %s376 = sphi 0, %s374
    %s377 = sphi 0, %s376
    %s391 = sphi 0, %s377
    %s395 = sphi 0, %s395
    %s397 = sphi 0, %s395
    %s398 = sphi 0, %s397
    %s412 = sphi 0, %s398
    %s416 = sphi 0, %s416
    %s418 = sphi 0, %s416
    %s419 = sphi 0, %s418
    %s433 = sphi 0, %s419
    %s439 = sphi 0, %s441
    %s442 = sphi 0, %s439
    %s443 = sphi 0, %s442
    %s459 = sphi 0, %s443
  $region4: #{forward.6} parent=0 // loop_header_branch
    %28 = sbr.rel (%p26) target = $region8
  $region5: #{forward.6} parent=0 // loop_body
    %s30 = ssub.s32 %s25, 1
    %s31 = ssub.s32 %s25, 2
    %s32 = sadd.s32 %s25, 1
    %s33 = ssub.s32 %s25, %s32
    %p34 = scmp.eq.s32.totalorder %s33, 0
    %s36 = sadd.s32 %s35, 1
    %s37 = scalar_select %p34, %s35, %s36
    %p40 = pneg %p34
    %p41 = scmp.eq.s32.totalorder %s25, 1
    %p42 = por %p40, %p41
    %p43 = scmp.ne.s32.totalorder %s35, %s38
    %p44 = scmp.eq.s32.totalorder %s25, 0
    %p45 = por %p43, %p44
    %p46 = scmp.ne.s32.totalorder %s35, %s38
    %p47 = scmp.eq.s32.totalorder %s30, 1
    %p48 = por %p46, %p47
    %p49 = scmp.ne.s32.totalorder %s38, %s39
    %p50 = scmp.eq.s32.totalorder %s30, 0
    %p51 = por %p49, %p50
    %p52 = scmp.ne.s32.totalorder %s38, %s39
    %p53 = scmp.eq.s32.totalorder %s31, 1
    %p54 = por %p52, %p53
    %p56 = scmp.ne.s32.totalorder %s39, %s55
    %p57 = scmp.eq.s32.totalorder %s31, 0
    %p58 = por %p56, %p57
    %s60 = sadd.s32 %s59, 1
    %p63 = scmp.eq.s32.totalorder %s25, 1
    %p64 = scmp.ne.s32.totalorder %s59, %s61
    %p65 = scmp.eq.s32.totalorder %s25, 0
    %p66 = por %p64, %p65
    %p67 = scmp.ne.s32.totalorder %s59, %s61
    %p68 = scmp.eq.s32.totalorder %s30, 1
    %p69 = por %p67, %p68
    %p70 = scmp.ne.s32.totalorder %s61, %s62
    %p71 = scmp.eq.s32.totalorder %s30, 0
    %p72 = por %p70, %p71
    %p73 = scmp.ne.s32.totalorder %s61, %s62
    %p74 = scmp.eq.s32.totalorder %s31, 1
    %p75 = por %p73, %p74
    %p77 = scmp.ne.s32.totalorder %s62, %s76
    %p78 = scmp.eq.s32.totalorder %s31, 0
    %p79 = por %p77, %p78
    %s81 = sadd.s32 %s80, 1
    %p84 = scmp.eq.s32.totalorder %s25, 1
    %p85 = scmp.ne.s32.totalorder %s80, %s82
    %p86 = scmp.eq.s32.totalorder %s25, 0
    %p87 = por %p85, %p86
    %p88 = scmp.ne.s32.totalorder %s80, %s82
    %p89 = scmp.eq.s32.totalorder %s30, 1
    %p90 = por %p88, %p89
    %p91 = scmp.ne.s32.totalorder %s82, %s83
    %p92 = scmp.eq.s32.totalorder %s30, 0
    %p93 = por %p91, %p92
    %p94 = scmp.ne.s32.totalorder %s82, %s83
    %p95 = scmp.eq.s32.totalorder %s31, 1
    %p96 = por %p94, %p95
    %p98 = scmp.ne.s32.totalorder %s83, %s97
    %p99 = scmp.eq.s32.totalorder %s31, 0
    %p100 = por %p98, %p99
    %s102 = sadd.s32 %s101, 1
    %p105 = scmp.eq.s32.totalorder %s25, 1
    %p106 = scmp.ne.s32.totalorder %s101, %s103
    %p107 = scmp.eq.s32.totalorder %s25, 0
    %p108 = por %p106, %p107
    %p109 = scmp.ne.s32.totalorder %s101, %s103
    %p110 = scmp.eq.s32.totalorder %s30, 1
    %p111 = por %p109, %p110
    %p112 = scmp.ne.s32.totalorder %s103, %s104
    %p113 = scmp.eq.s32.totalorder %s30, 0
    %p114 = por %p112, %p113
    %p115 = scmp.ne.s32.totalorder %s103, %s104
    %p116 = scmp.eq.s32.totalorder %s31, 1
    %p117 = por %p115, %p116
    %p119 = scmp.ne.s32.totalorder %s104, %s118
    %p120 = scmp.eq.s32.totalorder %s31, 0
    %p121 = por %p119, %p120
    %s123 = sadd.s32 %s122, 1
    %p126 = scmp.eq.s32.totalorder %s25, 1
    %p127 = scmp.ne.s32.totalorder %s122, %s124
    %p128 = scmp.eq.s32.totalorder %s25, 0
    %p129 = por %p127, %p128
    %p130 = scmp.ne.s32.totalorder %s122, %s124
    %p131 = scmp.eq.s32.totalorder %s30, 1
    %p132 = por %p130, %p131
    %p133 = scmp.ne.s32.totalorder %s124, %s125
    %p134 = scmp.eq.s32.totalorder %s30, 0
    %p135 = por %p133, %p134
    %p136 = scmp.ne.s32.totalorder %s124, %s125
    %p137 = scmp.eq.s32.totalorder %s31, 1
    %p138 = por %p136, %p137
    %p140 = scmp.ne.s32.totalorder %s125, %s139
    %p141 = scmp.eq.s32.totalorder %s31, 0
    %p142 = por %p140, %p141
    %s144 = sadd.s32 %s143, 1
    %p147 = scmp.eq.s32.totalorder %s25, 1
    %p148 = scmp.ne.s32.totalorder %s143, %s145
    %p149 = scmp.eq.s32.totalorder %s25, 0
    %p150 = por %p148, %p149
    %p151 = scmp.ne.s32.totalorder %s143, %s145
    %p152 = scmp.eq.s32.totalorder %s30, 1
    %p153 = por %p151, %p152
    %p154 = scmp.ne.s32.totalorder %s145, %s146
    %p155 = scmp.eq.s32.totalorder %s30, 0
    %p156 = por %p154, %p155
    %p157 = scmp.ne.s32.totalorder %s145, %s146
    %p158 = scmp.eq.s32.totalorder %s31, 1
    %p159 = por %p157, %p158
    %p161 = scmp.ne.s32.totalorder %s146, %s160
    %p162 = scmp.eq.s32.totalorder %s31, 0
    %p163 = por %p161, %p162
    %s165 = sadd.s32 %s164, 1
    %p168 = scmp.eq.s32.totalorder %s25, 1
    %p169 = scmp.ne.s32.totalorder %s164, %s166
    %p170 = scmp.eq.s32.totalorder %s25, 0
    %p171 = por %p169, %p170
    %p172 = scmp.ne.s32.totalorder %s164, %s166
    %p173 = scmp.eq.s32.totalorder %s30, 1
    %p174 = por %p172, %p173
    %p175 = scmp.ne.s32.totalorder %s166, %s167
    %p176 = scmp.eq.s32.totalorder %s30, 0
    %p177 = por %p175, %p176
    %p178 = scmp.ne.s32.totalorder %s166, %s167
    %p179 = scmp.eq.s32.totalorder %s31, 1
    %p180 = por %p178, %p179
    %p182 = scmp.ne.s32.totalorder %s167, %s181
    %p183 = scmp.eq.s32.totalorder %s31, 0
    %p184 = por %p182, %p183
    %s186 = sadd.s32 %s185, 1
    %p189 = scmp.eq.s32.totalorder %s25, 1
    %p190 = scmp.ne.s32.totalorder %s185, %s187
    %p191 = scmp.eq.s32.totalorder %s25, 0
    %p192 = por %p190, %p191
    %p193 = scmp.ne.s32.totalorder %s185, %s187
    %p194 = scmp.eq.s32.totalorder %s30, 1
    %p195 = por %p193, %p194
    %p196 = scmp.ne.s32.totalorder %s187, %s188
    %p197 = scmp.eq.s32.totalorder %s30, 0
    %p198 = por %p196, %p197
    %p199 = scmp.ne.s32.totalorder %s187, %s188
    %p200 = scmp.eq.s32.totalorder %s31, 1
    %p201 = por %p199, %p200
    %p203 = scmp.ne.s32.totalorder %s188, %s202
    %p204 = scmp.eq.s32.totalorder %s31, 0
    %p205 = por %p203, %p204
    %s207 = sadd.s32 %s206, 1
    %p210 = scmp.eq.s32.totalorder %s25, 1
    %p211 = scmp.ne.s32.totalorder %s206, %s208
    %p212 = scmp.eq.s32.totalorder %s25, 0
    %p213 = por %p211, %p212
    %p214 = scmp.ne.s32.totalorder %s206, %s208
    %p215 = scmp.eq.s32.totalorder %s30, 1
    %p216 = por %p214, %p215
    %p217 = scmp.ne.s32.totalorder %s208, %s209
    %p218 = scmp.eq.s32.totalorder %s30, 0
    %p219 = por %p217, %p218
    %p220 = scmp.ne.s32.totalorder %s208, %s209
    %p221 = scmp.eq.s32.totalorder %s31, 1
    %p222 = por %p220, %p221
    %p224 = scmp.ne.s32.totalorder %s209, %s223
    %p225 = scmp.eq.s32.totalorder %s31, 0
    %p226 = por %p224, %p225
    %s228 = sadd.s32 %s227, 1
    %p231 = scmp.eq.s32.totalorder %s25, 1
    %p232 = scmp.ne.s32.totalorder %s227, %s229
    %p233 = scmp.eq.s32.totalorder %s25, 0
    %p234 = por %p232, %p233
    %p235 = scmp.ne.s32.totalorder %s227, %s229
    %p236 = scmp.eq.s32.totalorder %s30, 1
    %p237 = por %p235, %p236
    %p238 = scmp.ne.s32.totalorder %s229, %s230
    %p239 = scmp.eq.s32.totalorder %s30, 0
    %p240 = por %p238, %p239
    %p241 = scmp.ne.s32.totalorder %s229, %s230
    %p242 = scmp.eq.s32.totalorder %s31, 1
    %p243 = por %p241, %p242
    %p245 = scmp.ne.s32.totalorder %s230, %s244
    %p246 = scmp.eq.s32.totalorder %s31, 0
    %p247 = por %p245, %p246
    %s249 = sadd.s32 %s248, 1
    %p252 = scmp.eq.s32.totalorder %s25, 1
    %p253 = scmp.ne.s32.totalorder %s248, %s250
    %p254 = scmp.eq.s32.totalorder %s25, 0
    %p255 = por %p253, %p254
    %p256 = scmp.ne.s32.totalorder %s248, %s250
    %p257 = scmp.eq.s32.totalorder %s30, 1
    %p258 = por %p256, %p257
    %p259 = scmp.ne.s32.totalorder %s250, %s251
    %p260 = scmp.eq.s32.totalorder %s30, 0
    %p261 = por %p259, %p260
    %p262 = scmp.ne.s32.totalorder %s250, %s251
    %p263 = scmp.eq.s32.totalorder %s31, 1
    %p264 = por %p262, %p263
    %p266 = scmp.ne.s32.totalorder %s251, %s265
    %p267 = scmp.eq.s32.totalorder %s31, 0
    %p268 = por %p266, %p267
    %s270 = sadd.s32 %s269, 1
    %p273 = scmp.eq.s32.totalorder %s25, 1
    %p274 = scmp.ne.s32.totalorder %s269, %s271
    %p275 = scmp.eq.s32.totalorder %s25, 0
    %p276 = por %p274, %p275
    %p277 = scmp.ne.s32.totalorder %s269, %s271
    %p278 = scmp.eq.s32.totalorder %s30, 1
    %p279 = por %p277, %p278
    %p280 = scmp.ne.s32.totalorder %s271, %s272
    %p281 = scmp.eq.s32.totalorder %s30, 0
    %p282 = por %p280, %p281
    %p283 = scmp.ne.s32.totalorder %s271, %s272
    %p284 = scmp.eq.s32.totalorder %s31, 1
    %p285 = por %p283, %p284
    %p287 = scmp.ne.s32.totalorder %s272, %s286
    %p288 = scmp.eq.s32.totalorder %s31, 0
    %p289 = por %p287, %p288
    %s291 = sadd.s32 %s290, 1
    %p294 = scmp.eq.s32.totalorder %s25, 1
    %p295 = scmp.ne.s32.totalorder %s290, %s292
    %p296 = scmp.eq.s32.totalorder %s25, 0
    %p297 = por %p295, %p296
    %p298 = scmp.ne.s32.totalorder %s290, %s292
    %p299 = scmp.eq.s32.totalorder %s30, 1
    %p300 = por %p298, %p299
    %p301 = scmp.ne.s32.totalorder %s292, %s293
    %p302 = scmp.eq.s32.totalorder %s30, 0
    %p303 = por %p301, %p302
    %p304 = scmp.ne.s32.totalorder %s292, %s293
    %p305 = scmp.eq.s32.totalorder %s31, 1
    %p306 = por %p304, %p305
    %p308 = scmp.ne.s32.totalorder %s293, %s307
    %p309 = scmp.eq.s32.totalorder %s31, 0
    %p310 = por %p308, %p309
    %s312 = sadd.s32 %s311, 1
    %p315 = scmp.eq.s32.totalorder %s25, 1
    %p316 = scmp.ne.s32.totalorder %s311, %s313
    %p317 = scmp.eq.s32.totalorder %s25, 0
    %p318 = por %p316, %p317
    %p319 = scmp.ne.s32.totalorder %s311, %s313
    %p320 = scmp.eq.s32.totalorder %s30, 1
    %p321 = por %p319, %p320
    %p322 = scmp.ne.s32.totalorder %s313, %s314
    %p323 = scmp.eq.s32.totalorder %s30, 0
    %p324 = por %p322, %p323
    %p325 = scmp.ne.s32.totalorder %s313, %s314
    %p326 = scmp.eq.s32.totalorder %s31, 1
    %p327 = por %p325, %p326
    %p329 = scmp.ne.s32.totalorder %s314, %s328
    %p330 = scmp.eq.s32.totalorder %s31, 0
    %p331 = por %p329, %p330
    %s333 = sadd.s32 %s332, 1
    %p336 = scmp.eq.s32.totalorder %s25, 1
    %p337 = scmp.ne.s32.totalorder %s332, %s334
    %p338 = scmp.eq.s32.totalorder %s25, 0
    %p339 = por %p337, %p338
    %p340 = scmp.ne.s32.totalorder %s332, %s334
    %p341 = scmp.eq.s32.totalorder %s30, 1
    %p342 = por %p340, %p341
    %p343 = scmp.ne.s32.totalorder %s334, %s335
    %p344 = scmp.eq.s32.totalorder %s30, 0
    %p345 = por %p343, %p344
    %p346 = scmp.ne.s32.totalorder %s334, %s335
    %p347 = scmp.eq.s32.totalorder %s31, 1
    %p348 = por %p346, %p347
    %p350 = scmp.ne.s32.totalorder %s335, %s349
    %p351 = scmp.eq.s32.totalorder %s31, 0
    %p352 = por %p350, %p351
    %s354 = sadd.s32 %s353, 1
    %p357 = scmp.eq.s32.totalorder %s25, 1
    %p358 = scmp.ne.s32.totalorder %s353, %s355
    %p359 = scmp.eq.s32.totalorder %s25, 0
    %p360 = por %p358, %p359
    %p361 = scmp.ne.s32.totalorder %s353, %s355
    %p362 = scmp.eq.s32.totalorder %s30, 1
    %p363 = por %p361, %p362
    %p364 = scmp.ne.s32.totalorder %s355, %s356
    %p365 = scmp.eq.s32.totalorder %s30, 0
    %p366 = por %p364, %p365
    %p367 = scmp.ne.s32.totalorder %s355, %s356
    %p368 = scmp.eq.s32.totalorder %s31, 1
    %p369 = por %p367, %p368
    %p371 = scmp.ne.s32.totalorder %s356, %s370
    %p372 = scmp.eq.s32.totalorder %s31, 0
    %p373 = por %p371, %p372
    %s375 = sadd.s32 %s374, 1
    %p378 = scmp.eq.s32.totalorder %s25, 1
    %p379 = scmp.ne.s32.totalorder %s374, %s376
    %p380 = scmp.eq.s32.totalorder %s25, 0
    %p381 = por %p379, %p380
    %p382 = scmp.ne.s32.totalorder %s374, %s376
    %p383 = scmp.eq.s32.totalorder %s30, 1
    %p384 = por %p382, %p383
    %p385 = scmp.ne.s32.totalorder %s376, %s377
    %p386 = scmp.eq.s32.totalorder %s30, 0
    %p387 = por %p385, %p386
    %p388 = scmp.ne.s32.totalorder %s376, %s377
    %p389 = scmp.eq.s32.totalorder %s31, 1
    %p390 = por %p388, %p389
    %p392 = scmp.ne.s32.totalorder %s377, %s391
    %p393 = scmp.eq.s32.totalorder %s31, 0
    %p394 = por %p392, %p393
    %s396 = sadd.s32 %s395, 1
    %p399 = scmp.eq.s32.totalorder %s25, 1
    %p400 = scmp.ne.s32.totalorder %s395, %s397
    %p401 = scmp.eq.s32.totalorder %s25, 0
    %p402 = por %p400, %p401
    %p403 = scmp.ne.s32.totalorder %s395, %s397
    %p404 = scmp.eq.s32.totalorder %s30, 1
    %p405 = por %p403, %p404
    %p406 = scmp.ne.s32.totalorder %s397, %s398
    %p407 = scmp.eq.s32.totalorder %s30, 0
    %p408 = por %p406, %p407
    %p409 = scmp.ne.s32.totalorder %s397, %s398
    %p410 = scmp.eq.s32.totalorder %s31, 1
    %p411 = por %p409, %p410
    %p413 = scmp.ne.s32.totalorder %s398, %s412
    %p414 = scmp.eq.s32.totalorder %s31, 0
    %p415 = por %p413, %p414
    %s417 = sadd.s32 %s416, 1
    %p420 = scmp.eq.s32.totalorder %s25, 1
    %p421 = scmp.ne.s32.totalorder %s416, %s418
    %p422 = scmp.eq.s32.totalorder %s25, 0
    %p423 = por %p421, %p422
    %p424 = scmp.ne.s32.totalorder %s416, %s418
    %p425 = scmp.eq.s32.totalorder %s30, 1
    %p426 = por %p424, %p425
    %p427 = scmp.ne.s32.totalorder %s418, %s419
    %p428 = scmp.eq.s32.totalorder %s30, 0
    %p429 = por %p427, %p428
    %p430 = scmp.ne.s32.totalorder %s418, %s419
    %p431 = scmp.eq.s32.totalorder %s31, 1
    %p432 = por %p430, %p431
    %p434 = scmp.ne.s32.totalorder %s419, %s433
    %p435 = scmp.eq.s32.totalorder %s31, 0
    %p436 = por %p434, %p435
    %s437 = ssub.s32 %s25, %s32
    %p438 = scmp.eq.s32.totalorder %s437, 0
    %s440 = sadd.s32 %s439, 1
    %s441 = scalar_select %p438, %s439, %s440
    %p444 = pneg %p438
    %p445 = scmp.eq.s32.totalorder %s25, 1
    %p446 = por %p444, %p445
    %p447 = scmp.ne.s32.totalorder %s439, %s442
    %p448 = scmp.eq.s32.totalorder %s25, 0
    %p449 = por %p447, %p448
    %p450 = scmp.ne.s32.totalorder %s439, %s442
    %p451 = scmp.eq.s32.totalorder %s30, 1
    %p452 = por %p450, %p451
    %p453 = scmp.ne.s32.totalorder %s442, %s443
    %p454 = scmp.eq.s32.totalorder %s30, 0
    %p455 = por %p453, %p454
    %p456 = scmp.ne.s32.totalorder %s442, %s443
    %p457 = scmp.eq.s32.totalorder %s31, 1
    %p458 = por %p456, %p457
    %p460 = scmp.ne.s32.totalorder %s443, %s459
    %p461 = scmp.eq.s32.totalorder %s31, 0
    %p462 = por %p460, %p461
    %p463 = scmp.le.s32.totalorder 1, %s25
    %p464 = scmp.lt.s32.totalorder %s25, 3
    %p465 = pnand %p463, %p464
    %p466 = pneg %p465
    // Predicated region
    $region9: #{forward.6} parent=5 // pred_check
      _
    $region10: #{forward.6} parent=5 // pred_check_branch
      %468 = sbr.rel (%p465) target = $region12
    $region11: #{forward.6} parent=5 // pred_region
      %s469 = ssub.s32 %s25, 1
      // Predicated region
      $region13: #{forward.6} parent=11 // pred_check
        %p470 = pneg %p72
      $region14: #{forward.6} parent=11 // pred_check_branch
        %472 = sbr.rel (%p470) target = $region16
      $region15: #{forward.6} parent=11 // pred_region
        _
      $region16: #{forward.6} parent=11 // pred_fallthru
        _
      // Predicated region
      $region17: #{forward.6} parent=11 // pred_check
        %p473 = pneg %p93
      $region18: #{forward.6} parent=11 // pred_check_branch
        %475 = sbr.rel (%p473) target = $region20
      $region19: #{forward.6} parent=11 // pred_region
        _
      $region20: #{forward.6} parent=11 // pred_fallthru
        _
      // Predicated region
      $region21: #{forward.6} parent=11 // pred_check
        %p476 = pneg %p114
      $region22: #{forward.6} parent=11 // pred_check_branch
        %478 = sbr.rel (%p476) target = $region24
      $region23: #{forward.6} parent=11 // pred_region
        _
      $region24: #{forward.6} parent=11 // pred_fallthru
        _
      // Predicated region
      $region25: #{forward.6} parent=11 // pred_check
        %p479 = pneg %p135
      $region26: #{forward.6} parent=11 // pred_check_branch
        %481 = sbr.rel (%p479) target = $region28
      $region27: #{forward.6} parent=11 // pred_region
        _
      $region28: #{forward.6} parent=11 // pred_fallthru
        _
      // Predicated region
      $region29: #{forward.6} parent=11 // pred_check
        %p482 = pneg %p156
      $region30: #{forward.6} parent=11 // pred_check_branch
        %484 = sbr.rel (%p482) target = $region32
      $region31: #{forward.6} parent=11 // pred_region
        _
      $region32: #{forward.6} parent=11 // pred_fallthru
        _
      // Predicated region
      $region33: #{forward.6} parent=11 // pred_check
        %p485 = pneg %p177
      $region34: #{forward.6} parent=11 // pred_check_branch
        %487 = sbr.rel (%p485) target = $region36
      $region35: #{forward.6} parent=11 // pred_region
        _
      $region36: #{forward.6} parent=11 // pred_fallthru
        _
      // Predicated region
      $region37: #{forward.6} parent=11 // pred_check
        %p488 = pneg %p198
      $region38: #{forward.6} parent=11 // pred_check_branch
        %490 = sbr.rel (%p488) target = $region40
      $region39: #{forward.6} parent=11 // pred_region
        _
      $region40: #{forward.6} parent=11 // pred_fallthru
        _
      // Predicated region
      $region41: #{forward.6} parent=11 // pred_check
        %p491 = pneg %p219
      $region42: #{forward.6} parent=11 // pred_check_branch
        %493 = sbr.rel (%p491) target = $region44
      $region43: #{forward.6} parent=11 // pred_region
        _
      $region44: #{forward.6} parent=11 // pred_fallthru
        _
      // Predicated region
      $region45: #{forward.6} parent=11 // pred_check
        %p494 = pneg %p240
      $region46: #{forward.6} parent=11 // pred_check_branch
        %496 = sbr.rel (%p494) target = $region48
      $region47: #{forward.6} parent=11 // pred_region
        _
      $region48: #{forward.6} parent=11 // pred_fallthru
        _
      // Predicated region
      $region49: #{forward.6} parent=11 // pred_check
        %p497 = pneg %p261
      $region50: #{forward.6} parent=11 // pred_check_branch
        %499 = sbr.rel (%p497) target = $region52
      $region51: #{forward.6} parent=11 // pred_region
        _
      $region52: #{forward.6} parent=11 // pred_fallthru
        _
      // Predicated region
      $region53: #{forward.6} parent=11 // pred_check
        %p500 = pneg %p282
      $region54: #{forward.6} parent=11 // pred_check_branch
        %502 = sbr.rel (%p500) target = $region56
      $region55: #{forward.6} parent=11 // pred_region
        _
      $region56: #{forward.6} parent=11 // pred_fallthru
        _
      // Predicated region
      $region57: #{forward.6} parent=11 // pred_check
        %p503 = pneg %p303
      $region58: #{forward.6} parent=11 // pred_check_branch
        %505 = sbr.rel (%p503) target = $region60
      $region59: #{forward.6} parent=11 // pred_region
        _
      $region60: #{forward.6} parent=11 // pred_fallthru
        _
      // Predicated region
      $region61: #{forward.6} parent=11 // pred_check
        %p506 = pneg %p324
      $region62: #{forward.6} parent=11 // pred_check_branch
        %508 = sbr.rel (%p506) target = $region64
      $region63: #{forward.6} parent=11 // pred_region
        _
      $region64: #{forward.6} parent=11 // pred_fallthru
        _
      // Predicated region
      $region65: #{forward.6} parent=11 // pred_check
        %p509 = pneg %p345
      $region66: #{forward.6} parent=11 // pred_check_branch
        %511 = sbr.rel (%p509) target = $region68
      $region67: #{forward.6} parent=11 // pred_region
        _
      $region68: #{forward.6} parent=11 // pred_fallthru
        _
      // Predicated region
      $region69: #{forward.6} parent=11 // pred_check
        %p512 = pneg %p366
      $region70: #{forward.6} parent=11 // pred_check_branch
        %514 = sbr.rel (%p512) target = $region72
      $region71: #{forward.6} parent=11 // pred_region
        _
      $region72: #{forward.6} parent=11 // pred_fallthru
        _
      // Predicated region
      $region73: #{forward.6} parent=11 // pred_check
        %p515 = pneg %p387
      $region74: #{forward.6} parent=11 // pred_check_branch
        %517 = sbr.rel (%p515) target = $region76
      $region75: #{forward.6} parent=11 // pred_region
        _
      $region76: #{forward.6} parent=11 // pred_fallthru
        _
      // Predicated region
      $region77: #{forward.6} parent=11 // pred_check
        %p518 = pneg %p408
      $region78: #{forward.6} parent=11 // pred_check_branch
        %520 = sbr.rel (%p518) target = $region80
      $region79: #{forward.6} parent=11 // pred_region
        _
      $region80: #{forward.6} parent=11 // pred_fallthru
        _
      // Predicated region
      $region81: #{forward.6} parent=11 // pred_check
        %p521 = pneg %p429
      $region82: #{forward.6} parent=11 // pred_check_branch
        %523 = sbr.rel (%p521) target = $region84
      $region83: #{forward.6} parent=11 // pred_region
        _
      $region84: #{forward.6} parent=11 // pred_fallthru
        _
    $region12: #{forward.6} parent=5 // pred_fallthru
      _
    %p524 = scmp.lt.s32.totalorder %s25, 2
    // Predicated region
    $region85: #{forward.6} parent=5 // pred_check
      %p525 = pneg %p524
    $region86: #{forward.6} parent=5 // pred_check_branch
      %527 = sbr.rel (%p525) target = $region88
    $region87: #{forward.6} parent=5 // pred_region
      // Predicated region
      $region89: #{forward.6} parent=87 // pred_check
        %p528 = pneg %p45
      $region90: #{forward.6} parent=87 // pred_check_branch
        %530 = sbr.rel (%p528) target = $region92
      $region91: #{forward.6} parent=87 // pred_region
        %p531 = scmp.lt.s32.totalorder %s25, 1
        %s532 = scalar_select %p531, %s25, 1
        %s533 = smul.addr %s532, 3
        %s534 = smul.addr %s533, 8
        %s535 = scalar_lea.vmem %s0, %s534
      $region92: #{forward.6} parent=87 // pred_fallthru
        _
    $region88: #{forward.6} parent=5 // pred_fallthru
      _
    %p536 = scmp.le.s32.totalorder 1, %s25
    %p537 = scmp.lt.s32.totalorder %s25, 3
    %p538 = pnand %p536, %p537
    %p539 = pneg %p538
    // Predicated region
    $region93: #{forward.6} parent=5 // pred_check
      _
    $region94: #{forward.6} parent=5 // pred_check_branch
      %541 = sbr.rel (%p538) target = $region96
    $region95: #{forward.6} parent=5 // pred_region
      %s542 = ssub.s32 %s25, 1
      %p543 = scmp.lt.s32.totalorder %s30, 1
      %s544 = scalar_select %p543, %s30, 1
      %s545 = smul.addr %s544, 3
      %s546 = smul.addr %s545, 8
      %s547 = scalar_lea.vmem %s0, %s546
      %p548 = pneg %p51
      %p549 = pneg %p48
      %p550 = pneg %p72
      %p551 = pneg %p69
      %p552 = pneg %p93
      %p553 = pneg %p90
      %p554 = pneg %p114
      %p555 = pneg %p111
      %p556 = pneg %p135
      %p557 = pneg %p132
      %p558 = pneg %p156
      %p559 = pneg %p153
      %p560 = pneg %p177
      %p561 = pneg %p174
      %p562 = pneg %p198
      %p563 = pneg %p195
      %p564 = pneg %p219
      %p565 = pneg %p216
      %p566 = pneg %p240
      %p567 = pneg %p237
      %p568 = pneg %p261
      %p569 = pneg %p258
      %p570 = pneg %p282
      %p571 = pneg %p279
      %p572 = pneg %p303
      %p573 = pneg %p300
      %p574 = pneg %p324
      %p575 = pneg %p321
      %p576 = pneg %p345
      %p577 = pneg %p342
      %p578 = pneg %p366
      %p579 = pneg %p363
      %p580 = pneg %p387
      %p581 = pneg %p384
      %p582 = pneg %p408
      %p583 = pneg %p405
      %p584 = pneg %p429
      %p585 = pneg %p426
      %p586 = pneg %p455
      %p587 = pneg %p452
      %p588 = scmp.lt.s32.totalorder %s30, 1
      %s589 = scalar_select %p588, %s30, 1
      %s590 = smul.addr %s589, 3
      %s591 = smul.addr %s590, 8
      %s592 = scalar_lea.vmem %s19, %s591
      %p593 = scmp.lt.s32.totalorder %s30, 1
      %s594 = scalar_select %p593, %s30, 1
      %s595 = smul.addr %s594, 3
      %s596 = smul.addr %s595, 8
      %s597 = scalar_lea.vmem %s0, %s596
      %p598 = scmp.lt.s32.totalorder %s30, 1
      %s599 = scalar_select %p598, %s30, 1
      %s600 = smul.addr %s599, 3
      %s601 = smul.addr %s600, 8
      %s602 = scalar_lea.vmem %s19, %s601
      %v604 = vld [vmem:[%s597] sm:$0xff]
      %v605 = vld [vmem:[%s597 + $0x8] sm:$0xff]
      %v606 = vld [vmem:[%s597 + $0x10] sm:$0xff]
      %v607 = vld [vmem:[%s1] sm:$0xff]
      %v608 = vld [vmem:[%s1 + $0x8] sm:$0xff]
      %v609 = vld [vmem:[%s1 + $0x10] sm:$0xff]
      %v610 = vadd.f32 %v604, %v607
      %v611 = vadd.f32 %v605, %v608
      %v612 = vadd.f32 %v606, %v609
      %v613 = vld [vmem:[%s2] sm:$0x1]
      %v614 = vld [vmem:[%s3] sm:$0x1]
      %v615 = vld [vmem:[%s4] sm:$0x1]
      %vm616 = vcmask 261120
      %v617 = vsel %vm616, %v610, 0.0
      %618 = vadd.xlane.f32.xlu0 %v617
      %v619 = vpop.xlane.xlu0 %618
      %v620 = vsel %vm616, %v611, 0.0
      %621 = vadd.xlane.f32.xlu0 %v620
      %v622 = vpop.xlane.xlu0 %621
      %v623 = vsel %vm616, %v612, 0.0
      %624 = vadd.xlane.f32.xlu0 %v623
      %v625 = vpop.xlane.xlu0 %624
      %v626 = vrcp.pop 32.0
      %v627 = vmul.f32 %v619, %v626
      %v628 = vmul.f32 %v622, %v626
      %v629 = vmul.f32 %v625, %v626
      %v630 = vsub.f32 %v610, %v627
      %v631 = vsub.f32 %v611, %v628
      %v632 = vsub.f32 %v612, %v629
      %v633 = vmul.f32 %v630, %v630
      %v634 = vmul.f32 %v631, %v631
      %v635 = vmul.f32 %v632, %v632
      %v636 = vsel %vm616, %v633, 0.0
      %637 = vadd.xlane.f32.xlu0 %v636
      %v638 = vpop.xlane.xlu0 %637
      %v639 = vsel %vm616, %v634, 0.0
      %640 = vadd.xlane.f32.xlu0 %v639
      %v641 = vpop.xlane.xlu0 %640
      %v642 = vsel %vm616, %v635, 0.0
      %643 = vadd.xlane.f32.xlu0 %v642
      %v644 = vpop.xlane.xlu0 %643
      %v645 = vmul.f32 %v638, %v626
      %v646 = vmul.f32 %v641, %v626
      %v647 = vmul.f32 %v644, %v626
      %v648 = vadd.f32 %v645, 1e-05
      %v649 = vadd.f32 %v646, 1e-05
      %v650 = vadd.f32 %v647, 1e-05
      %v651 = vrsqrt.pop %v648
      %v652 = vrsqrt.pop %v649
      %v653 = vrsqrt.pop %v650
      %v654 = vmul.f32 %v630, %v651
      %v655 = vmul.f32 %v631, %v652
      %v656 = vmul.f32 %v632, %v653
      %v658 = vlaneseq
      %v659 = vshrl.u32 %v658, 7
      %v660 = vsub.s32 0, %v659
      %v661 = vrot.slane %v614, %v660
      %v663 = vmul.f32 %v654, %v661
      %v664 = vmul.f32 %v655, %v661
      %v665 = vmul.f32 %v656, %v661
      %v667 = vlaneseq
      %v668 = vshrl.u32 %v667, 7
      %v669 = vsub.s32 0, %v668
      %v670 = vrot.slane %v615, %v669
      %v672 = vadd.f32 %v663, %v670
      %v673 = vadd.f32 %v664, %v670
      %v674 = vadd.f32 %v665, %v670
      %v675 = vpack.c.bf16 %v673, %v672
      %v676 = vpack.c.bf16 %v674, %v674
      %v677 = vld [vmem:[%s5] sm:$0xf]
      %v678 = vld [vmem:[%s5 + $0x4] sm:$0xf]
      %v679 = vld [vmem:[%s5 + $0x8] sm:$0xf]
      %v680 = vld [vmem:[%s5 + $0xc] sm:$0xf]
      %v681 = vld [vmem:[%s6] sm:$0x1]
      %v683 = vlaneseq
      %v684 = vshrl.u32 %v683, 7
      %v685 = vsub.s32 0, %v684
      %v686 = vrot.slane %v681, %v685
      %v692 = vunpack.c.l.b16 %v677
      %v693 = vunpack.c.l.b16 %v678
      %v694 = vunpack.c.l.b16 %v679
      %v695 = vunpack.c.l.b16 %v680
      %v696 = vpack.c.b16 %v693, %v692
      %v697 = vpack.c.b16 %v695, %v694
      %v701 = vsel %vm616, %v675, 0
      %v704 = vsel %vm616, %v676, 0
      %706 = vmatprep.subr.bf16.mxu0 0
      %707 = vmatpush1.bf16.msra.mxu0 %v696
      %708 = vmatprep.subr.bf16.mxu0 0
      %709 = vmatpush1.bf16.msra.mxu0 %v697
      %710 = vmatprep.subr.bf16.mxu0 0
      %711 = vmatpush1.bf16.msra.mxu0 0
      %712 = vmatprep.subr.bf16.mxu0 0
      %713 = vmatpush1.bf16.msra.mxu0 0
      %714 = vmatprep.subr.bf16.mxu0 0
      %715 = vmatpush1.bf16.msra.mxu0 0
      %716 = vmatprep.subr.bf16.mxu0 0
      %717 = vmatpush1.bf16.msra.mxu0 0
      %718 = vmatprep.subr.bf16.mxu0 0
      %719 = vmatpush1.bf16.msra.mxu0 0
      %720 = vmatprep.subr.bf16.mxu0 0
      %721 = vmatpush1.bf16.msra.mxu0 0
      %722 = vmatprep.subr.bf16.mxu0 0
      %723 = vmatpush1.bf16.msra.mxu0 0
      %724 = vmatprep.subr.bf16.mxu0 0
      %725 = vmatpush1.bf16.msra.mxu0 0
      %726 = vmatprep.subr.bf16.mxu0 0
      %727 = vmatpush1.bf16.msra.mxu0 0
      %728 = vmatprep.subr.bf16.mxu0 0
      %729 = vmatpush1.bf16.msra.mxu0 0
      %730 = vmatprep.subr.bf16.mxu0 0
      %731 = vmatpush1.bf16.msra.mxu0 0
      %732 = vmatprep.subr.bf16.mxu0 0
      %733 = vmatpush1.bf16.msra.mxu0 0
      %734 = vmatprep.subr.bf16.mxu0 0
      %735 = vmatpush1.bf16.msra.mxu0 0
      %736 = vmatprep.subr.bf16.mxu0 0
      %737 = vmatpush1.bf16.msra.mxu0 0
      %738 = vmatprep.mubr.bf16.mxu0 0
      %739 = vmatmul.mubr.bf16.gmra.mrb[0].mxu0 %v701
      %v740 = vpop.f32.mrb[0].mxu0
      %v741 = vadd.f32 %v686, %v740
      %v742 = vpop.f32.mrb[0].mxu0
      %v743 = vpop.f32.mrb[0].mxu0
      %v744 = vadd.f32 %v686, %v743
      %v745 = vpop.f32.mrb[0].mxu0
      %746 = vmatprep.mubr.bf16.mxu0 0
      %747 = vmatmul.mubr.bf16.gmra.mrb[0].mxu0 %v704
      %v748 = vpop.f32.mrb[0].mxu0
      %v749 = vadd.f32 %v686, %v748
      %v750 = vpop.f32.mrb[0].mxu0
      %v751 = vpop.f32.mrb[0].mxu0
      %v752 = vpop.f32.mrb[0].mxu0
      %753 = vdwg.mxu0
      %v754 = vmul.f32 %v741, 0.35355338
      %v755 = vmul.f32 %v744, 0.35355338
      %v756 = vmul.f32 %v749, 0.35355338
      %v757 = vpack.c.bf16 %v755, %v754
      %v758 = vpack.c.bf16 %v756, %v756
      %v759 = vpack.c.bf16 %v744, %v741
      %v760 = vpack.c.bf16 %v749, %v749
      %v762 = vlaneseq
      %v763 = vshrl.u32 %v762, 7
      %v764 = vsub.s32 0, %v763
      %v765 = vrot.slane %v613, %v764
      %769 = vrot.lane.b32.xlu0 %v759, 96
      %v770 = vpop.permute.xlu0 %769
      %771 = vrot.lane.b32.xlu0 %v760, 96
      %v772 = vpop.permute.xlu0 %771
      %vm773 = vcmask 64512
      %v775 = vsel %vm773, %v757, 0
      %v778 = vsel %vm773, %v758, 0
      %v781 = vsel %vm773, %v770, 0
      %v784 = vsel %vm773, %v772, 0
      %786 = vmatprep.subr.bf16.mxu0 0
      %787 = vmatpush1.bf16.xpose.msra.mxu0 %v781
      %788 = vmatprep.subr.bf16.mxu0 0
      %789 = vmatpush1.bf16.xpose.msra.mxu0 %v784
      %790 = vmatprep.subr.bf16.mxu0 0
      %791 = vmatpush1.bf16.xpose.msra.mxu0 0
      %792 = vmatprep.subr.bf16.mxu0 0
      %793 = vmatpush1.bf16.xpose.msra.mxu0 0
      %794 = vmatprep.subr.bf16.mxu0 0
      %795 = vmatpush1.bf16.xpose.msra.mxu0 0
      %796 = vmatprep.subr.bf16.mxu0 0
      %797 = vmatpush1.bf16.xpose.msra.mxu0 0
      %798 = vmatprep.subr.bf16.mxu0 0
      %799 = vmatpush1.bf16.xpose.msra.mxu0 0
      %800 = vmatprep.subr.bf16.mxu0 0
      %801 = vmatpush1.bf16.xpose.msra.mxu0 0
      %802 = vmatprep.subr.bf16.mxu0 0
      %803 = vmatpush1.bf16.xpose.msra.mxu0 0
      %804 = vmatprep.subr.bf16.mxu0 0
      %805 = vmatpush1.bf16.xpose.msra.mxu0 0
      %806 = vmatprep.subr.bf16.mxu0 0
      %807 = vmatpush1.bf16.xpose.msra.mxu0 0
      %808 = vmatprep.subr.bf16.mxu0 0
      %809 = vmatpush1.bf16.xpose.msra.mxu0 0
      %810 = vmatprep.subr.bf16.mxu0 0
      %811 = vmatpush1.bf16.xpose.msra.mxu0 0
      %812 = vmatprep.subr.bf16.mxu0 0
      %813 = vmatpush1.bf16.xpose.msra.mxu0 0
      %814 = vmatprep.subr.bf16.mxu0 0
      %815 = vmatpush1.bf16.xpose.msra.mxu0 0
      %816 = vmatprep.subr.bf16.mxu0 0
      %817 = vmatpush1.bf16.xpose.msra.mxu0 0
      %818 = vmatprep.mubr.bf16.mxu0 0
      %819 = vmatmul.mubr.bf16.gmra.mrb[0].mxu0 %v775
      %v820 = vpop.f32.mrb[0].mxu0
      %v821 = vadd.f32 %v765, %v820
      %v822 = vpop.f32.mrb[0].mxu0
      %v823 = vpop.f32.mrb[0].mxu0
      %v824 = vadd.f32 %v765, %v823
      %v825 = vpop.f32.mrb[0].mxu0
      %826 = vmatprep.mubr.bf16.mxu0 0
      %827 = vmatmul.mubr.bf16.gmra.mrb[0].mxu0 %v778
      %v828 = vpop.f32.mrb[0].mxu0
      %v829 = vadd.f32 %v765, %v828
      %v830 = vpop.f32.mrb[0].mxu0
      %v831 = vpop.f32.mrb[0].mxu0
      %v832 = vpop.f32.mrb[0].mxu0
      %833 = vdwg.mxu0
      %vm834 = vcmask 195584
      %v835 = vsel %vm834, %v821, -inf
      %836 = vmax.xlane.f32.xlu0 %v835
      %v837 = vpop.xlane.xlu0 %836
      %v838 = vsel %vm834, %v824, -inf
      %839 = vmax.xlane.f32.xlu0 %v838
      %v840 = vpop.xlane.xlu0 %839
      %v841 = vsel %vm834, %v829, -inf
      %842 = vmax.xlane.f32.xlu0 %v841
      %v843 = vpop.xlane.xlu0 %842
      %v844 = vsub.f32 %v821, %v837
      %v845 = vsub.f32 %v824, %v840
      %v846 = vsub.f32 %v829, %v843
      %v847 = vmul.f32 %v844, 1.442695
      %v848 = vpow.pop %v847
      %v849 = vmul.f32 %v845, 1.442695
      %v850 = vpow.pop %v849
      %v851 = vmul.f32 %v846, 1.442695
      %v852 = vpow.pop %v851
      %v853 = vsel %vm834, %v848, 0.0
      %854 = vadd.xlane.f32.xlu0 %v853
      %v855 = vpop.xlane.xlu0 %854
      %v856 = vsel %vm834, %v850, 0.0
      %857 = vadd.xlane.f32.xlu0 %v856
      %v858 = vpop.xlane.xlu0 %857
      %v859 = vsel %vm834, %v852, 0.0
      %860 = vadd.xlane.f32.xlu0 %v859
      %v861 = vpop.xlane.xlu0 %860
      %v862 = vrcp.pop %v855
      %v863 = vrcp.pop %v858
      %v864 = vrcp.pop %v861
      %v865 = vmul.f32 %v848, %v862
      %v866 = vmul.f32 %v850, %v863
      %v867 = vmul.f32 %v852, %v864
      %v868 = vpack.c.bf16 %v866, %v865
      %v869 = vpack.c.bf16 %v867, %v867
      %870 = vrot.lane.b32.xlu0 %v759, 64
      %v871 = vpop.permute.xlu0 %870
      %872 = vrot.lane.b32.xlu0 %v760, 64
      %v873 = vpop.permute.xlu0 %872
      %v876 = vsel %vm834, %v868, 0
      %v879 = vsel %vm834, %v869, 0
      %vm881 = vcmask 1043456
      %v883 = vsel %vm881, %v873, 0
      %885 = vmatprep.subr.bf16.mxu0 0
      %886 = vmatpush1.bf16.msra.mxu0 %v871
      %887 = vmatprep.subr.bf16.mxu0 0
      %888 = vmatpush1.bf16.msra.mxu0 %v883
      %889 = vmatprep.subr.bf16.mxu0 0
      %890 = vmatpush1.bf16.msra.mxu0 0
      %891 = vmatprep.subr.bf16.mxu0 0
      %892 = vmatpush1.bf16.msra.mxu0 0
      %893 = vmatprep.subr.bf16.mxu0 0
      %894 = vmatpush1.bf16.msra.mxu0 0
      %895 = vmatprep.subr.bf16.mxu0 0
      %896 = vmatpush1.bf16.msra.mxu0 0
      %897 = vmatprep.subr.bf16.mxu0 0
      %898 = vmatpush1.bf16.msra.mxu0 0
      %899 = vmatprep.subr.bf16.mxu0 0
      %900 = vmatpush1.bf16.msra.mxu0 0
      %901 = vmatprep.subr.bf16.mxu0 0
      %902 = vmatpush1.bf16.msra.mxu0 0
      %903 = vmatprep.subr.bf16.mxu0 0
      %904 = vmatpush1.bf16.msra.mxu0 0
      %905 = vmatprep.subr.bf16.mxu0 0
      %906 = vmatpush1.bf16.msra.mxu0 0
      %907 = vmatprep.subr.bf16.mxu0 0
      %908 = vmatpush1.bf16.msra.mxu0 0
      %909 = vmatprep.subr.bf16.mxu0 0
      %910 = vmatpush1.bf16.msra.mxu0 0
      %911 = vmatprep.subr.bf16.mxu0 0
      %912 = vmatpush1.bf16.msra.mxu0 0
      %913 = vmatprep.subr.bf16.mxu0 0
      %914 = vmatpush1.bf16.msra.mxu0 0
      %915 = vmatprep.subr.bf16.mxu0 0
      %916 = vmatpush1.bf16.msra.mxu0 0
      %917 = vmatprep.mubr.bf16.mxu0 0
      %918 = vmatmul.mubr.bf16.gmra.mrb[0].mxu0 %v876
      %v919 = vpop.f32.mrb[0].mxu0
      %v920 = vadd.f32 0.0, %v919
      %v921 = vpop.f32.mrb[0].mxu0
      %v922 = vpop.f32.mrb[0].mxu0
      %v923 = vadd.f32 0.0, %v922
      %v924 = vpop.f32.mrb[0].mxu0
      %925 = vmatprep.mubr.bf16.mxu0 0
      %926 = vmatmul.mubr.bf16.gmra.mrb[0].mxu0 %v879
      %v927 = vpop.f32.mrb[0].mxu0
      %v928 = vadd.f32 0.0, %v927
      %v929 = vpop.f32.mrb[0].mxu0
      %v930 = vpop.f32.mrb[0].mxu0
      %v931 = vpop.f32.mrb[0].mxu0
      %932 = vdwg.mxu0
      %935 = vrot.lane.b32.xlu0 %v757, 120
      %v936 = vpop.permute.xlu0 %935
      %937 = vrot.lane.b32.xlu0 %v758, 120
      %v938 = vpop.permute.xlu0 %937
      %939 = vrot.lane.b32.xlu0 %v759, 88
      %v940 = vpop.permute.xlu0 %939
      %941 = vrot.lane.b32.xlu0 %v760, 88
      %v942 = vpop.permute.xlu0 %941
      %v944 = vsel %vm773, %v936, 0
      %v947 = vsel %vm773, %v938, 0
      %v950 = vsel %vm773, %v940, 0
      %v953 = vsel %vm773, %v942, 0
      %955 = vmatprep.subr.bf16.mxu0 0
      %956 = vmatpush1.bf16.xpose.msra.mxu0 %v950
      %957 = vmatprep.subr.bf16.mxu0 0
      %958 = vmatpush1.bf16.xpose.msra.mxu0 %v953
      %959 = vmatprep.subr.bf16.mxu0 0
      %960 = vmatpush1.bf16.xpose.msra.mxu0 0
      %961 = vmatprep.subr.bf16.mxu0 0
      %962 = vmatpush1.bf16.xpose.msra.mxu0 0
      %963 = vmatprep.subr.bf16.mxu0 0
      %964 = vmatpush1.bf16.xpose.msra.mxu0 0
      %965 = vmatprep.subr.bf16.mxu0 0
      %966 = vmatpush1.bf16.xpose.msra.mxu0 0
      %967 = vmatprep.subr.bf16.mxu0 0
      %968 = vmatpush1.bf16.xpose.msra.mxu0 0
      %969 = vmatprep.subr.bf16.mxu0 0
      %970 = vmatpush1.bf16.xpose.msra.mxu0 0
      %971 = vmatprep.subr.bf16.mxu0 0
      %972 = vmatpush1.bf16.xpose.msra.mxu0 0
      %973 = vmatprep.subr.bf16.mxu0 0
      %974 = vmatpush1.bf16.xpose.msra.mxu0 0
      %975 = vmatprep.subr.bf16.mxu0 0
      %976 = vmatpush1.bf16.xpose.msra.mxu0 0
      %977 = vmatprep.subr.bf16.mxu0 0
      %978 = vmatpush1.bf16.xpose.msra.mxu0 0
      %979 = vmatprep.subr.bf16.mxu0 0
      %980 = vmatpush1.bf16.xpose.msra.mxu0 0
      %981 = vmatprep.subr.bf16.mxu0 0
      %982 = vmatpush1.bf16.xpose.msra.mxu0 0
      %983 = vmatprep.subr.bf16.mxu0 0
      %984 = vmatpush1.bf16.xpose.msra.mxu0 0
      %985 = vmatprep.subr.bf16.mxu0 0
      %986 = vmatpush1.bf16.xpose.msra.mxu0 0
      %987 = vmatprep.mubr.bf16.mxu0 0
      %988 = vmatmul.mubr.bf16.gmra.mrb[0].mxu0 %v944
      %v989 = vpop.f32.mrb[0].mxu0
      %v990 = vadd.f32 %v765, %v989
      %v991 = vpop.f32.mrb[0].mxu0
      %v992 = vpop.f32.mrb[0].mxu0
      %v993 = vadd.f32 %v765, %v992
      %v994 = vpop.f32.mrb[0].mxu0
      %995 = vmatprep.mubr.bf16.mxu0 0
      %996 = vmatmul.mubr.bf16.gmra.mrb[0].mxu0 %v947
      %v997 = vpop.f32.mrb[0].mxu0
      %v998 = vadd.f32 %v765, %v997
      %v999 = vpop.f32.mrb[0].mxu0
      %v1000 = vpop.f32.mrb[0].mxu0
      %v1001 = vpop.f32.mrb[0].mxu0
      %1002 = vdwg.mxu0
      %v1003 = vsel %vm834, %v990, -inf
      %1004 = vmax.xlane.f32.xlu0 %v1003
      %v1005 = vpop.xlane.xlu0 %1004
      %v1006 = vsel %vm834, %v993, -inf
      %1007 = vmax.xlane.f32.xlu0 %v1006
      %v1008 = vpop.xlane.xlu0 %1007
      %v1009 = vsel %vm834, %v998, -inf
      %1010 = vmax.xlane.f32.xlu0 %v1009
      %v1011 = vpop.xlane.xlu0 %1010
      %v1012 = vsub.f32 %v990, %v1005
      %v1013 = vsub.f32 %v993, %v1008
      %v1014 = vsub.f32 %v998, %v1011
      %v1015 = vmul.f32 %v1012, 1.442695
      %v1016 = vpow.pop %v1015
      %v1017 = vmul.f32 %v1013, 1.442695
      %v1018 = vpow.pop %v1017
      %v1019 = vmul.f32 %v1014, 1.442695
      %v1020 = vpow.pop %v1019
      %v1021 = vsel %vm834, %v1016, 0.0
      %1022 = vadd.xlane.f32.xlu0 %v1021
      %v1023 = vpop.xlane.xlu0 %1022
      %v1024 = vsel %vm834, %v1018, 0.0
      %1025 = vadd.xlane.f32.xlu0 %v1024
      %v1026 = vpop.xlane.xlu0 %1025
      %v1027 = vsel %vm834, %v1020, 0.0
      %1028 = vadd.xlane.f32.xlu0 %v1027
      %v1029 = vpop.xlane.xlu0 %1028
      %v1030 = vrcp.pop %v1023
      %v1031 = vrcp.pop %v1026
      %v1032 = vrcp.pop %v1029
      %v1033 = vmul.f32 %v1016, %v1030
      %v1034 = vmul.f32 %v1018, %v1031
      %v1035 = vmul.f32 %v1020, %v1032
      %v1036 = vpack.c.bf16 %v1034, %v1033
      %v1037 = vpack.c.bf16 %v1035, %v1035
      %1038 = vrot.lane.b32.xlu0 %v759, 56
      %v1039 = vpop.permute.xlu0 %1038
      %1040 = vrot.lane.b32.xlu0 %v760, 56
      %v1041 = vpop.permute.xlu0 %1040
      %v1044 = vsel %vm834, %v1036, 0
      %v1047 = vsel %vm834, %v1037, 0
      %v1050 = vsel %vm881, %v1041, 0
      %1052 = vmatprep.subr.bf16.mxu0 0
      %1053 = vmatpush1.bf16.msra.mxu0 %v1039
      %1054 = vmatprep.subr.bf16.mxu0 0
      %1055 = vmatpush1.bf16.msra.mxu0 %v1050
      %1056 = vmatprep.subr.bf16.mxu0 0
      %1057 = vmatpush1.bf16.msra.mxu0 0
      %1058 = vmatprep.subr.bf16.mxu0 0
      %1059 = vmatpush1.bf16.msra.mxu0 0
      %1060 = vmatprep.subr.bf16.mxu0 0
      %1061 = vmatpush1.bf16.msra.mxu0 0
      %1062 = vmatprep.subr.bf16.mxu0 0
      %1063 = vmatpush1.bf16.msra.mxu0 0
      %1064 = vmatprep.subr.bf16.mxu0 0
      %1065 = vmatpush1.bf16.msra.mxu0 0
      %1066 = vmatprep.subr.bf16.mxu0 0
      %1067 = vmatpush1.bf16.msra.mxu0 0
      %1068 = vmatprep.subr.bf16.mxu0 0
      %1069 = vmatpush1.bf16.msra.mxu0 0
      %1070 = vmatprep.subr.bf16.mxu0 0
      %1071 = vmatpush1.bf16.msra.mxu0 0
      %1072 = vmatprep.subr.bf16.mxu0 0
      %1073 = vmatpush1.bf16.msra.mxu0 0
      %1074 = vmatprep.subr.bf16.mxu0 0
      %1075 = vmatpush1.bf16.msra.mxu0 0
      %1076 = vmatprep.subr.bf16.mxu0 0
      %1077 = vmatpush1.bf16.msra.mxu0 0
      %1078 = vmatprep.subr.bf16.mxu0 0
      %1079 = vmatpush1.bf16.msra.mxu0 0
      %1080 = vmatprep.subr.bf16.mxu0 0
      %1081 = vmatpush1.bf16.msra.mxu0 0
      %1082 = vmatprep.subr.bf16.mxu0 0
      %1083 = vmatpush1.bf16.msra.mxu0 0
      %1084 = vmatprep.mubr.bf16.mxu0 0
      %1085 = vmatmul.mubr.bf16.gmra.mrb[0].mxu0 %v1044
      %v1086 = vpop.f32.mrb[0].mxu0
      %v1087 = vadd.f32 0.0, %v1086
      %v1088 = vpop.f32.mrb[0].mxu0
      %v1089 = vpop.f32.mrb[0].mxu0
      %v1090 = vadd.f32 0.0, %v1089
      %v1091 = vpop.f32.mrb[0].mxu0
      %1092 = vmatprep.mubr.bf16.mxu0 0
      %1093 = vmatmul.mubr.bf16.gmra.mrb[0].mxu0 %v1047
      %v1094 = vpop.f32.mrb[0].mxu0
      %v1095 = vadd.f32 0.0, %v1094
      %v1096 = vpop.f32.mrb[0].mxu0
      %v1097 = vpop.f32.mrb[0].mxu0
      %v1098 = vpop.f32.mrb[0].mxu0
      %1099 = vdwg.mxu0
      %1100 = vrot.lane.b32.xlu0 %v757, 112
      %v1101 = vpop.permute.xlu0 %1100
      %1102 = vrot.lane.b32.xlu0 %v758, 112
      %v1103 = vpop.permute.xlu0 %1102
      %1104 = vrot.lane.b32.xlu0 %v759, 80
      %v1105 = vpop.permute.xlu0 %1104
      %1106 = vrot.lane.b32.xlu0 %v760, 80
      %v1107 = vpop.permute.xlu0 %1106
      %v1109 = vsel %vm773, %v1101, 0
      %v1112 = vsel %vm773, %v1103, 0
      %v1115 = vsel %vm773, %v1105, 0
      %v1118 = vsel %vm773, %v1107, 0
      %1120 = vmatprep.subr.bf16.mxu0 0
      %1121 = vmatpush1.bf16.xpose.msra.mxu0 %v1115
      %1122 = vmatprep.subr.bf16.mxu0 0
      %1123 = vmatpush1.bf16.xpose.msra.mxu0 %v1118
      %1124 = vmatprep.subr.bf16.mxu0 0
      %1125 = vmatpush1.bf16.xpose.msra.mxu0 0
      %1126 = vmatprep.subr.bf16.mxu0 0
      %1127 = vmatpush1.bf16.xpose.msra.mxu0 0
      %1128 = vmatprep.subr.bf16.mxu0 0
      %1129 = vmatpush1.bf16.xpose.msra.mxu0 0
      %1130 = vmatprep.subr.bf16.mxu0 0
      %1131 = vmatpush1.bf16.xpose.msra.mxu0 0
      %1132 = vmatprep.subr.bf16.mxu0 0
      %1133 = vmatpush1.bf16.xpose.msra.mxu0 0
      %1134 = vmatprep.subr.bf16.mxu0 0
      %1135 = vmatpush1.bf16.xpose.msra.mxu0 0
      %1136 = vmatprep.subr.bf16.mxu0 0
      %1137 = vmatpush1.bf16.xpose.msra.mxu0 0
      %1138 = vmatprep.subr.bf16.mxu0 0
      %1139 = vmatpush1.bf16.xpose.msra.mxu0 0
      %1140 = vmatprep.subr.bf16.mxu0 0
      %1141 = vmatpush1.bf16.xpose.msra.mxu0 0
      %1142 = vmatprep.subr.bf16.mxu0 0
      %1143 = vmatpush1.bf16.xpose.msra.mxu0 0
      %1144 = vmatprep.subr.bf16.mxu0 0
      %1145 = vmatpush1.bf16.xpose.msra.mxu0 0
      %1146 = vmatprep.subr.bf16.mxu0 0
      %1147 = vmatpush1.bf16.xpose.msra.mxu0 0
      %1148 = vmatprep.subr.bf16.mxu0 0
      %1149 = vmatpush1.bf16.xpose.msra.mxu0 0
      %1150 = vmatprep.subr.bf16.mxu0 0
      %1151 = vmatpush1.bf16.xpose.msra.mxu0 0
      %1152 = vmatprep.mubr.bf16.mxu0 0
      %1153 = vmatmul.mubr.bf16.gmra.mrb[0].mxu0 %v1109
      %v1154 = vpop.f32.mrb[0].mxu0
      %v1155 = vadd.f32 %v765, %v1154
      %v1156 = vpop.f32.mrb[0].mxu0
      %v1157 = vpop.f32.mrb[0].mxu0
      %v1158 = vadd.f32 %v765, %v1157
      %v1159 = vpop.f32.mrb[0].mxu0
      %1160 = vmatprep.mubr.bf16.mxu0 0
      %1161 = vmatmul.mubr.bf16.gmra.mrb[0].mxu0 %v1112
      %v1162 = vpop.f32.mrb[0].mxu0
      %v1163 = vadd.f32 %v765, %v1162
      %v1164 = vpop.f32.mrb[0].mxu0
      %v1165 = vpop.f32.mrb[0].mxu0
      %v1166 = vpop.f32.mrb[0].mxu0
      %1167 = vdwg.mxu0
      %v1168 = vsel %vm834, %v1155, -inf
      %1169 = vmax.xlane.f32.xlu0 %v1168
      %v1170 = vpop.xlane.xlu0 %1169
      %v1171 = vsel %vm834, %v1158, -inf
      %1172 = vmax.xlane.f32.xlu0 %v1171
      %v1173 = vpop.xlane.xlu0 %1172
      %v1174 = vsel %vm834, %v1163, -inf
      %1175 = vmax.xlane.f32.xlu0 %v1174
      %v1176 = vpop.xlane.xlu0 %1175
      %v1177 = vsub.f32 %v1155, %v1170
      %v1178 = vsub.f32 %v1158, %v1173
      %v1179 = vsub.f32 %v1163, %v1176
      %v1180 = vmul.f32 %v1177, 1.442695
      %v1181 = vpow.pop %v1180
      %v1182 = vmul.f32 %v1178, 1.442695
      %v1183 = vpow.pop %v1182
      %v1184 = vmul.f32 %v1179, 1.442695
      %v1185 = vpow.pop %v1184
      %v1186 = vsel %vm834, %v1181, 0.0
      %1187 = vadd.xlane.f32.xlu0 %v1186
      %v1188 = vpop.xlane.xlu0 %1187
      %v1189 = vsel %vm834, %v1183, 0.0
      %1190 = vadd.xlane.f32.xlu0 %v1189
      %v1191 = vpop.xlane.xlu0 %1190
      %v1192 = vsel %vm834, %v1185, 0.0
      %1193 = vadd.xlane.f32.xlu0 %v1192
      %v1194 = vpop.xlane.xlu0 %1193
      %v1195 = vrcp.pop %v1188
      %v1196 = vrcp.pop %v1191
      %v1197 = vrcp.pop %v1194
      %v1198 = vmul.f32 %v1181, %v1195
      %v1199 = vmul.f32 %v1183, %v1196
      %v1200 = vmul.f32 %v1185, %v1197
      %v1201 = vpack.c.bf16 %v1199, %v1198
      %v1202 = vpack.c.bf16 %v1200, %v1200
      %1203 = vrot.lane.b32.xlu0 %v759, 48
      %v1204 = vpop.permute.xlu0 %1203
      %1205 = vrot.lane.b32.xlu0 %v760, 48
      %v1206 = vpop.permute.xlu0 %1205
      %v1209 = vsel %vm834, %v1201, 0
      %v1212 = vsel %vm834, %v1202, 0
      %v1215 = vsel %vm881, %v1206, 0
      %1217 = vmatprep.subr.bf16.mxu0 0
      %1218 = vmatpush1.bf16.msra.mxu0 %v1204
      %1219 = vmatprep.subr.bf16.mxu0 0
      %1220 = vmatpush1.bf16.msra.mxu0 %v1215
      %1221 = vmatprep.subr.bf16.mxu0 0
      %1222 = vmatpush1.bf16.msra.mxu0 0
      %1223 = vmatprep.subr.bf16.mxu0 0
      %1224 = vmatpush1.bf16.msra.mxu0 0
      %1225 = vmatprep.subr.bf16.mxu0 0
      %1226 = vmatpush1.bf16.msra.mxu0 0
      %1227 = vmatprep.subr.bf16.mxu0 0
      %1228 = vmatpush1.bf16.msra.mxu0 0
      %1229 = vmatprep.subr.bf16.mxu0 0
      %1230 = vmatpush1.bf16.msra.mxu0 0
      %1231 = vmatprep.subr.bf16.mxu0 0
      %1232 = vmatpush1.bf16.msra.mxu0 0
      %1233 = vmatprep.subr.bf16.mxu0 0
      %1234 = vmatpush1.bf16.msra.mxu0 0
      %1235 = vmatprep.subr.bf16.mxu0 0
      %1236 = vmatpush1.bf16.msra.mxu0 0
      %1237 = vmatprep.subr.bf16.mxu0 0
      %1238 = vmatpush1.bf16.msra.mxu0 0
      %1239 = vmatprep.subr.bf16.mxu0 0
      %1240 = vmatpush1.bf16.msra.mxu0 0
      %1241 = vmatprep.subr.bf16.mxu0 0
      %1242 = vmatpush1.bf16.msra.mxu0 0
      %1243 = vmatprep.subr.bf16.mxu0 0
      %1244 = vmatpush1.bf16.msra.mxu0 0
      %1245 = vmatprep.subr.bf16.mxu0 0
      %1246 = vmatpush1.bf16.msra.mxu0 0
      %1247 = vmatprep.subr.bf16.mxu0 0
      %1248 = vmatpush1.bf16.msra.mxu0 0
      %1249 = vmatprep.mubr.bf16.mxu0 0
      %1250 = vmatmul.mubr.bf16.gmra.mrb[0].mxu0 %v1209
      %v1251 = vpop.f32.mrb[0].mxu0
      %v1252 = vadd.f32 0.0, %v1251
      %v1253 = vpop.f32.mrb[0].mxu0
      %v1254 = vpop.f32.mrb[0].mxu0
      %v1255 = vadd.f32 0.0, %v1254
      %v1256 = vpop.f32.mrb[0].mxu0
      %1257 = vmatprep.mubr.bf16.mxu0 0
      %1258 = vmatmul.mubr.bf16.gmra.mrb[0].mxu0 %v1212
      %v1259 = vpop.f32.mrb[0].mxu0
      %v1260 = vadd.f32 0.0, %v1259
      %v1261 = vpop.f32.mrb[0].mxu0
      %v1262 = vpop.f32.mrb[0].mxu0
      %v1263 = vpop.f32.mrb[0].mxu0
      %1264 = vdwg.mxu0
      %1265 = vrot.lane.b32.xlu0 %v757, 104
      %v1266 = vpop.permute.xlu0 %1265
      %1267 = vrot.lane.b32.xlu0 %v758, 104
      %v1268 = vpop.permute.xlu0 %1267
      %1269 = vrot.lane.b32.xlu0 %v759, 72
      %v1270 = vpop.permute.xlu0 %1269
      %1271 = vrot.lane.b32.xlu0 %v760, 72
      %v1272 = vpop.permute.xlu0 %1271
      %v1274 = vsel %vm773, %v1266, 0
      %v1277 = vsel %vm773, %v1268, 0
      %v1280 = vsel %vm773, %v1270, 0
      %v1283 = vsel %vm773, %v1272, 0
      %1285 = vmatprep.subr.bf16.mxu0 0
      %1286 = vmatpush1.bf16.xpose.msra.mxu0 %v1280
      %1287 = vmatprep.subr.bf16.mxu0 0
      %1288 = vmatpush1.bf16.xpose.msra.mxu0 %v1283
      %1289 = vmatprep.subr.bf16.mxu0 0
      %1290 = vmatpush1.bf16.xpose.msra.mxu0 0
      %1291 = vmatprep.subr.bf16.mxu0 0
      %1292 = vmatpush1.bf16.xpose.msra.mxu0 0
      %1293 = vmatprep.subr.bf16.mxu0 0
      %1294 = vmatpush1.bf16.xpose.msra.mxu0 0
      %1295 = vmatprep.subr.bf16.mxu0 0
      %1296 = vmatpush1.bf16.xpose.msra.mxu0 0
      %1297 = vmatprep.subr.bf16.mxu0 0
      %1298 = vmatpush1.bf16.xpose.msra.mxu0 0
      %1299 = vmatprep.subr.bf16.mxu0 0
      %1300 = vmatpush1.bf16.xpose.msra.mxu0 0
      %1301 = vmatprep.subr.bf16.mxu0 0
      %1302 = vmatpush1.bf16.xpose.msra.mxu0 0
      %1303 = vmatprep.subr.bf16.mxu0 0
      %1304 = vmatpush1.bf16.xpose.msra.mxu0 0
      %1305 = vmatprep.subr.bf16.mxu0 0
      %1306 = vmatpush1.bf16.xpose.msra.mxu0 0
      %1307 = vmatprep.subr.bf16.mxu0 0
      %1308 = vmatpush1.bf16.xpose.msra.mxu0 0
      %1309 = vmatprep.subr.bf16.mxu0 0
      %1310 = vmatpush1.bf16.xpose.msra.mxu0 0
      %1311 = vmatprep.subr.bf16.mxu0 0
      %1312 = vmatpush1.bf16.xpose.msra.mxu0 0
      %1313 = vmatprep.subr.bf16.mxu0 0
      %1314 = vmatpush1.bf16.xpose.msra.mxu0 0
      %1315 = vmatprep.subr.bf16.mxu0 0
      %1316 = vmatpush1.bf16.xpose.msra.mxu0 0
      %1317 = vmatprep.mubr.bf16.mxu0 0
      %1318 = vmatmul.mubr.bf16.gmra.mrb[0].mxu0 %v1274
      %v1319 = vpop.f32.mrb[0].mxu0
      %v1320 = vadd.f32 %v765, %v1319
      %v1321 = vpop.f32.mrb[0].mxu0
      %v1322 = vpop.f32.mrb[0].mxu0
      %v1323 = vadd.f32 %v765, %v1322
      %v1324 = vpop.f32.mrb[0].mxu0
      %1325 = vmatprep.mubr.bf16.mxu0 0
      %1326 = vmatmul.mubr.bf16.gmra.mrb[0].mxu0 %v1277
      %v1327 = vpop.f32.mrb[0].mxu0
      %v1328 = vadd.f32 %v765, %v1327
      %v1329 = vpop.f32.mrb[0].mxu0
      %v1330 = vpop.f32.mrb[0].mxu0
      %v1331 = vpop.f32.mrb[0].mxu0
      %1332 = vdwg.mxu0
      %v1333 = vsel %vm834, %v1320, -inf
      %1334 = vmax.xlane.f32.xlu0 %v1333
      %v1335 = vpop.xlane.xlu0 %1334
      %v1336 = vsel %vm834, %v1323, -inf
      %1337 = vmax.xlane.f32.xlu0 %v1336
      %v1338 = vpop.xlane.xlu0 %1337
      %v1339 = vsel %vm834, %v1328, -inf
      %1340 = vmax.xlane.f32.xlu0 %v1339
      %v1341 = vpop.xlane.xlu0 %1340
      %v1342 = vsub.f32 %v1320, %v1335
      %v1343 = vsub.f32 %v1323, %v1338
      %v1344 = vsub.f32 %v1328, %v1341
      %v1345 = vmul.f32 %v1342, 1.442695
      %v1346 = vpow.pop %v1345
      %v1347 = vmul.f32 %v1343, 1.442695
      %v1348 = vpow.pop %v1347
      %v1349 = vmul.f32 %v1344, 1.442695
      %v1350 = vpow.pop %v1349
      %v1351 = vsel %vm834, %v1346, 0.0
      %1352 = vadd.xlane.f32.xlu0 %v1351
      %v1353 = vpop.xlane.xlu0 %1352
      %v1354 = vsel %vm834, %v1348, 0.0
      %1355 = vadd.xlane.f32.xlu0 %v1354
      %v1356 = vpop.xlane.xlu0 %1355
      %v1357 = vsel %vm834, %v1350, 0.0
      %1358 = vadd.xlane.f32.xlu0 %v1357
      %v1359 = vpop.xlane.xlu0 %1358
      %v1360 = vrcp.pop %v1353
      %v1361 = vrcp.pop %v1356
      %v1362 = vrcp.pop %v1359
      %v1363 = vmul.f32 %v1346, %v1360
      %v1364 = vmul.f32 %v1348, %v1361
      %v1365 = vmul.f32 %v1350, %v1362
      %v1366 = vpack.c.bf16 %v1364, %v1363
      %v1367 = vpack.c.bf16 %v1365, %v1365
      %1368 = vrot.lane.b32.xlu0 %v759, 40
      %v1369 = vpop.permute.xlu0 %1368
      %1370 = vrot.lane.b32.xlu0 %v760, 40
      %v1371 = vpop.permute.xlu0 %1370
      %v1374 = vsel %vm834, %v1366, 0
      %v1377 = vsel %vm834, %v1367, 0
      %v1380 = vsel %vm881, %v1371, 0
      %1382 = vmatprep.subr.bf16.mxu0 0
      %1383 = vmatpush1.bf16.msra.mxu0 %v1369
      %1384 = vmatprep.subr.bf16.mxu0 0
      %1385 = vmatpush1.bf16.msra.mxu0 %v1380
      %1386 = vmatprep.subr.bf16.mxu0 0
      %1387 = vmatpush1.bf16.msra.mxu0 0
      %1388 = vmatprep.subr.bf16.mxu0 0
      %1389 = vmatpush1.bf16.msra.mxu0 0
      %1390 = vmatprep.subr.bf16.mxu0 0
      %1391 = vmatpush1.bf16.msra.mxu0 0
      %1392 = vmatprep.subr.bf16.mxu0 0
      %1393 = vmatpush1.bf16.msra.mxu0 0
      %1394 = vmatprep.subr.bf16.mxu0 0
      %1395 = vmatpush1.bf16.msra.mxu0 0
      %1396 = vmatprep.subr.bf16.mxu0 0
      %1397 = vmatpush1.bf16.msra.mxu0 0
      %1398 = vmatprep.subr.bf16.mxu0 0
      %1399 = vmatpush1.bf16.msra.mxu0 0
      %1400 = vmatprep.subr.bf16.mxu0 0
      %1401 = vmatpush1.bf16.msra.mxu0 0
      %1402 = vmatprep.subr.bf16.mxu0 0
      %1403 = vmatpush1.bf16.msra.mxu0 0
      %1404 = vmatprep.subr.bf16.mxu0 0
      %1405 = vmatpush1.bf16.msra.mxu0 0
      %1406 = vmatprep.subr.bf16.mxu0 0
      %1407 = vmatpush1.bf16.msra.mxu0 0
      %1408 = vmatprep.subr.bf16.mxu0 0
      %1409 = vmatpush1.bf16.msra.mxu0 0
      %1410 = vmatprep.subr.bf16.mxu0 0
      %1411 = vmatpush1.bf16.msra.mxu0 0
      %1412 = vmatprep.subr.bf16.mxu0 0
      %1413 = vmatpush1.bf16.msra.mxu0 0
      %1414 = vmatprep.mubr.bf16.mxu0 0
      %1415 = vmatmul.mubr.bf16.gmra.mrb[0].mxu0 %v1374
      %v1416 = vpop.f32.mrb[0].mxu0
      %v1417 = vadd.f32 0.0, %v1416
      %v1418 = vpop.f32.mrb[0].mxu0
      %v1419 = vpop.f32.mrb[0].mxu0
      %v1420 = vadd.f32 0.0, %v1419
      %v1421 = vpop.f32.mrb[0].mxu0
      %1422 = vmatprep.mubr.bf16.mxu0 0
      %1423 = vmatmul.mubr.bf16.gmra.mrb[0].mxu0 %v1377
      %v1424 = vpop.f32.mrb[0].mxu0
      %v1425 = vadd.f32 0.0, %v1424
      %v1426 = vpop.f32.mrb[0].mxu0
      %v1427 = vpop.f32.mrb[0].mxu0
      %v1428 = vpop.f32.mrb[0].mxu0
      %1429 = vdwg.mxu0
      %1433 = vrot.lane.b32.xlu0 %v1087, 8
      %v1434 = vpop.permute.xlu0 %1433
      %1435 = vrot.lane.b32.xlu0 %v1090, 8
      %v1436 = vpop.permute.xlu0 %1435
      %1437 = vrot.lane.b32.xlu0 %v1095, 8
      %v1438 = vpop.permute.xlu0 %1437
      %1445 = vrot.lane.b32.xlu0 %v1252, 16
      %v1446 = vpop.permute.xlu0 %1445
      %1447 = vrot.lane.b32.xlu0 %v1255, 16
      %v1448 = vpop.permute.xlu0 %1447
      %1449 = vrot.lane.b32.xlu0 %v1260, 16
      %v1450 = vpop.permute.xlu0 %1449
      %1457 = vrot.lane.b32.xlu0 %v1417, 24
      %v1458 = vpop.permute.xlu0 %1457
      %1459 = vrot.lane.b32.xlu0 %v1420, 24
      %v1460 = vpop.permute.xlu0 %1459
      %1461 = vrot.lane.b32.xlu0 %v1425, 24
      %v1462 = vpop.permute.xlu0 %1461
      %v1466 = vsel %vm773, %v920, %v1434
      %v1467 = vsel %vm773, %v923, %v1436
      %v1468 = vsel %vm773, %v928, %v1438
      %vm1469 = vcmask 130048
      %v1470 = vsel %vm1469, %v1466, %v1446
      %v1471 = vsel %vm1469, %v1467, %v1448
      %v1472 = vsel %vm1469, %v1468, %v1450
      %v1473 = vsel %vm834, %v1470, %v1458
      %v1474 = vsel %vm834, %v1471, %v1460
      %v1475 = vsel %vm834, %v1472, %v1462
      %v1476 = vpack.c.bf16 %v1474, %v1473
      %v1477 = vpack.c.bf16 %v1475, %v1475
      %v1478 = vld [vmem:[%s7] sm:$0xf]
      %v1479 = vld [vmem:[%s7 + $0x4] sm:$0xf]
      %v1480 = vld [vmem:[%s7 + $0x8] sm:$0xf]
      %v1481 = vld [vmem:[%s7 + $0xc] sm:$0xf]
      %v1482 = vld [vmem:[%s8] sm:$0x1]
      %v1484 = vlaneseq
      %v1485 = vshrl.u32 %v1484, 7
      %v1486 = vsub.s32 0, %v1485
      %v1487 = vrot.slane %v1482, %v1486
      %v1493 = vunpack.c.l.b16 %v1478
      %v1494 = vunpack.c.l.b16 %v1479
      %v1495 = vunpack.c.l.b16 %v1480
      %v1496 = vunpack.c.l.b16 %v1481
      %v1497 = vpack.c.b16 %v1494, %v1493
      %v1498 = vpack.c.b16 %v1496, %v1495
      %v1502 = vsel %vm616, %v1476, 0
      %v1505 = vsel %vm616, %v1477, 0
      %1507 = vmatprep.subr.bf16.mxu0 0
      %1508 = vmatpush1.bf16.msra.mxu0 %v1497
      %1509 = vmatprep.subr.bf16.mxu0 0
      %1510 = vmatpush1.bf16.msra.mxu0 %v1498
      %1511 = vmatprep.subr.bf16.mxu0 0
      %1512 = vmatpush1.bf16.msra.mxu0 0
      %1513 = vmatprep.subr.bf16.mxu0 0
      %1514 = vmatpush1.bf16.msra.mxu0 0
      %1515 = vmatprep.subr.bf16.mxu0 0
      %1516 = vmatpush1.bf16.msra.mxu0 0
      %1517 = vmatprep.subr.bf16.mxu0 0
      %1518 = vmatpush1.bf16.msra.mxu0 0
      %1519 = vmatprep.subr.bf16.mxu0 0
      %1520 = vmatpush1.bf16.msra.mxu0 0
      %1521 = vmatprep.subr.bf16.mxu0 0
      %1522 = vmatpush1.bf16.msra.mxu0 0
      %1523 = vmatprep.subr.bf16.mxu0 0
      %1524 = vmatpush1.bf16.msra.mxu0 0
      %1525 = vmatprep.subr.bf16.mxu0 0
      %1526 = vmatpush1.bf16.msra.mxu0 0
      %1527 = vmatprep.subr.bf16.mxu0 0
      %1528 = vmatpush1.bf16.msra.mxu0 0
      %1529 = vmatprep.subr.bf16.mxu0 0
      %1530 = vmatpush1.bf16.msra.mxu0 0
      %1531 = vmatprep.subr.bf16.mxu0 0
      %1532 = vmatpush1.bf16.msra.mxu0 0
      %1533 = vmatprep.subr.bf16.mxu0 0
      %1534 = vmatpush1.bf16.msra.mxu0 0
      %1535 = vmatprep.subr.bf16.mxu0 0
      %1536 = vmatpush1.bf16.msra.mxu0 0
      %1537 = vmatprep.subr.bf16.mxu0 0
      %1538 = vmatpush1.bf16.msra.mxu0 0
      %1539 = vmatprep.mubr.bf16.mxu0 0
      %1540 = vmatmul.mubr.bf16.gmra.mrb[0].mxu0 %v1502
      %v1541 = vpop.f32.mrb[0].mxu0
      %v1542 = vadd.f32 %v1487, %v1541
      %v1543 = vpop.f32.mrb[0].mxu0
      %v1544 = vpop.f32.mrb[0].mxu0
      %v1545 = vadd.f32 %v1487, %v1544
      %v1546 = vpop.f32.mrb[0].mxu0
      %1547 = vmatprep.mubr.bf16.mxu0 0
      %1548 = vmatmul.mubr.bf16.gmra.mrb[0].mxu0 %v1505
      %v1549 = vpop.f32.mrb[0].mxu0
      %v1550 = vadd.f32 %v1487, %v1549
      %v1551 = vpop.f32.mrb[0].mxu0
      %v1552 = vpop.f32.mrb[0].mxu0
      %v1553 = vpop.f32.mrb[0].mxu0
      %1554 = vdwg.mxu0
      %v1555 = vadd.f32 %v610, %v1542
      %v1556 = vadd.f32 %v611, %v1545
      %v1557 = vadd.f32 %v612, %v1550
      %v1558 = vld [vmem:[%s9] sm:$0x1]
      %v1559 = vld [vmem:[%s10] sm:$0x1]
      %v1560 = vsel %vm616, %v1555, 0.0
      %1561 = vadd.xlane.f32.xlu0 %v1560
      %v1562 = vpop.xlane.xlu0 %1561
      %v1563 = vsel %vm616, %v1556, 0.0
      %1564 = vadd.xlane.f32.xlu0 %v1563
      %v1565 = vpop.xlane.xlu0 %1564
      %v1566 = vsel %vm616, %v1557, 0.0
      %1567 = vadd.xlane.f32.xlu0 %v1566
      %v1568 = vpop.xlane.xlu0 %1567
      %v1569 = vmul.f32 %v1562, %v626
      %v1570 = vmul.f32 %v1565, %v626
      %v1571 = vmul.f32 %v1568, %v626
      %v1572 = vsub.f32 %v1555, %v1569
      %v1573 = vsub.f32 %v1556, %v1570
      %v1574 = vsub.f32 %v1557, %v1571
      %v1575 = vmul.f32 %v1572, %v1572
      %v1576 = vmul.f32 %v1573, %v1573
      %v1577 = vmul.f32 %v1574, %v1574
      %v1578 = vsel %vm616, %v1575, 0.0
      %1579 = vadd.xlane.f32.xlu0 %v1578
      %v1580 = vpop.xlane.xlu0 %1579
      %v1581 = vsel %vm616, %v1576, 0.0
      %1582 = vadd.xlane.f32.xlu0 %v1581
      %v1583 = vpop.xlane.xlu0 %1582
      %v1584 = vsel %vm616, %v1577, 0.0
      %1585 = vadd.xlane.f32.xlu0 %v1584
      %v1586 = vpop.xlane.xlu0 %1585
      %v1587 = vmul.f32 %v1580, %v626
      %v1588 = vmul.f32 %v1583, %v626
      %v1589 = vmul.f32 %v1586, %v626
      %v1590 = vadd.f32 %v1587, 1e-05
      %v1591 = vadd.f32 %v1588, 1e-05
      %v1592 = vadd.f32 %v1589, 1e-05
      %v1593 = vrsqrt.pop %v1590
      %v1594 = vrsqrt.pop %v1591
      %v1595 = vrsqrt.pop %v1592
      %v1596 = vmul.f32 %v1572, %v1593
      %v1597 = vmul.f32 %v1573, %v1594
      %v1598 = vmul.f32 %v1574, %v1595
      %v1600 = vlaneseq
      %v1601 = vshrl.u32 %v1600, 7
      %v1602 = vsub.s32 0, %v1601
      %v1603 = vrot.slane %v1558, %v1602
      %v1605 = vmul.f32 %v1596, %v1603
      %v1606 = vmul.f32 %v1597, %v1603
      %v1607 = vmul.f32 %v1598, %v1603
      %v1609 = vlaneseq
      %v1610 = vshrl.u32 %v1609, 7
      %v1611 = vsub.s32 0, %v1610
      %v1612 = vrot.slane %v1559, %v1611
      %v1614 = vadd.f32 %v1605, %v1612
      %v1615 = vadd.f32 %v1606, %v1612
      %v1616 = vadd.f32 %v1607, %v1612
      %v1617 = vpack.c.bf16 %v1615, %v1614
      %v1618 = vpack.c.bf16 %v1616, %v1616
      %v1619 = vld [vmem:[%s11] sm:$0xf]
      %v1620 = vld [vmem:[%s11 + $0x4] sm:$0xf]
      %v1621 = vld [vmem:[%s11 + $0x8] sm:$0xf]
      %v1622 = vld [vmem:[%s11 + $0xc] sm:$0xf]
      %v1623 = vld [vmem:[%s12] sm:$0x1]
      %v1625 = vlaneseq
      %v1626 = vshrl.u32 %v1625, 7
      %v1627 = vsub.s32 0, %v1626
      %v1628 = vrot.slane %v1623, %v1627
      %v1634 = vunpack.c.l.b16 %v1619
      %v1635 = vunpack.c.l.b16 %v1620
      %v1636 = vunpack.c.l.b16 %v1621
      %v1637 = vunpack.c.l.b16 %v1622
      %v1638 = vpack.c.b16 %v1635, %v1634
      %v1639 = vpack.c.b16 %v1637, %v1636
      %v1643 = vsel %vm616, %v1617, 0
      %v1646 = vsel %vm616, %v1618, 0
      %1648 = vmatprep.subr.bf16.mxu0 0
      %1649 = vmatpush1.bf16.msra.mxu0 %v1638
      %1650 = vmatprep.subr.bf16.mxu0 0
      %1651 = vmatpush1.bf16.msra.mxu0 %v1639
      %1652 = vmatprep.subr.bf16.mxu0 0
      %1653 = vmatpush1.bf16.msra.mxu0 0
      %1654 = vmatprep.subr.bf16.mxu0 0
      %1655 = vmatpush1.bf16.msra.mxu0 0
      %1656 = vmatprep.subr.bf16.mxu0 0
      %1657 = vmatpush1.bf16.msra.mxu0 0
      %1658 = vmatprep.subr.bf16.mxu0 0
      %1659 = vmatpush1.bf16.msra.mxu0 0
      %1660 = vmatprep.subr.bf16.mxu0 0
      %1661 = vmatpush1.bf16.msra.mxu0 0
      %1662 = vmatprep.subr.bf16.mxu0 0
      %1663 = vmatpush1.bf16.msra.mxu0 0
      %1664 = vmatprep.subr.bf16.mxu0 0
      %1665 = vmatpush1.bf16.msra.mxu0 0
      %1666 = vmatprep.subr.bf16.mxu0 0
      %1667 = vmatpush1.bf16.msra.mxu0 0
      %1668 = vmatprep.subr.bf16.mxu0 0
      %1669 = vmatpush1.bf16.msra.mxu0 0
      %1670 = vmatprep.subr.bf16.mxu0 0
      %1671 = vmatpush1.bf16.msra.mxu0 0
      %1672 = vmatprep.subr.bf16.mxu0 0
      %1673 = vmatpush1.bf16.msra.mxu0 0
      %1674 = vmatprep.subr.bf16.mxu0 0
      %1675 = vmatpush1.bf16.msra.mxu0 0
      %1676 = vmatprep.subr.bf16.mxu0 0
      %1677 = vmatpush1.bf16.msra.mxu0 0
      %1678 = vmatprep.subr.bf16.mxu0 0
      %1679 = vmatpush1.bf16.msra.mxu0 0
      %1680 = vmatprep.mubr.bf16.mxu0 0
      %1681 = vmatmul.mubr.bf16.gmra.mrb[0].mxu0 %v1643
      %v1682 = vpop.f32.mrb[0].mxu0
      %v1683 = vadd.f32 %v1628, %v1682
      %v1684 = vpop.f32.mrb[0].mxu0
      %v1685 = vpop.f32.mrb[0].mxu0
      %v1686 = vadd.f32 %v1628, %v1685
      %v1687 = vpop.f32.mrb[0].mxu0
      %1688 = vmatprep.mubr.bf16.mxu0 0
      %1689 = vmatmul.mubr.bf16.gmra.mrb[0].mxu0 %v1646
      %v1690 = vpop.f32.mrb[0].mxu0
      %v1691 = vadd.f32 %v1628, %v1690
      %v1692 = vpop.f32.mrb[0].mxu0
      %v1693 = vpop.f32.mrb[0].mxu0
      %v1694 = vpop.f32.mrb[0].mxu0
      %1695 = vdwg.mxu0
      %v1696 = vmul.f32 %v1683, 0.5
      %v1697 = vmul.f32 %v1686, 0.5
      %v1698 = vmul.f32 %v1691, 0.5
      %v1699 = vmul.f32 %v1683, 0.044715
      %v1700 = vmul.f32 %v1686, 0.044715
      %v1701 = vmul.f32 %v1691, 0.044715
      %v1702 = vmul.f32 %v1699, %v1683
      %v1703 = vmul.f32 %v1700, %v1686
      %v1704 = vmul.f32 %v1701, %v1691
      %v1705 = vmul.f32 %v1702, %v1683
      %v1706 = vmul.f32 %v1703, %v1686
      %v1707 = vmul.f32 %v1704, %v1691
      %v1708 = vadd.f32 %v1683, %v1705
      %v1709 = vadd.f32 %v1686, %v1706
      %v1710 = vadd.f32 %v1691, %v1707
      %v1711 = vmul.f32 %v1708, 0.7978846
      %v1712 = vmul.f32 %v1709, 0.7978846
      %v1713 = vmul.f32 %v1710, 0.7978846
      %v1714 = vtanh.pop %v1711
      %v1715 = vtanh.pop %v1712
      %v1716 = vtanh.pop %v1713
      %v1717 = vadd.f32 %v1714, 1.0
      %v1718 = vadd.f32 %v1715, 1.0
      %v1719 = vadd.f32 %v1716, 1.0
      %v1720 = vmul.f32 %v1696, %v1717
      %v1721 = vmul.f32 %v1697, %v1718
      %v1722 = vmul.f32 %v1698, %v1719
      %v1723 = vpack.c.bf16 %v1721, %v1720
      %v1724 = vpack.c.bf16 %v1722, %v1722
      %v1725 = vld [vmem:[%s13] sm:$0xf]
      %v1726 = vld [vmem:[%s13 + $0x4] sm:$0xf]
      %v1727 = vld [vmem:[%s13 + $0x8] sm:$0xf]
      %v1728 = vld [vmem:[%s13 + $0xc] sm:$0xf]
      %v1729 = vld [vmem:[%s13 + $0x10] sm:$0xf]
      %v1730 = vld [vmem:[%s13 + $0x14] sm:$0xf]
      %v1731 = vld [vmem:[%s13 + $0x18] sm:$0xf]
      %v1732 = vld [vmem:[%s13 + $0x1c] sm:$0xf]
      %v1733 = vld [vmem:[%s13 + $0x20] sm:$0xf]
      %v1734 = vld [vmem:[%s13 + $0x24] sm:$0xf]
      %v1735 = vld [vmem:[%s13 + $0x28] sm:$0xf]
      %v1736 = vld [vmem:[%s13 + $0x2c] sm:$0xf]
      %v1737 = vld [vmem:[%s13 + $0x30] sm:$0xf]
      %v1738 = vld [vmem:[%s13 + $0x34] sm:$0xf]
      %v1739 = vld [vmem:[%s13 + $0x38] sm:$0xf]
      %v1740 = vld [vmem:[%s13 + $0x3c] sm:$0xf]
      %v1741 = vld [vmem:[%s14] sm:$0x1]
      %v1743 = vlaneseq
      %v1744 = vshrl.u32 %v1743, 7
      %v1745 = vsub.s32 0, %v1744
      %v1746 = vrot.slane %v1741, %v1745
      %v1764 = vunpack.c.l.b16 %v1725
      %v1765 = vunpack.c.l.b16 %v1726
      %v1766 = vunpack.c.l.b16 %v1727
      %v1767 = vunpack.c.l.b16 %v1728
      %v1768 = vunpack.c.l.b16 %v1729
      %v1769 = vunpack.c.l.b16 %v1730
      %v1770 = vunpack.c.l.b16 %v1731
      %v1771 = vunpack.c.l.b16 %v1732
      %v1772 = vunpack.c.l.b16 %v1733
      %v1773 = vunpack.c.l.b16 %v1734
      %v1774 = vunpack.c.l.b16 %v1735
      %v1775 = vunpack.c.l.b16 %v1736
      %v1776 = vunpack.c.l.b16 %v1737
      %v1777 = vunpack.c.l.b16 %v1738
      %v1778 = vunpack.c.l.b16 %v1739
      %v1779 = vunpack.c.l.b16 %v1740
      %v1780 = vpack.c.b16 %v1765, %v1764
      %v1781 = vpack.c.b16 %v1767, %v1766
      %v1782 = vpack.c.b16 %v1769, %v1768
      %v1783 = vpack.c.b16 %v1771, %v1770
      %v1784 = vpack.c.b16 %v1773, %v1772
      %v1785 = vpack.c.b16 %v1775, %v1774
      %v1786 = vpack.c.b16 %v1777, %v1776
      %v1787 = vpack.c.b16 %v1779, %v1778
      %1796 = vmatprep.subr.bf16.mxu0 0
      %1797 = vmatpush1.bf16.msra.mxu0 %v1780
      %1798 = vmatprep.subr.bf16.mxu0 0
      %1799 = vmatpush1.bf16.msra.mxu0 %v1781
      %1800 = vmatprep.subr.bf16.mxu0 0
      %1801 = vmatpush1.bf16.msra.mxu0 %v1782
      %1802 = vmatprep.subr.bf16.mxu0 0
      %1803 = vmatpush1.bf16.msra.mxu0 %v1783
      %1804 = vmatprep.subr.bf16.mxu0 0
      %1805 = vmatpush1.bf16.msra.mxu0 %v1784
      %1806 = vmatprep.subr.bf16.mxu0 0
      %1807 = vmatpush1.bf16.msra.mxu0 %v1785
      %1808 = vmatprep.subr.bf16.mxu0 0
      %1809 = vmatpush1.bf16.msra.mxu0 %v1786
      %1810 = vmatprep.subr.bf16.mxu0 0
      %1811 = vmatpush1.bf16.msra.mxu0 %v1787
      %1812 = vmatprep.subr.bf16.mxu0 0
      %1813 = vmatpush1.bf16.msra.mxu0 0
      %1814 = vmatprep.subr.bf16.mxu0 0
      %1815 = vmatpush1.bf16.msra.mxu0 0
      %1816 = vmatprep.subr.bf16.mxu0 0
      %1817 = vmatpush1.bf16.msra.mxu0 0
      %1818 = vmatprep.subr.bf16.mxu0 0
      %1819 = vmatpush1.bf16.msra.mxu0 0
      %1820 = vmatprep.subr.bf16.mxu0 0
      %1821 = vmatpush1.bf16.msra.mxu0 0
      %1822 = vmatprep.subr.bf16.mxu0 0
      %1823 = vmatpush1.bf16.msra.mxu0 0
      %1824 = vmatprep.subr.bf16.mxu0 0
      %1825 = vmatpush1.bf16.msra.mxu0 0
      %1826 = vmatprep.subr.bf16.mxu0 0
      %1827 = vmatpush1.bf16.msra.mxu0 0
      %1828 = vmatprep.mubr.bf16.mxu0 0
      %1829 = vmatmul.mubr.bf16.gmra.mrb[0].mxu0 %v1723
      %v1830 = vpop.f32.mrb[0].mxu0
      %v1831 = vadd.f32 %v1746, %v1830
      %v1832 = vpop.f32.mrb[0].mxu0
      %v1833 = vpop.f32.mrb[0].mxu0
      %v1834 = vadd.f32 %v1746, %v1833
      %v1835 = vpop.f32.mrb[0].mxu0
      %1836 = vmatprep.mubr.bf16.mxu0 0
      %1837 = vmatmul.mubr.bf16.gmra.mrb[0].mxu0 %v1724
      %v1838 = vpop.f32.mrb[0].mxu0
      %v1839 = vadd.f32 %v1746, %v1838
      %v1840 = vpop.f32.mrb[0].mxu0
      %v1841 = vpop.f32.mrb[0].mxu0
      %v1842 = vpop.f32.mrb[0].mxu0
      %1843 = vdwg.mxu0
      %v1844 = vadd.f32 %v1555, %v1831
      %v1845 = vadd.f32 %v1556, %v1834
      %v1846 = vadd.f32 %v1557, %v1839
      %s1847 = scalar_lea.vmem %s3, 1
      %v1848 = vld [vmem:[%s1847] sm:$0x1]
      %s1849 = scalar_lea.vmem %s4, 1
      %v1850 = vld [vmem:[%s1849] sm:$0x1]
      %v1851 = vsel %vm616, %v1844, 0.0
      %1852 = vadd.xlane.f32.xlu0 %v1851
      %v1853 = vpop.xlane.xlu0 %1852
      %v1854 = vsel %vm616, %v1845, 0.0
      %1855 = vadd.xlane.f32.xlu0 %v1854
      %v1856 = vpop.xlane.xlu0 %1855
      %v1857 = vsel %vm616, %v1846, 0.0
      %1858 = vadd.xlane.f32.xlu0 %v1857
      %v1859 = vpop.xlane.xlu0 %1858
      %v1860 = vmul.f32 %v1853, %v626
      %v1861 = vmul.f32 %v1856, %v626
      %v1862 = vmul.f32 %v1859, %v626
      %v1863 = vsub.f32 %v1844, %v1860
      %v1864 = vsub.f32 %v1845, %v1861
      %v1865 = vsub.f32 %v1846, %v1862
      %v1866 = vmul.f32 %v1863, %v1863
      %v1867 = vmul.f32 %v1864, %v1864
      %v1868 = vmul.f32 %v1865, %v1865
      %v1869 = vsel %vm616, %v1866, 0.0
      %1870 = vadd.xlane.f32.xlu0 %v1869
      %v1871 = vpop.xlane.xlu0 %1870
      %v1872 = vsel %vm616, %v1867, 0.0
      %1873 = vadd.xlane.f32.xlu0 %v1872
      %v1874 = vpop.xlane.xlu0 %1873
      %v1875 = vsel %vm616, %v1868, 0.0
      %1876 = vadd.xlane.f32.xlu0 %v1875
      %v1877 = vpop.xlane.xlu0 %1876
      %v1878 = vmul.f32 %v1871, %v626
      %v1879 = vmul.f32 %v1874, %v626
      %v1880 = vmul.f32 %v1877, %v626
      %v1881 = vadd.f32 %v1878, 1e-05
      %v1882 = vadd.f32 %v1879, 1e-05
      %v1883 = vadd.f32 %v1880, 1e-05
      %v1884 = vrsqrt.pop %v1881
      %v1885 = vrsqrt.pop %v1882
      %v1886 = vrsqrt.pop %v1883
      %v1887 = vmul.f32 %v1863, %v1884
      %v1888 = vmul.f32 %v1864, %v1885
      %v1889 = vmul.f32 %v1865, %v1886
      %v1891 = vlaneseq
      %v1892 = vshrl.u32 %v1891, 7
      %v1893 = vsub.s32 0, %v1892
      %v1894 = vrot.slane %v1848, %v1893
      %v1896 = vmul.f32 %v1887, %v1894
      %v1897 = vmul.f32 %v1888, %v1894
      %v1898 = vmul.f32 %v1889, %v1894
      %v1900 = vlaneseq
      %v1901 = vshrl.u32 %v1900, 7
      %v1902 = vsub.s32 0, %v1901
      %v1903 = vrot.slane %v1850, %v1902
      %v1905 = vadd.f32 %v1896, %v1903
      %v1906 = vadd.f32 %v1897, %v1903
      %v1907 = vadd.f32 %v1898, %v1903
      %v1908 = vpack.c.bf16 %v1906, %v1905
      %v1909 = vpack.c.bf16 %v1907, %v1907
      %s1910 = scalar_lea.vmem %s5, 16
      %v1911 = vld [vmem:[%s1910] sm:$0xf]
      %v1912 = vld [vmem:[%s1910 + $0x4] sm:$0xf]
      %v1913 = vld [vmem:[%s1910 + $0x8] sm:$0xf]
      %v1914 = vld [vmem:[%s1910 + $0xc] sm:$0xf]
      %s1915 = scalar_lea.vmem %s6, 1
      %v1916 = vld [vmem:[%s1915] sm:$0x1]
      %v1918 = vlaneseq
      %v1919 = vshrl.u32 %v1918, 7
      %v1920 = vsub.s32 0, %v1919
      %v1921 = vrot.slane %v1916, %v1920
      %v1927 = vunpack.c.l.b16 %v1911
      %v1928 = vunpack.c.l.b16 %v1912
      %v1929 = vunpack.c.l.b16 %v1913
      %v1930 = vunpack.c.l.b16 %v1914
      %v1931 = vpack.c.b16 %v1928, %v1927
      %v1932 = vpack.c.b16 %v1930, %v1929
      %v1936 = vsel %vm616, %v1908, 0
      %v1939 = vsel %vm616, %v1909, 0
      %1941 = vmatprep.subr.bf16.mxu0 0
      %1942 = vmatpush1.bf16.msra.mxu0 %v1931
      %1943 = vmatprep.subr.bf16.mxu0 0
      %1944 = vmatpush1.bf16.msra.mxu0 %v1932
      %1945 = vmatprep.subr.bf16.mxu0 0
      %1946 = vmatpush1.bf16.msra.mxu0 0
      %1947 = vmatprep.subr.bf16.mxu0 0
      %1948 = vmatpush1.bf16.msra.mxu0 0
      %1949 = vmatprep.subr.bf16.mxu0 0
      %1950 = vmatpush1.bf16.msra.mxu0 0
      %1951 = vmatprep.subr.bf16.mxu0 0
      %1952 = vmatpush1.bf16.msra.mxu0 0
      %1953 = vmatprep.subr.bf16.mxu0 0
      %1954 = vmatpush1.bf16.msra.mxu0 0
      %1955 = vmatprep.subr.bf16.mxu0 0
      %1956 = vmatpush1.bf16.msra.mxu0 0
      %1957 = vmatprep.subr.bf16.mxu0 0
      %1958 = vmatpush1.bf16.msra.mxu0 0
      %1959 = vmatprep.subr.bf16.mxu0 0
      %1960 = vmatpush1.bf16.msra.mxu0 0
      %1961 = vmatprep.subr.bf16.mxu0 0
      %1962 = vmatpush1.bf16.msra.mxu0 0
      %1963 = vmatprep.subr.bf16.mxu0 0
      %1964 = vmatpush1.bf16.msra.mxu0 0
      %1965 = vmatprep.subr.bf16.mxu0 0
      %1966 = vmatpush1.bf16.msra.mxu0 0
      %1967 = vmatprep.subr.bf16.mxu0 0
      %1968 = vmatpush1.bf16.msra.mxu0 0
      %1969 = vmatprep.subr.bf16.mxu0 0
      %1970 = vmatpush1.bf16.msra.mxu0 0
      %1971 = vmatprep.subr.bf16.mxu0 0
      %1972 = vmatpush1.bf16.msra.mxu0 0
      %1973 = vmatprep.mubr.bf16.mxu0 0
      %1974 = vmatmul.mubr.bf16.gmra.mrb[0].mxu0 %v1936
      %v1975 = vpop.f32.mrb[0].mxu0
      %v1976 = vadd.f32 %v1921, %v1975
      %v1977 = vpop.f32.mrb[0].mxu0
      %v1978 = vpop.f32.mrb[0].mxu0
      %v1979 = vadd.f32 %v1921, %v1978
      %v1980 = vpop.f32.mrb[0].mxu0
      %1981 = vmatprep.mubr.bf16.mxu0 0
      %1982 = vmatmul.mubr.bf16.gmra.mrb[0].mxu0 %v1939
      %v1983 = vpop.f32.mrb[0].mxu0
      %v1984 = vadd.f32 %v1921, %v1983
      %v1985 = vpop.f32.mrb[0].mxu0
      %v1986 = vpop.f32.mrb[0].mxu0
      %v1987 = vpop.f32.mrb[0].mxu0
      %1988 = vdwg.mxu0
      %v1989 = vmul.f32 %v1976, 0.35355338
      %v1990 = vmul.f32 %v1979, 0.35355338
      %v1991 = vmul.f32 %v1984, 0.35355338
      %v1992 = vpack.c.bf16 %v1990, %v1989
      %v1993 = vpack.c.bf16 %v1991, %v1991
      %v1994 = vpack.c.bf16 %v1979, %v1976
      %v1995 = vpack.c.bf16 %v1984, %v1984
      %1998 = vrot.lane.b32.xlu0 %v1994, 96
      %v1999 = vpop.permute.xlu0 %1998
      %2000 = vrot.lane.b32.xlu0 %v1995, 96
      %v2001 = vpop.permute.xlu0 %2000
      %v2003 = vsel %vm773, %v1992, 0
      %v2006 = vsel %vm773, %v1993, 0
      %v2009 = vsel %vm773, %v1999, 0
      %v2012 = vsel %vm773, %v2001, 0
      %2014 = vmatprep.subr.bf16.mxu0 0
      %2015 = vmatpush1.bf16.xpose.msra.mxu0 %v2009
      %2016 = vmatprep.subr.bf16.mxu0 0
      %2017 = vmatpush1.bf16.xpose.msra.mxu0 %v2012
      %2018 = vmatprep.subr.bf16.mxu0 0
      %2019 = vmatpush1.bf16.xpose.msra.mxu0 0
      %2020 = vmatprep.subr.bf16.mxu0 0
      %2021 = vmatpush1.bf16.xpose.msra.mxu0 0
      %2022 = vmatprep.subr.bf16.mxu0 0
      %2023 = vmatpush1.bf16.xpose.msra.mxu0 0
      %2024 = vmatprep.subr.bf16.mxu0 0
      %2025 = vmatpush1.bf16.xpose.msra.mxu0 0
      %2026 = vmatprep.subr.bf16.mxu0 0
      %2027 = vmatpush1.bf16.xpose.msra.mxu0 0
      %2028 = vmatprep.subr.bf16.mxu0 0
      %2029 = vmatpush1.bf16.xpose.msra.mxu0 0
      %2030 = vmatprep.subr.bf16.mxu0 0
      %2031 = vmatpush1.bf16.xpose.msra.mxu0 0
      %2032 = vmatprep.subr.bf16.mxu0 0
      %2033 = vmatpush1.bf16.xpose.msra.mxu0 0
      %2034 = vmatprep.subr.bf16.mxu0 0
      %2035 = vmatpush1.bf16.xpose.msra.mxu0 0
      %2036 = vmatprep.subr.bf16.mxu0 0
      %2037 = vmatpush1.bf16.xpose.msra.mxu0 0
      %2038 = vmatprep.subr.bf16.mxu0 0
      %2039 = vmatpush1.bf16.xpose.msra.mxu0 0
      %2040 = vmatprep.subr.bf16.mxu0 0
      %2041 = vmatpush1.bf16.xpose.msra.mxu0 0
      %2042 = vmatprep.subr.bf16.mxu0 0
      %2043 = vmatpush1.bf16.xpose.msra.mxu0 0
      %2044 = vmatprep.subr.bf16.mxu0 0
      %2045 = vmatpush1.bf16.xpose.msra.mxu0 0
      %2046 = vmatprep.mubr.bf16.mxu0 0
      %2047 = vmatmul.mubr.bf16.gmra.mrb[0].mxu0 %v2003
      %v2048 = vpop.f32.mrb[0].mxu0
      %v2049 = vadd.f32 %v765, %v2048
      %v2050 = vpop.f32.mrb[0].mxu0
      %v2051 = vpop.f32.mrb[0].mxu0
      %v2052 = vadd.f32 %v765, %v2051
      %v2053 = vpop.f32.mrb[0].mxu0
      %2054 = vmatprep.mubr.bf16.mxu0 0
      %2055 = vmatmul.mubr.bf16.gmra.mrb[0].mxu0 %v2006
      %v2056 = vpop.f32.mrb[0].mxu0
      %v2057 = vadd.f32 %v765, %v2056
      %v2058 = vpop.f32.mrb[0].mxu0
      %v2059 = vpop.f32.mrb[0].mxu0
      %v2060 = vpop.f32.mrb[0].mxu0
      %2061 = vdwg.mxu0
      %v2062 = vsel %vm834, %v2049, -inf
      %2063 = vmax.xlane.f32.xlu0 %v2062
      %v2064 = vpop.xlane.xlu0 %2063
      %v2065 = vsel %vm834, %v2052, -inf
      %2066 = vmax.xlane.f32.xlu0 %v2065
      %v2067 = vpop.xlane.xlu0 %2066
      %v2068 = vsel %vm834, %v2057, -inf
      %2069 = vmax.xlane.f32.xlu0 %v2068
      %v2070 = vpop.xlane.xlu0 %2069
      %v2071 = vsub.f32 %v2049, %v2064
      %v2072 = vsub.f32 %v2052, %v2067
      %v2073 = vsub.f32 %v2057, %v2070
      %v2074 = vmul.f32 %v2071, 1.442695
      %v2075 = vpow.pop %v2074
      %v2076 = vmul.f32 %v2072, 1.442695
      %v2077 = vpow.pop %v2076
      %v2078 = vmul.f32 %v2073, 1.442695
      %v2079 = vpow.pop %v2078
      %v2080 = vsel %vm834, %v2075, 0.0
      %2081 = vadd.xlane.f32.xlu0 %v2080
      %v2082 = vpop.xlane.xlu0 %2081
      %v2083 = vsel %vm834, %v2077, 0.0
      %2084 = vadd.xlane.f32.xlu0 %v2083
      %v2085 = vpop.xlane.xlu0 %2084
      %v2086 = vsel %vm834, %v2079, 0.0
      %2087 = vadd.xlane.f32.xlu0 %v2086
      %v2088 = vpop.xlane.xlu0 %2087
      %v2089 = vrcp.pop %v2082
      %v2090 = vrcp.pop %v2085
      %v2091 = vrcp.pop %v2088
      %v2092 = vmul.f32 %v2075, %v2089
      %v2093 = vmul.f32 %v2077, %v2090
      %v2094 = vmul.f32 %v2079, %v2091
      %v2095 = vpack.c.bf16 %v2093, %v2092
      %v2096 = vpack.c.bf16 %v2094, %v2094
      %2097 = vrot.lane.b32.xlu0 %v1994, 64
      %v2098 = vpop.permute.xlu0 %2097
      %2099 = vrot.lane.b32.xlu0 %v1995, 64
      %v2100 = vpop.permute.xlu0 %2099
      %v2103 = vsel %vm834, %v2095, 0
      %v2106 = vsel %vm834, %v2096, 0
      %v2109 = vsel %vm881, %v2100, 0
      %2111 = vmatprep.subr.bf16.mxu0 0
      %2112 = vmatpush1.bf16.msra.mxu0 %v2098
      %2113 = vmatprep.subr.bf16.mxu0 0
      %2114 = vmatpush1.bf16.msra.mxu0 %v2109
      %2115 = vmatprep.subr.bf16.mxu0 0
      %2116 = vmatpush1.bf16.msra.mxu0 0
      %2117 = vmatprep.subr.bf16.mxu0 0
      %2118 = vmatpush1.bf16.msra.mxu0 0
      %2119 = vmatprep.subr.bf16.mxu0 0
      %2120 = vmatpush1.bf16.msra.mxu0 0
      %2121 = vmatprep.subr.bf16.mxu0 0
      %2122 = vmatpush1.bf16.msra.mxu0 0
      %2123 = vmatprep.subr.bf16.mxu0 0
      %2124 = vmatpush1.bf16.msra.mxu0 0
      %2125 = vmatprep.subr.bf16.mxu0 0
      %2126 = vmatpush1.bf16.msra.mxu0 0
      %2127 = vmatprep.subr.bf16.mxu0 0
      %2128 = vmatpush1.bf16.msra.mxu0 0
      %2129 = vmatprep.subr.bf16.mxu0 0
      %2130 = vmatpush1.bf16.msra.mxu0 0
      %2131 = vmatprep.subr.bf16.mxu0 0
      %2132 = vmatpush1.bf16.msra.mxu0 0
      %2133 = vmatprep.subr.bf16.mxu0 0
      %2134 = vmatpush1.bf16.msra.mxu0 0
      %2135 = vmatprep.subr.bf16.mxu0 0
      %2136 = vmatpush1.bf16.msra.mxu0 0
      %2137 = vmatprep.subr.bf16.mxu0 0
      %2138 = vmatpush1.bf16.msra.mxu0 0
      %2139 = vmatprep.subr.bf16.mxu0 0
      %2140 = vmatpush1.bf16.msra.mxu0 0
      %2141 = vmatprep.subr.bf16.mxu0 0
      %2142 = vmatpush1.bf16.msra.mxu0 0
      %2143 = vmatprep.mubr.bf16.mxu0 0
      %2144 = vmatmul.mubr.bf16.gmra.mrb[0].mxu0 %v2103
      %v2145 = vpop.f32.mrb[0].mxu0
      %v2146 = vadd.f32 0.0, %v2145
      %v2147 = vpop.f32.mrb[0].mxu0
      %v2148 = vpop.f32.mrb[0].mxu0
      %v2149 = vadd.f32 0.0, %v2148
      %v2150 = vpop.f32.mrb[0].mxu0
      %2151 = vmatprep.mubr.bf16.mxu0 0
      %2152 = vmatmul.mubr.bf16.gmra.mrb[0].mxu0 %v2106
      %v2153 = vpop.f32.mrb[0].mxu0
      %v2154 = vadd.f32 0.0, %v2153
      %v2155 = vpop.f32.mrb[0].mxu0
      %v2156 = vpop.f32.mrb[0].mxu0
      %v2157 = vpop.f32.mrb[0].mxu0
      %2158 = vdwg.mxu0
      %2161 = vrot.lane.b32.xlu0 %v1992, 120
      %v2162 = vpop.permute.xlu0 %2161
      %2163 = vrot.lane.b32.xlu0 %v1993, 120
      %v2164 = vpop.permute.xlu0 %2163
      %2165 = vrot.lane.b32.xlu0 %v1994, 88
      %v2166 = vpop.permute.xlu0 %2165
      %2167 = vrot.lane.b32.xlu0 %v1995, 88
      %v2168 = vpop.permute.xlu0 %2167
      %v2170 = vsel %vm773, %v2162, 0
      %v2173 = vsel %vm773, %v2164, 0
      %v2176 = vsel %vm773, %v2166, 0
      %v2179 = vsel %vm773, %v2168, 0
      %2181 = vmatprep.subr.bf16.mxu0 0
      %2182 = vmatpush1.bf16.xpose.msra.mxu0 %v2176
      %2183 = vmatprep.subr.bf16.mxu0 0
      %2184 = vmatpush1.bf16.xpose.msra.mxu0 %v2179
      %2185 = vmatprep.subr.bf16.mxu0 0
      %2186 = vmatpush1.bf16.xpose.msra.mxu0 0
      %2187 = vmatprep.subr.bf16.mxu0 0
      %2188 = vmatpush1.bf16.xpose.msra.mxu0 0
      %2189 = vmatprep.subr.bf16.mxu0 0
      %2190 = vmatpush1.bf16.xpose.msra.mxu0 0
      %2191 = vmatprep.subr.bf16.mxu0 0
      %2192 = vmatpush1.bf16.xpose.msra.mxu0 0
      %2193 = vmatprep.subr.bf16.mxu0 0
      %2194 = vmatpush1.bf16.xpose.msra.mxu0 0
      %2195 = vmatprep.subr.bf16.mxu0 0
      %2196 = vmatpush1.bf16.xpose.msra.mxu0 0
      %2197 = vmatprep.subr.bf16.mxu0 0
      %2198 = vmatpush1.bf16.xpose.msra.mxu0 0
      %2199 = vmatprep.subr.bf16.mxu0 0
      %2200 = vmatpush1.bf16.xpose.msra.mxu0 0
      %2201 = vmatprep.subr.bf16.mxu0 0
      %2202 = vmatpush1.bf16.xpose.msra.mxu0 0
      %2203 = vmatprep.subr.bf16.mxu0 0
      %2204 = vmatpush1.bf16.xpose.msra.mxu0 0
      %2205 = vmatprep.subr.bf16.mxu0 0
      %2206 = vmatpush1.bf16.xpose.msra.mxu0 0
      %2207 = vmatprep.subr.bf16.mxu0 0
      %2208 = vmatpush1.bf16.xpose.msra.mxu0 0
      %2209 = vmatprep.subr.bf16.mxu0 0
      %2210 = vmatpush1.bf16.xpose.msra.mxu0 0
      %2211 = vmatprep.subr.bf16.mxu0 0
      %2212 = vmatpush1.bf16.xpose.msra.mxu0 0
      %2213 = vmatprep.mubr.bf16.mxu0 0
      %2214 = vmatmul.mubr.bf16.gmra.mrb[0].mxu0 %v2170
      %v2215 = vpop.f32.mrb[0].mxu0
      %v2216 = vadd.f32 %v765, %v2215
      %v2217 = vpop.f32.mrb[0].mxu0
      %v2218 = vpop.f32.mrb[0].mxu0
      %v2219 = vadd.f32 %v765, %v2218
      %v2220 = vpop.f32.mrb[0].mxu0
      %2221 = vmatprep.mubr.bf16.mxu0 0
      %2222 = vmatmul.mubr.bf16.gmra.mrb[0].mxu0 %v2173
      %v2223 = vpop.f32.mrb[0].mxu0
      %v2224 = vadd.f32 %v765, %v2223
      %v2225 = vpop.f32.mrb[0].mxu0
      %v2226 = vpop.f32.mrb[0].mxu0
      %v2227 = vpop.f32.mrb[0].mxu0
      %2228 = vdwg.mxu0
      %v2229 = vsel %vm834, %v2216, -inf
      %2230 = vmax.xlane.f32.xlu0 %v2229
      %v2231 = vpop.xlane.xlu0 %2230
      %v2232 = vsel %vm834, %v2219, -inf
      %2233 = vmax.xlane.f32.xlu0 %v2232
      %v2234 = vpop.xlane.xlu0 %2233
      %v2235 = vsel %vm834, %v2224, -inf
      %2236 = vmax.xlane.f32.xlu0 %v2235
      %v2237 = vpop.xlane.xlu0 %2236
      %v2238 = vsub.f32 %v2216, %v2231
      %v2239 = vsub.f32 %v2219, %v2234
      %v2240 = vsub.f32 %v2224, %v2237
      %v2241 = vmul.f32 %v2238, 1.442695
      %v2242 = vpow.pop %v2241
      %v2243 = vmul.f32 %v2239, 1.442695
      %v2244 = vpow.pop %v2243
      %v2245 = vmul.f32 %v2240, 1.442695
      %v2246 = vpow.pop %v2245
      %v2247 = vsel %vm834, %v2242, 0.0
      %2248 = vadd.xlane.f32.xlu0 %v2247
      %v2249 = vpop.xlane.xlu0 %2248
      %v2250 = vsel %vm834, %v2244, 0.0
      %2251 = vadd.xlane.f32.xlu0 %v2250
      %v2252 = vpop.xlane.xlu0 %2251
      %v2253 = vsel %vm834, %v2246, 0.0
      %2254 = vadd.xlane.f32.xlu0 %v2253
      %v2255 = vpop.xlane.xlu0 %2254
      %v2256 = vrcp.pop %v2249
      %v2257 = vrcp.pop %v2252
      %v2258 = vrcp.pop %v2255
      %v2259 = vmul.f32 %v2242, %v2256
      %v2260 = vmul.f32 %v2244, %v2257
      %v2261 = vmul.f32 %v2246, %v2258
      %v2262 = vpack.c.bf16 %v2260, %v2259
      %v2263 = vpack.c.bf16 %v2261, %v2261
      %2264 = vrot.lane.b32.xlu0 %v1994, 56
      %v2265 = vpop.permute.xlu0 %2264
      %2266 = vrot.lane.b32.xlu0 %v1995, 56
      %v2267 = vpop.permute.xlu0 %2266
      %v2270 = vsel %vm834, %v2262, 0
      %v2273 = vsel %vm834, %v2263, 0
      %v2276 = vsel %vm881, %v2267, 0
      %2278 = vmatprep.subr.bf16.mxu0 0
      %2279 = vmatpush1.bf16.msra.mxu0 %v2265
      %2280 = vmatprep.subr.bf16.mxu0 0
      %2281 = vmatpush1.bf16.msra.mxu0 %v2276
      %2282 = vmatprep.subr.bf16.mxu0 0
      %2283 = vmatpush1.bf16.msra.mxu0 0
      %2284 = vmatprep.subr.bf16.mxu0 0
      %2285 = vmatpush1.bf16.msra.mxu0 0
      %2286 = vmatprep.subr.bf16.mxu0 0
      %2287 = vmatpush1.bf16.msra.mxu0 0
      %2288 = vmatprep.subr.bf16.mxu0 0
      %2289 = vmatpush1.bf16.msra.mxu0 0
      %2290 = vmatprep.subr.bf16.mxu0 0
      %2291 = vmatpush1.bf16.msra.mxu0 0
      %2292 = vmatprep.subr.bf16.mxu0 0
      %2293 = vmatpush1.bf16.msra.mxu0 0
      %2294 = vmatprep.subr.bf16.mxu0 0
      %2295 = vmatpush1.bf16.msra.mxu0 0
      %2296 = vmatprep.subr.bf16.mxu0 0
      %2297 = vmatpush1.bf16.msra.mxu0 0
      %2298 = vmatprep.subr.bf16.mxu0 0
      %2299 = vmatpush1.bf16.msra.mxu0 0
      %2300 = vmatprep.subr.bf16.mxu0 0
      %2301 = vmatpush1.bf16.msra.mxu0 0
      %2302 = vmatprep.subr.bf16.mxu0 0
      %2303 = vmatpush1.bf16.msra.mxu0 0
      %2304 = vmatprep.subr.bf16.mxu0 0
      %2305 = vmatpush1.bf16.msra.mxu0 0
      %2306 = vmatprep.subr.bf16.mxu0 0
      %2307 = vmatpush1.bf16.msra.mxu0 0
      %2308 = vmatprep.subr.bf16.mxu0 0
      %2309 = vmatpush1.bf16.msra.mxu0 0
      %2310 = vmatprep.mubr.bf16.mxu0 0
      %2311 = vmatmul.mubr.bf16.gmra.mrb[0].mxu0 %v2270
      %v2312 = vpop.f32.mrb[0].mxu0
      %v2313 = vadd.f32 0.0, %v2312
      %v2314 = vpop.f32.mrb[0].mxu0
      %v2315 = vpop.f32.mrb[0].mxu0
      %v2316 = vadd.f32 0.0, %v2315
      %v2317 = vpop.f32.mrb[0].mxu0
      %2318 = vmatprep.mubr.bf16.mxu0 0
      %2319 = vmatmul.mubr.bf16.gmra.mrb[0].mxu0 %v2273
      %v2320 = vpop.f32.mrb[0].mxu0
      %v2321 = vadd.f32 0.0, %v2320
      %v2322 = vpop.f32.mrb[0].mxu0
      %v2323 = vpop.f32.mrb[0].mxu0
      %v2324 = vpop.f32.mrb[0].mxu0
      %2325 = vdwg.mxu0
      %2326 = vrot.lane.b32.xlu0 %v1992, 112
      %v2327 = vpop.permute.xlu0 %2326
      %2328 = vrot.lane.b32.xlu0 %v1993, 112
      %v2329 = vpop.permute.xlu0 %2328
      %2330 = vrot.lane.b32.xlu0 %v1994, 80
      %v2331 = vpop.permute.xlu0 %2330
      %2332 = vrot.lane.b32.xlu0 %v1995, 80
      %v2333 = vpop.permute.xlu0 %2332
      %v2335 = vsel %vm773, %v2327, 0
      %v2338 = vsel %vm773, %v2329, 0
      %v2341 = vsel %vm773, %v2331, 0
      %v2344 = vsel %vm773, %v2333, 0
      %2346 = vmatprep.subr.bf16.mxu0 0
      %2347 = vmatpush1.bf16.xpose.msra.mxu0 %v2341
      %2348 = vmatprep.subr.bf16.mxu0 0
      %2349 = vmatpush1.bf16.xpose.msra.mxu0 %v2344
      %2350 = vmatprep.subr.bf16.mxu0 0
      %2351 = vmatpush1.bf16.xpose.msra.mxu0 0
      %2352 = vmatprep.subr.bf16.mxu0 0
      %2353 = vmatpush1.bf16.xpose.msra.mxu0 0
      %2354 = vmatprep.subr.bf16.mxu0 0
      %2355 = vmatpush1.bf16.xpose.msra.mxu0 0
      %2356 = vmatprep.subr.bf16.mxu0 0
      %2357 = vmatpush1.bf16.xpose.msra.mxu0 0
      %2358 = vmatprep.subr.bf16.mxu0 0
      %2359 = vmatpush1.bf16.xpose.msra.mxu0 0
      %2360 = vmatprep.subr.bf16.mxu0 0
      %2361 = vmatpush1.bf16.xpose.msra.mxu0 0
      %2362 = vmatprep.subr.bf16.mxu0 0
      %2363 = vmatpush1.bf16.xpose.msra.mxu0 0
      %2364 = vmatprep.subr.bf16.mxu0 0
      %2365 = vmatpush1.bf16.xpose.msra.mxu0 0
      %2366 = vmatprep.subr.bf16.mxu0 0
      %2367 = vmatpush1.bf16.xpose.msra.mxu0 0
      %2368 = vmatprep.subr.bf16.mxu0 0
      %2369 = vmatpush1.bf16.xpose.msra.mxu0 0
      %2370 = vmatprep.subr.bf16.mxu0 0
      %2371 = vmatpush1.bf16.xpose.msra.mxu0 0
      %2372 = vmatprep.subr.bf16.mxu0 0
      %2373 = vmatpush1.bf16.xpose.msra.mxu0 0
      %2374 = vmatprep.subr.bf16.mxu0 0
      %2375 = vmatpush1.bf16.xpose.msra.mxu0 0
      %2376 = vmatprep.subr.bf16.mxu0 0
      %2377 = vmatpush1.bf16.xpose.msra.mxu0 0
      %2378 = vmatprep.mubr.bf16.mxu0 0
      %2379 = vmatmul.mubr.bf16.gmra.mrb[0].mxu0 %v2335
      %v2380 = vpop.f32.mrb[0].mxu0
      %v2381 = vadd.f32 %v765, %v2380
      %v2382 = vpop.f32.mrb[0].mxu0
      %v2383 = vpop.f32.mrb[0].mxu0
      %v2384 = vadd.f32 %v765, %v2383
      %v2385 = vpop.f32.mrb[0].mxu0
      %2386 = vmatprep.mubr.bf16.mxu0 0
      %2387 = vmatmul.mubr.bf16.gmra.mrb[0].mxu0 %v2338
      %v2388 = vpop.f32.mrb[0].mxu0
      %v2389 = vadd.f32 %v765, %v2388
      %v2390 = vpop.f32.mrb[0].mxu0
      %v2391 = vpop.f32.mrb[0].mxu0
      %v2392 = vpop.f32.mrb[0].mxu0
      %2393 = vdwg.mxu0
      %v2394 = vsel %vm834, %v2381, -inf
      %2395 = vmax.xlane.f32.xlu0 %v2394
      %v2396 = vpop.xlane.xlu0 %2395
      %v2397 = vsel %vm834, %v2384, -inf
      %2398 = vmax.xlane.f32.xlu0 %v2397
      %v2399 = vpop.xlane.xlu0 %2398
      %v2400 = vsel %vm834, %v2389, -inf
      %2401 = vmax.xlane.f32.xlu0 %v2400
      %v2402 = vpop.xlane.xlu0 %2401
      %v2403 = vsub.f32 %v2381, %v2396
      %v2404 = vsub.f32 %v2384, %v2399
      %v2405 = vsub.f32 %v2389, %v2402
      %v2406 = vmul.f32 %v2403, 1.442695
      %v2407 = vpow.pop %v2406
      %v2408 = vmul.f32 %v2404, 1.442695
      %v2409 = vpow.pop %v2408
      %v2410 = vmul.f32 %v2405, 1.442695
      %v2411 = vpow.pop %v2410
      %v2412 = vsel %vm834, %v2407, 0.0
      %2413 = vadd.xlane.f32.xlu0 %v2412
      %v2414 = vpop.xlane.xlu0 %2413
      %v2415 = vsel %vm834, %v2409, 0.0
      %2416 = vadd.xlane.f32.xlu0 %v2415
      %v2417 = vpop.xlane.xlu0 %2416
      %v2418 = vsel %vm834, %v2411, 0.0
      %2419 = vadd.xlane.f32.xlu0 %v2418
      %v2420 = vpop.xlane.xlu0 %2419
      %v2421 = vrcp.pop %v2414
      %v2422 = vrcp.pop %v2417
      %v2423 = vrcp.pop %v2420
      %v2424 = vmul.f32 %v2407, %v2421
      %v2425 = vmul.f32 %v2409, %v2422
      %v2426 = vmul.f32 %v2411, %v2423
      %v2427 = vpack.c.bf16 %v2425, %v2424
      %v2428 = vpack.c.bf16 %v2426, %v2426
      %2429 = vrot.lane.b32.xlu0 %v1994, 48
      %v2430 = vpop.permute.xlu0 %2429
      %2431 = vrot.lane.b32.xlu0 %v1995, 48
      %v2432 = vpop.permute.xlu0 %2431
      %v2435 = vsel %vm834, %v2427, 0
      %v2438 = vsel %vm834, %v2428, 0
      %v2441 = vsel %vm881, %v2432, 0
      %2443 = vmatprep.subr.bf16.mxu0 0
      %2444 = vmatpush1.bf16.msra.mxu0 %v2430
      %2445 = vmatprep.subr.bf16.mxu0 0
      %2446 = vmatpush1.bf16.msra.mxu0 %v2441
      %2447 = vmatprep.subr.bf16.mxu0 0
      %2448 = vmatpush1.bf16.msra.mxu0 0
      %2449 = vmatprep.subr.bf16.mxu0 0
      %2450 = vmatpush1.bf16.msra.mxu0 0
      %2451 = vmatprep.subr.bf16.mxu0 0
      %2452 = vmatpush1.bf16.msra.mxu0 0
      %2453 = vmatprep.subr.bf16.mxu0 0
      %2454 = vmatpush1.bf16.msra.mxu0 0
      %2455 = vmatprep.subr.bf16.mxu0 0
      %2456 = vmatpush1.bf16.msra.mxu0 0
      %2457 = vmatprep.subr.bf16.mxu0 0
      %2458 = vmatpush1.bf16.msra.mxu0 0
      %2459 = vmatprep.subr.bf16.mxu0 0
      %2460 = vmatpush1.bf16.msra.mxu0 0
      %2461 = vmatprep.subr.bf16.mxu0 0
      %2462 = vmatpush1.bf16.msra.mxu0 0
      %2463 = vmatprep.subr.bf16.mxu0 0
      %2464 = vmatpush1.bf16.msra.mxu0 0
      %2465 = vmatprep.subr.bf16.mxu0 0
      %2466 = vmatpush1.bf16.msra.mxu0 0
      %2467 = vmatprep.subr.bf16.mxu0 0
      %2468 = vmatpush1.bf16.msra.mxu0 0
      %2469 = vmatprep.subr.bf16.mxu0 0
      %2470 = vmatpush1.bf16.msra.mxu0 0
      %2471 = vmatprep.subr.bf16.mxu0 0
      %2472 = vmatpush1.bf16.msra.mxu0 0
      %2473 = vmatprep.subr.bf16.mxu0 0
      %2474 = vmatpush1.bf16.msra.mxu0 0
      %2475 = vmatprep.mubr.bf16.mxu0 0
      %2476 = vmatmul.mubr.bf16.gmra.mrb[0].mxu0 %v2435
      %v2477 = vpop.f32.mrb[0].mxu0
      %v2478 = vadd.f32 0.0, %v2477
      %v2479 = vpop.f32.mrb[0].mxu0
      %v2480 = vpop.f32.mrb[0].mxu0
      %v2481 = vadd.f32 0.0, %v2480
      %v2482 = vpop.f32.mrb[0].mxu0
      %2483 = vmatprep.mubr.bf16.mxu0 0
      %2484 = vmatmul.mubr.bf16.gmra.mrb[0].mxu0 %v2438
      %v2485 = vpop.f32.mrb[0].mxu0
      %v2486 = vadd.f32 0.0, %v2485
      %v2487 = vpop.f32.mrb[0].mxu0
      %v2488 = vpop.f32.mrb[0].mxu0
      %v2489 = vpop.f32.mrb[0].mxu0
      %2490 = vdwg.mxu0
      %2491 = vrot.lane.b32.xlu0 %v1992, 104
      %v2492 = vpop.permute.xlu0 %2491
      %2493 = vrot.lane.b32.xlu0 %v1993, 104
      %v2494 = vpop.permute.xlu0 %2493
      %2495 = vrot.lane.b32.xlu0 %v1994, 72
      %v2496 = vpop.permute.xlu0 %2495
      %2497 = vrot.lane.b32.xlu0 %v1995, 72
      %v2498 = vpop.permute.xlu0 %2497
      %v2500 = vsel %vm773, %v2492, 0
      %v2503 = vsel %vm773, %v2494, 0
      %v2506 = vsel %vm773, %v2496, 0
      %v2509 = vsel %vm773, %v2498, 0
      %2511 = vmatprep.subr.bf16.mxu0 0
      %2512 = vmatpush1.bf16.xpose.msra.mxu0 %v2506
      %2513 = vmatprep.subr.bf16.mxu0 0
      %2514 = vmatpush1.bf16.xpose.msra.mxu0 %v2509
      %2515 = vmatprep.subr.bf16.mxu0 0
      %2516 = vmatpush1.bf16.xpose.msra.mxu0 0
      %2517 = vmatprep.subr.bf16.mxu0 0
      %2518 = vmatpush1.bf16.xpose.msra.mxu0 0
      %2519 = vmatprep.subr.bf16.mxu0 0
      %2520 = vmatpush1.bf16.xpose.msra.mxu0 0
      %2521 = vmatprep.subr.bf16.mxu0 0
      %2522 = vmatpush1.bf16.xpose.msra.mxu0 0
      %2523 = vmatprep.subr.bf16.mxu0 0
      %2524 = vmatpush1.bf16.xpose.msra.mxu0 0
      %2525 = vmatprep.subr.bf16.mxu0 0
      %2526 = vmatpush1.bf16.xpose.msra.mxu0 0
      %2527 = vmatprep.subr.bf16.mxu0 0
      %2528 = vmatpush1.bf16.xpose.msra.mxu0 0
      %2529 = vmatprep.subr.bf16.mxu0 0
      %2530 = vmatpush1.bf16.xpose.msra.mxu0 0
      %2531 = vmatprep.subr.bf16.mxu0 0
      %2532 = vmatpush1.bf16.xpose.msra.mxu0 0
      %2533 = vmatprep.subr.bf16.mxu0 0
      %2534 = vmatpush1.bf16.xpose.msra.mxu0 0
      %2535 = vmatprep.subr.bf16.mxu0 0
      %2536 = vmatpush1.bf16.xpose.msra.mxu0 0
      %2537 = vmatprep.subr.bf16.mxu0 0
      %2538 = vmatpush1.bf16.xpose.msra.mxu0 0
      %2539 = vmatprep.subr.bf16.mxu0 0
      %2540 = vmatpush1.bf16.xpose.msra.mxu0 0
      %2541 = vmatprep.subr.bf16.mxu0 0
      %2542 = vmatpush1.bf16.xpose.msra.mxu0 0
      %2543 = vmatprep.mubr.bf16.mxu0 0
      %2544 = vmatmul.mubr.bf16.gmra.mrb[0].mxu0 %v2500
      %v2545 = vpop.f32.mrb[0].mxu0
      %v2546 = vadd.f32 %v765, %v2545
      %v2547 = vpop.f32.mrb[0].mxu0
      %v2548 = vpop.f32.mrb[0].mxu0
      %v2549 = vadd.f32 %v765, %v2548
      %v2550 = vpop.f32.mrb[0].mxu0
      %2551 = vmatprep.mubr.bf16.mxu0 0
      %2552 = vmatmul.mubr.bf16.gmra.mrb[0].mxu0 %v2503
      %v2553 = vpop.f32.mrb[0].mxu0
      %v2554 = vadd.f32 %v765, %v2553
      %v2555 = vpop.f32.mrb[0].mxu0
      %v2556 = vpop.f32.mrb[0].mxu0
      %v2557 = vpop.f32.mrb[0].mxu0
      %2558 = vdwg.mxu0
      %v2559 = vsel %vm834, %v2546, -inf
      %2560 = vmax.xlane.f32.xlu0 %v2559
      %v2561 = vpop.xlane.xlu0 %2560
      %v2562 = vsel %vm834, %v2549, -inf
      %2563 = vmax.xlane.f32.xlu0 %v2562
      %v2564 = vpop.xlane.xlu0 %2563
      %v2565 = vsel %vm834, %v2554, -inf
      %2566 = vmax.xlane.f32.xlu0 %v2565
      %v2567 = vpop.xlane.xlu0 %2566
      %v2568 = vsub.f32 %v2546, %v2561
      %v2569 = vsub.f32 %v2549, %v2564
      %v2570 = vsub.f32 %v2554, %v2567
      %v2571 = vmul.f32 %v2568, 1.442695
      %v2572 = vpow.pop %v2571
      %v2573 = vmul.f32 %v2569, 1.442695
      %v2574 = vpow.pop %v2573
      %v2575 = vmul.f32 %v2570, 1.442695
      %v2576 = vpow.pop %v2575
      %v2577 = vsel %vm834, %v2572, 0.0
      %2578 = vadd.xlane.f32.xlu0 %v2577
      %v2579 = vpop.xlane.xlu0 %2578
      %v2580 = vsel %vm834, %v2574, 0.0
      %2581 = vadd.xlane.f32.xlu0 %v2580
      %v2582 = vpop.xlane.xlu0 %2581
      %v2583 = vsel %vm834, %v2576, 0.0
      %2584 = vadd.xlane.f32.xlu0 %v2583
      %v2585 = vpop.xlane.xlu0 %2584
      %v2586 = vrcp.pop %v2579
      %v2587 = vrcp.pop %v2582
      %v2588 = vrcp.pop %v2585
      %v2589 = vmul.f32 %v2572, %v2586
      %v2590 = vmul.f32 %v2574, %v2587
      %v2591 = vmul.f32 %v2576, %v2588
      %v2592 = vpack.c.bf16 %v2590, %v2589
      %v2593 = vpack.c.bf16 %v2591, %v2591
      %2594 = vrot.lane.b32.xlu0 %v1994, 40
      %v2595 = vpop.permute.xlu0 %2594
      %2596 = vrot.lane.b32.xlu0 %v1995, 40
      %v2597 = vpop.permute.xlu0 %2596
      %v2600 = vsel %vm834, %v2592, 0
      %v2603 = vsel %vm834, %v2593, 0
      %v2606 = vsel %vm881, %v2597, 0
      %2608 = vmatprep.subr.bf16.mxu0 0
      %2609 = vmatpush1.bf16.msra.mxu0 %v2595
      %2610 = vmatprep.subr.bf16.mxu0 0
      %2611 = vmatpush1.bf16.msra.mxu0 %v2606
      %2612 = vmatprep.subr.bf16.mxu0 0
      %2613 = vmatpush1.bf16.msra.mxu0 0
      %2614 = vmatprep.subr.bf16.mxu0 0
      %2615 = vmatpush1.bf16.msra.mxu0 0
      %2616 = vmatprep.subr.bf16.mxu0 0
      %2617 = vmatpush1.bf16.msra.mxu0 0
      %2618 = vmatprep.subr.bf16.mxu0 0
      %2619 = vmatpush1.bf16.msra.mxu0 0
      %2620 = vmatprep.subr.bf16.mxu0 0
      %2621 = vmatpush1.bf16.msra.mxu0 0
      %2622 = vmatprep.subr.bf16.mxu0 0
      %2623 = vmatpush1.bf16.msra.mxu0 0
      %2624 = vmatprep.subr.bf16.mxu0 0
      %2625 = vmatpush1.bf16.msra.mxu0 0
      %2626 = vmatprep.subr.bf16.mxu0 0
      %2627 = vmatpush1.bf16.msra.mxu0 0
      %2628 = vmatprep.subr.bf16.mxu0 0
      %2629 = vmatpush1.bf16.msra.mxu0 0
      %2630 = vmatprep.subr.bf16.mxu0 0
      %2631 = vmatpush1.bf16.msra.mxu0 0
      %2632 = vmatprep.subr.bf16.mxu0 0
      %2633 = vmatpush1.bf16.msra.mxu0 0
      %2634 = vmatprep.subr.bf16.mxu0 0
      %2635 = vmatpush1.bf16.msra.mxu0 0
      %2636 = vmatprep.subr.bf16.mxu0 0
      %2637 = vmatpush1.bf16.msra.mxu0 0
      %2638 = vmatprep.subr.bf16.mxu0 0
      %2639 = vmatpush1.bf16.msra.mxu0 0
      %2640 = vmatprep.mubr.bf16.mxu0 0
      %2641 = vmatmul.mubr.bf16.gmra.mrb[0].mxu0 %v2600
      %v2642 = vpop.f32.mrb[0].mxu0
      %v2643 = vadd.f32 0.0, %v2642
      %v2644 = vpop.f32.mrb[0].mxu0
      %v2645 = vpop.f32.mrb[0].mxu0
      %v2646 = vadd.f32 0.0, %v2645
      %v2647 = vpop.f32.mrb[0].mxu0
      %2648 = vmatprep.mubr.bf16.mxu0 0
      %2649 = vmatmul.mubr.bf16.gmra.mrb[0].mxu0 %v2603
      %v2650 = vpop.f32.mrb[0].mxu0
      %v2651 = vadd.f32 0.0, %v2650
      %v2652 = vpop.f32.mrb[0].mxu0
      %v2653 = vpop.f32.mrb[0].mxu0
      %v2654 = vpop.f32.mrb[0].mxu0
      %2655 = vdwg.mxu0
      %2659 = vrot.lane.b32.xlu0 %v2313, 8
      %v2660 = vpop.permute.xlu0 %2659
      %2661 = vrot.lane.b32.xlu0 %v2316, 8
      %v2662 = vpop.permute.xlu0 %2661
      %2663 = vrot.lane.b32.xlu0 %v2321, 8
      %v2664 = vpop.permute.xlu0 %2663
      %2671 = vrot.lane.b32.xlu0 %v2478, 16
      %v2672 = vpop.permute.xlu0 %2671
      %2673 = vrot.lane.b32.xlu0 %v2481, 16
      %v2674 = vpop.permute.xlu0 %2673
      %2675 = vrot.lane.b32.xlu0 %v2486, 16
      %v2676 = vpop.permute.xlu0 %2675
      %2683 = vrot.lane.b32.xlu0 %v2643, 24
      %v2684 = vpop.permute.xlu0 %2683
      %2685 = vrot.lane.b32.xlu0 %v2646, 24
      %v2686 = vpop.permute.xlu0 %2685
      %2687 = vrot.lane.b32.xlu0 %v2651, 24
      %v2688 = vpop.permute.xlu0 %2687
      %v2692 = vsel %vm773, %v2146, %v2660
      %v2693 = vsel %vm773, %v2149, %v2662
      %v2694 = vsel %vm773, %v2154, %v2664
      %v2695 = vsel %vm1469, %v2692, %v2672
      %v2696 = vsel %vm1469, %v2693, %v2674
      %v2697 = vsel %vm1469, %v2694, %v2676
      %v2698 = vsel %vm834, %v2695, %v2684
      %v2699 = vsel %vm834, %v2696, %v2686
      %v2700 = vsel %vm834, %v2697, %v2688
      %v2701 = vpack.c.bf16 %v2699, %v2698
      %v2702 = vpack.c.bf16 %v2700, %v2700
      %s2703 = scalar_lea.vmem %s7, 16
      %v2704 = vld [vmem:[%s2703] sm:$0xf]
      %v2705 = vld [vmem:[%s2703 + $0x4] sm:$0xf]
      %v2706 = vld [vmem:[%s2703 + $0x8] sm:$0xf]
      %v2707 = vld [vmem:[%s2703 + $0xc] sm:$0xf]
      %s2708 = scalar_lea.vmem %s8, 1
      %v2709 = vld [vmem:[%s2708] sm:$0x1]
      %v2711 = vlaneseq
      %v2712 = vshrl.u32 %v2711, 7
      %v2713 = vsub.s32 0, %v2712
      %v2714 = vrot.slane %v2709, %v2713
      %v2720 = vunpack.c.l.b16 %v2704
      %v2721 = vunpack.c.l.b16 %v2705
      %v2722 = vunpack.c.l.b16 %v2706
      %v2723 = vunpack.c.l.b16 %v2707
      %v2724 = vpack.c.b16 %v2721, %v2720
      %v2725 = vpack.c.b16 %v2723, %v2722
      %v2729 = vsel %vm616, %v2701, 0
      %v2732 = vsel %vm616, %v2702, 0
      %2734 = vmatprep.subr.bf16.mxu0 0
      %2735 = vmatpush1.bf16.msra.mxu0 %v2724
      %2736 = vmatprep.subr.bf16.mxu0 0
      %2737 = vmatpush1.bf16.msra.mxu0 %v2725
      %2738 = vmatprep.subr.bf16.mxu0 0
      %2739 = vmatpush1.bf16.msra.mxu0 0
      %2740 = vmatprep.subr.bf16.mxu0 0
      %2741 = vmatpush1.bf16.msra.mxu0 0
      %2742 = vmatprep.subr.bf16.mxu0 0
      %2743 = vmatpush1.bf16.msra.mxu0 0
      %2744 = vmatprep.subr.bf16.mxu0 0
      %2745 = vmatpush1.bf16.msra.mxu0 0
      %2746 = vmatprep.subr.bf16.mxu0 0
      %2747 = vmatpush1.bf16.msra.mxu0 0
      %2748 = vmatprep.subr.bf16.mxu0 0
      %2749 = vmatpush1.bf16.msra.mxu0 0
      %2750 = vmatprep.subr.bf16.mxu0 0
      %2751 = vmatpush1.bf16.msra.mxu0 0
      %2752 = vmatprep.subr.bf16.mxu0 0
      %2753 = vmatpush1.bf16.msra.mxu0 0
      %2754 = vmatprep.subr.bf16.mxu0 0
      %2755 = vmatpush1.bf16.msra.mxu0 0
      %2756 = vmatprep.subr.bf16.mxu0 0
      %2757 = vmatpush1.bf16.msra.mxu0 0
      %2758 = vmatprep.subr.bf16.mxu0 0
      %2759 = vmatpush1.bf16.msra.mxu0 0
      %2760 = vmatprep.subr.bf16.mxu0 0
      %2761 = vmatpush1.bf16.msra.mxu0 0
      %2762 = vmatprep.subr.bf16.mxu0 0
      %2763 = vmatpush1.bf16.msra.mxu0 0
      %2764 = vmatprep.subr.bf16.mxu0 0
      %2765 = vmatpush1.bf16.msra.mxu0 0
      %2766 = vmatprep.mubr.bf16.mxu0 0
      %2767 = vmatmul.mubr.bf16.gmra.mrb[0].mxu0 %v2729
      %v2768 = vpop.f32.mrb[0].mxu0
      %v2769 = vadd.f32 %v2714, %v2768
      %v2770 = vpop.f32.mrb[0].mxu0
      %v2771 = vpop.f32.mrb[0].mxu0
      %v2772 = vadd.f32 %v2714, %v2771
      %v2773 = vpop.f32.mrb[0].mxu0
      %2774 = vmatprep.mubr.bf16.mxu0 0
      %2775 = vmatmul.mubr.bf16.gmra.mrb[0].mxu0 %v2732
      %v2776 = vpop.f32.mrb[0].mxu0
      %v2777 = vadd.f32 %v2714, %v2776
      %v2778 = vpop.f32.mrb[0].mxu0
      %v2779 = vpop.f32.mrb[0].mxu0
      %v2780 = vpop.f32.mrb[0].mxu0
      %2781 = vdwg.mxu0
      %v2782 = vadd.f32 %v1844, %v2769
      %v2783 = vadd.f32 %v1845, %v2772
      %v2784 = vadd.f32 %v1846, %v2777
      %s2785 = scalar_lea.vmem %s9, 1
      %v2786 = vld [vmem:[%s2785] sm:$0x1]
      %s2787 = scalar_lea.vmem %s10, 1
      %v2788 = vld [vmem:[%s2787] sm:$0x1]
      %v2789 = vsel %vm616, %v2782, 0.0
      %2790 = vadd.xlane.f32.xlu0 %v2789
      %v2791 = vpop.xlane.xlu0 %2790
      %v2792 = vsel %vm616, %v2783, 0.0
      %2793 = vadd.xlane.f32.xlu0 %v2792
      %v2794 = vpop.xlane.xlu0 %2793
      %v2795 = vsel %vm616, %v2784, 0.0
      %2796 = vadd.xlane.f32.xlu0 %v2795
      %v2797 = vpop.xlane.xlu0 %2796
      %v2798 = vmul.f32 %v2791, %v626
      %v2799 = vmul.f32 %v2794, %v626
      %v2800 = vmul.f32 %v2797, %v626
      %v2801 = vsub.f32 %v2782, %v2798
      %v2802 = vsub.f32 %v2783, %v2799
      %v2803 = vsub.f32 %v2784, %v2800
      %v2804 = vmul.f32 %v2801, %v2801
      %v2805 = vmul.f32 %v2802, %v2802
      %v2806 = vmul.f32 %v2803, %v2803
      %v2807 = vsel %vm616, %v2804, 0.0
      %2808 = vadd.xlane.f32.xlu0 %v2807
      %v2809 = vpop.xlane.xlu0 %2808
      %v2810 = vsel %vm616, %v2805, 0.0
      %2811 = vadd.xlane.f32.xlu0 %v2810
      %v2812 = vpop.xlane.xlu0 %2811
      %v2813 = vsel %vm616, %v2806, 0.0
      %2814 = vadd.xlane.f32.xlu0 %v2813
      %v2815 = vpop.xlane.xlu0 %2814
      %v2816 = vmul.f32 %v2809, %v626
      %v2817 = vmul.f32 %v2812, %v626
      %v2818 = vmul.f32 %v2815, %v626
      %v2819 = vadd.f32 %v2816, 1e-05
      %v2820 = vadd.f32 %v2817, 1e-05
      %v2821 = vadd.f32 %v2818, 1e-05
      %v2822 = vrsqrt.pop %v2819
      %v2823 = vrsqrt.pop %v2820
      %v2824 = vrsqrt.pop %v2821
      %v2825 = vmul.f32 %v2801, %v2822
      %v2826 = vmul.f32 %v2802, %v2823
      %v2827 = vmul.f32 %v2803, %v2824
      %v2829 = vlaneseq
      %v2830 = vshrl.u32 %v2829, 7
      %v2831 = vsub.s32 0, %v2830
      %v2832 = vrot.slane %v2786, %v2831
      %v2834 = vmul.f32 %v2825, %v2832
      %v2835 = vmul.f32 %v2826, %v2832
      %v2836 = vmul.f32 %v2827, %v2832
      %v2838 = vlaneseq
      %v2839 = vshrl.u32 %v2838, 7
      %v2840 = vsub.s32 0, %v2839
      %v2841 = vrot.slane %v2788, %v2840
      %v2843 = vadd.f32 %v2834, %v2841
      %v2844 = vadd.f32 %v2835, %v2841
      %v2845 = vadd.f32 %v2836, %v2841
      %v2846 = vpack.c.bf16 %v2844, %v2843
      %v2847 = vpack.c.bf16 %v2845, %v2845
      %s2848 = scalar_lea.vmem %s11, 16
      %v2849 = vld [vmem:[%s2848] sm:$0xf]
      %v2850 = vld [vmem:[%s2848 + $0x4] sm:$0xf]
      %v2851 = vld [vmem:[%s2848 + $0x8] sm:$0xf]
      %v2852 = vld [vmem:[%s2848 + $0xc] sm:$0xf]
      %s2853 = scalar_lea.vmem %s12, 1
      %v2854 = vld [vmem:[%s2853] sm:$0x1]
      %v2856 = vlaneseq
      %v2857 = vshrl.u32 %v2856, 7
      %v2858 = vsub.s32 0, %v2857
      %v2859 = vrot.slane %v2854, %v2858
      %v2865 = vunpack.c.l.b16 %v2849
      %v2866 = vunpack.c.l.b16 %v2850
      %v2867 = vunpack.c.l.b16 %v2851
      %v2868 = vunpack.c.l.b16 %v2852
      %v2869 = vpack.c.b16 %v2866, %v2865
      %v2870 = vpack.c.b16 %v2868, %v2867
      %v2874 = vsel %vm616, %v2846, 0
      %v2877 = vsel %vm616, %v2847, 0
      %2879 = vmatprep.subr.bf16.mxu0 0
      %2880 = vmatpush1.bf16.msra.mxu0 %v2869
      %2881 = vmatprep.subr.bf16.mxu0 0
      %2882 = vmatpush1.bf16.msra.mxu0 %v2870
      %2883 = vmatprep.subr.bf16.mxu0 0
      %2884 = vmatpush1.bf16.msra.mxu0 0
      %2885 = vmatprep.subr.bf16.mxu0 0
      %2886 = vmatpush1.bf16.msra.mxu0 0
      %2887 = vmatprep.subr.bf16.mxu0 0
      %2888 = vmatpush1.bf16.msra.mxu0 0
      %2889 = vmatprep.subr.bf16.mxu0 0
      %2890 = vmatpush1.bf16.msra.mxu0 0
      %2891 = vmatprep.subr.bf16.mxu0 0
      %2892 = vmatpush1.bf16.msra.mxu0 0
      %2893 = vmatprep.subr.bf16.mxu0 0
      %2894 = vmatpush1.bf16.msra.mxu0 0
      %2895 = vmatprep.subr.bf16.mxu0 0
      %2896 = vmatpush1.bf16.msra.mxu0 0
      %2897 = vmatprep.subr.bf16.mxu0 0
      %2898 = vmatpush1.bf16.msra.mxu0 0
      %2899 = vmatprep.subr.bf16.mxu0 0
      %2900 = vmatpush1.bf16.msra.mxu0 0
      %2901 = vmatprep.subr.bf16.mxu0 0
      %2902 = vmatpush1.bf16.msra.mxu0 0
      %2903 = vmatprep.subr.bf16.mxu0 0
      %2904 = vmatpush1.bf16.msra.mxu0 0
      %2905 = vmatprep.subr.bf16.mxu0 0
      %2906 = vmatpush1.bf16.msra.mxu0 0
      %2907 = vmatprep.subr.bf16.mxu0 0
      %2908 = vmatpush1.bf16.msra.mxu0 0
      %2909 = vmatprep.subr.bf16.mxu0 0
      %2910 = vmatpush1.bf16.msra.mxu0 0
      %2911 = vmatprep.mubr.bf16.mxu0 0
      %2912 = vmatmul.mubr.bf16.gmra.mrb[0].mxu0 %v2874
      %v2913 = vpop.f32.mrb[0].mxu0
      %v2914 = vadd.f32 %v2859, %v2913
      %v2915 = vpop.f32.mrb[0].mxu0
      %v2916 = vpop.f32.mrb[0].mxu0
      %v2917 = vadd.f32 %v2859, %v2916
      %v2918 = vpop.f32.mrb[0].mxu0
      %2919 = vmatprep.mubr.bf16.mxu0 0
      %2920 = vmatmul.mubr.bf16.gmra.mrb[0].mxu0 %v2877
      %v2921 = vpop.f32.mrb[0].mxu0
      %v2922 = vadd.f32 %v2859, %v2921
      %v2923 = vpop.f32.mrb[0].mxu0
      %v2924 = vpop.f32.mrb[0].mxu0
      %v2925 = vpop.f32.mrb[0].mxu0
      %2926 = vdwg.mxu0
      %v2927 = vmul.f32 %v2914, 0.5
      %v2928 = vmul.f32 %v2917, 0.5
      %v2929 = vmul.f32 %v2922, 0.5
      %v2930 = vmul.f32 %v2914, 0.044715
      %v2931 = vmul.f32 %v2917, 0.044715
      %v2932 = vmul.f32 %v2922, 0.044715
      %v2933 = vmul.f32 %v2930, %v2914
      %v2934 = vmul.f32 %v2931, %v2917
      %v2935 = vmul.f32 %v2932, %v2922
      %v2936 = vmul.f32 %v2933, %v2914
      %v2937 = vmul.f32 %v2934, %v2917
      %v2938 = vmul.f32 %v2935, %v2922
      %v2939 = vadd.f32 %v2914, %v2936
      %v2940 = vadd.f32 %v2917, %v2937
      %v2941 = vadd.f32 %v2922, %v2938
      %v2942 = vmul.f32 %v2939, 0.7978846
      %v2943 = vmul.f32 %v2940, 0.7978846
      %v2944 = vmul.f32 %v2941, 0.7978846
      %v2945 = vtanh.pop %v2942
      %v2946 = vtanh.pop %v2943
      %v2947 = vtanh.pop %v2944
      %v2948 = vadd.f32 %v2945, 1.0
      %v2949 = vadd.f32 %v2946, 1.0
      %v2950 = vadd.f32 %v2947, 1.0
      %v2951 = vmul.f32 %v2927, %v2948
      %v2952 = vmul.f32 %v2928, %v2949
      %v2953 = vmul.f32 %v2929, %v2950
      %v2954 = vpack.c.bf16 %v2952, %v2951
      %v2955 = vpack.c.bf16 %v2953, %v2953
      %s2956 = scalar_lea.vmem %s13, 64
      %v2957 = vld [vmem:[%s2956] sm:$0xf]
      %v2958 = vld [vmem:[%s2956 + $0x4] sm:$0xf]
      %v2959 = vld [vmem:[%s2956 + $0x8] sm:$0xf]
      %v2960 = vld [vmem:[%s2956 + $0xc] sm:$0xf]
      %v2961 = vld [vmem:[%s2956 + $0x10] sm:$0xf]
      %v2962 = vld [vmem:[%s2956 + $0x14] sm:$0xf]
      %v2963 = vld [vmem:[%s2956 + $0x18] sm:$0xf]
      %v2964 = vld [vmem:[%s2956 + $0x1c] sm:$0xf]
      %v2965 = vld [vmem:[%s2956 + $0x20] sm:$0xf]
      %v2966 = vld [vmem:[%s2956 + $0x24] sm:$0xf]
      %v2967 = vld [vmem:[%s2956 + $0x28] sm:$0xf]
      %v2968 = vld [vmem:[%s2956 + $0x2c] sm:$0xf]
      %v2969 = vld [vmem:[%s2956 + $0x30] sm:$0xf]
      %v2970 = vld [vmem:[%s2956 + $0x34] sm:$0xf]
      %v2971 = vld [vmem:[%s2956 + $0x38] sm:$0xf]
      %v2972 = vld [vmem:[%s2956 + $0x3c] sm:$0xf]
      %s2973 = scalar_lea.vmem %s14, 1
      %v2974 = vld [vmem:[%s2973] sm:$0x1]
      %v2976 = vlaneseq
      %v2977 = vshrl.u32 %v2976, 7
      %v2978 = vsub.s32 0, %v2977
      %v2979 = vrot.slane %v2974, %v2978
      %v2997 = vunpack.c.l.b16 %v2957
      %v2998 = vunpack.c.l.b16 %v2958
      %v2999 = vunpack.c.l.b16 %v2959
      %v3000 = vunpack.c.l.b16 %v2960
      %v3001 = vunpack.c.l.b16 %v2961
      %v3002 = vunpack.c.l.b16 %v2962
      %v3003 = vunpack.c.l.b16 %v2963
      %v3004 = vunpack.c.l.b16 %v2964
      %v3005 = vunpack.c.l.b16 %v2965
      %v3006 = vunpack.c.l.b16 %v2966
      %v3007 = vunpack.c.l.b16 %v2967
      %v3008 = vunpack.c.l.b16 %v2968
      %v3009 = vunpack.c.l.b16 %v2969
      %v3010 = vunpack.c.l.b16 %v2970
      %v3011 = vunpack.c.l.b16 %v2971
      %v3012 = vunpack.c.l.b16 %v2972
      %v3013 = vpack.c.b16 %v2998, %v2997
      %v3014 = vpack.c.b16 %v3000, %v2999
      %v3015 = vpack.c.b16 %v3002, %v3001
      %v3016 = vpack.c.b16 %v3004, %v3003
      %v3017 = vpack.c.b16 %v3006, %v3005
      %v3018 = vpack.c.b16 %v3008, %v3007
      %v3019 = vpack.c.b16 %v3010, %v3009
      %v3020 = vpack.c.b16 %v3012, %v3011
      %3029 = vmatprep.subr.bf16.mxu0 0
      %3030 = vmatpush1.bf16.msra.mxu0 %v3013
      %3031 = vmatprep.subr.bf16.mxu0 0
      %3032 = vmatpush1.bf16.msra.mxu0 %v3014
      %3033 = vmatprep.subr.bf16.mxu0 0
      %3034 = vmatpush1.bf16.msra.mxu0 %v3015
      %3035 = vmatprep.subr.bf16.mxu0 0
      %3036 = vmatpush1.bf16.msra.mxu0 %v3016
      %3037 = vmatprep.subr.bf16.mxu0 0
      %3038 = vmatpush1.bf16.msra.mxu0 %v3017
      %3039 = vmatprep.subr.bf16.mxu0 0
      %3040 = vmatpush1.bf16.msra.mxu0 %v3018
      %3041 = vmatprep.subr.bf16.mxu0 0
      %3042 = vmatpush1.bf16.msra.mxu0 %v3019
      %3043 = vmatprep.subr.bf16.mxu0 0
      %3044 = vmatpush1.bf16.msra.mxu0 %v3020
      %3045 = vmatprep.subr.bf16.mxu0 0
      %3046 = vmatpush1.bf16.msra.mxu0 0
      %3047 = vmatprep.subr.bf16.mxu0 0
      %3048 = vmatpush1.bf16.msra.mxu0 0
      %3049 = vmatprep.subr.bf16.mxu0 0
      %3050 = vmatpush1.bf16.msra.mxu0 0
      %3051 = vmatprep.subr.bf16.mxu0 0
      %3052 = vmatpush1.bf16.msra.mxu0 0
      %3053 = vmatprep.subr.bf16.mxu0 0
      %3054 = vmatpush1.bf16.msra.mxu0 0
      %3055 = vmatprep.subr.bf16.mxu0 0
      %3056 = vmatpush1.bf16.msra.mxu0 0
      %3057 = vmatprep.subr.bf16.mxu0 0
      %3058 = vmatpush1.bf16.msra.mxu0 0
      %3059 = vmatprep.subr.bf16.mxu0 0
      %3060 = vmatpush1.bf16.msra.mxu0 0
      %3061 = vmatprep.mubr.bf16.mxu0 0
      %3062 = vmatmul.mubr.bf16.gmra.mrb[0].mxu0 %v2954
      %v3063 = vpop.f32.mrb[0].mxu0
      %v3064 = vadd.f32 %v2979, %v3063
      %v3065 = vpop.f32.mrb[0].mxu0
      %v3066 = vpop.f32.mrb[0].mxu0
      %v3067 = vadd.f32 %v2979, %v3066
      %v3068 = vpop.f32.mrb[0].mxu0
      %3069 = vmatprep.mubr.bf16.mxu0 0
      %3070 = vmatmul.mubr.bf16.gmra.mrb[0].mxu0 %v2955
      %v3071 = vpop.f32.mrb[0].mxu0
      %v3072 = vadd.f32 %v2979, %v3071
      %v3073 = vpop.f32.mrb[0].mxu0
      %v3074 = vpop.f32.mrb[0].mxu0
      %v3075 = vpop.f32.mrb[0].mxu0
      %3076 = vdwg.mxu0
      %v3077 = vadd.f32 %v2782, %v3064
      %v3078 = vadd.f32 %v2783, %v3067
      %v3079 = vadd.f32 %v2784, %v3072
      %v3080 = vld [vmem:[%s15] sm:$0x1]
      %v3081 = vld [vmem:[%s16] sm:$0x1]
      %v3082 = vsel %vm616, %v3077, 0.0
      %3083 = vadd.xlane.f32.xlu0 %v3082
      %v3084 = vpop.xlane.xlu0 %3083
      %v3085 = vsel %vm616, %v3078, 0.0
      %3086 = vadd.xlane.f32.xlu0 %v3085
      %v3087 = vpop.xlane.xlu0 %3086
      %v3088 = vsel %vm616, %v3079, 0.0
      %3089 = vadd.xlane.f32.xlu0 %v3088
      %v3090 = vpop.xlane.xlu0 %3089
      %v3091 = vmul.f32 %v3084, %v626
      %v3092 = vmul.f32 %v3087, %v626
      %v3093 = vmul.f32 %v3090, %v626
      %v3094 = vsub.f32 %v3077, %v3091
      %v3095 = vsub.f32 %v3078, %v3092
      %v3096 = vsub.f32 %v3079, %v3093
      %v3097 = vmul.f32 %v3094, %v3094
      %v3098 = vmul.f32 %v3095, %v3095
      %v3099 = vmul.f32 %v3096, %v3096
      %v3100 = vsel %vm616, %v3097, 0.0
      %3101 = vadd.xlane.f32.xlu0 %v3100
      %v3102 = vpop.xlane.xlu0 %3101
      %v3103 = vsel %vm616, %v3098, 0.0
      %3104 = vadd.xlane.f32.xlu0 %v3103
      %v3105 = vpop.xlane.xlu0 %3104
      %v3106 = vsel %vm616, %v3099, 0.0
      %3107 = vadd.xlane.f32.xlu0 %v3106
      %v3108 = vpop.xlane.xlu0 %3107
      %v3109 = vmul.f32 %v3102, %v626
      %v3110 = vmul.f32 %v3105, %v626
      %v3111 = vmul.f32 %v3108, %v626
      %v3112 = vadd.f32 %v3109, 1e-05
      %v3113 = vadd.f32 %v3110, 1e-05
      %v3114 = vadd.f32 %v3111, 1e-05
      %v3115 = vrsqrt.pop %v3112
      %v3116 = vrsqrt.pop %v3113
      %v3117 = vrsqrt.pop %v3114
      %v3118 = vmul.f32 %v3094, %v3115
      %v3119 = vmul.f32 %v3095, %v3116
      %v3120 = vmul.f32 %v3096, %v3117
      %v3122 = vlaneseq
      %v3123 = vshrl.u32 %v3122, 7
      %v3124 = vsub.s32 0, %v3123
      %v3125 = vrot.slane %v3080, %v3124
      %v3127 = vmul.f32 %v3118, %v3125
      %v3128 = vmul.f32 %v3119, %v3125
      %v3129 = vmul.f32 %v3120, %v3125
      %v3131 = vlaneseq
      %v3132 = vshrl.u32 %v3131, 7
      %v3133 = vsub.s32 0, %v3132
      %v3134 = vrot.slane %v3081, %v3133
      %v3136 = vadd.f32 %v3127, %v3134
      %v3137 = vadd.f32 %v3128, %v3134
      %v3138 = vadd.f32 %v3129, %v3134
      %v3139 = vpack.c.bf16 %v3137, %v3136
      %v3140 = vpack.c.bf16 %v3138, %v3138
      %v3141 = vld [vmem:[%s17] sm:$0xf]
      %v3142 = vld [vmem:[%s17 + $0x4] sm:$0xf]
      %v3143 = vld [vmem:[%s17 + $0x8] sm:$0xf]
      %v3144 = vld [vmem:[%s17 + $0xc] sm:$0xf]
      %v3145 = vld [vmem:[%s18] sm:$0x1]
      %v3147 = vlaneseq
      %v3148 = vshrl.u32 %v3147, 7
      %v3149 = vsub.s32 0, %v3148
      %v3150 = vrot.slane %v3145, %v3149
      %v3156 = vunpack.c.l.b16 %v3141
      %v3157 = vunpack.c.l.b16 %v3142
      %v3158 = vunpack.c.l.b16 %v3143
      %v3159 = vunpack.c.l.b16 %v3144
      %v3160 = vpack.c.b16 %v3157, %v3156
      %v3161 = vpack.c.b16 %v3159, %v3158
      %v3165 = vsel %vm616, %v3139, 0
      %v3168 = vsel %vm616, %v3140, 0
      %3170 = vmatprep.subr.bf16.mxu0 0
      %3171 = vmatpush1.bf16.msra.mxu0 %v3160
      %3172 = vmatprep.subr.bf16.mxu0 0
      %3173 = vmatpush1.bf16.msra.mxu0 %v3161
      %3174 = vmatprep.subr.bf16.mxu0 0
      %3175 = vmatpush1.bf16.msra.mxu0 0
      %3176 = vmatprep.subr.bf16.mxu0 0
      %3177 = vmatpush1.bf16.msra.mxu0 0
      %3178 = vmatprep.subr.bf16.mxu0 0
      %3179 = vmatpush1.bf16.msra.mxu0 0
      %3180 = vmatprep.subr.bf16.mxu0 0
      %3181 = vmatpush1.bf16.msra.mxu0 0
      %3182 = vmatprep.subr.bf16.mxu0 0
      %3183 = vmatpush1.bf16.msra.mxu0 0
      %3184 = vmatprep.subr.bf16.mxu0 0
      %3185 = vmatpush1.bf16.msra.mxu0 0
      %3186 = vmatprep.subr.bf16.mxu0 0
      %3187 = vmatpush1.bf16.msra.mxu0 0
      %3188 = vmatprep.subr.bf16.mxu0 0
      %3189 = vmatpush1.bf16.msra.mxu0 0
      %3190 = vmatprep.subr.bf16.mxu0 0
      %3191 = vmatpush1.bf16.msra.mxu0 0
      %3192 = vmatprep.subr.bf16.mxu0 0
      %3193 = vmatpush1.bf16.msra.mxu0 0
      %3194 = vmatprep.subr.bf16.mxu0 0
      %3195 = vmatpush1.bf16.msra.mxu0 0
      %3196 = vmatprep.subr.bf16.mxu0 0
      %3197 = vmatpush1.bf16.msra.mxu0 0
      %3198 = vmatprep.subr.bf16.mxu0 0
      %3199 = vmatpush1.bf16.msra.mxu0 0
      %3200 = vmatprep.subr.bf16.mxu0 0
      %3201 = vmatpush1.bf16.msra.mxu0 0
      %3202 = vmatprep.mubr.bf16.mxu0 0
      %3203 = vmatmul.mubr.bf16.gmra.mrb[0].mxu0 %v3165
      %v3204 = vpop.f32.mrb[0].mxu0
      %v3205 = vadd.f32 %v3150, %v3204
      %v3206 = vpop.f32.mrb[0].mxu0
      %v3207 = vpop.f32.mrb[0].mxu0
      %v3208 = vadd.f32 %v3150, %v3207
      %v3209 = vpop.f32.mrb[0].mxu0
      %3210 = vmatprep.mubr.bf16.mxu0 0
      %3211 = vmatmul.mubr.bf16.gmra.mrb[0].mxu0 %v3168
      %v3212 = vpop.f32.mrb[0].mxu0
      %v3213 = vadd.f32 %v3150, %v3212
      %v3214 = vpop.f32.mrb[0].mxu0
      %v3215 = vpop.f32.mrb[0].mxu0
      %v3216 = vpop.f32.mrb[0].mxu0
      %3217 = vdwg.mxu0
      %vm3218 = vcmask 392192
      %3219 = vst.msk [vmem:[%s602] sm:$0xff] %vm3218, %v3205
      %3220 = vst.msk [vmem:[%s602 + $0x8] sm:$0xff] %vm3218, %v3208
      %3221 = vst.msk [vmem:[%s602 + $0x10] sm:$0xff] %vm3218, %v3213
      %p3222 = scmp.lt.s32.totalorder %s30, 1
      %s3223 = scalar_select %p3222, %s30, 1
      %s3224 = smul.addr %s3223, 3
      %s3225 = smul.addr %s3224, 8
      %s3226 = scalar_lea.vmem %s19, %s3225
      // Predicated region
      $region97: #{forward.6} parent=95 // pred_check
        %p3227 = pneg %p452
      $region98: #{forward.6} parent=95 // pred_check_branch
        %3229 = sbr.rel (%p3227) target = $region100
      $region99: #{forward.6} parent=95 // pred_region
        _
      $region100: #{forward.6} parent=95 // pred_fallthru
        _
    $region96: #{forward.6} parent=5 // pred_fallthru
      _
    %p3230 = scmp.le.s32.totalorder 2, %s25
    // Predicated region
    $region101: #{forward.6} parent=5 // pred_check
      %p3231 = pneg %p3230
    $region102: #{forward.6} parent=5 // pred_check_branch
      %3233 = sbr.rel (%p3231) target = $region104
    $region103: #{forward.6} parent=5 // pred_region
      %s3234 = ssub.s32 %s25, 2
      // Predicated region
      $region105: #{forward.6} parent=103 // pred_check
        %p3235 = pneg %p458
      $region106: #{forward.6} parent=103 // pred_check_branch
        %3237 = sbr.rel (%p3235) target = $region108
      $region107: #{forward.6} parent=103 // pred_region
        %p3238 = scmp.lt.s32.totalorder %s31, 1
        %s3239 = scalar_select %p3238, %s31, 1
        %s3240 = smul.addr %s3239, 3
        %s3241 = smul.addr %s3240, 8
        %s3242 = scalar_lea.vmem %s19, %s3241
      $region108: #{forward.6} parent=103 // pred_fallthru
        _
    $region104: #{forward.6} parent=5 // pred_fallthru
      _
  $region6: #{forward.6} parent=0 // loop_footer
    %s29 = sadd.s32 1, %s25
  $region7: #{forward.6} parent=0 // loop_footer_branch
    %24 = sbr.rel target = $region3
  $region8: #{forward.6} parent=0 // loop_exit
    _

// kernel: forward.7
$region0: #{forward.7}
  #allocation0 [shape = 'u32[]', space=smem, size = 0x4, offset = 0x4, fixed_abs, tag = 'smem constant byte address 0x4 - core index']
  #allocation1 [shape = 'u32[144,128]{1,0:T(1,128)}', space=vmem, size = 0x12000, scoped, tag = 'internal scratch']
  %s0 = inlined_call_operand.vmem [shape: f32[2,16,48], index: 0, kind: input, shape index: {}]
  %s1 = inlined_call_operand.vmem [shape: f32[2,16,48], index: 1, kind: input, shape index: {}]
  %s2 = inlined_call_operand.vmem [shape: f32[2,16], index: 2, kind: input, shape index: {}]
  %s3 = inlined_call_operand.hbm [shape: f32[1,1], index: 3, kind: output, shape index: {}]
  %s4 = sld [smem:[#allocation0]]
  $region22: #{forward.7} parent=0
    _
  %s6 = ssub.s32 1, %s4
  %s7 = scalar_select 0, %s6, %s4
  $region1: #{forward.7} parent=0
    #allocation2 [shape = 'u8[512]{0}', space=vmem, size = 0x400, scoped, tag = 'output window, operand 0, single buffered']
    #allocation3 [shape = 's32[1]{0}', space=sflag, size = 0x4, scoped, tag = 'scoped memory for forward.7']
    %8 = vsyncpa [#allocation3], 0
    // Predicated region
    $region2: #{forward.7} parent=1 // pred_check
      _
    $region3: #{forward.7} parent=1 // pred_check_branch
      %10 = sbr.rel (0) target = $region5
    $region4: #{forward.7} parent=1 // pred_region
      _
    $region5: #{forward.7} parent=1 // pred_fallthru
      _
    // Predicated region
    $region6: #{forward.7} parent=1 // pred_check
      _
    $region7: #{forward.7} parent=1 // pred_check_branch
      %12 = sbr.rel (0) target = $region9
    $region8: #{forward.7} parent=1 // pred_region
      _
    $region9: #{forward.7} parent=1 // pred_fallthru
      _
    // Predicated region
    $region10: #{forward.7} parent=1 // pred_check
      _
    $region11: #{forward.7} parent=1 // pred_check_branch
      %14 = sbr.rel (0) target = $region13
    $region12: #{forward.7} parent=1 // pred_region
      _
    $region13: #{forward.7} parent=1 // pred_fallthru
      _
    %v15 = vld [vmem:[%s0] sm:$0xff]
    %v16 = vld [vmem:[%s0 + $0x8] sm:$0xff]
    %v17 = vld [vmem:[%s0 + $0x10] sm:$0xff]
    %v18 = vld [vmem:[%s0 + $0x18] sm:$0xff]
    %v19 = vld [vmem:[%s1] sm:$0xff]
    %v20 = vld [vmem:[%s1 + $0x8] sm:$0xff]
    %v21 = vld [vmem:[%s1 + $0x10] sm:$0xff]
    %v22 = vld [vmem:[%s1 + $0x18] sm:$0xff]
    %v23 = vsub.f32 %v15, %v19
    %v24 = vsub.f32 %v16, %v20
    %v25 = vsub.f32 %v17, %v21
    %v26 = vsub.f32 %v18, %v22
    %v27 = vmul.f32 %v23, %v23
    %v28 = vmul.f32 %v24, %v24
    %v29 = vmul.f32 %v25, %v25
    %v30 = vmul.f32 %v26, %v26
    %vm31 = vcmask 392192
    %v32 = vsel %vm31, %v27, 0.0
    %33 = vadd.xlane.f32.xlu0 %v32
    %v34 = vpop.xlane.xlu0 %33
    %v35 = vsel %vm31, %v28, 0.0
    %36 = vadd.xlane.f32.xlu0 %v35
    %v37 = vpop.xlane.xlu0 %36
    %v38 = vsel %vm31, %v29, 0.0
    %39 = vadd.xlane.f32.xlu0 %v38
    %v40 = vpop.xlane.xlu0 %39
    %v41 = vsel %vm31, %v30, 0.0
    %42 = vadd.xlane.f32.xlu0 %v41
    %v43 = vpop.xlane.xlu0 %42
    %v44 = vrcp.pop 48.0
    %v45 = vmul.f32 %v34, %v44
    %v46 = vmul.f32 %v37, %v44
    %v47 = vmul.f32 %v40, %v44
    %v48 = vmul.f32 %v43, %v44
    %v49 = vld [vmem:[%s2] sm:$0x3]
    %v51 = vlaneseq
    %v52 = vshrl.u32 %v51, 7
    %v53 = vsub.s32 0, %v52
    %v54 = vrot.slane %v49, %v53
    %56 = vbcast.lane.b32.xlu0 %v54, 256
    %v57 = vpop.permute.xlu0 %56
    %s59 = sor.u32 256, 8
    %60 = vbcast.lane.b32.xlu0 %v54, %s59
    %v61 = vpop.permute.xlu0 %60
    %v62 = vlaneseq
    %v63 = vshrl.u32 %v62, 7
    %v64 = vsub.s32 1, %v63
    %v65 = vrot.slane %v49, %v64
    %67 = vbcast.lane.b32.xlu0 %v65, 256
    %v68 = vpop.permute.xlu0 %67
    %s70 = sor.u32 256, 8
    %71 = vbcast.lane.b32.xlu0 %v65, %s70
    %v72 = vpop.permute.xlu0 %71
    %v77 = vmul.f32 %v45, %v57
    %v78 = vmul.f32 %v46, %v61
    %v79 = vmul.f32 %v47, %v68
    %v80 = vmul.f32 %v48, %v72
    %85 = vset.pattern.permute.xlu0 0
    %86 = vperm.xlu0 %85, %v77
    %v87 = vpop.permute.xlu0 %86
    %88 = vset.pattern.permute.xlu0 0
    %89 = vperm.xlu0 %88, %v78
    %v90 = vpop.permute.xlu0 %89
    %91 = vset.pattern.permute.xlu0 0
    %92 = vperm.xlu0 %91, %v79
    %v93 = vpop.permute.xlu0 %92
    %94 = vset.pattern.permute.xlu0 0
    %95 = vperm.xlu0 %94, %v80
    %v96 = vpop.permute.xlu0 %95
    %v97 = vlaneseq
    %v98 = vand.u32 %v97, 127
    %v99 = vlaneseq
    %v100 = vshrl.u32 %v99, 7
    %v101 = vsub.s32 %v98, %v100
    %v102 = vrot.slane %v87, %v101
    %v103 = vadd.s32 %v98, 4294967288
    %v104 = vlaneseq
    %v105 = vshrl.u32 %v104, 7
    %v106 = vsub.s32 %v103, %v105
    %v107 = vrot.slane %v90, %v106
    %vm108 = vcmask 130112
    %v109 = vsel %vm108, %v107, %v102
    %v110 = vlaneseq
    %v111 = vshrl.u32 %v110, 7
    %v112 = vsub.s32 %v98, %v111
    %v113 = vrot.slane %v93, %v112
    %v114 = vlaneseq
    %v115 = vshrl.u32 %v114, 7
    %v116 = vsub.s32 %v103, %v115
    %v117 = vrot.slane %v96, %v116
    %v118 = vsel %vm108, %v117, %v113
    %vm119 = vcmask 1041409
    %v120 = vsel %vm119, %v118, %v109
    %vm122 = vcmask 123904
    %v123 = vsel %vm122, %v120, 0.0
    %124 = vadd.xlane.f32.xlu0 %v123
    %v125 = vpop.xlane.xlu0 %124
    %v126 = vrot.slane %v125, 4
    %v127 = vadd.f32 %v125, %v126
    %v128 = vrot.slane %v127, 2
    %v129 = vadd.f32 %v127, %v128
    %v130 = vrot.slane %v129, 1
    %v131 = vadd.f32 %v129, %v130
    %s132 = vtos %v131
    %v133 = vsel %vm122, %v49, 0.0
    %134 = vadd.xlane.f32.xlu0 %v133
    %v135 = vpop.xlane.xlu0 %134
    %v136 = vrot.slane %v135, 4
    %v137 = vadd.f32 %v135, %v136
    %v138 = vrot.slane %v137, 2
    %v139 = vadd.f32 %v137, %v138
    %v140 = vrot.slane %v139, 1
    %v141 = vadd.f32 %v139, %v140
    %s142 = vtos %v141
    %v143 = vstv %s142
    %v144 = vrcp.pop %v143
    %s145 = vtos %v144
    %s146 = smul.f32 %s132, %s145
    %v147 = vstv %s146
    %vm148 = vcmask 0
    %149 = vst.msk [vmem:[#allocation2] sm:$0x1] %vm148, %v147
    // Predicated region
    $region14: #{forward.7} parent=1 // pred_check
      _
    $region15: #{forward.7} parent=1 // pred_check_branch
      %151 = sbr.rel (0) target = $region17
    $region16: #{forward.7} parent=1 // pred_region
      %s153 = ssub.s32 16, 16
      %154 = vsyncadd [#allocation3], %s153
      %s156 = sshll.u32 [#allocation2], 4
      %s157 = int_to_ptr.vmem [resolvable:$true] %s156
      %159 = dma.vmem_to_hbm [thread:$0]  %s157, 16, %s3, [#allocation3]
    $region17: #{forward.7} parent=1 // pred_fallthru
      _
    // Predicated region
    $region18: #{forward.7} parent=1 // pred_check
      _
    $region19: #{forward.7} parent=1 // pred_check_branch
      %161 = sbr.rel (0) target = $region21
    $region20: #{forward.7} parent=1 // pred_region
      %162 = dma.done [#allocation3], 16
    $region21: #{forward.7} parent=1 // pred_fallthru
      _
    %163 = vsyncpa [#allocation3], 1

</llo_original>
